<compile_context>
chip_gen: v6e
topology: v6e:2x2x1
jax: 0.10.0
libtpu: 0.0.40
codegen_flags: <defaults>
</compile_context>

<pallas_src>
import functools

import jax
import jax.numpy as jnp
from jax.experimental import pallas as pl
from jax.experimental.pallas import tpu as pltpu


def _round_up(x, m):
    return ((x + m - 1) // m) * m


# ----------------------------------------------------------------------------
# Pallas kernel: out = x @ w.T + b  (+ optional ReLU), M-tiled.
# ----------------------------------------------------------------------------
def _linear_kernel(x_ref, w_ref, b_ref, o_ref, *, relu):
    acc = jax.lax.dot_general(
        x_ref[...], w_ref[...],
        dimension_numbers=(((1,), (1,)), ((), ())),   # contract K with K (trans_b)
        preferred_element_type=jnp.float32)
    acc = acc + b_ref[...]
    if relu:
        acc = jnp.maximum(acc, 0.0)
    o_ref[...] = acc


def pallas_linear(x, w, b, *, relu=False, pad_n=False, tile_m=512):
    """x: (M, K), w: (N, K), b: (N,) -> (M, N) = x @ w.T + b  (f32 out)."""
    M, K = x.shape
    N = w.shape[0]
    n_pad = _round_up(N, 128) if pad_n else N
    if n_pad != N:
        w = jnp.pad(w, ((0, n_pad - N), (0, 0)))
        b = jnp.pad(b, (0, n_pad - N))

    x_bf = x.astype(jnp.bfloat16)
    w_bf = w.astype(jnp.bfloat16)
    b2 = b.reshape(1, n_pad).astype(jnp.float32)

    # Row-tile choice: full M if small, else a multiple of 8 up to tile_m.
    if M <= tile_m:
        tm = M
    else:
        tm = max(8, (min(tile_m, M) // 8) * 8)
    grid_m = pl.cdiv(M, tm)

    # VMEM footprint: double-buffered x/out tiles + resident weight + bias.
    est = 2 * (tm * K * 2 + tm * n_pad * 4) + n_pad * K * 2 + n_pad * 4
    vmem_limit = int(min(max(2 * est, 32 * 1024 * 1024), 64 * 1024 * 1024))

    out = pl.pallas_call(
        functools.partial(_linear_kernel, relu=relu),
        out_shape=jax.ShapeDtypeStruct((M, n_pad), jnp.float32),
        grid=(grid_m,),
        in_specs=[
            pl.BlockSpec((tm, K), lambda i: (i, 0)),
            pl.BlockSpec((n_pad, K), lambda i: (0, 0)),   # weight resident
            pl.BlockSpec((1, n_pad), lambda i: (0, 0)),
        ],
        out_specs=pl.BlockSpec((tm, n_pad), lambda i: (i, 0)),
        compiler_params=pltpu.CompilerParams(
            dimension_semantics=("parallel",),
            vmem_limit_bytes=vmem_limit),
    )(x_bf, w_bf, b2)
    if n_pad != N:
        out = out[:, :N]
    return out


# ----------------------------------------------------------------------------
# Conv2d (valid, stride s) via NHWC im2col + the Pallas matmul above.
# ----------------------------------------------------------------------------
# TODO(synk): fuse im2col into the matmul kernel (index_map/pl.ds over the
# (B, H, W, C) input) so the patch matrix is never materialized in HBM.
def _im2col_nhwc(x, kh, kw, stride):
    B, H, W, C = x.shape
    OH = (H - kh) // stride + 1
    OW = (W - kw) // stride + 1
    cols = []
    for i in range(kh):
        for j in range(kw):
            sl = jax.lax.slice(
                x, (0, i, j, 0),
                (B, i + stride * (OH - 1) + 1, j + stride * (OW - 1) + 1, C),
                (1, stride, stride, 1))                # (B, OH, OW, C)
            cols.append(sl)
    p = jnp.stack(cols, axis=3)                        # (B, OH, OW, KH*KW, C)
    return p.reshape(B * OH * OW, kh * kw * C), OH, OW


def conv2d_fused(x_nhwc, w_flat, b, *, stride, kh, kw):
    """x_nhwc: (B,H,W,C); w_flat: (O, KH*KW*C) in (i, j, c) column order."""
    B = x_nhwc.shape[0]
    p, OH, OW = _im2col_nhwc(x_nhwc, kh, kw, stride)
    y = pallas_linear(p, w_flat, b, relu=True)
    return y.reshape(B, OH, OW, -1)


# ----------------------------------------------------------------------------
# Parameter init (shape-faithful to the PyTorch module) and branch fusion.
# ----------------------------------------------------------------------------
def _conv_out_hw(h, w):
    o1h, o1w = (h - 8) // 4 + 1, (w - 8) // 4 + 1
    o2h, o2w = (o1h - 4) // 2 + 1, (o1w - 4) // 2 + 1
    return o2h - 3 + 1, o2w - 3 + 1


def init_branch(key, c, h, w, z_size, output_dim, prior=False,
                prior_mean=0.0, prior_std=1.0):
    ks = jax.random.split(key, 6)
    o3h, o3w = _conv_out_hw(h, w)
    cnn_out = 64 * o3h * o3w
    scale = 0.05
    p = {
        "w1": scale * jax.random.normal(ks[0], (32, c, 8, 8), jnp.float32),
        "b1": jnp.zeros((32,), jnp.float32),
        "w2": scale * jax.random.normal(ks[1], (64, 32, 4, 4), jnp.float32),
        "b2": jnp.zeros((64,), jnp.float32),
        "w3": scale * jax.random.normal(ks[2], (64, 64, 3, 3), jnp.float32),
        "b3": jnp.zeros((64,), jnp.float32),
        "fc_w": scale * jax.random.normal(ks[3], (512, cnn_out), jnp.float32),
        "fc_b": jnp.zeros((512,), jnp.float32),
    }
    if prior:
        # LinearPriorNet: row-normalized gaussian rows scaled by prior_std,
        # bias = prior_mean (scalar case).
        wh = jax.random.normal(ks[4], (output_dim, z_size), jnp.float32)
        wh = wh / jnp.linalg.norm(wh, axis=1, keepdims=True)
        p["hyper_w"] = prior_std * wh
        p["hyper_b"] = jnp.full((output_dim,), prior_mean, jnp.float32)
    else:
        p["hyper_w"] = scale * jax.random.normal(ks[4], (output_dim, z_size),
                                                 jnp.float32)
        p["hyper_b"] = 0.01 * jax.random.normal(ks[5], (output_dim,),
                                                jnp.float32)
    return p


def fuse_params(post_p, prior_p, o3h, o3w):
    """Fuse posterior+prior branches into lane-dense weights (done once,
    outside the jitted forward). Conv weights are re-ordered to NHWC patch
    order (kh, kw, c); layers whose inputs differ per branch become
    block-diagonal over the fused channel axis."""
    def reorder(w):                                   # (O,C,KH,KW)->(O, KH*KW*C)
        return jnp.transpose(w, (0, 2, 3, 1)).reshape(w.shape[0], -1)

    def blockdiag_conv(wp, wr):
        O, Ci, KH, KW = wp.shape
        wpn = jnp.transpose(wp, (0, 2, 3, 1))         # (O, KH, KW, Ci)
        wrn = jnp.transpose(wr, (0, 2, 3, 1))
        fused = jnp.zeros((2 * O, KH, KW, 2 * Ci), wp.dtype)
        fused = fused.at[:O, :, :, :Ci].set(wpn)
        fused = fused.at[O:, :, :, Ci:].set(wrn)
        return fused.reshape(2 * O, KH * KW * 2 * Ci)

    def blockdiag_fc(wp, wr):
        Dout = wp.shape[0]
        C = 64
        wpn = wp.reshape(Dout, C, o3h, o3w).transpose(0, 2, 3, 1)
        wrn = wr.reshape(Dout, C, o3h, o3w).transpose(0, 2, 3, 1)
        fused = jnp.zeros((2 * Dout, o3h, o3w, 2 * C), wp.dtype)
        fused = fused.at[:Dout, :, :, :C].set(wpn)
        fused = fused.at[Dout:, :, :, C:].set(wrn)
        return fused.reshape(2 * Dout, o3h * o3w * 2 * C)

    bf = jnp.bfloat16
    f = {
        # conv1: shared input x -> simple output-channel concat (N=64)
        "w1": jnp.concatenate([reorder(post_p["w1"]),
                               reorder(prior_p["w1"])], axis=0).astype(bf),
        "b1": jnp.concatenate([post_p["b1"], prior_p["b1"]]),
        # conv2/conv3/fc: block-diagonal over the fused branch channels
        "w2": blockdiag_conv(post_p["w2"], prior_p["w2"]).astype(bf),
        "b2": jnp.concatenate([post_p["b2"], prior_p["b2"]]),
        "w3": blockdiag_conv(post_p["w3"], prior_p["w3"]).astype(bf),
        "b3": jnp.concatenate([post_p["b3"], prior_p["b3"]]),
        "fc_w": blockdiag_fc(post_p["fc_w"], prior_p["fc_w"]).astype(bf),
        "fc_b": jnp.concatenate([post_p["fc_b"], prior_p["fc_b"]]),
        # hypermodels: concat along the output (param) axis
        "hyper_w": jnp.concatenate([post_p["hyper_w"],
                                    prior_p["hyper_w"]], axis=0).astype(bf),
        "hyper_b": jnp.concatenate([post_p["hyper_b"], prior_p["hyper_b"]]),
    }
    return f


# ----------------------------------------------------------------------------
# HyperDQN forward (model='all'): q*posterior_scale + q_prior*prior_scale.
# ----------------------------------------------------------------------------
def hyperdqn_forward(x, z, fp, *, num_action, output_dim, bias_coef,
                     posterior_scale, prior_scale):
    B = x.shape[0]
    Kz = z.shape[0]
    A, D = num_action, 512

    # Fused conv trunk (posterior + prior in one pass), NHWC between layers.
    h = jnp.transpose(x, (0, 2, 3, 1))                               # NCHW->NHWC once
    h = conv2d_fused(h, fp["w1"], fp["b1"], stride=4, kh=8, kw=8)    # (B,.,.,64)
    h = conv2d_fused(h, fp["w2"], fp["b2"], stride=2, kh=4, kw=4)    # (B,.,.,128)
    h = conv2d_fused(h, fp["w3"], fp["b3"], stride=1, kh=3, kw=3)    # (B,.,.,128)
    feat = pallas_linear(h.reshape(B, -1), fp["fc_w"], fp["fc_b"],
                         relu=True)                                  # (B,1024)=[post|prior]

    # Fused hypermodels: z -> [posterior params | prior params].
    params = pallas_linear(z, fp["hyper_w"], fp["hyper_b"], pad_n=True)
    pp = params[:, :output_dim]                                      # (Kz, A*(D+1))
    pr = params[:, output_dim:]

    # Single fused Q-head matmul with scales/bias_coef folded in.
    w_head = jnp.concatenate(
        [posterior_scale * pp[:, :A * D].reshape(Kz * A, D),
         prior_scale * pr[:, :A * D].reshape(Kz * A, D)], axis=1)    # (Kz*A, 2D)
    b_head = bias_coef * (posterior_scale * pp[:, A * D:]
                          + prior_scale * pr[:, A * D:]).reshape(Kz * A)
    q = pallas_linear(feat, w_head, b_head, pad_n=True)              # (B, Kz*A)
    q = q.reshape(B, Kz, A)
    if Kz == 1:
        q = q[:, 0, :]
    return q


# ----------------------------------------------------------------------------
# Pure-JAX f32 reference (PyTorch-faithful, NCHW, unfused) for validation.
# ----------------------------------------------------------------------------
def _ref_conv(x, w, b, stride):
    y = jax.lax.conv_general_dilated(
        x, w, (stride, stride), "VALID",
        dimension_numbers=("NCHW", "OIHW", "NCHW"))
    return jax.nn.relu(y + b.reshape(1, -1, 1, 1))


def _ref_branch(x, p):
    h = _ref_conv(x, p["w1"], p["b1"], 4)
    h = _ref_conv(h, p["w2"], p["b2"], 2)
    h = _ref_conv(h, p["w3"], p["b3"], 1)
    flat = h.reshape(h.shape[0], -1)
    return jax.nn.relu(flat @ p["fc_w"].T + p["fc_b"])


def ref_forward(x, z, post_p, prior_p, *, num_action, bias_coef,
                posterior_scale, prior_scale):
    A, D = num_action, 512
    Kz = z.shape[0]
    fpost = _ref_branch(x, post_p)
    fprior = _ref_branch(x, prior_p)
    pp = z @ post_p["hyper_w"].T + post_p["hyper_b"]
    pr = z @ prior_p["hyper_w"].T + prior_p["hyper_b"]
    qs = []
    for k in range(Kz):
        wp = pp[k, :A * D].reshape(A, D)
        bp = pp[k, A * D:] * bias_coef
        wr = pr[k, :A * D].reshape(A, D)
        br = pr[k, A * D:] * bias_coef
        qs.append(posterior_scale * (fpost @ wp.T + bp)
                  + prior_scale * (fprior @ wr.T + br))
    q = jnp.stack(qs, axis=1)
    if Kz == 1:
        q = q[:, 0, :]
    return q


# ----------------------------------------------------------------------------
if __name__ == "__main__":
    # Small shapes consistent with the module (Atari-style conv trunk).
    B, C, H, W = 2, 4, 36, 36          # (36-8)/4+1=8 -> (8-4)/2+1=3 -> 3-3+1=1
    A = 6                              # num_action
    Z_SIZE = 8
    KZ = 2                             # z batch
    BIAS_COEF = 0.01
    POSTERIOR_SCALE = 1.0
    PRIOR_SCALE = 0.5
    OUTPUT_DIM = A * (512 + 1)

    root = jax.random.PRNGKey(0)
    k_x, k_z, k_post, k_prior = jax.random.split(root, 4)

    x = jax.random.uniform(k_x, (B, C, H, W), jnp.float32)
    z = jax.random.normal(k_z, (KZ, Z_SIZE), jnp.float32)

    post_params = init_branch(k_post, C, H, W, Z_SIZE, OUTPUT_DIM, prior=False)
    prior_params = init_branch(k_prior, C, H, W, Z_SIZE, OUTPUT_DIM, prior=True,
                               prior_mean=0.0, prior_std=1.0)

    o3h, o3w = _conv_out_hw(H, W)
    fused = fuse_params(post_params, prior_params, o3h, o3w)   # once, outside jit

    fwd = jax.jit(functools.partial(
        hyperdqn_forward, num_action=A, output_dim=OUTPUT_DIM,
        bias_coef=BIAS_COEF, posterior_scale=POSTERIOR_SCALE,
        prior_scale=PRIOR_SCALE))

    q = fwd(x, z, fused)
    q = jax.block_until_ready(q)
    assert q.shape == (B, KZ, A), q.shape

    q_ref = ref_forward(x, z, post_params, prior_params, num_action=A,
                        bias_coef=BIAS_COEF, posterior_scale=POSTERIOR_SCALE,
                        prior_scale=PRIOR_SCALE)
    max_err = float(jnp.max(jnp.abs(q - q_ref)))
    assert jnp.allclose(q, q_ref, rtol=5e-2, atol=5e-2), max_err

    print("KERNEL_OK")
</pallas_src>

<mosaic_0001>
module attributes {stable_mosaic.version = 11 : i64} {
  func.func @_linear_kernel(%arg0: i32, %arg1: memref<128x256xbf16, #tpu.memory_space<vmem>>, %arg2: memref<64x256xbf16, #tpu.memory_space<vmem>>, %arg3: memref<1x64xf32, #tpu.memory_space<vmem>>, %arg4: memref<128x64xf32, #tpu.memory_space<vmem>>) attributes {dimension_semantics = [#tpu.dimension_semantics<parallel>], iteration_bounds = array<i64: 1>, scalar_prefetch = 0 : i64, scratch_operands = 0 : i64, tpu.core_type = #tpu.core_type<tc>, window_params = [{transform_indices = @transform_0, window_bounds = array<i64: 128, 256>}, {pipeline_mode = #tpu.pipeline_mode<synchronous>, transform_indices = @transform_1, window_bounds = array<i64: 64, 256>}, {pipeline_mode = #tpu.pipeline_mode<synchronous>, transform_indices = @transform_2, window_bounds = array<i64: 1, 64>}, {transform_indices = @transform_3, window_bounds = array<i64: 128, 64>}]} {
    %c0 = arith.constant 0 : index
    %c0_0 = arith.constant 0 : index
    %0 = vector.load %arg1[%c0, %c0_0] : memref<128x256xbf16, #tpu.memory_space<vmem>>, vector<128x256xbf16>
    %c0_1 = arith.constant 0 : index
    %c0_2 = arith.constant 0 : index
    %1 = vector.load %arg2[%c0_1, %c0_2] : memref<64x256xbf16, #tpu.memory_space<vmem>>, vector<64x256xbf16>
    %cst = arith.constant dense<0.000000e+00> : vector<128x64xf32>
    %2 = tpu.matmul %0, %1, %cst {dimension_numbers = #tpu.dot_dimension_numbers<[1], [1], [0], [0], [0, 0, 1, 0], [], []>} : vector<128x256xbf16>, vector<64x256xbf16>, vector<128x64xf32> -> vector<128x64xf32>
    %c0_3 = arith.constant 0 : index
    %c0_4 = arith.constant 0 : index
    %3 = vector.load %arg3[%c0_3, %c0_4] : memref<1x64xf32, #tpu.memory_space<vmem>>, vector<1x64xf32>
    %4 = vector.broadcast %3 : vector<1x64xf32> to vector<128x64xf32>
    %5 = arith.addf %2, %4 : vector<128x64xf32>
    %cst_5 = arith.constant 0.000000e+00 : f32
    %6 = vector.broadcast %cst_5 : f32 to vector<128x64xf32>
    %7 = arith.maximumf %5, %6 : vector<128x64xf32>
    %c0_6 = arith.constant 0 : index
    %c0_7 = arith.constant 0 : index
    %8 = vector.load %arg4[%c0_6, %c0_7] : memref<128x64xf32, #tpu.memory_space<vmem>>, vector<128x64xf32>
    tpu.vector_store %arg4[%c0_6, %c0_7], %7 {strides = array<i32>} : memref<128x64xf32, #tpu.memory_space<vmem>>, vector<128x64xf32>,
    return
  }
  func.func @transform_0(%arg0: i32) -> (i32, i32) {
    %c0_i32 = arith.constant 0 : i32
    %c0_i32_0 = arith.constant 0 : i32
    return %arg0, %c0_i32 : i32, i32
  }
  func.func @transform_1(%arg0: i32) -> (i32, i32) {
    %c0_i32 = arith.constant 0 : i32
    %c0_i32_0 = arith.constant 0 : i32
    %c0_i32_1 = arith.constant 0 : i32
    return %c0_i32, %c0_i32_0 : i32, i32
  }
  func.func @transform_2(%arg0: i32) -> (i32, i32) {
    %c0_i32 = arith.constant 0 : i32
    %c0_i32_0 = arith.constant 0 : i32
    %c0_i32_1 = arith.constant 0 : i32
    return %c0_i32, %c0_i32_0 : i32, i32
  }
  func.func @transform_3(%arg0: i32) -> (i32, i32) {
    %c0_i32 = arith.constant 0 : i32
    %c0_i32_0 = arith.constant 0 : i32
    return %arg0, %c0_i32 : i32, i32
  }
}

module attributes {stable_mosaic.version = 11 : i64} {
  func.func @_linear_kernel(%arg0: i32, %arg1: memref<18x1024xbf16, #tpu.memory_space<vmem>>, %arg2: memref<128x1024xbf16, #tpu.memory_space<vmem>>, %arg3: memref<1x128xf32, #tpu.memory_space<vmem>>, %arg4: memref<18x128xf32, #tpu.memory_space<vmem>>) attributes {dimension_semantics = [#tpu.dimension_semantics<parallel>], iteration_bounds = array<i64: 1>, scalar_prefetch = 0 : i64, scratch_operands = 0 : i64, tpu.core_type = #tpu.core_type<tc>, window_params = [{transform_indices = @transform_0, window_bounds = array<i64: 18, 1024>}, {pipeline_mode = #tpu.pipeline_mode<synchronous>, transform_indices = @transform_1, window_bounds = array<i64: 128, 1024>}, {pipeline_mode = #tpu.pipeline_mode<synchronous>, transform_indices = @transform_2, window_bounds = array<i64: 1, 128>}, {transform_indices = @transform_3, window_bounds = array<i64: 18, 128>}]} {
    %c0 = arith.constant 0 : index
    %c0_0 = arith.constant 0 : index
    %0 = vector.load %arg1[%c0, %c0_0] : memref<18x1024xbf16, #tpu.memory_space<vmem>>, vector<18x1024xbf16>
    %c0_1 = arith.constant 0 : index
    %c0_2 = arith.constant 0 : index
    %1 = vector.load %arg2[%c0_1, %c0_2] : memref<128x1024xbf16, #tpu.memory_space<vmem>>, vector<128x1024xbf16>
    %cst = arith.constant dense<0.000000e+00> : vector<18x128xf32>
    %2 = tpu.matmul %0, %1, %cst {dimension_numbers = #tpu.dot_dimension_numbers<[1], [1], [0], [0], [0, 0, 1, 0], [], []>} : vector<18x1024xbf16>, vector<128x1024xbf16>, vector<18x128xf32> -> vector<18x128xf32>
    %c0_3 = arith.constant 0 : index
    %c0_4 = arith.constant 0 : index
    %3 = vector.load %arg3[%c0_3, %c0_4] : memref<1x128xf32, #tpu.memory_space<vmem>>, vector<1x128xf32>
    %4 = vector.broadcast %3 : vector<1x128xf32> to vector<18x128xf32>
    %5 = arith.addf %2, %4 : vector<18x128xf32>
    %cst_5 = arith.constant 0.000000e+00 : f32
    %6 = vector.broadcast %cst_5 : f32 to vector<18x128xf32>
    %7 = arith.maximumf %5, %6 : vector<18x128xf32>
    %c0_6 = arith.constant 0 : index
    %c0_7 = arith.constant 0 : index
    %8 = vector.load %arg4[%c0_6, %c0_7] : memref<18x128xf32, #tpu.memory_space<vmem>>, vector<18x128xf32>
    tpu.vector_store %arg4[%c0_6, %c0_7], %7 {strides = array<i32>} : memref<18x128xf32, #tpu.memory_space<vmem>>, vector<18x128xf32>,
    return
  }
  func.func @transform_0(%arg0: i32) -> (i32, i32) {
    %c0_i32 = arith.constant 0 : i32
    %c0_i32_0 = arith.constant 0 : i32
    return %arg0, %c0_i32 : i32, i32
  }
  func.func @transform_1(%arg0: i32) -> (i32, i32) {
    %c0_i32 = arith.constant 0 : i32
    %c0_i32_0 = arith.constant 0 : i32
    %c0_i32_1 = arith.constant 0 : i32
    return %c0_i32, %c0_i32_0 : i32, i32
  }
  func.func @transform_2(%arg0: i32) -> (i32, i32) {
    %c0_i32 = arith.constant 0 : i32
    %c0_i32_0 = arith.constant 0 : i32
    %c0_i32_1 = arith.constant 0 : i32
    return %c0_i32, %c0_i32_0 : i32, i32
  }
  func.func @transform_3(%arg0: i32) -> (i32, i32) {
    %c0_i32 = arith.constant 0 : i32
    %c0_i32_0 = arith.constant 0 : i32
    return %arg0, %c0_i32 : i32, i32
  }
}

module attributes {stable_mosaic.version = 11 : i64} {
  func.func @_linear_kernel(%arg0: i32, %arg1: memref<2x1152xbf16, #tpu.memory_space<vmem>>, %arg2: memref<128x1152xbf16, #tpu.memory_space<vmem>>, %arg3: memref<1x128xf32, #tpu.memory_space<vmem>>, %arg4: memref<2x128xf32, #tpu.memory_space<vmem>>) attributes {dimension_semantics = [#tpu.dimension_semantics<parallel>], iteration_bounds = array<i64: 1>, scalar_prefetch = 0 : i64, scratch_operands = 0 : i64, tpu.core_type = #tpu.core_type<tc>, window_params = [{transform_indices = @transform_0, window_bounds = array<i64: 2, 1152>}, {pipeline_mode = #tpu.pipeline_mode<synchronous>, transform_indices = @transform_1, window_bounds = array<i64: 128, 1152>}, {pipeline_mode = #tpu.pipeline_mode<synchronous>, transform_indices = @transform_2, window_bounds = array<i64: 1, 128>}, {transform_indices = @transform_3, window_bounds = array<i64: 2, 128>}]} {
    %c0 = arith.constant 0 : index
    %c0_0 = arith.constant 0 : index
    %0 = vector.load %arg1[%c0, %c0_0] : memref<2x1152xbf16, #tpu.memory_space<vmem>>, vector<2x1152xbf16>
    %c0_1 = arith.constant 0 : index
    %c0_2 = arith.constant 0 : index
    %1 = vector.load %arg2[%c0_1, %c0_2] : memref<128x1152xbf16, #tpu.memory_space<vmem>>, vector<128x1152xbf16>
    %cst = arith.constant dense<0.000000e+00> : vector<2x128xf32>
    %2 = tpu.matmul %0, %1, %cst {dimension_numbers = #tpu.dot_dimension_numbers<[1], [1], [0], [0], [0, 0, 1, 0], [], []>} : vector<2x1152xbf16>, vector<128x1152xbf16>, vector<2x128xf32> -> vector<2x128xf32>
    %c0_3 = arith.constant 0 : index
    %c0_4 = arith.constant 0 : index
    %3 = vector.load %arg3[%c0_3, %c0_4] : memref<1x128xf32, #tpu.memory_space<vmem>>, vector<1x128xf32>
    %4 = vector.broadcast %3 : vector<1x128xf32> to vector<2x128xf32>
    %5 = arith.addf %2, %4 : vector<2x128xf32>
    %cst_5 = arith.constant 0.000000e+00 : f32
    %6 = vector.broadcast %cst_5 : f32 to vector<2x128xf32>
    %7 = arith.maximumf %5, %6 : vector<2x128xf32>
    %c0_6 = arith.constant 0 : index
    %c0_7 = arith.constant 0 : index
    %8 = vector.load %arg4[%c0_6, %c0_7] : memref<2x128xf32, #tpu.memory_space<vmem>>, vector<2x128xf32>
    tpu.vector_store %arg4[%c0_6, %c0_7], %7 {strides = array<i32>} : memref<2x128xf32, #tpu.memory_space<vmem>>, vector<2x128xf32>,
    return
  }
  func.func @transform_0(%arg0: i32) -> (i32, i32) {
    %c0_i32 = arith.constant 0 : i32
    %c0_i32_0 = arith.constant 0 : i32
    return %arg0, %c0_i32 : i32, i32
  }
  func.func @transform_1(%arg0: i32) -> (i32, i32) {
    %c0_i32 = arith.constant 0 : i32
    %c0_i32_0 = arith.constant 0 : i32
    %c0_i32_1 = arith.constant 0 : i32
    return %c0_i32, %c0_i32_0 : i32, i32
  }
  func.func @transform_2(%arg0: i32) -> (i32, i32) {
    %c0_i32 = arith.constant 0 : i32
    %c0_i32_0 = arith.constant 0 : i32
    %c0_i32_1 = arith.constant 0 : i32
    return %c0_i32, %c0_i32_0 : i32, i32
  }
  func.func @transform_3(%arg0: i32) -> (i32, i32) {
    %c0_i32 = arith.constant 0 : i32
    %c0_i32_0 = arith.constant 0 : i32
    return %arg0, %c0_i32 : i32, i32
  }
}

module attributes {stable_mosaic.version = 11 : i64} {
  func.func @_linear_kernel(%arg0: i32, %arg1: memref<2x128xbf16, #tpu.memory_space<vmem>>, %arg2: memref<1024x128xbf16, #tpu.memory_space<vmem>>, %arg3: memref<1x1024xf32, #tpu.memory_space<vmem>>, %arg4: memref<2x1024xf32, #tpu.memory_space<vmem>>) attributes {dimension_semantics = [#tpu.dimension_semantics<parallel>], iteration_bounds = array<i64: 1>, scalar_prefetch = 0 : i64, scratch_operands = 0 : i64, tpu.core_type = #tpu.core_type<tc>, window_params = [{transform_indices = @transform_0, window_bounds = array<i64: 2, 128>}, {pipeline_mode = #tpu.pipeline_mode<synchronous>, transform_indices = @transform_1, window_bounds = array<i64: 1024, 128>}, {pipeline_mode = #tpu.pipeline_mode<synchronous>, transform_indices = @transform_2, window_bounds = array<i64: 1, 1024>}, {transform_indices = @transform_3, window_bounds = array<i64: 2, 1024>}]} {
    %c0 = arith.constant 0 : index
    %c0_0 = arith.constant 0 : index
    %0 = vector.load %arg1[%c0, %c0_0] : memref<2x128xbf16, #tpu.memory_space<vmem>>, vector<2x128xbf16>
    %c0_1 = arith.constant 0 : index
    %c0_2 = arith.constant 0 : index
    %1 = vector.load %arg2[%c0_1, %c0_2] : memref<1024x128xbf16, #tpu.memory_space<vmem>>, vector<1024x128xbf16>
    %cst = arith.constant dense<0.000000e+00> : vector<2x1024xf32>
    %2 = tpu.matmul %0, %1, %cst {dimension_numbers = #tpu.dot_dimension_numbers<[1], [1], [0], [0], [0, 0, 1, 0], [], []>} : vector<2x128xbf16>, vector<1024x128xbf16>, vector<2x1024xf32> -> vector<2x1024xf32>
    %c0_3 = arith.constant 0 : index
    %c0_4 = arith.constant 0 : index
    %3 = vector.load %arg3[%c0_3, %c0_4] : memref<1x1024xf32, #tpu.memory_space<vmem>>, vector<1x1024xf32>
    %4 = vector.broadcast %3 : vector<1x1024xf32> to vector<2x1024xf32>
    %5 = arith.addf %2, %4 : vector<2x1024xf32>
    %cst_5 = arith.constant 0.000000e+00 : f32
    %6 = vector.broadcast %cst_5 : f32 to vector<2x1024xf32>
    %7 = arith.maximumf %5, %6 : vector<2x1024xf32>
    %c0_6 = arith.constant 0 : index
    %c0_7 = arith.constant 0 : index
    %8 = vector.load %arg4[%c0_6, %c0_7] : memref<2x1024xf32, #tpu.memory_space<vmem>>, vector<2x1024xf32>
    tpu.vector_store %arg4[%c0_6, %c0_7], %7 {strides = array<i32>} : memref<2x1024xf32, #tpu.memory_space<vmem>>, vector<2x1024xf32>,
    return
  }
  func.func @transform_0(%arg0: i32) -> (i32, i32) {
    %c0_i32 = arith.constant 0 : i32
    %c0_i32_0 = arith.constant 0 : i32
    return %arg0, %c0_i32 : i32, i32
  }
  func.func @transform_1(%arg0: i32) -> (i32, i32) {
    %c0_i32 = arith.constant 0 : i32
    %c0_i32_0 = arith.constant 0 : i32
    %c0_i32_1 = arith.constant 0 : i32
    return %c0_i32, %c0_i32_0 : i32, i32
  }
  func.func @transform_2(%arg0: i32) -> (i32, i32) {
    %c0_i32 = arith.constant 0 : i32
    %c0_i32_0 = arith.constant 0 : i32
    %c0_i32_1 = arith.constant 0 : i32
    return %c0_i32, %c0_i32_0 : i32, i32
  }
  func.func @transform_3(%arg0: i32) -> (i32, i32) {
    %c0_i32 = arith.constant 0 : i32
    %c0_i32_0 = arith.constant 0 : i32
    return %arg0, %c0_i32 : i32, i32
  }
}

module attributes {stable_mosaic.version = 11 : i64} {
  func.func @_linear_kernel(%arg0: i32, %arg1: memref<2x8xbf16, #tpu.memory_space<vmem>>, %arg2: memref<6272x8xbf16, #tpu.memory_space<vmem>>, %arg3: memref<1x6272xf32, #tpu.memory_space<vmem>>, %arg4: memref<2x6272xf32, #tpu.memory_space<vmem>>) attributes {dimension_semantics = [#tpu.dimension_semantics<parallel>], iteration_bounds = array<i64: 1>, scalar_prefetch = 0 : i64, scratch_operands = 0 : i64, tpu.core_type = #tpu.core_type<tc>, window_params = [{transform_indices = @transform_0, window_bounds = array<i64: 2, 8>}, {pipeline_mode = #tpu.pipeline_mode<synchronous>, transform_indices = @transform_1, window_bounds = array<i64: 6272, 8>}, {pipeline_mode = #tpu.pipeline_mode<synchronous>, transform_indices = @transform_2, window_bounds = array<i64: 1, 6272>}, {transform_indices = @transform_3, window_bounds = array<i64: 2, 6272>}]} {
    %c0 = arith.constant 0 : index
    %c0_0 = arith.constant 0 : index
    %0 = vector.load %arg1[%c0, %c0_0] : memref<2x8xbf16, #tpu.memory_space<vmem>>, vector<2x8xbf16>
    %c0_1 = arith.constant 0 : index
    %c0_2 = arith.constant 0 : index
    %1 = vector.load %arg2[%c0_1, %c0_2] : memref<6272x8xbf16, #tpu.memory_space<vmem>>, vector<6272x8xbf16>
    %cst = arith.constant dense<0.000000e+00> : vector<2x6272xf32>
    %2 = tpu.matmul %0, %1, %cst {dimension_numbers = #tpu.dot_dimension_numbers<[1], [1], [0], [0], [0, 0, 1, 0], [], []>} : vector<2x8xbf16>, vector<6272x8xbf16>, vector<2x6272xf32> -> vector<2x6272xf32>
    %c0_3 = arith.constant 0 : index
    %c0_4 = arith.constant 0 : index
    %3 = vector.load %arg3[%c0_3, %c0_4] : memref<1x6272xf32, #tpu.memory_space<vmem>>, vector<1x6272xf32>
    %4 = vector.broadcast %3 : vector<1x6272xf32> to vector<2x6272xf32>
    %5 = arith.addf %2, %4 : vector<2x6272xf32>
    %c0_5 = arith.constant 0 : index
    %c0_6 = arith.constant 0 : index
    %6 = vector.load %arg4[%c0_5, %c0_6] : memref<2x6272xf32, #tpu.memory_space<vmem>>, vector<2x6272xf32>
    tpu.vector_store %arg4[%c0_5, %c0_6], %5 {strides = array<i32>} : memref<2x6272xf32, #tpu.memory_space<vmem>>, vector<2x6272xf32>,
    return
  }
  func.func @transform_0(%arg0: i32) -> (i32, i32) {
    %c0_i32 = arith.constant 0 : i32
    %c0_i32_0 = arith.constant 0 : i32
    return %arg0, %c0_i32 : i32, i32
  }
  func.func @transform_1(%arg0: i32) -> (i32, i32) {
    %c0_i32 = arith.constant 0 : i32
    %c0_i32_0 = arith.constant 0 : i32
    %c0_i32_1 = arith.constant 0 : i32
    return %c0_i32, %c0_i32_0 : i32, i32
  }
  func.func @transform_2(%arg0: i32) -> (i32, i32) {
    %c0_i32 = arith.constant 0 : i32
    %c0_i32_0 = arith.constant 0 : i32
    %c0_i32_1 = arith.constant 0 : i32
    return %c0_i32, %c0_i32_0 : i32, i32
  }
  func.func @transform_3(%arg0: i32) -> (i32, i32) {
    %c0_i32 = arith.constant 0 : i32
    %c0_i32_0 = arith.constant 0 : i32
    return %arg0, %c0_i32 : i32, i32
  }
}

module attributes {stable_mosaic.version = 11 : i64} {
  func.func @_linear_kernel(%arg0: i32, %arg1: memref<2x1024xbf16, #tpu.memory_space<vmem>>, %arg2: memref<128x1024xbf16, #tpu.memory_space<vmem>>, %arg3: memref<1x128xf32, #tpu.memory_space<vmem>>, %arg4: memref<2x128xf32, #tpu.memory_space<vmem>>) attributes {dimension_semantics = [#tpu.dimension_semantics<parallel>], iteration_bounds = array<i64: 1>, scalar_prefetch = 0 : i64, scratch_operands = 0 : i64, tpu.core_type = #tpu.core_type<tc>, window_params = [{transform_indices = @transform_0, window_bounds = array<i64: 2, 1024>}, {pipeline_mode = #tpu.pipeline_mode<synchronous>, transform_indices = @transform_1, window_bounds = array<i64: 128, 1024>}, {pipeline_mode = #tpu.pipeline_mode<synchronous>, transform_indices = @transform_2, window_bounds = array<i64: 1, 128>}, {transform_indices = @transform_3, window_bounds = array<i64: 2, 128>}]} {
    %c0 = arith.constant 0 : index
    %c0_0 = arith.constant 0 : index
    %0 = vector.load %arg1[%c0, %c0_0] : memref<2x1024xbf16, #tpu.memory_space<vmem>>, vector<2x1024xbf16>
    %c0_1 = arith.constant 0 : index
    %c0_2 = arith.constant 0 : index
    %1 = vector.load %arg2[%c0_1, %c0_2] : memref<128x1024xbf16, #tpu.memory_space<vmem>>, vector<128x1024xbf16>
    %cst = arith.constant dense<0.000000e+00> : vector<2x128xf32>
    %2 = tpu.matmul %0, %1, %cst {dimension_numbers = #tpu.dot_dimension_numbers<[1], [1], [0], [0], [0, 0, 1, 0], [], []>} : vector<2x1024xbf16>, vector<128x1024xbf16>, vector<2x128xf32> -> vector<2x128xf32>
    %c0_3 = arith.constant 0 : index
    %c0_4 = arith.constant 0 : index
    %3 = vector.load %arg3[%c0_3, %c0_4] : memref<1x128xf32, #tpu.memory_space<vmem>>, vector<1x128xf32>
    %4 = vector.broadcast %3 : vector<1x128xf32> to vector<2x128xf32>
    %5 = arith.addf %2, %4 : vector<2x128xf32>
    %c0_5 = arith.constant 0 : index
    %c0_6 = arith.constant 0 : index
    %6 = vector.load %arg4[%c0_5, %c0_6] : memref<2x128xf32, #tpu.memory_space<vmem>>, vector<2x128xf32>
    tpu.vector_store %arg4[%c0_5, %c0_6], %5 {strides = array<i32>} : memref<2x128xf32, #tpu.memory_space<vmem>>, vector<2x128xf32>,
    return
  }
  func.func @transform_0(%arg0: i32) -> (i32, i32) {
    %c0_i32 = arith.constant 0 : i32
    %c0_i32_0 = arith.constant 0 : i32
    return %arg0, %c0_i32 : i32, i32
  }
  func.func @transform_1(%arg0: i32) -> (i32, i32) {
    %c0_i32 = arith.constant 0 : i32
    %c0_i32_0 = arith.constant 0 : i32
    %c0_i32_1 = arith.constant 0 : i32
    return %c0_i32, %c0_i32_0 : i32, i32
  }
  func.func @transform_2(%arg0: i32) -> (i32, i32) {
    %c0_i32 = arith.constant 0 : i32
    %c0_i32_0 = arith.constant 0 : i32
    %c0_i32_1 = arith.constant 0 : i32
    return %c0_i32, %c0_i32_0 : i32, i32
  }
  func.func @transform_3(%arg0: i32) -> (i32, i32) {
    %c0_i32 = arith.constant 0 : i32
    %c0_i32_0 = arith.constant 0 : i32
    return %arg0, %c0_i32 : i32, i32
  }
}

</mosaic_0001>

<llo_original>
// kernel: hyperdqn_forward.6
$region0: #{hyperdqn_forward.6}
  #allocation0 [shape = 'u32[]', space=smem, size = 0x4, offset = 0x4, fixed_abs, tag = 'smem constant byte address 0x4 - core index']
  #allocation1 [shape = 'u32[144,128]{1,0:T(1,128)}', space=vmem, size = 0x12000, scoped, tag = 'internal scratch']
  %s0 = inlined_call_operand.vmem [shape: bf16[128,256], index: 0, kind: input, shape index: {}]
  %s1 = inlined_call_operand.vmem [shape: bf16[64,256], index: 1, kind: input, shape index: {}]
  %s2 = inlined_call_operand.vmem [shape: f32[1,64], index: 2, kind: input, shape index: {}]
  %s3 = inlined_call_operand.vmem [shape: f32[128,64], index: 3, kind: output, shape index: {}]
  %s4 = sld [smem:[#allocation0]]
  $region22: #{hyperdqn_forward.6} parent=0
    _
  %s6 = ssub.s32 1, %s4
  %s7 = scalar_select 0, %s6, %s4
  // Predicated region
  $region2: #{hyperdqn_forward.6} parent=0 // pred_check
    _
  $region3: #{hyperdqn_forward.6} parent=0 // pred_check_branch
    %9 = sbr.rel (0) target = $region5
  $region4: #{hyperdqn_forward.6} parent=0 // pred_region
    _
  $region5: #{hyperdqn_forward.6} parent=0 // pred_fallthru
    _
  // Predicated region
  $region6: #{hyperdqn_forward.6} parent=0 // pred_check
    _
  $region7: #{hyperdqn_forward.6} parent=0 // pred_check_branch
    %11 = sbr.rel (0) target = $region9
  $region8: #{hyperdqn_forward.6} parent=0 // pred_region
    _
  $region9: #{hyperdqn_forward.6} parent=0 // pred_fallthru
    _
  // Predicated region
  $region10: #{hyperdqn_forward.6} parent=0 // pred_check
    _
  $region11: #{hyperdqn_forward.6} parent=0 // pred_check_branch
    %13 = sbr.rel (0) target = $region13
  $region12: #{hyperdqn_forward.6} parent=0 // pred_region
    _
  $region13: #{hyperdqn_forward.6} parent=0 // pred_fallthru
    _
  %v15 = vld [vmem:[%s0] sm:$0xff]
  %v16 = vld [vmem:[%s0 + $0x8] sm:$0xff]
  %v17 = vld [vmem:[%s0 + $0x10] sm:$0xff]
  %v18 = vld [vmem:[%s0 + $0x18] sm:$0xff]
  %v19 = vld [vmem:[%s0 + $0x20] sm:$0xff]
  %v20 = vld [vmem:[%s0 + $0x28] sm:$0xff]
  %v21 = vld [vmem:[%s0 + $0x30] sm:$0xff]
  %v22 = vld [vmem:[%s0 + $0x38] sm:$0xff]
  %v23 = vld [vmem:[%s0 + $0x40] sm:$0xff]
  %v24 = vld [vmem:[%s0 + $0x48] sm:$0xff]
  %v25 = vld [vmem:[%s0 + $0x50] sm:$0xff]
  %v26 = vld [vmem:[%s0 + $0x58] sm:$0xff]
  %v27 = vld [vmem:[%s0 + $0x60] sm:$0xff]
  %v28 = vld [vmem:[%s0 + $0x68] sm:$0xff]
  %v29 = vld [vmem:[%s0 + $0x70] sm:$0xff]
  %v30 = vld [vmem:[%s0 + $0x78] sm:$0xff]
  %v31 = vld [vmem:[%s1] sm:$0xff]
  %v32 = vld [vmem:[%s1 + $0x8] sm:$0xff]
  %v33 = vld [vmem:[%s1 + $0x10] sm:$0xff]
  %v34 = vld [vmem:[%s1 + $0x18] sm:$0xff]
  %v35 = vld [vmem:[%s1 + $0x20] sm:$0xff]
  %v36 = vld [vmem:[%s1 + $0x28] sm:$0xff]
  %v37 = vld [vmem:[%s1 + $0x30] sm:$0xff]
  %v38 = vld [vmem:[%s1 + $0x38] sm:$0xff]
  %v39 = vld [vmem:[%s2] sm:$0x1]
  %v41 = vlaneseq
  %v42 = vshrl.u32 %v41, 7
  %v43 = vsub.s32 0, %v42
  %v44 = vrot.slane %v39, %v43
  %v62 = vunpack.c.l.b16 %v15
  %v63 = vunpack.c.h.b16 %v15
  %v64 = vunpack.c.l.b16 %v16
  %v65 = vunpack.c.h.b16 %v16
  %v66 = vunpack.c.l.b16 %v17
  %v67 = vunpack.c.h.b16 %v17
  %v68 = vunpack.c.l.b16 %v18
  %v69 = vunpack.c.h.b16 %v18
  %v70 = vunpack.c.l.b16 %v19
  %v71 = vunpack.c.h.b16 %v19
  %v72 = vunpack.c.l.b16 %v20
  %v73 = vunpack.c.h.b16 %v20
  %v74 = vunpack.c.l.b16 %v21
  %v75 = vunpack.c.h.b16 %v21
  %v76 = vunpack.c.l.b16 %v22
  %v77 = vunpack.c.h.b16 %v22
  %v78 = vunpack.c.l.b16 %v23
  %v79 = vunpack.c.h.b16 %v23
  %v80 = vunpack.c.l.b16 %v24
  %v81 = vunpack.c.h.b16 %v24
  %v82 = vunpack.c.l.b16 %v25
  %v83 = vunpack.c.h.b16 %v25
  %v84 = vunpack.c.l.b16 %v26
  %v85 = vunpack.c.h.b16 %v26
  %v86 = vunpack.c.l.b16 %v27
  %v87 = vunpack.c.h.b16 %v27
  %v88 = vunpack.c.l.b16 %v28
  %v89 = vunpack.c.h.b16 %v28
  %v90 = vunpack.c.l.b16 %v29
  %v91 = vunpack.c.h.b16 %v29
  %v92 = vunpack.c.l.b16 %v30
  %v93 = vunpack.c.h.b16 %v30
  %v94 = vpack.c.b16 %v64, %v62
  %v95 = vpack.c.b16 %v65, %v63
  %v96 = vpack.c.b16 %v68, %v66
  %v97 = vpack.c.b16 %v69, %v67
  %v98 = vpack.c.b16 %v72, %v70
  %v99 = vpack.c.b16 %v73, %v71
  %v100 = vpack.c.b16 %v76, %v74
  %v101 = vpack.c.b16 %v77, %v75
  %v102 = vpack.c.b16 %v80, %v78
  %v103 = vpack.c.b16 %v81, %v79
  %v104 = vpack.c.b16 %v84, %v82
  %v105 = vpack.c.b16 %v85, %v83
  %v106 = vpack.c.b16 %v88, %v86
  %v107 = vpack.c.b16 %v89, %v87
  %v108 = vpack.c.b16 %v92, %v90
  %v109 = vpack.c.b16 %v93, %v91
  %v134 = vunpack.c.l.b16 %v31
  %v135 = vunpack.c.h.b16 %v31
  %v136 = vunpack.c.l.b16 %v32
  %v137 = vunpack.c.h.b16 %v32
  %v138 = vunpack.c.l.b16 %v33
  %v139 = vunpack.c.h.b16 %v33
  %v140 = vunpack.c.l.b16 %v34
  %v141 = vunpack.c.h.b16 %v34
  %v142 = vunpack.c.l.b16 %v35
  %v143 = vunpack.c.h.b16 %v35
  %v144 = vunpack.c.l.b16 %v36
  %v145 = vunpack.c.h.b16 %v36
  %v146 = vunpack.c.l.b16 %v37
  %v147 = vunpack.c.h.b16 %v37
  %v148 = vunpack.c.l.b16 %v38
  %v149 = vunpack.c.h.b16 %v38
  %v150 = vpack.c.b16 %v136, %v134
  %v151 = vpack.c.b16 %v137, %v135
  %v152 = vpack.c.b16 %v140, %v138
  %v153 = vpack.c.b16 %v141, %v139
  %v154 = vpack.c.b16 %v144, %v142
  %v155 = vpack.c.b16 %v145, %v143
  %v156 = vpack.c.b16 %v148, %v146
  %v157 = vpack.c.b16 %v149, %v147
  %166 = vmatprep.subr.bf16.mxu0 0
  %167 = vmatpush1.bf16.xpose.msra.mxu0 0
  %168 = vmatprep.subr.bf16.mxu0 0
  %169 = vmatpush1.bf16.xpose.msra.mxu0 0
  %170 = vmatprep.subr.bf16.mxu0 0
  %171 = vmatpush1.bf16.xpose.msra.mxu0 0
  %172 = vmatprep.subr.bf16.mxu0 0
  %173 = vmatpush1.bf16.xpose.msra.mxu0 0
  %174 = vmatprep.subr.bf16.mxu0 %v157
  %175 = vmatpush1.bf16.xpose.msra.mxu0 %v156
  %176 = vmatprep.subr.bf16.mxu0 %v155
  %177 = vmatpush1.bf16.xpose.msra.mxu0 %v154
  %178 = vmatprep.subr.bf16.mxu0 %v153
  %179 = vmatpush1.bf16.xpose.msra.mxu0 %v152
  %180 = vmatprep.subr.bf16.mxu0 %v151
  %181 = vmatpush1.bf16.xpose.msra.mxu0 %v150
  %182 = vmatprep.subr.bf16.mxu0 0
  %183 = vmatpush2.bf16.xpose.msra.mxu0 0
  %184 = vmatprep.subr.bf16.mxu0 0
  %185 = vmatpush2.bf16.xpose.msra.mxu0 0
  %186 = vmatprep.subr.bf16.mxu0 0
  %187 = vmatpush2.bf16.xpose.msra.mxu0 0
  %188 = vmatprep.subr.bf16.mxu0 0
  %189 = vmatpush2.bf16.xpose.msra.mxu0 0
  %190 = vmatprep.subr.bf16.mxu0 0
  %191 = vmatpush2.bf16.xpose.msra.mxu0 0
  %192 = vmatprep.subr.bf16.mxu0 0
  %193 = vmatpush2.bf16.xpose.msra.mxu0 0
  %194 = vmatprep.subr.bf16.mxu0 0
  %195 = vmatpush2.bf16.xpose.msra.mxu0 0
  %196 = vmatprep.subr.bf16.mxu0 0
  %197 = vmatpush2.bf16.xpose.msra.mxu0 0
  %198 = vmatprep.mubr.bf16.mxu0 %v95
  %199 = vmatmul.mubr.bf16.gmra.mxu0 %v94
  %v200 = vpop.f32.mrf.mxu0
  %v201 = vadd.f32 %v44, %v200
  %v202 = vpop.f32.mrf.mxu0
  %v203 = vpop.f32.mrf.mxu0
  %v204 = vadd.f32 %v44, %v203
  %v205 = vpop.f32.mrf.mxu0
  %206 = vmatprep.mubr.bf16.mxu0 %v97
  %207 = vmatmul.mubr.bf16.gmra.mxu0 %v96
  %v208 = vpop.f32.mrf.mxu0
  %v209 = vadd.f32 %v44, %v208
  %v210 = vpop.f32.mrf.mxu0
  %v211 = vpop.f32.mrf.mxu0
  %v212 = vadd.f32 %v44, %v211
  %v213 = vpop.f32.mrf.mxu0
  %214 = vmatprep.mubr.bf16.mxu0 %v99
  %215 = vmatmul.mubr.bf16.gmra.mxu0 %v98
  %v216 = vpop.f32.mrf.mxu0
  %v217 = vadd.f32 %v44, %v216
  %v218 = vpop.f32.mrf.mxu0
  %v219 = vpop.f32.mrf.mxu0
  %v220 = vadd.f32 %v44, %v219
  %v221 = vpop.f32.mrf.mxu0
  %222 = vmatprep.mubr.bf16.mxu0 %v101
  %223 = vmatmul.mubr.bf16.gmra.mxu0 %v100
  %v224 = vpop.f32.mrf.mxu0
  %v225 = vadd.f32 %v44, %v224
  %v226 = vpop.f32.mrf.mxu0
  %v227 = vpop.f32.mrf.mxu0
  %v228 = vadd.f32 %v44, %v227
  %v229 = vpop.f32.mrf.mxu0
  %230 = vmatprep.mubr.bf16.mxu0 %v103
  %231 = vmatmul.mubr.bf16.gmra.mxu0 %v102
  %v232 = vpop.f32.mrf.mxu0
  %v233 = vadd.f32 %v44, %v232
  %v234 = vpop.f32.mrf.mxu0
  %v235 = vpop.f32.mrf.mxu0
  %v236 = vadd.f32 %v44, %v235
  %v237 = vpop.f32.mrf.mxu0
  %238 = vmatprep.mubr.bf16.mxu0 %v105
  %239 = vmatmul.mubr.bf16.gmra.mxu0 %v104
  %v240 = vpop.f32.mrf.mxu0
  %v241 = vadd.f32 %v44, %v240
  %v242 = vpop.f32.mrf.mxu0
  %v243 = vpop.f32.mrf.mxu0
  %v244 = vadd.f32 %v44, %v243
  %v245 = vpop.f32.mrf.mxu0
  %246 = vmatprep.mubr.bf16.mxu0 %v107
  %247 = vmatmul.mubr.bf16.gmra.mxu0 %v106
  %v248 = vpop.f32.mrf.mxu0
  %v249 = vadd.f32 %v44, %v248
  %v250 = vpop.f32.mrf.mxu0
  %v251 = vpop.f32.mrf.mxu0
  %v252 = vadd.f32 %v44, %v251
  %v253 = vpop.f32.mrf.mxu0
  %254 = vmatprep.mubr.bf16.mxu0 %v109
  %255 = vmatmul.mubr.bf16.gmra.mxu0 %v108
  %v256 = vpop.f32.mrf.mxu0
  %v257 = vadd.f32 %v44, %v256
  %v258 = vpop.f32.mrf.mxu0
  %v259 = vpop.f32.mrf.mxu0
  %v260 = vadd.f32 %v44, %v259
  %v261 = vpop.f32.mrf.mxu0
  %262 = vdwg.mxu0
  %v263 = vmax.f32 %v201, 0.0
  %v264 = vmax.f32 %v204, 0.0
  %v265 = vmax.f32 %v209, 0.0
  %v266 = vmax.f32 %v212, 0.0
  %v267 = vmax.f32 %v217, 0.0
  %v268 = vmax.f32 %v220, 0.0
  %v269 = vmax.f32 %v225, 0.0
  %v270 = vmax.f32 %v228, 0.0
  %v271 = vmax.f32 %v233, 0.0
  %v272 = vmax.f32 %v236, 0.0
  %v273 = vmax.f32 %v241, 0.0
  %v274 = vmax.f32 %v244, 0.0
  %v275 = vmax.f32 %v249, 0.0
  %v276 = vmax.f32 %v252, 0.0
  %v277 = vmax.f32 %v257, 0.0
  %v278 = vmax.f32 %v260, 0.0
  %vm279 = vcmask 523264
  %280 = vst.msk [vmem:[%s3] sm:$0xff] %vm279, %v263
  %281 = vst.msk [vmem:[%s3 + $0x8] sm:$0xff] %vm279, %v264
  %282 = vst.msk [vmem:[%s3 + $0x10] sm:$0xff] %vm279, %v265
  %283 = vst.msk [vmem:[%s3 + $0x18] sm:$0xff] %vm279, %v266
  %284 = vst.msk [vmem:[%s3 + $0x20] sm:$0xff] %vm279, %v267
  %285 = vst.msk [vmem:[%s3 + $0x28] sm:$0xff] %vm279, %v268
  %286 = vst.msk [vmem:[%s3 + $0x30] sm:$0xff] %vm279, %v269
  %287 = vst.msk [vmem:[%s3 + $0x38] sm:$0xff] %vm279, %v270
  %288 = vst.msk [vmem:[%s3 + $0x40] sm:$0xff] %vm279, %v271
  %289 = vst.msk [vmem:[%s3 + $0x48] sm:$0xff] %vm279, %v272
  %290 = vst.msk [vmem:[%s3 + $0x50] sm:$0xff] %vm279, %v273
  %291 = vst.msk [vmem:[%s3 + $0x58] sm:$0xff] %vm279, %v274
  %292 = vst.msk [vmem:[%s3 + $0x60] sm:$0xff] %vm279, %v275
  %293 = vst.msk [vmem:[%s3 + $0x68] sm:$0xff] %vm279, %v276
  %294 = vst.msk [vmem:[%s3 + $0x70] sm:$0xff] %vm279, %v277
  %295 = vst.msk [vmem:[%s3 + $0x78] sm:$0xff] %vm279, %v278
  // Predicated region
  $region14: #{hyperdqn_forward.6} parent=0 // pred_check
    _
  $region15: #{hyperdqn_forward.6} parent=0 // pred_check_branch
    %297 = sbr.rel (0) target = $region17
  $region16: #{hyperdqn_forward.6} parent=0 // pred_region
    _
  $region17: #{hyperdqn_forward.6} parent=0 // pred_fallthru
    _
  // Predicated region
  $region18: #{hyperdqn_forward.6} parent=0 // pred_check
    _
  $region19: #{hyperdqn_forward.6} parent=0 // pred_check_branch
    %299 = sbr.rel (0) target = $region21
  $region20: #{hyperdqn_forward.6} parent=0 // pred_region
    _
  $region21: #{hyperdqn_forward.6} parent=0 // pred_fallthru
    _

// kernel: hyperdqn_forward.7
$region0: #{hyperdqn_forward.7}
  #allocation0 [shape = 'u32[]', space=smem, size = 0x4, offset = 0x4, fixed_abs, tag = 'smem constant byte address 0x4 - core index']
  #allocation1 [shape = 'u32[144,128]{1,0:T(1,128)}', space=vmem, size = 0x12000, scoped, tag = 'internal scratch']
  %s0 = inlined_call_operand.vmem [shape: bf16[18,1024], index: 0, kind: input, shape index: {}]
  %s1 = inlined_call_operand.vmem [shape: bf16[128,1024], index: 1, kind: input, shape index: {}]
  %s2 = inlined_call_operand.vmem [shape: f32[1,128], index: 2, kind: input, shape index: {}]
  %s3 = inlined_call_operand.vmem [shape: f32[18,128], index: 3, kind: output, shape index: {}]
  %s4 = sld [smem:[#allocation0]]
  $region22: #{hyperdqn_forward.7} parent=0
    _
  %s6 = ssub.s32 1, %s4
  %s7 = scalar_select 0, %s6, %s4
  // Predicated region
  $region2: #{hyperdqn_forward.7} parent=0 // pred_check
    _
  $region3: #{hyperdqn_forward.7} parent=0 // pred_check_branch
    %9 = sbr.rel (0) target = $region5
  $region4: #{hyperdqn_forward.7} parent=0 // pred_region
    _
  $region5: #{hyperdqn_forward.7} parent=0 // pred_fallthru
    _
  // Predicated region
  $region6: #{hyperdqn_forward.7} parent=0 // pred_check
    _
  $region7: #{hyperdqn_forward.7} parent=0 // pred_check_branch
    %11 = sbr.rel (0) target = $region9
  $region8: #{hyperdqn_forward.7} parent=0 // pred_region
    _
  $region9: #{hyperdqn_forward.7} parent=0 // pred_fallthru
    _
  // Predicated region
  $region10: #{hyperdqn_forward.7} parent=0 // pred_check
    _
  $region11: #{hyperdqn_forward.7} parent=0 // pred_check_branch
    %13 = sbr.rel (0) target = $region13
  $region12: #{hyperdqn_forward.7} parent=0 // pred_region
    _
  $region13: #{hyperdqn_forward.7} parent=0 // pred_fallthru
    _
  %v15 = vld [vmem:[%s0] sm:$0xff]
  %v16 = vld [vmem:[%s0 + $0x8] sm:$0xff]
  %v17 = vld [vmem:[%s0 + $0x10] sm:$0xff]
  %v18 = vld [vmem:[%s0 + $0x18] sm:$0xff]
  %v19 = vld [vmem:[%s0 + $0x20] sm:$0xff]
  %v20 = vld [vmem:[%s0 + $0x28] sm:$0xff]
  %v21 = vld [vmem:[%s0 + $0x30] sm:$0xff]
  %v22 = vld [vmem:[%s0 + $0x38] sm:$0xff]
  %v23 = vld [vmem:[%s0 + $0x40] sm:$0x11]
  %v24 = vld [vmem:[%s0 + $0x48] sm:$0x11]
  %v25 = vld [vmem:[%s0 + $0x50] sm:$0x11]
  %v26 = vld [vmem:[%s0 + $0x58] sm:$0x11]
  %v27 = vld [vmem:[%s1] sm:$0xff]
  %v28 = vld [vmem:[%s1 + $0x8] sm:$0xff]
  %v29 = vld [vmem:[%s1 + $0x10] sm:$0xff]
  %v30 = vld [vmem:[%s1 + $0x18] sm:$0xff]
  %v31 = vld [vmem:[%s1 + $0x20] sm:$0xff]
  %v32 = vld [vmem:[%s1 + $0x28] sm:$0xff]
  %v33 = vld [vmem:[%s1 + $0x30] sm:$0xff]
  %v34 = vld [vmem:[%s1 + $0x38] sm:$0xff]
  %v35 = vld [vmem:[%s1 + $0x40] sm:$0xff]
  %v36 = vld [vmem:[%s1 + $0x48] sm:$0xff]
  %v37 = vld [vmem:[%s1 + $0x50] sm:$0xff]
  %v38 = vld [vmem:[%s1 + $0x58] sm:$0xff]
  %v39 = vld [vmem:[%s1 + $0x60] sm:$0xff]
  %v40 = vld [vmem:[%s1 + $0x68] sm:$0xff]
  %v41 = vld [vmem:[%s1 + $0x70] sm:$0xff]
  %v42 = vld [vmem:[%s1 + $0x78] sm:$0xff]
  %v43 = vld [vmem:[%s1 + $0x80] sm:$0xff]
  %v44 = vld [vmem:[%s1 + $0x88] sm:$0xff]
  %v45 = vld [vmem:[%s1 + $0x90] sm:$0xff]
  %v46 = vld [vmem:[%s1 + $0x98] sm:$0xff]
  %v47 = vld [vmem:[%s1 + $0xa0] sm:$0xff]
  %v48 = vld [vmem:[%s1 + $0xa8] sm:$0xff]
  %v49 = vld [vmem:[%s1 + $0xb0] sm:$0xff]
  %v50 = vld [vmem:[%s1 + $0xb8] sm:$0xff]
  %v51 = vld [vmem:[%s1 + $0xc0] sm:$0xff]
  %v52 = vld [vmem:[%s1 + $0xc8] sm:$0xff]
  %v53 = vld [vmem:[%s1 + $0xd0] sm:$0xff]
  %v54 = vld [vmem:[%s1 + $0xd8] sm:$0xff]
  %v55 = vld [vmem:[%s1 + $0xe0] sm:$0xff]
  %v56 = vld [vmem:[%s1 + $0xe8] sm:$0xff]
  %v57 = vld [vmem:[%s1 + $0xf0] sm:$0xff]
  %v58 = vld [vmem:[%s1 + $0xf8] sm:$0xff]
  %v59 = vld [vmem:[%s1 + $0x100] sm:$0xff]
  %v60 = vld [vmem:[%s1 + $0x108] sm:$0xff]
  %v61 = vld [vmem:[%s1 + $0x110] sm:$0xff]
  %v62 = vld [vmem:[%s1 + $0x118] sm:$0xff]
  %v63 = vld [vmem:[%s1 + $0x120] sm:$0xff]
  %v64 = vld [vmem:[%s1 + $0x128] sm:$0xff]
  %v65 = vld [vmem:[%s1 + $0x130] sm:$0xff]
  %v66 = vld [vmem:[%s1 + $0x138] sm:$0xff]
  %v67 = vld [vmem:[%s1 + $0x140] sm:$0xff]
  %v68 = vld [vmem:[%s1 + $0x148] sm:$0xff]
  %v69 = vld [vmem:[%s1 + $0x150] sm:$0xff]
  %v70 = vld [vmem:[%s1 + $0x158] sm:$0xff]
  %v71 = vld [vmem:[%s1 + $0x160] sm:$0xff]
  %v72 = vld [vmem:[%s1 + $0x168] sm:$0xff]
  %v73 = vld [vmem:[%s1 + $0x170] sm:$0xff]
  %v74 = vld [vmem:[%s1 + $0x178] sm:$0xff]
  %v75 = vld [vmem:[%s1 + $0x180] sm:$0xff]
  %v76 = vld [vmem:[%s1 + $0x188] sm:$0xff]
  %v77 = vld [vmem:[%s1 + $0x190] sm:$0xff]
  %v78 = vld [vmem:[%s1 + $0x198] sm:$0xff]
  %v79 = vld [vmem:[%s1 + $0x1a0] sm:$0xff]
  %v80 = vld [vmem:[%s1 + $0x1a8] sm:$0xff]
  %v81 = vld [vmem:[%s1 + $0x1b0] sm:$0xff]
  %v82 = vld [vmem:[%s1 + $0x1b8] sm:$0xff]
  %v83 = vld [vmem:[%s1 + $0x1c0] sm:$0xff]
  %v84 = vld [vmem:[%s1 + $0x1c8] sm:$0xff]
  %v85 = vld [vmem:[%s1 + $0x1d0] sm:$0xff]
  %v86 = vld [vmem:[%s1 + $0x1d8] sm:$0xff]
  %v87 = vld [vmem:[%s1 + $0x1e0] sm:$0xff]
  %v88 = vld [vmem:[%s1 + $0x1e8] sm:$0xff]
  %v89 = vld [vmem:[%s1 + $0x1f0] sm:$0xff]
  %v90 = vld [vmem:[%s1 + $0x1f8] sm:$0xff]
  %v91 = vld [vmem:[%s2] sm:$0x1]
  %v93 = vlaneseq
  %v94 = vshrl.u32 %v93, 7
  %v95 = vsub.s32 0, %v94
  %v96 = vrot.slane %v91, %v95
  %v110 = vunpack.c.l.b16 %v15
  %v111 = vunpack.c.h.b16 %v15
  %v112 = vunpack.c.l.b16 %v16
  %v113 = vunpack.c.h.b16 %v16
  %v114 = vunpack.c.l.b16 %v17
  %v115 = vunpack.c.h.b16 %v17
  %v116 = vunpack.c.l.b16 %v18
  %v117 = vunpack.c.h.b16 %v18
  %v118 = vunpack.c.l.b16 %v19
  %v119 = vunpack.c.h.b16 %v19
  %v120 = vunpack.c.l.b16 %v20
  %v121 = vunpack.c.h.b16 %v20
  %v122 = vunpack.c.l.b16 %v21
  %v123 = vunpack.c.h.b16 %v21
  %v124 = vunpack.c.l.b16 %v22
  %v125 = vunpack.c.h.b16 %v22
  %v126 = vunpack.c.l.b16 %v23
  %v127 = vunpack.c.h.b16 %v23
  %v128 = vunpack.c.l.b16 %v24
  %v129 = vunpack.c.h.b16 %v24
  %v130 = vunpack.c.l.b16 %v25
  %v131 = vunpack.c.h.b16 %v25
  %v132 = vunpack.c.l.b16 %v26
  %v133 = vunpack.c.h.b16 %v26
  %v134 = vpack.c.b16 %v118, %v110
  %v135 = vpack.c.b16 %v119, %v111
  %v136 = vpack.c.b16 %v120, %v112
  %v137 = vpack.c.b16 %v121, %v113
  %v138 = vpack.c.b16 %v122, %v114
  %v139 = vpack.c.b16 %v123, %v115
  %v140 = vpack.c.b16 %v124, %v116
  %v141 = vpack.c.b16 %v125, %v117
  %v142 = vpack.c.b16 %v126, %v126
  %v143 = vpack.c.b16 %v127, %v127
  %v144 = vpack.c.b16 %v128, %v128
  %v145 = vpack.c.b16 %v129, %v129
  %v146 = vpack.c.b16 %v130, %v130
  %v147 = vpack.c.b16 %v131, %v131
  %v148 = vpack.c.b16 %v132, %v132
  %v149 = vpack.c.b16 %v133, %v133
  %v230 = vunpack.c.l.b16 %v27
  %v231 = vunpack.c.h.b16 %v27
  %v232 = vunpack.c.l.b16 %v28
  %v233 = vunpack.c.h.b16 %v28
  %v234 = vunpack.c.l.b16 %v29
  %v235 = vunpack.c.h.b16 %v29
  %v236 = vunpack.c.l.b16 %v30
  %v237 = vunpack.c.h.b16 %v30
  %v238 = vunpack.c.l.b16 %v31
  %v239 = vunpack.c.h.b16 %v31
  %v240 = vunpack.c.l.b16 %v32
  %v241 = vunpack.c.h.b16 %v32
  %v242 = vunpack.c.l.b16 %v33
  %v243 = vunpack.c.h.b16 %v33
  %v244 = vunpack.c.l.b16 %v34
  %v245 = vunpack.c.h.b16 %v34
  %v246 = vunpack.c.l.b16 %v35
  %v247 = vunpack.c.h.b16 %v35
  %v248 = vunpack.c.l.b16 %v36
  %v249 = vunpack.c.h.b16 %v36
  %v250 = vunpack.c.l.b16 %v37
  %v251 = vunpack.c.h.b16 %v37
  %v252 = vunpack.c.l.b16 %v38
  %v253 = vunpack.c.h.b16 %v38
  %v254 = vunpack.c.l.b16 %v39
  %v255 = vunpack.c.h.b16 %v39
  %v256 = vunpack.c.l.b16 %v40
  %v257 = vunpack.c.h.b16 %v40
  %v258 = vunpack.c.l.b16 %v41
  %v259 = vunpack.c.h.b16 %v41
  %v260 = vunpack.c.l.b16 %v42
  %v261 = vunpack.c.h.b16 %v42
  %v262 = vunpack.c.l.b16 %v43
  %v263 = vunpack.c.h.b16 %v43
  %v264 = vunpack.c.l.b16 %v44
  %v265 = vunpack.c.h.b16 %v44
  %v266 = vunpack.c.l.b16 %v45
  %v267 = vunpack.c.h.b16 %v45
  %v268 = vunpack.c.l.b16 %v46
  %v269 = vunpack.c.h.b16 %v46
  %v270 = vunpack.c.l.b16 %v47
  %v271 = vunpack.c.h.b16 %v47
  %v272 = vunpack.c.l.b16 %v48
  %v273 = vunpack.c.h.b16 %v48
  %v274 = vunpack.c.l.b16 %v49
  %v275 = vunpack.c.h.b16 %v49
  %v276 = vunpack.c.l.b16 %v50
  %v277 = vunpack.c.h.b16 %v50
  %v278 = vunpack.c.l.b16 %v51
  %v279 = vunpack.c.h.b16 %v51
  %v280 = vunpack.c.l.b16 %v52
  %v281 = vunpack.c.h.b16 %v52
  %v282 = vunpack.c.l.b16 %v53
  %v283 = vunpack.c.h.b16 %v53
  %v284 = vunpack.c.l.b16 %v54
  %v285 = vunpack.c.h.b16 %v54
  %v286 = vunpack.c.l.b16 %v55
  %v287 = vunpack.c.h.b16 %v55
  %v288 = vunpack.c.l.b16 %v56
  %v289 = vunpack.c.h.b16 %v56
  %v290 = vunpack.c.l.b16 %v57
  %v291 = vunpack.c.h.b16 %v57
  %v292 = vunpack.c.l.b16 %v58
  %v293 = vunpack.c.h.b16 %v58
  %v294 = vunpack.c.l.b16 %v59
  %v295 = vunpack.c.h.b16 %v59
  %v296 = vunpack.c.l.b16 %v60
  %v297 = vunpack.c.h.b16 %v60
  %v298 = vunpack.c.l.b16 %v61
  %v299 = vunpack.c.h.b16 %v61
  %v300 = vunpack.c.l.b16 %v62
  %v301 = vunpack.c.h.b16 %v62
  %v302 = vunpack.c.l.b16 %v63
  %v303 = vunpack.c.h.b16 %v63
  %v304 = vunpack.c.l.b16 %v64
  %v305 = vunpack.c.h.b16 %v64
  %v306 = vunpack.c.l.b16 %v65
  %v307 = vunpack.c.h.b16 %v65
  %v308 = vunpack.c.l.b16 %v66
  %v309 = vunpack.c.h.b16 %v66
  %v310 = vunpack.c.l.b16 %v67
  %v311 = vunpack.c.h.b16 %v67
  %v312 = vunpack.c.l.b16 %v68
  %v313 = vunpack.c.h.b16 %v68
  %v314 = vunpack.c.l.b16 %v69
  %v315 = vunpack.c.h.b16 %v69
  %v316 = vunpack.c.l.b16 %v70
  %v317 = vunpack.c.h.b16 %v70
  %v318 = vunpack.c.l.b16 %v71
  %v319 = vunpack.c.h.b16 %v71
  %v320 = vunpack.c.l.b16 %v72
  %v321 = vunpack.c.h.b16 %v72
  %v322 = vunpack.c.l.b16 %v73
  %v323 = vunpack.c.h.b16 %v73
  %v324 = vunpack.c.l.b16 %v74
  %v325 = vunpack.c.h.b16 %v74
  %v326 = vunpack.c.l.b16 %v75
  %v327 = vunpack.c.h.b16 %v75
  %v328 = vunpack.c.l.b16 %v76
  %v329 = vunpack.c.h.b16 %v76
  %v330 = vunpack.c.l.b16 %v77
  %v331 = vunpack.c.h.b16 %v77
  %v332 = vunpack.c.l.b16 %v78
  %v333 = vunpack.c.h.b16 %v78
  %v334 = vunpack.c.l.b16 %v79
  %v335 = vunpack.c.h.b16 %v79
  %v336 = vunpack.c.l.b16 %v80
  %v337 = vunpack.c.h.b16 %v80
  %v338 = vunpack.c.l.b16 %v81
  %v339 = vunpack.c.h.b16 %v81
  %v340 = vunpack.c.l.b16 %v82
  %v341 = vunpack.c.h.b16 %v82
  %v342 = vunpack.c.l.b16 %v83
  %v343 = vunpack.c.h.b16 %v83
  %v344 = vunpack.c.l.b16 %v84
  %v345 = vunpack.c.h.b16 %v84
  %v346 = vunpack.c.l.b16 %v85
  %v347 = vunpack.c.h.b16 %v85
  %v348 = vunpack.c.l.b16 %v86
  %v349 = vunpack.c.h.b16 %v86
  %v350 = vunpack.c.l.b16 %v87
  %v351 = vunpack.c.h.b16 %v87
  %v352 = vunpack.c.l.b16 %v88
  %v353 = vunpack.c.h.b16 %v88
  %v354 = vunpack.c.l.b16 %v89
  %v355 = vunpack.c.h.b16 %v89
  %v356 = vunpack.c.l.b16 %v90
  %v357 = vunpack.c.h.b16 %v90
  %v358 = vpack.c.b16 %v238, %v230
  %v359 = vpack.c.b16 %v239, %v231
  %v360 = vpack.c.b16 %v240, %v232
  %v361 = vpack.c.b16 %v241, %v233
  %v362 = vpack.c.b16 %v242, %v234
  %v363 = vpack.c.b16 %v243, %v235
  %v364 = vpack.c.b16 %v244, %v236
  %v365 = vpack.c.b16 %v245, %v237
  %v366 = vpack.c.b16 %v254, %v246
  %v367 = vpack.c.b16 %v255, %v247
  %v368 = vpack.c.b16 %v256, %v248
  %v369 = vpack.c.b16 %v257, %v249
  %v370 = vpack.c.b16 %v258, %v250
  %v371 = vpack.c.b16 %v259, %v251
  %v372 = vpack.c.b16 %v260, %v252
  %v373 = vpack.c.b16 %v261, %v253
  %v374 = vpack.c.b16 %v270, %v262
  %v375 = vpack.c.b16 %v271, %v263
  %v376 = vpack.c.b16 %v272, %v264
  %v377 = vpack.c.b16 %v273, %v265
  %v378 = vpack.c.b16 %v274, %v266
  %v379 = vpack.c.b16 %v275, %v267
  %v380 = vpack.c.b16 %v276, %v268
  %v381 = vpack.c.b16 %v277, %v269
  %v382 = vpack.c.b16 %v286, %v278
  %v383 = vpack.c.b16 %v287, %v279
  %v384 = vpack.c.b16 %v288, %v280
  %v385 = vpack.c.b16 %v289, %v281
  %v386 = vpack.c.b16 %v290, %v282
  %v387 = vpack.c.b16 %v291, %v283
  %v388 = vpack.c.b16 %v292, %v284
  %v389 = vpack.c.b16 %v293, %v285
  %v390 = vpack.c.b16 %v302, %v294
  %v391 = vpack.c.b16 %v303, %v295
  %v392 = vpack.c.b16 %v304, %v296
  %v393 = vpack.c.b16 %v305, %v297
  %v394 = vpack.c.b16 %v306, %v298
  %v395 = vpack.c.b16 %v307, %v299
  %v396 = vpack.c.b16 %v308, %v300
  %v397 = vpack.c.b16 %v309, %v301
  %v398 = vpack.c.b16 %v318, %v310
  %v399 = vpack.c.b16 %v319, %v311
  %v400 = vpack.c.b16 %v320, %v312
  %v401 = vpack.c.b16 %v321, %v313
  %v402 = vpack.c.b16 %v322, %v314
  %v403 = vpack.c.b16 %v323, %v315
  %v404 = vpack.c.b16 %v324, %v316
  %v405 = vpack.c.b16 %v325, %v317
  %v406 = vpack.c.b16 %v334, %v326
  %v407 = vpack.c.b16 %v335, %v327
  %v408 = vpack.c.b16 %v336, %v328
  %v409 = vpack.c.b16 %v337, %v329
  %v410 = vpack.c.b16 %v338, %v330
  %v411 = vpack.c.b16 %v339, %v331
  %v412 = vpack.c.b16 %v340, %v332
  %v413 = vpack.c.b16 %v341, %v333
  %v414 = vpack.c.b16 %v350, %v342
  %v415 = vpack.c.b16 %v351, %v343
  %v416 = vpack.c.b16 %v352, %v344
  %v417 = vpack.c.b16 %v353, %v345
  %v418 = vpack.c.b16 %v354, %v346
  %v419 = vpack.c.b16 %v355, %v347
  %v420 = vpack.c.b16 %v356, %v348
  %v421 = vpack.c.b16 %v357, %v349
  %486 = vmatprep.subr.bf16.mxu0 %v415
  %487 = vmatpush1.bf16.xpose.msra.mxu0 %v414
  %488 = vmatprep.subr.bf16.mxu0 %v407
  %489 = vmatpush1.bf16.xpose.msra.mxu0 %v406
  %490 = vmatprep.subr.bf16.mxu0 %v399
  %491 = vmatpush1.bf16.xpose.msra.mxu0 %v398
  %492 = vmatprep.subr.bf16.mxu0 %v391
  %493 = vmatpush1.bf16.xpose.msra.mxu0 %v390
  %494 = vmatprep.subr.bf16.mxu0 %v383
  %495 = vmatpush1.bf16.xpose.msra.mxu0 %v382
  %496 = vmatprep.subr.bf16.mxu0 %v375
  %497 = vmatpush1.bf16.xpose.msra.mxu0 %v374
  %498 = vmatprep.subr.bf16.mxu0 %v367
  %499 = vmatpush1.bf16.xpose.msra.mxu0 %v366
  %500 = vmatprep.subr.bf16.mxu0 %v359
  %501 = vmatpush1.bf16.xpose.msra.mxu0 %v358
  %502 = vmatprep.subr.bf16.mxu0 0
  %503 = vmatpush2.bf16.xpose.msra.mxu0 0
  %504 = vmatprep.subr.bf16.mxu0 0
  %505 = vmatpush2.bf16.xpose.msra.mxu0 0
  %506 = vmatprep.subr.bf16.mxu0 0
  %507 = vmatpush2.bf16.xpose.msra.mxu0 0
  %508 = vmatprep.subr.bf16.mxu0 0
  %509 = vmatpush2.bf16.xpose.msra.mxu0 0
  %510 = vmatprep.subr.bf16.mxu0 0
  %511 = vmatpush2.bf16.xpose.msra.mxu0 0
  %512 = vmatprep.subr.bf16.mxu0 0
  %513 = vmatpush2.bf16.xpose.msra.mxu0 0
  %514 = vmatprep.subr.bf16.mxu0 0
  %515 = vmatpush2.bf16.xpose.msra.mxu0 0
  %516 = vmatprep.subr.bf16.mxu0 0
  %517 = vmatpush2.bf16.xpose.msra.mxu0 0
  %518 = vmatprep.mubr.bf16.mxu0 %v135
  %519 = vmatmul.mubr.bf16.gmra.mxu0 %v134
  %v520 = vpop.f32.mrf.mxu0
  %v521 = vadd.f32 %v96, %v520
  %v522 = vpop.f32.mrf.mxu0
  %v523 = vpop.f32.mrf.mxu0
  %v524 = vadd.f32 %v96, %v523
  %v525 = vpop.f32.mrf.mxu0
  %526 = vmatprep.mubr.bf16.mxu0 %v143
  %527 = vmatmul.mubr.bf16.gmra.mxu0 %v142
  %v528 = vpop.f32.mrf.mxu0
  %v529 = vadd.f32 %v96, %v528
  %v530 = vpop.f32.mrf.mxu0
  %v531 = vpop.f32.mrf.mxu0
  %v532 = vpop.f32.mrf.mxu0
  %533 = vdwg.mxu0
  %534 = vmatprep.subr.bf16.mxu0 %v417
  %535 = vmatpush1.bf16.xpose.msra.mxu0 %v416
  %536 = vmatprep.subr.bf16.mxu0 %v409
  %537 = vmatpush1.bf16.xpose.msra.mxu0 %v408
  %538 = vmatprep.subr.bf16.mxu0 %v401
  %539 = vmatpush1.bf16.xpose.msra.mxu0 %v400
  %540 = vmatprep.subr.bf16.mxu0 %v393
  %541 = vmatpush1.bf16.xpose.msra.mxu0 %v392
  %542 = vmatprep.subr.bf16.mxu0 %v385
  %543 = vmatpush1.bf16.xpose.msra.mxu0 %v384
  %544 = vmatprep.subr.bf16.mxu0 %v377
  %545 = vmatpush1.bf16.xpose.msra.mxu0 %v376
  %546 = vmatprep.subr.bf16.mxu0 %v369
  %547 = vmatpush1.bf16.xpose.msra.mxu0 %v368
  %548 = vmatprep.subr.bf16.mxu0 %v361
  %549 = vmatpush1.bf16.xpose.msra.mxu0 %v360
  %550 = vmatprep.subr.bf16.mxu0 0
  %551 = vmatpush2.bf16.xpose.msra.mxu0 0
  %552 = vmatprep.subr.bf16.mxu0 0
  %553 = vmatpush2.bf16.xpose.msra.mxu0 0
  %554 = vmatprep.subr.bf16.mxu0 0
  %555 = vmatpush2.bf16.xpose.msra.mxu0 0
  %556 = vmatprep.subr.bf16.mxu0 0
  %557 = vmatpush2.bf16.xpose.msra.mxu0 0
  %558 = vmatprep.subr.bf16.mxu0 0
  %559 = vmatpush2.bf16.xpose.msra.mxu0 0
  %560 = vmatprep.subr.bf16.mxu0 0
  %561 = vmatpush2.bf16.xpose.msra.mxu0 0
  %562 = vmatprep.subr.bf16.mxu0 0
  %563 = vmatpush2.bf16.xpose.msra.mxu0 0
  %564 = vmatprep.subr.bf16.mxu0 0
  %565 = vmatpush2.bf16.xpose.msra.mxu0 0
  %566 = vmatprep.mubr.bf16.mxu0 %v137
  %567 = vmatmul.mubr.bf16.gmra.mxu0 %v136
  %v568 = vpop.f32.mrf.mxu0
  %v569 = vadd.f32 %v521, %v568
  %v570 = vpop.f32.mrf.mxu0
  %v571 = vpop.f32.mrf.mxu0
  %v572 = vadd.f32 %v524, %v571
  %v573 = vpop.f32.mrf.mxu0
  %574 = vmatprep.mubr.bf16.mxu0 %v145
  %575 = vmatmul.mubr.bf16.gmra.mxu0 %v144
  %v576 = vpop.f32.mrf.mxu0
  %v577 = vadd.f32 %v529, %v576
  %v578 = vpop.f32.mrf.mxu0
  %v579 = vpop.f32.mrf.mxu0
  %v580 = vpop.f32.mrf.mxu0
  %581 = vdwg.mxu0
  %582 = vmatprep.subr.bf16.mxu0 %v419
  %583 = vmatpush1.bf16.xpose.msra.mxu0 %v418
  %584 = vmatprep.subr.bf16.mxu0 %v411
  %585 = vmatpush1.bf16.xpose.msra.mxu0 %v410
  %586 = vmatprep.subr.bf16.mxu0 %v403
  %587 = vmatpush1.bf16.xpose.msra.mxu0 %v402
  %588 = vmatprep.subr.bf16.mxu0 %v395
  %589 = vmatpush1.bf16.xpose.msra.mxu0 %v394
  %590 = vmatprep.subr.bf16.mxu0 %v387
  %591 = vmatpush1.bf16.xpose.msra.mxu0 %v386
  %592 = vmatprep.subr.bf16.mxu0 %v379
  %593 = vmatpush1.bf16.xpose.msra.mxu0 %v378
  %594 = vmatprep.subr.bf16.mxu0 %v371
  %595 = vmatpush1.bf16.xpose.msra.mxu0 %v370
  %596 = vmatprep.subr.bf16.mxu0 %v363
  %597 = vmatpush1.bf16.xpose.msra.mxu0 %v362
  %598 = vmatprep.subr.bf16.mxu0 0
  %599 = vmatpush2.bf16.xpose.msra.mxu0 0
  %600 = vmatprep.subr.bf16.mxu0 0
  %601 = vmatpush2.bf16.xpose.msra.mxu0 0
  %602 = vmatprep.subr.bf16.mxu0 0
  %603 = vmatpush2.bf16.xpose.msra.mxu0 0
  %604 = vmatprep.subr.bf16.mxu0 0
  %605 = vmatpush2.bf16.xpose.msra.mxu0 0
  %606 = vmatprep.subr.bf16.mxu0 0
  %607 = vmatpush2.bf16.xpose.msra.mxu0 0
  %608 = vmatprep.subr.bf16.mxu0 0
  %609 = vmatpush2.bf16.xpose.msra.mxu0 0
  %610 = vmatprep.subr.bf16.mxu0 0
  %611 = vmatpush2.bf16.xpose.msra.mxu0 0
  %612 = vmatprep.subr.bf16.mxu0 0
  %613 = vmatpush2.bf16.xpose.msra.mxu0 0
  %614 = vmatprep.mubr.bf16.mxu0 %v139
  %615 = vmatmul.mubr.bf16.gmra.mxu0 %v138
  %v616 = vpop.f32.mrf.mxu0
  %v617 = vadd.f32 %v569, %v616
  %v618 = vpop.f32.mrf.mxu0
  %v619 = vpop.f32.mrf.mxu0
  %v620 = vadd.f32 %v572, %v619
  %v621 = vpop.f32.mrf.mxu0
  %622 = vmatprep.mubr.bf16.mxu0 %v147
  %623 = vmatmul.mubr.bf16.gmra.mxu0 %v146
  %v624 = vpop.f32.mrf.mxu0
  %v625 = vadd.f32 %v577, %v624
  %v626 = vpop.f32.mrf.mxu0
  %v627 = vpop.f32.mrf.mxu0
  %v628 = vpop.f32.mrf.mxu0
  %629 = vdwg.mxu0
  %630 = vmatprep.subr.bf16.mxu0 %v421
  %631 = vmatpush1.bf16.xpose.msra.mxu0 %v420
  %632 = vmatprep.subr.bf16.mxu0 %v413
  %633 = vmatpush1.bf16.xpose.msra.mxu0 %v412
  %634 = vmatprep.subr.bf16.mxu0 %v405
  %635 = vmatpush1.bf16.xpose.msra.mxu0 %v404
  %636 = vmatprep.subr.bf16.mxu0 %v397
  %637 = vmatpush1.bf16.xpose.msra.mxu0 %v396
  %638 = vmatprep.subr.bf16.mxu0 %v389
  %639 = vmatpush1.bf16.xpose.msra.mxu0 %v388
  %640 = vmatprep.subr.bf16.mxu0 %v381
  %641 = vmatpush1.bf16.xpose.msra.mxu0 %v380
  %642 = vmatprep.subr.bf16.mxu0 %v373
  %643 = vmatpush1.bf16.xpose.msra.mxu0 %v372
  %644 = vmatprep.subr.bf16.mxu0 %v365
  %645 = vmatpush1.bf16.xpose.msra.mxu0 %v364
  %646 = vmatprep.subr.bf16.mxu0 0
  %647 = vmatpush2.bf16.xpose.msra.mxu0 0
  %648 = vmatprep.subr.bf16.mxu0 0
  %649 = vmatpush2.bf16.xpose.msra.mxu0 0
  %650 = vmatprep.subr.bf16.mxu0 0
  %651 = vmatpush2.bf16.xpose.msra.mxu0 0
  %652 = vmatprep.subr.bf16.mxu0 0
  %653 = vmatpush2.bf16.xpose.msra.mxu0 0
  %654 = vmatprep.subr.bf16.mxu0 0
  %655 = vmatpush2.bf16.xpose.msra.mxu0 0
  %656 = vmatprep.subr.bf16.mxu0 0
  %657 = vmatpush2.bf16.xpose.msra.mxu0 0
  %658 = vmatprep.subr.bf16.mxu0 0
  %659 = vmatpush2.bf16.xpose.msra.mxu0 0
  %660 = vmatprep.subr.bf16.mxu0 0
  %661 = vmatpush2.bf16.xpose.msra.mxu0 0
  %662 = vmatprep.mubr.bf16.mxu0 %v141
  %663 = vmatmul.mubr.bf16.gmra.mxu0 %v140
  %v664 = vpop.f32.mrf.mxu0
  %v665 = vadd.f32 %v617, %v664
  %v666 = vpop.f32.mrf.mxu0
  %v667 = vpop.f32.mrf.mxu0
  %v668 = vadd.f32 %v620, %v667
  %v669 = vpop.f32.mrf.mxu0
  %670 = vmatprep.mubr.bf16.mxu0 %v149
  %671 = vmatmul.mubr.bf16.gmra.mxu0 %v148
  %v672 = vpop.f32.mrf.mxu0
  %v673 = vadd.f32 %v625, %v672
  %v674 = vpop.f32.mrf.mxu0
  %v675 = vpop.f32.mrf.mxu0
  %v676 = vpop.f32.mrf.mxu0
  %677 = vdwg.mxu0
  %v678 = vmax.f32 %v665, 0.0
  %v679 = vmax.f32 %v668, 0.0
  %v680 = vmax.f32 %v673, 0.0
  %681 = vst [vmem:[%s3] sm:$0xff] %v678
  %682 = vst [vmem:[%s3 + $0x8] sm:$0xff] %v679
  %683 = vst [vmem:[%s3 + $0x10] sm:$0x3] %v680
  // Predicated region
  $region14: #{hyperdqn_forward.7} parent=0 // pred_check
    _
  $region15: #{hyperdqn_forward.7} parent=0 // pred_check_branch
    %685 = sbr.rel (0) target = $region17
  $region16: #{hyperdqn_forward.7} parent=0 // pred_region
    _
  $region17: #{hyperdqn_forward.7} parent=0 // pred_fallthru
    _
  // Predicated region
  $region18: #{hyperdqn_forward.7} parent=0 // pred_check
    _
  $region19: #{hyperdqn_forward.7} parent=0 // pred_check_branch
    %687 = sbr.rel (0) target = $region21
  $region20: #{hyperdqn_forward.7} parent=0 // pred_region
    _
  $region21: #{hyperdqn_forward.7} parent=0 // pred_fallthru
    _

// kernel: hyperdqn_forward.8
$region0: #{hyperdqn_forward.8}
  #allocation0 [shape = 'u32[]', space=smem, size = 0x4, offset = 0x4, fixed_abs, tag = 'smem constant byte address 0x4 - core index']
  #allocation1 [shape = 'u32[144,128]{1,0:T(1,128)}', space=vmem, size = 0x12000, scoped, tag = 'internal scratch']
  %s0 = inlined_call_operand.vmem [shape: bf16[2,1152], index: 0, kind: input, shape index: {}]
  %s1 = inlined_call_operand.vmem [shape: bf16[128,1152], index: 1, kind: input, shape index: {}]
  %s2 = inlined_call_operand.vmem [shape: f32[1,128], index: 2, kind: input, shape index: {}]
  %s3 = inlined_call_operand.vmem [shape: f32[2,128], index: 3, kind: output, shape index: {}]
  %s4 = sld [smem:[#allocation0]]
  $region22: #{hyperdqn_forward.8} parent=0
    _
  %s6 = ssub.s32 1, %s4
  %s7 = scalar_select 0, %s6, %s4
  // Predicated region
  $region2: #{hyperdqn_forward.8} parent=0 // pred_check
    _
  $region3: #{hyperdqn_forward.8} parent=0 // pred_check_branch
    %9 = sbr.rel (0) target = $region5
  $region4: #{hyperdqn_forward.8} parent=0 // pred_region
    _
  $region5: #{hyperdqn_forward.8} parent=0 // pred_fallthru
    _
  // Predicated region
  $region6: #{hyperdqn_forward.8} parent=0 // pred_check
    _
  $region7: #{hyperdqn_forward.8} parent=0 // pred_check_branch
    %11 = sbr.rel (0) target = $region9
  $region8: #{hyperdqn_forward.8} parent=0 // pred_region
    _
  $region9: #{hyperdqn_forward.8} parent=0 // pred_fallthru
    _
  // Predicated region
  $region10: #{hyperdqn_forward.8} parent=0 // pred_check
    _
  $region11: #{hyperdqn_forward.8} parent=0 // pred_check_branch
    %13 = sbr.rel (0) target = $region13
  $region12: #{hyperdqn_forward.8} parent=0 // pred_region
    _
  $region13: #{hyperdqn_forward.8} parent=0 // pred_fallthru
    _
  %v15 = vld [vmem:[%s0] sm:$0xff]
  %v16 = vld [vmem:[%s0 + $0x8] sm:$0x1]
  %v17 = vld [vmem:[%s1] sm:$0xff]
  %v18 = vld [vmem:[%s1 + $0x8] sm:$0xff]
  %v19 = vld [vmem:[%s1 + $0x10] sm:$0xff]
  %v20 = vld [vmem:[%s1 + $0x18] sm:$0xff]
  %v21 = vld [vmem:[%s1 + $0x20] sm:$0xf]
  %v22 = vld [vmem:[%s1 + $0x24] sm:$0xff]
  %v23 = vld [vmem:[%s1 + $0x2c] sm:$0xff]
  %v24 = vld [vmem:[%s1 + $0x34] sm:$0xff]
  %v25 = vld [vmem:[%s1 + $0x3c] sm:$0xff]
  %v26 = vld [vmem:[%s1 + $0x44] sm:$0xf]
  %v27 = vld [vmem:[%s1 + $0x48] sm:$0xff]
  %v28 = vld [vmem:[%s1 + $0x50] sm:$0xff]
  %v29 = vld [vmem:[%s1 + $0x58] sm:$0xff]
  %v30 = vld [vmem:[%s1 + $0x60] sm:$0xff]
  %v31 = vld [vmem:[%s1 + $0x68] sm:$0xf]
  %v32 = vld [vmem:[%s1 + $0x6c] sm:$0xff]
  %v33 = vld [vmem:[%s1 + $0x74] sm:$0xff]
  %v34 = vld [vmem:[%s1 + $0x7c] sm:$0xff]
  %v35 = vld [vmem:[%s1 + $0x84] sm:$0xff]
  %v36 = vld [vmem:[%s1 + $0x8c] sm:$0xf]
  %v37 = vld [vmem:[%s1 + $0x90] sm:$0xff]
  %v38 = vld [vmem:[%s1 + $0x98] sm:$0xff]
  %v39 = vld [vmem:[%s1 + $0xa0] sm:$0xff]
  %v40 = vld [vmem:[%s1 + $0xa8] sm:$0xff]
  %v41 = vld [vmem:[%s1 + $0xb0] sm:$0xf]
  %v42 = vld [vmem:[%s1 + $0xb4] sm:$0xff]
  %v43 = vld [vmem:[%s1 + $0xbc] sm:$0xff]
  %v44 = vld [vmem:[%s1 + $0xc4] sm:$0xff]
  %v45 = vld [vmem:[%s1 + $0xcc] sm:$0xff]
  %v46 = vld [vmem:[%s1 + $0xd4] sm:$0xf]
  %v47 = vld [vmem:[%s1 + $0xd8] sm:$0xff]
  %v48 = vld [vmem:[%s1 + $0xe0] sm:$0xff]
  %v49 = vld [vmem:[%s1 + $0xe8] sm:$0xff]
  %v50 = vld [vmem:[%s1 + $0xf0] sm:$0xff]
  %v51 = vld [vmem:[%s1 + $0xf8] sm:$0xf]
  %v52 = vld [vmem:[%s1 + $0xfc] sm:$0xff]
  %v53 = vld [vmem:[%s1 + $0x104] sm:$0xff]
  %v54 = vld [vmem:[%s1 + $0x10c] sm:$0xff]
  %v55 = vld [vmem:[%s1 + $0x114] sm:$0xff]
  %v56 = vld [vmem:[%s1 + $0x11c] sm:$0xf]
  %v57 = vld [vmem:[%s1 + $0x120] sm:$0xff]
  %v58 = vld [vmem:[%s1 + $0x128] sm:$0xff]
  %v59 = vld [vmem:[%s1 + $0x130] sm:$0xff]
  %v60 = vld [vmem:[%s1 + $0x138] sm:$0xff]
  %v61 = vld [vmem:[%s1 + $0x140] sm:$0xf]
  %v62 = vld [vmem:[%s1 + $0x144] sm:$0xff]
  %v63 = vld [vmem:[%s1 + $0x14c] sm:$0xff]
  %v64 = vld [vmem:[%s1 + $0x154] sm:$0xff]
  %v65 = vld [vmem:[%s1 + $0x15c] sm:$0xff]
  %v66 = vld [vmem:[%s1 + $0x164] sm:$0xf]
  %v67 = vld [vmem:[%s1 + $0x168] sm:$0xff]
  %v68 = vld [vmem:[%s1 + $0x170] sm:$0xff]
  %v69 = vld [vmem:[%s1 + $0x178] sm:$0xff]
  %v70 = vld [vmem:[%s1 + $0x180] sm:$0xff]
  %v71 = vld [vmem:[%s1 + $0x188] sm:$0xf]
  %v72 = vld [vmem:[%s1 + $0x18c] sm:$0xff]
  %v73 = vld [vmem:[%s1 + $0x194] sm:$0xff]
  %v74 = vld [vmem:[%s1 + $0x19c] sm:$0xff]
  %v75 = vld [vmem:[%s1 + $0x1a4] sm:$0xff]
  %v76 = vld [vmem:[%s1 + $0x1ac] sm:$0xf]
  %v77 = vld [vmem:[%s1 + $0x1b0] sm:$0xff]
  %v78 = vld [vmem:[%s1 + $0x1b8] sm:$0xff]
  %v79 = vld [vmem:[%s1 + $0x1c0] sm:$0xff]
  %v80 = vld [vmem:[%s1 + $0x1c8] sm:$0xff]
  %v81 = vld [vmem:[%s1 + $0x1d0] sm:$0xf]
  %v82 = vld [vmem:[%s1 + $0x1d4] sm:$0xff]
  %v83 = vld [vmem:[%s1 + $0x1dc] sm:$0xff]
  %v84 = vld [vmem:[%s1 + $0x1e4] sm:$0xff]
  %v85 = vld [vmem:[%s1 + $0x1ec] sm:$0xff]
  %v86 = vld [vmem:[%s1 + $0x1f4] sm:$0xf]
  %v87 = vld [vmem:[%s1 + $0x1f8] sm:$0xff]
  %v88 = vld [vmem:[%s1 + $0x200] sm:$0xff]
  %v89 = vld [vmem:[%s1 + $0x208] sm:$0xff]
  %v90 = vld [vmem:[%s1 + $0x210] sm:$0xff]
  %v91 = vld [vmem:[%s1 + $0x218] sm:$0xf]
  %v92 = vld [vmem:[%s1 + $0x21c] sm:$0xff]
  %v93 = vld [vmem:[%s1 + $0x224] sm:$0xff]
  %v94 = vld [vmem:[%s1 + $0x22c] sm:$0xff]
  %v95 = vld [vmem:[%s1 + $0x234] sm:$0xff]
  %v96 = vld [vmem:[%s1 + $0x23c] sm:$0xf]
  %v97 = vld [vmem:[%s2] sm:$0x1]
  %v99 = vlaneseq
  %v100 = vshrl.u32 %v99, 7
  %v101 = vsub.s32 0, %v100
  %v102 = vrot.slane %v97, %v101
  %v106 = vcombine.high %v15, %v15
  %v108 = vunpack.c.l.s4 1966171168
  %v109 = vunpack.c.0.s8 %v108
  %v110 = vlaneseq
  %v111 = vshrl.u32 %v110, 7
  %v112 = vsub.s32 %v109, %v111
  %v113 = vrot.slane %v15, %v112
  %v115 = vunpack.c.l.s4 1966171168
  %v116 = vunpack.c.0.s8 %v115
  %v117 = vlaneseq
  %v118 = vshrl.u32 %v117, 7
  %v119 = vsub.s32 %v116, %v118
  %v120 = vrot.slane %v106, %v119
  %v121 = vcombine.high %v113, %v113
  %v122 = vcombine.high %v120, %v120
  %v124 = vunpack.c.l.s4 1966171168
  %v125 = vunpack.c.0.s8 %v124
  %v126 = vlaneseq
  %v127 = vshrl.u32 %v126, 7
  %v128 = vsub.s32 %v125, %v127
  %v129 = vrot.slane %v113, %v128
  %v131 = vunpack.c.l.s4 1966171168
  %v132 = vunpack.c.0.s8 %v131
  %v133 = vlaneseq
  %v134 = vshrl.u32 %v133, 7
  %v135 = vsub.s32 %v132, %v134
  %v136 = vrot.slane %v120, %v135
  %v138 = vunpack.c.l.s4 1966171168
  %v139 = vunpack.c.0.s8 %v138
  %v140 = vlaneseq
  %v141 = vshrl.u32 %v140, 7
  %v142 = vsub.s32 %v139, %v141
  %v143 = vrot.slane %v121, %v142
  %v145 = vunpack.c.l.s4 1966171168
  %v146 = vunpack.c.0.s8 %v145
  %v147 = vlaneseq
  %v148 = vshrl.u32 %v147, 7
  %v149 = vsub.s32 %v146, %v148
  %v150 = vrot.slane %v122, %v149
  %v151 = vcombine.high %v129, %v129
  %v152 = vcombine.high %v136, %v136
  %v153 = vcombine.high %v143, %v143
  %v154 = vcombine.high %v150, %v150
  %v156 = vunpack.c.l.s4 1966171168
  %v157 = vunpack.c.0.s8 %v156
  %v158 = vlaneseq
  %v159 = vshrl.u32 %v158, 7
  %v160 = vsub.s32 %v157, %v159
  %v161 = vrot.slane %v16, %v160
  %v163 = vunpack.c.l.s4 1966171168
  %v164 = vunpack.c.0.s8 %v163
  %v165 = vlaneseq
  %v166 = vshrl.u32 %v165, 7
  %v167 = vsub.s32 %v164, %v166
  %v168 = vrot.slane %v161, %v167
  %v258 = vunpack.c.l.b16 %v17
  %v259 = vunpack.c.h.b16 %v17
  %v260 = vunpack.c.l.b16 %v18
  %v261 = vunpack.c.h.b16 %v18
  %v262 = vunpack.c.l.b16 %v19
  %v263 = vunpack.c.h.b16 %v19
  %v264 = vunpack.c.l.b16 %v20
  %v265 = vunpack.c.h.b16 %v20
  %v266 = vunpack.c.l.b16 %v21
  %v267 = vunpack.c.l.b16 %v22
  %v268 = vunpack.c.h.b16 %v22
  %v269 = vunpack.c.l.b16 %v23
  %v270 = vunpack.c.h.b16 %v23
  %v271 = vunpack.c.l.b16 %v24
  %v272 = vunpack.c.h.b16 %v24
  %v273 = vunpack.c.l.b16 %v25
  %v274 = vunpack.c.h.b16 %v25
  %v275 = vunpack.c.l.b16 %v26
  %v276 = vunpack.c.l.b16 %v27
  %v277 = vunpack.c.h.b16 %v27
  %v278 = vunpack.c.l.b16 %v28
  %v279 = vunpack.c.h.b16 %v28
  %v280 = vunpack.c.l.b16 %v29
  %v281 = vunpack.c.h.b16 %v29
  %v282 = vunpack.c.l.b16 %v30
  %v283 = vunpack.c.h.b16 %v30
  %v284 = vunpack.c.l.b16 %v31
  %v285 = vunpack.c.l.b16 %v32
  %v286 = vunpack.c.h.b16 %v32
  %v287 = vunpack.c.l.b16 %v33
  %v288 = vunpack.c.h.b16 %v33
  %v289 = vunpack.c.l.b16 %v34
  %v290 = vunpack.c.h.b16 %v34
  %v291 = vunpack.c.l.b16 %v35
  %v292 = vunpack.c.h.b16 %v35
  %v293 = vunpack.c.l.b16 %v36
  %v294 = vunpack.c.l.b16 %v37
  %v295 = vunpack.c.h.b16 %v37
  %v296 = vunpack.c.l.b16 %v38
  %v297 = vunpack.c.h.b16 %v38
  %v298 = vunpack.c.l.b16 %v39
  %v299 = vunpack.c.h.b16 %v39
  %v300 = vunpack.c.l.b16 %v40
  %v301 = vunpack.c.h.b16 %v40
  %v302 = vunpack.c.l.b16 %v41
  %v303 = vunpack.c.l.b16 %v42
  %v304 = vunpack.c.h.b16 %v42
  %v305 = vunpack.c.l.b16 %v43
  %v306 = vunpack.c.h.b16 %v43
  %v307 = vunpack.c.l.b16 %v44
  %v308 = vunpack.c.h.b16 %v44
  %v309 = vunpack.c.l.b16 %v45
  %v310 = vunpack.c.h.b16 %v45
  %v311 = vunpack.c.l.b16 %v46
  %v312 = vunpack.c.l.b16 %v47
  %v313 = vunpack.c.h.b16 %v47
  %v314 = vunpack.c.l.b16 %v48
  %v315 = vunpack.c.h.b16 %v48
  %v316 = vunpack.c.l.b16 %v49
  %v317 = vunpack.c.h.b16 %v49
  %v318 = vunpack.c.l.b16 %v50
  %v319 = vunpack.c.h.b16 %v50
  %v320 = vunpack.c.l.b16 %v51
  %v321 = vunpack.c.l.b16 %v52
  %v322 = vunpack.c.h.b16 %v52
  %v323 = vunpack.c.l.b16 %v53
  %v324 = vunpack.c.h.b16 %v53
  %v325 = vunpack.c.l.b16 %v54
  %v326 = vunpack.c.h.b16 %v54
  %v327 = vunpack.c.l.b16 %v55
  %v328 = vunpack.c.h.b16 %v55
  %v329 = vunpack.c.l.b16 %v56
  %v330 = vunpack.c.l.b16 %v57
  %v331 = vunpack.c.h.b16 %v57
  %v332 = vunpack.c.l.b16 %v58
  %v333 = vunpack.c.h.b16 %v58
  %v334 = vunpack.c.l.b16 %v59
  %v335 = vunpack.c.h.b16 %v59
  %v336 = vunpack.c.l.b16 %v60
  %v337 = vunpack.c.h.b16 %v60
  %v338 = vunpack.c.l.b16 %v61
  %v339 = vunpack.c.l.b16 %v62
  %v340 = vunpack.c.h.b16 %v62
  %v341 = vunpack.c.l.b16 %v63
  %v342 = vunpack.c.h.b16 %v63
  %v343 = vunpack.c.l.b16 %v64
  %v344 = vunpack.c.h.b16 %v64
  %v345 = vunpack.c.l.b16 %v65
  %v346 = vunpack.c.h.b16 %v65
  %v347 = vunpack.c.l.b16 %v66
  %v348 = vunpack.c.l.b16 %v67
  %v349 = vunpack.c.h.b16 %v67
  %v350 = vunpack.c.l.b16 %v68
  %v351 = vunpack.c.h.b16 %v68
  %v352 = vunpack.c.l.b16 %v69
  %v353 = vunpack.c.h.b16 %v69
  %v354 = vunpack.c.l.b16 %v70
  %v355 = vunpack.c.h.b16 %v70
  %v356 = vunpack.c.l.b16 %v71
  %v357 = vunpack.c.l.b16 %v72
  %v358 = vunpack.c.h.b16 %v72
  %v359 = vunpack.c.l.b16 %v73
  %v360 = vunpack.c.h.b16 %v73
  %v361 = vunpack.c.l.b16 %v74
  %v362 = vunpack.c.h.b16 %v74
  %v363 = vunpack.c.l.b16 %v75
  %v364 = vunpack.c.h.b16 %v75
  %v365 = vunpack.c.l.b16 %v76
  %v366 = vunpack.c.l.b16 %v77
  %v367 = vunpack.c.h.b16 %v77
  %v368 = vunpack.c.l.b16 %v78
  %v369 = vunpack.c.h.b16 %v78
  %v370 = vunpack.c.l.b16 %v79
  %v371 = vunpack.c.h.b16 %v79
  %v372 = vunpack.c.l.b16 %v80
  %v373 = vunpack.c.h.b16 %v80
  %v374 = vunpack.c.l.b16 %v81
  %v375 = vunpack.c.l.b16 %v82
  %v376 = vunpack.c.h.b16 %v82
  %v377 = vunpack.c.l.b16 %v83
  %v378 = vunpack.c.h.b16 %v83
  %v379 = vunpack.c.l.b16 %v84
  %v380 = vunpack.c.h.b16 %v84
  %v381 = vunpack.c.l.b16 %v85
  %v382 = vunpack.c.h.b16 %v85
  %v383 = vunpack.c.l.b16 %v86
  %v384 = vunpack.c.l.b16 %v87
  %v385 = vunpack.c.h.b16 %v87
  %v386 = vunpack.c.l.b16 %v88
  %v387 = vunpack.c.h.b16 %v88
  %v388 = vunpack.c.l.b16 %v89
  %v389 = vunpack.c.h.b16 %v89
  %v390 = vunpack.c.l.b16 %v90
  %v391 = vunpack.c.h.b16 %v90
  %v392 = vunpack.c.l.b16 %v91
  %v393 = vunpack.c.l.b16 %v92
  %v394 = vunpack.c.h.b16 %v92
  %v395 = vunpack.c.l.b16 %v93
  %v396 = vunpack.c.h.b16 %v93
  %v397 = vunpack.c.l.b16 %v94
  %v398 = vunpack.c.h.b16 %v94
  %v399 = vunpack.c.l.b16 %v95
  %v400 = vunpack.c.h.b16 %v95
  %v401 = vunpack.c.l.b16 %v96
  %v402 = vpack.c.b16 %v267, %v258
  %v403 = vpack.c.b16 %v268, %v259
  %v404 = vpack.c.b16 %v269, %v260
  %v405 = vpack.c.b16 %v270, %v261
  %v406 = vpack.c.b16 %v271, %v262
  %v407 = vpack.c.b16 %v272, %v263
  %v408 = vpack.c.b16 %v273, %v264
  %v409 = vpack.c.b16 %v274, %v265
  %v410 = vpack.c.b16 %v275, %v266
  %v411 = vpack.c.b16 %v285, %v276
  %v412 = vpack.c.b16 %v286, %v277
  %v413 = vpack.c.b16 %v287, %v278
  %v414 = vpack.c.b16 %v288, %v279
  %v415 = vpack.c.b16 %v289, %v280
  %v416 = vpack.c.b16 %v290, %v281
  %v417 = vpack.c.b16 %v291, %v282
  %v418 = vpack.c.b16 %v292, %v283
  %v419 = vpack.c.b16 %v293, %v284
  %v420 = vpack.c.b16 %v303, %v294
  %v421 = vpack.c.b16 %v304, %v295
  %v422 = vpack.c.b16 %v305, %v296
  %v423 = vpack.c.b16 %v306, %v297
  %v424 = vpack.c.b16 %v307, %v298
  %v425 = vpack.c.b16 %v308, %v299
  %v426 = vpack.c.b16 %v309, %v300
  %v427 = vpack.c.b16 %v310, %v301
  %v428 = vpack.c.b16 %v311, %v302
  %v429 = vpack.c.b16 %v321, %v312
  %v430 = vpack.c.b16 %v322, %v313
  %v431 = vpack.c.b16 %v323, %v314
  %v432 = vpack.c.b16 %v324, %v315
  %v433 = vpack.c.b16 %v325, %v316
  %v434 = vpack.c.b16 %v326, %v317
  %v435 = vpack.c.b16 %v327, %v318
  %v436 = vpack.c.b16 %v328, %v319
  %v437 = vpack.c.b16 %v329, %v320
  %v438 = vpack.c.b16 %v339, %v330
  %v439 = vpack.c.b16 %v340, %v331
  %v440 = vpack.c.b16 %v341, %v332
  %v441 = vpack.c.b16 %v342, %v333
  %v442 = vpack.c.b16 %v343, %v334
  %v443 = vpack.c.b16 %v344, %v335
  %v444 = vpack.c.b16 %v345, %v336
  %v445 = vpack.c.b16 %v346, %v337
  %v446 = vpack.c.b16 %v347, %v338
  %v447 = vpack.c.b16 %v357, %v348
  %v448 = vpack.c.b16 %v358, %v349
  %v449 = vpack.c.b16 %v359, %v350
  %v450 = vpack.c.b16 %v360, %v351
  %v451 = vpack.c.b16 %v361, %v352
  %v452 = vpack.c.b16 %v362, %v353
  %v453 = vpack.c.b16 %v363, %v354
  %v454 = vpack.c.b16 %v364, %v355
  %v455 = vpack.c.b16 %v365, %v356
  %v456 = vpack.c.b16 %v375, %v366
  %v457 = vpack.c.b16 %v376, %v367
  %v458 = vpack.c.b16 %v377, %v368
  %v459 = vpack.c.b16 %v378, %v369
  %v460 = vpack.c.b16 %v379, %v370
  %v461 = vpack.c.b16 %v380, %v371
  %v462 = vpack.c.b16 %v381, %v372
  %v463 = vpack.c.b16 %v382, %v373
  %v464 = vpack.c.b16 %v383, %v374
  %v465 = vpack.c.b16 %v393, %v384
  %v466 = vpack.c.b16 %v394, %v385
  %v467 = vpack.c.b16 %v395, %v386
  %v468 = vpack.c.b16 %v396, %v387
  %v469 = vpack.c.b16 %v397, %v388
  %v470 = vpack.c.b16 %v398, %v389
  %v471 = vpack.c.b16 %v399, %v390
  %v472 = vpack.c.b16 %v400, %v391
  %v473 = vpack.c.b16 %v401, %v392
  %546 = vmatprep.subr.bf16.mxu0 %v466
  %547 = vmatpush1.bf16.xpose.msra.mxu0 %v465
  %548 = vmatprep.subr.bf16.mxu0 %v457
  %549 = vmatpush1.bf16.xpose.msra.mxu0 %v456
  %550 = vmatprep.subr.bf16.mxu0 %v448
  %551 = vmatpush1.bf16.xpose.msra.mxu0 %v447
  %552 = vmatprep.subr.bf16.mxu0 %v439
  %553 = vmatpush1.bf16.xpose.msra.mxu0 %v438
  %554 = vmatprep.subr.bf16.mxu0 %v430
  %555 = vmatpush1.bf16.xpose.msra.mxu0 %v429
  %556 = vmatprep.subr.bf16.mxu0 %v421
  %557 = vmatpush1.bf16.xpose.msra.mxu0 %v420
  %558 = vmatprep.subr.bf16.mxu0 %v412
  %559 = vmatpush1.bf16.xpose.msra.mxu0 %v411
  %560 = vmatprep.subr.bf16.mxu0 %v403
  %561 = vmatpush1.bf16.xpose.msra.mxu0 %v402
  %562 = vmatprep.subr.bf16.mxu0 0
  %563 = vmatpush2.bf16.xpose.msra.mxu0 0
  %564 = vmatprep.subr.bf16.mxu0 0
  %565 = vmatpush2.bf16.xpose.msra.mxu0 0
  %566 = vmatprep.subr.bf16.mxu0 0
  %567 = vmatpush2.bf16.xpose.msra.mxu0 0
  %568 = vmatprep.subr.bf16.mxu0 0
  %569 = vmatpush2.bf16.xpose.msra.mxu0 0
  %570 = vmatprep.subr.bf16.mxu0 0
  %571 = vmatpush2.bf16.xpose.msra.mxu0 0
  %572 = vmatprep.subr.bf16.mxu0 0
  %573 = vmatpush2.bf16.xpose.msra.mxu0 0
  %574 = vmatprep.subr.bf16.mxu0 0
  %575 = vmatpush2.bf16.xpose.msra.mxu0 0
  %576 = vmatprep.subr.bf16.mxu0 0
  %577 = vmatpush2.bf16.xpose.msra.mxu0 0
  %578 = vmatprep.mubr.bf16.mxu0 %v143
  %579 = vmatmul.mubr.bf16.gmra.mxu0 %v129
  %v580 = vpop.f32.mrf.mxu0
  %v581 = vadd.f32 %v102, %v580
  %v582 = vpop.f32.mrf.mxu0
  %v583 = vpop.f32.mrf.mxu0
  %v584 = vpop.f32.mrf.mxu0
  %585 = vdwg.mxu0
  %586 = vmatprep.subr.bf16.mxu0 %v468
  %587 = vmatpush1.bf16.xpose.msra.mxu0 %v467
  %588 = vmatprep.subr.bf16.mxu0 %v459
  %589 = vmatpush1.bf16.xpose.msra.mxu0 %v458
  %590 = vmatprep.subr.bf16.mxu0 %v450
  %591 = vmatpush1.bf16.xpose.msra.mxu0 %v449
  %592 = vmatprep.subr.bf16.mxu0 %v441
  %593 = vmatpush1.bf16.xpose.msra.mxu0 %v440
  %594 = vmatprep.subr.bf16.mxu0 %v432
  %595 = vmatpush1.bf16.xpose.msra.mxu0 %v431
  %596 = vmatprep.subr.bf16.mxu0 %v423
  %597 = vmatpush1.bf16.xpose.msra.mxu0 %v422
  %598 = vmatprep.subr.bf16.mxu0 %v414
  %599 = vmatpush1.bf16.xpose.msra.mxu0 %v413
  %600 = vmatprep.subr.bf16.mxu0 %v405
  %601 = vmatpush1.bf16.xpose.msra.mxu0 %v404
  %602 = vmatprep.subr.bf16.mxu0 0
  %603 = vmatpush2.bf16.xpose.msra.mxu0 0
  %604 = vmatprep.subr.bf16.mxu0 0
  %605 = vmatpush2.bf16.xpose.msra.mxu0 0
  %606 = vmatprep.subr.bf16.mxu0 0
  %607 = vmatpush2.bf16.xpose.msra.mxu0 0
  %608 = vmatprep.subr.bf16.mxu0 0
  %609 = vmatpush2.bf16.xpose.msra.mxu0 0
  %610 = vmatprep.subr.bf16.mxu0 0
  %611 = vmatpush2.bf16.xpose.msra.mxu0 0
  %612 = vmatprep.subr.bf16.mxu0 0
  %613 = vmatpush2.bf16.xpose.msra.mxu0 0
  %614 = vmatprep.subr.bf16.mxu0 0
  %615 = vmatpush2.bf16.xpose.msra.mxu0 0
  %616 = vmatprep.subr.bf16.mxu0 0
  %617 = vmatpush2.bf16.xpose.msra.mxu0 0
  %618 = vmatprep.mubr.bf16.mxu0 %v153
  %619 = vmatmul.mubr.bf16.gmra.mxu0 %v151
  %v620 = vpop.f32.mrf.mxu0
  %v621 = vadd.f32 %v581, %v620
  %v622 = vpop.f32.mrf.mxu0
  %v623 = vpop.f32.mrf.mxu0
  %v624 = vpop.f32.mrf.mxu0
  %625 = vdwg.mxu0
  %626 = vmatprep.subr.bf16.mxu0 %v470
  %627 = vmatpush1.bf16.xpose.msra.mxu0 %v469
  %628 = vmatprep.subr.bf16.mxu0 %v461
  %629 = vmatpush1.bf16.xpose.msra.mxu0 %v460
  %630 = vmatprep.subr.bf16.mxu0 %v452
  %631 = vmatpush1.bf16.xpose.msra.mxu0 %v451
  %632 = vmatprep.subr.bf16.mxu0 %v443
  %633 = vmatpush1.bf16.xpose.msra.mxu0 %v442
  %634 = vmatprep.subr.bf16.mxu0 %v434
  %635 = vmatpush1.bf16.xpose.msra.mxu0 %v433
  %636 = vmatprep.subr.bf16.mxu0 %v425
  %637 = vmatpush1.bf16.xpose.msra.mxu0 %v424
  %638 = vmatprep.subr.bf16.mxu0 %v416
  %639 = vmatpush1.bf16.xpose.msra.mxu0 %v415
  %640 = vmatprep.subr.bf16.mxu0 %v407
  %641 = vmatpush1.bf16.xpose.msra.mxu0 %v406
  %642 = vmatprep.subr.bf16.mxu0 0
  %643 = vmatpush2.bf16.xpose.msra.mxu0 0
  %644 = vmatprep.subr.bf16.mxu0 0
  %645 = vmatpush2.bf16.xpose.msra.mxu0 0
  %646 = vmatprep.subr.bf16.mxu0 0
  %647 = vmatpush2.bf16.xpose.msra.mxu0 0
  %648 = vmatprep.subr.bf16.mxu0 0
  %649 = vmatpush2.bf16.xpose.msra.mxu0 0
  %650 = vmatprep.subr.bf16.mxu0 0
  %651 = vmatpush2.bf16.xpose.msra.mxu0 0
  %652 = vmatprep.subr.bf16.mxu0 0
  %653 = vmatpush2.bf16.xpose.msra.mxu0 0
  %654 = vmatprep.subr.bf16.mxu0 0
  %655 = vmatpush2.bf16.xpose.msra.mxu0 0
  %656 = vmatprep.subr.bf16.mxu0 0
  %657 = vmatpush2.bf16.xpose.msra.mxu0 0
  %658 = vmatprep.mubr.bf16.mxu0 %v150
  %659 = vmatmul.mubr.bf16.gmra.mxu0 %v136
  %v660 = vpop.f32.mrf.mxu0
  %v661 = vadd.f32 %v621, %v660
  %v662 = vpop.f32.mrf.mxu0
  %v663 = vpop.f32.mrf.mxu0
  %v664 = vpop.f32.mrf.mxu0
  %665 = vdwg.mxu0
  %666 = vmatprep.subr.bf16.mxu0 %v472
  %667 = vmatpush1.bf16.xpose.msra.mxu0 %v471
  %668 = vmatprep.subr.bf16.mxu0 %v463
  %669 = vmatpush1.bf16.xpose.msra.mxu0 %v462
  %670 = vmatprep.subr.bf16.mxu0 %v454
  %671 = vmatpush1.bf16.xpose.msra.mxu0 %v453
  %672 = vmatprep.subr.bf16.mxu0 %v445
  %673 = vmatpush1.bf16.xpose.msra.mxu0 %v444
  %674 = vmatprep.subr.bf16.mxu0 %v436
  %675 = vmatpush1.bf16.xpose.msra.mxu0 %v435
  %676 = vmatprep.subr.bf16.mxu0 %v427
  %677 = vmatpush1.bf16.xpose.msra.mxu0 %v426
  %678 = vmatprep.subr.bf16.mxu0 %v418
  %679 = vmatpush1.bf16.xpose.msra.mxu0 %v417
  %680 = vmatprep.subr.bf16.mxu0 %v409
  %681 = vmatpush1.bf16.xpose.msra.mxu0 %v408
  %682 = vmatprep.subr.bf16.mxu0 0
  %683 = vmatpush2.bf16.xpose.msra.mxu0 0
  %684 = vmatprep.subr.bf16.mxu0 0
  %685 = vmatpush2.bf16.xpose.msra.mxu0 0
  %686 = vmatprep.subr.bf16.mxu0 0
  %687 = vmatpush2.bf16.xpose.msra.mxu0 0
  %688 = vmatprep.subr.bf16.mxu0 0
  %689 = vmatpush2.bf16.xpose.msra.mxu0 0
  %690 = vmatprep.subr.bf16.mxu0 0
  %691 = vmatpush2.bf16.xpose.msra.mxu0 0
  %692 = vmatprep.subr.bf16.mxu0 0
  %693 = vmatpush2.bf16.xpose.msra.mxu0 0
  %694 = vmatprep.subr.bf16.mxu0 0
  %695 = vmatpush2.bf16.xpose.msra.mxu0 0
  %696 = vmatprep.subr.bf16.mxu0 0
  %697 = vmatpush2.bf16.xpose.msra.mxu0 0
  %698 = vmatprep.mubr.bf16.mxu0 %v154
  %699 = vmatmul.mubr.bf16.gmra.mxu0 %v152
  %v700 = vpop.f32.mrf.mxu0
  %v701 = vadd.f32 %v661, %v700
  %v702 = vpop.f32.mrf.mxu0
  %v703 = vpop.f32.mrf.mxu0
  %v704 = vpop.f32.mrf.mxu0
  %705 = vdwg.mxu0
  %706 = vmatprep.subr.bf16.mxu0 0
  %707 = vmatpush1.bf16.xpose.msra.mxu0 %v473
  %708 = vmatprep.subr.bf16.mxu0 0
  %709 = vmatpush1.bf16.xpose.msra.mxu0 %v464
  %710 = vmatprep.subr.bf16.mxu0 0
  %711 = vmatpush1.bf16.xpose.msra.mxu0 %v455
  %712 = vmatprep.subr.bf16.mxu0 0
  %713 = vmatpush1.bf16.xpose.msra.mxu0 %v446
  %714 = vmatprep.subr.bf16.mxu0 0
  %715 = vmatpush1.bf16.xpose.msra.mxu0 %v437
  %716 = vmatprep.subr.bf16.mxu0 0
  %717 = vmatpush1.bf16.xpose.msra.mxu0 %v428
  %718 = vmatprep.subr.bf16.mxu0 0
  %719 = vmatpush1.bf16.xpose.msra.mxu0 %v419
  %720 = vmatprep.subr.bf16.mxu0 0
  %721 = vmatpush1.bf16.xpose.msra.mxu0 %v410
  %722 = vmatprep.subr.bf16.mxu0 0
  %723 = vmatpush2.bf16.xpose.msra.mxu0 0
  %724 = vmatprep.subr.bf16.mxu0 0
  %725 = vmatpush2.bf16.xpose.msra.mxu0 0
  %726 = vmatprep.subr.bf16.mxu0 0
  %727 = vmatpush2.bf16.xpose.msra.mxu0 0
  %728 = vmatprep.subr.bf16.mxu0 0
  %729 = vmatpush2.bf16.xpose.msra.mxu0 0
  %730 = vmatprep.subr.bf16.mxu0 0
  %731 = vmatpush2.bf16.xpose.msra.mxu0 0
  %732 = vmatprep.subr.bf16.mxu0 0
  %733 = vmatpush2.bf16.xpose.msra.mxu0 0
  %734 = vmatprep.subr.bf16.mxu0 0
  %735 = vmatpush2.bf16.xpose.msra.mxu0 0
  %736 = vmatprep.subr.bf16.mxu0 0
  %737 = vmatpush2.bf16.xpose.msra.mxu0 0
  %738 = vmatprep.mubr.bf16.mxu0 0
  %739 = vmatmul.mubr.bf16.gmra.mxu0 %v168
  %v740 = vpop.f32.mrf.mxu0
  %v741 = vadd.f32 %v701, %v740
  %v742 = vpop.f32.mrf.mxu0
  %v743 = vpop.f32.mrf.mxu0
  %v744 = vpop.f32.mrf.mxu0
  %745 = vdwg.mxu0
  %v746 = vmax.f32 %v741, 0.0
  %747 = vst [vmem:[%s3] sm:$0x3] %v746
  // Predicated region
  $region14: #{hyperdqn_forward.8} parent=0 // pred_check
    _
  $region15: #{hyperdqn_forward.8} parent=0 // pred_check_branch
    %749 = sbr.rel (0) target = $region17
  $region16: #{hyperdqn_forward.8} parent=0 // pred_region
    _
  $region17: #{hyperdqn_forward.8} parent=0 // pred_fallthru
    _
  // Predicated region
  $region18: #{hyperdqn_forward.8} parent=0 // pred_check
    _
  $region19: #{hyperdqn_forward.8} parent=0 // pred_check_branch
    %751 = sbr.rel (0) target = $region21
  $region20: #{hyperdqn_forward.8} parent=0 // pred_region
    _
  $region21: #{hyperdqn_forward.8} parent=0 // pred_fallthru
    _

// kernel: hyperdqn_forward.9
$region0: #{hyperdqn_forward.9}
  #allocation0 [shape = 'u32[]', space=smem, size = 0x4, offset = 0x4, fixed_abs, tag = 'smem constant byte address 0x4 - core index']
  #allocation1 [shape = 'u32[144,128]{1,0:T(1,128)}', space=vmem, size = 0x12000, scoped, tag = 'internal scratch']
  %s0 = inlined_call_operand.vmem [shape: bf16[2,128], index: 0, kind: input, shape index: {}]
  %s1 = inlined_call_operand.vmem [shape: bf16[1024,128], index: 1, kind: input, shape index: {}]
  %s2 = inlined_call_operand.vmem [shape: f32[1,1024], index: 2, kind: input, shape index: {}]
  %s3 = inlined_call_operand.vmem [shape: f32[2,1024], index: 3, kind: output, shape index: {}]
  %s4 = sld [smem:[#allocation0]]
  $region22: #{hyperdqn_forward.9} parent=0
    _
  %s6 = ssub.s32 1, %s4
  %s7 = scalar_select 0, %s6, %s4
  // Predicated region
  $region2: #{hyperdqn_forward.9} parent=0 // pred_check
    _
  $region3: #{hyperdqn_forward.9} parent=0 // pred_check_branch
    %9 = sbr.rel (0) target = $region5
  $region4: #{hyperdqn_forward.9} parent=0 // pred_region
    _
  $region5: #{hyperdqn_forward.9} parent=0 // pred_fallthru
    _
  // Predicated region
  $region6: #{hyperdqn_forward.9} parent=0 // pred_check
    _
  $region7: #{hyperdqn_forward.9} parent=0 // pred_check_branch
    %11 = sbr.rel (0) target = $region9
  $region8: #{hyperdqn_forward.9} parent=0 // pred_region
    _
  $region9: #{hyperdqn_forward.9} parent=0 // pred_fallthru
    _
  // Predicated region
  $region10: #{hyperdqn_forward.9} parent=0 // pred_check
    _
  $region11: #{hyperdqn_forward.9} parent=0 // pred_check_branch
    %13 = sbr.rel (0) target = $region13
  $region12: #{hyperdqn_forward.9} parent=0 // pred_region
    _
  $region13: #{hyperdqn_forward.9} parent=0 // pred_fallthru
    _
  %v15 = vld [vmem:[%s0] sm:$0x1]
  %v16 = vld [vmem:[%s1] sm:$0xf]
  %v17 = vld [vmem:[%s1 + $0x4] sm:$0xf]
  %v18 = vld [vmem:[%s1 + $0x8] sm:$0xf]
  %v19 = vld [vmem:[%s1 + $0xc] sm:$0xf]
  %v20 = vld [vmem:[%s1 + $0x10] sm:$0xf]
  %v21 = vld [vmem:[%s1 + $0x14] sm:$0xf]
  %v22 = vld [vmem:[%s1 + $0x18] sm:$0xf]
  %v23 = vld [vmem:[%s1 + $0x1c] sm:$0xf]
  %v24 = vld [vmem:[%s1 + $0x20] sm:$0xf]
  %v25 = vld [vmem:[%s1 + $0x24] sm:$0xf]
  %v26 = vld [vmem:[%s1 + $0x28] sm:$0xf]
  %v27 = vld [vmem:[%s1 + $0x2c] sm:$0xf]
  %v28 = vld [vmem:[%s1 + $0x30] sm:$0xf]
  %v29 = vld [vmem:[%s1 + $0x34] sm:$0xf]
  %v30 = vld [vmem:[%s1 + $0x38] sm:$0xf]
  %v31 = vld [vmem:[%s1 + $0x3c] sm:$0xf]
  %v32 = vld [vmem:[%s1 + $0x40] sm:$0xf]
  %v33 = vld [vmem:[%s1 + $0x44] sm:$0xf]
  %v34 = vld [vmem:[%s1 + $0x48] sm:$0xf]
  %v35 = vld [vmem:[%s1 + $0x4c] sm:$0xf]
  %v36 = vld [vmem:[%s1 + $0x50] sm:$0xf]
  %v37 = vld [vmem:[%s1 + $0x54] sm:$0xf]
  %v38 = vld [vmem:[%s1 + $0x58] sm:$0xf]
  %v39 = vld [vmem:[%s1 + $0x5c] sm:$0xf]
  %v40 = vld [vmem:[%s1 + $0x60] sm:$0xf]
  %v41 = vld [vmem:[%s1 + $0x64] sm:$0xf]
  %v42 = vld [vmem:[%s1 + $0x68] sm:$0xf]
  %v43 = vld [vmem:[%s1 + $0x6c] sm:$0xf]
  %v44 = vld [vmem:[%s1 + $0x70] sm:$0xf]
  %v45 = vld [vmem:[%s1 + $0x74] sm:$0xf]
  %v46 = vld [vmem:[%s1 + $0x78] sm:$0xf]
  %v47 = vld [vmem:[%s1 + $0x7c] sm:$0xf]
  %v48 = vld [vmem:[%s1 + $0x80] sm:$0xf]
  %v49 = vld [vmem:[%s1 + $0x84] sm:$0xf]
  %v50 = vld [vmem:[%s1 + $0x88] sm:$0xf]
  %v51 = vld [vmem:[%s1 + $0x8c] sm:$0xf]
  %v52 = vld [vmem:[%s1 + $0x90] sm:$0xf]
  %v53 = vld [vmem:[%s1 + $0x94] sm:$0xf]
  %v54 = vld [vmem:[%s1 + $0x98] sm:$0xf]
  %v55 = vld [vmem:[%s1 + $0x9c] sm:$0xf]
  %v56 = vld [vmem:[%s1 + $0xa0] sm:$0xf]
  %v57 = vld [vmem:[%s1 + $0xa4] sm:$0xf]
  %v58 = vld [vmem:[%s1 + $0xa8] sm:$0xf]
  %v59 = vld [vmem:[%s1 + $0xac] sm:$0xf]
  %v60 = vld [vmem:[%s1 + $0xb0] sm:$0xf]
  %v61 = vld [vmem:[%s1 + $0xb4] sm:$0xf]
  %v62 = vld [vmem:[%s1 + $0xb8] sm:$0xf]
  %v63 = vld [vmem:[%s1 + $0xbc] sm:$0xf]
  %v64 = vld [vmem:[%s1 + $0xc0] sm:$0xf]
  %v65 = vld [vmem:[%s1 + $0xc4] sm:$0xf]
  %v66 = vld [vmem:[%s1 + $0xc8] sm:$0xf]
  %v67 = vld [vmem:[%s1 + $0xcc] sm:$0xf]
  %v68 = vld [vmem:[%s1 + $0xd0] sm:$0xf]
  %v69 = vld [vmem:[%s1 + $0xd4] sm:$0xf]
  %v70 = vld [vmem:[%s1 + $0xd8] sm:$0xf]
  %v71 = vld [vmem:[%s1 + $0xdc] sm:$0xf]
  %v72 = vld [vmem:[%s1 + $0xe0] sm:$0xf]
  %v73 = vld [vmem:[%s1 + $0xe4] sm:$0xf]
  %v74 = vld [vmem:[%s1 + $0xe8] sm:$0xf]
  %v75 = vld [vmem:[%s1 + $0xec] sm:$0xf]
  %v76 = vld [vmem:[%s1 + $0xf0] sm:$0xf]
  %v77 = vld [vmem:[%s1 + $0xf4] sm:$0xf]
  %v78 = vld [vmem:[%s1 + $0xf8] sm:$0xf]
  %v79 = vld [vmem:[%s1 + $0xfc] sm:$0xf]
  %v80 = vld [vmem:[%s1 + $0x100] sm:$0xf]
  %v81 = vld [vmem:[%s1 + $0x104] sm:$0xf]
  %v82 = vld [vmem:[%s1 + $0x108] sm:$0xf]
  %v83 = vld [vmem:[%s1 + $0x10c] sm:$0xf]
  %v84 = vld [vmem:[%s1 + $0x110] sm:$0xf]
  %v85 = vld [vmem:[%s1 + $0x114] sm:$0xf]
  %v86 = vld [vmem:[%s1 + $0x118] sm:$0xf]
  %v87 = vld [vmem:[%s1 + $0x11c] sm:$0xf]
  %v88 = vld [vmem:[%s1 + $0x120] sm:$0xf]
  %v89 = vld [vmem:[%s1 + $0x124] sm:$0xf]
  %v90 = vld [vmem:[%s1 + $0x128] sm:$0xf]
  %v91 = vld [vmem:[%s1 + $0x12c] sm:$0xf]
  %v92 = vld [vmem:[%s1 + $0x130] sm:$0xf]
  %v93 = vld [vmem:[%s1 + $0x134] sm:$0xf]
  %v94 = vld [vmem:[%s1 + $0x138] sm:$0xf]
  %v95 = vld [vmem:[%s1 + $0x13c] sm:$0xf]
  %v96 = vld [vmem:[%s1 + $0x140] sm:$0xf]
  %v97 = vld [vmem:[%s1 + $0x144] sm:$0xf]
  %v98 = vld [vmem:[%s1 + $0x148] sm:$0xf]
  %v99 = vld [vmem:[%s1 + $0x14c] sm:$0xf]
  %v100 = vld [vmem:[%s1 + $0x150] sm:$0xf]
  %v101 = vld [vmem:[%s1 + $0x154] sm:$0xf]
  %v102 = vld [vmem:[%s1 + $0x158] sm:$0xf]
  %v103 = vld [vmem:[%s1 + $0x15c] sm:$0xf]
  %v104 = vld [vmem:[%s1 + $0x160] sm:$0xf]
  %v105 = vld [vmem:[%s1 + $0x164] sm:$0xf]
  %v106 = vld [vmem:[%s1 + $0x168] sm:$0xf]
  %v107 = vld [vmem:[%s1 + $0x16c] sm:$0xf]
  %v108 = vld [vmem:[%s1 + $0x170] sm:$0xf]
  %v109 = vld [vmem:[%s1 + $0x174] sm:$0xf]
  %v110 = vld [vmem:[%s1 + $0x178] sm:$0xf]
  %v111 = vld [vmem:[%s1 + $0x17c] sm:$0xf]
  %v112 = vld [vmem:[%s1 + $0x180] sm:$0xf]
  %v113 = vld [vmem:[%s1 + $0x184] sm:$0xf]
  %v114 = vld [vmem:[%s1 + $0x188] sm:$0xf]
  %v115 = vld [vmem:[%s1 + $0x18c] sm:$0xf]
  %v116 = vld [vmem:[%s1 + $0x190] sm:$0xf]
  %v117 = vld [vmem:[%s1 + $0x194] sm:$0xf]
  %v118 = vld [vmem:[%s1 + $0x198] sm:$0xf]
  %v119 = vld [vmem:[%s1 + $0x19c] sm:$0xf]
  %v120 = vld [vmem:[%s1 + $0x1a0] sm:$0xf]
  %v121 = vld [vmem:[%s1 + $0x1a4] sm:$0xf]
  %v122 = vld [vmem:[%s1 + $0x1a8] sm:$0xf]
  %v123 = vld [vmem:[%s1 + $0x1ac] sm:$0xf]
  %v124 = vld [vmem:[%s1 + $0x1b0] sm:$0xf]
  %v125 = vld [vmem:[%s1 + $0x1b4] sm:$0xf]
  %v126 = vld [vmem:[%s1 + $0x1b8] sm:$0xf]
  %v127 = vld [vmem:[%s1 + $0x1bc] sm:$0xf]
  %v128 = vld [vmem:[%s1 + $0x1c0] sm:$0xf]
  %v129 = vld [vmem:[%s1 + $0x1c4] sm:$0xf]
  %v130 = vld [vmem:[%s1 + $0x1c8] sm:$0xf]
  %v131 = vld [vmem:[%s1 + $0x1cc] sm:$0xf]
  %v132 = vld [vmem:[%s1 + $0x1d0] sm:$0xf]
  %v133 = vld [vmem:[%s1 + $0x1d4] sm:$0xf]
  %v134 = vld [vmem:[%s1 + $0x1d8] sm:$0xf]
  %v135 = vld [vmem:[%s1 + $0x1dc] sm:$0xf]
  %v136 = vld [vmem:[%s1 + $0x1e0] sm:$0xf]
  %v137 = vld [vmem:[%s1 + $0x1e4] sm:$0xf]
  %v138 = vld [vmem:[%s1 + $0x1e8] sm:$0xf]
  %v139 = vld [vmem:[%s1 + $0x1ec] sm:$0xf]
  %v140 = vld [vmem:[%s1 + $0x1f0] sm:$0xf]
  %v141 = vld [vmem:[%s1 + $0x1f4] sm:$0xf]
  %v142 = vld [vmem:[%s1 + $0x1f8] sm:$0xf]
  %v143 = vld [vmem:[%s1 + $0x1fc] sm:$0xf]
  %v144 = vld [vmem:[%s2] sm:$0xff]
  %v146 = vlaneseq
  %v147 = vshrl.u32 %v146, 7
  %v148 = vsub.s32 0, %v147
  %v149 = vrot.slane %v144, %v148
  %v150 = vlaneseq
  %v151 = vshrl.u32 %v150, 7
  %v152 = vsub.s32 1, %v151
  %v153 = vrot.slane %v144, %v152
  %v154 = vlaneseq
  %v155 = vshrl.u32 %v154, 7
  %v156 = vsub.s32 2, %v155
  %v157 = vrot.slane %v144, %v156
  %v158 = vlaneseq
  %v159 = vshrl.u32 %v158, 7
  %v160 = vsub.s32 3, %v159
  %v161 = vrot.slane %v144, %v160
  %v162 = vlaneseq
  %v163 = vshrl.u32 %v162, 7
  %v164 = vsub.s32 4, %v163
  %v165 = vrot.slane %v144, %v164
  %v166 = vlaneseq
  %v167 = vshrl.u32 %v166, 7
  %v168 = vsub.s32 5, %v167
  %v169 = vrot.slane %v144, %v168
  %v170 = vlaneseq
  %v171 = vshrl.u32 %v170, 7
  %v172 = vsub.s32 6, %v171
  %v173 = vrot.slane %v144, %v172
  %v174 = vlaneseq
  %v175 = vshrl.u32 %v174, 7
  %v176 = vsub.s32 7, %v175
  %v177 = vrot.slane %v144, %v176
  %v314 = vunpack.c.l.b16 %v16
  %v315 = vunpack.c.l.b16 %v17
  %v316 = vunpack.c.l.b16 %v18
  %v317 = vunpack.c.l.b16 %v19
  %v318 = vunpack.c.l.b16 %v20
  %v319 = vunpack.c.l.b16 %v21
  %v320 = vunpack.c.l.b16 %v22
  %v321 = vunpack.c.l.b16 %v23
  %v322 = vunpack.c.l.b16 %v24
  %v323 = vunpack.c.l.b16 %v25
  %v324 = vunpack.c.l.b16 %v26
  %v325 = vunpack.c.l.b16 %v27
  %v326 = vunpack.c.l.b16 %v28
  %v327 = vunpack.c.l.b16 %v29
  %v328 = vunpack.c.l.b16 %v30
  %v329 = vunpack.c.l.b16 %v31
  %v330 = vunpack.c.l.b16 %v32
  %v331 = vunpack.c.l.b16 %v33
  %v332 = vunpack.c.l.b16 %v34
  %v333 = vunpack.c.l.b16 %v35
  %v334 = vunpack.c.l.b16 %v36
  %v335 = vunpack.c.l.b16 %v37
  %v336 = vunpack.c.l.b16 %v38
  %v337 = vunpack.c.l.b16 %v39
  %v338 = vunpack.c.l.b16 %v40
  %v339 = vunpack.c.l.b16 %v41
  %v340 = vunpack.c.l.b16 %v42
  %v341 = vunpack.c.l.b16 %v43
  %v342 = vunpack.c.l.b16 %v44
  %v343 = vunpack.c.l.b16 %v45
  %v344 = vunpack.c.l.b16 %v46
  %v345 = vunpack.c.l.b16 %v47
  %v346 = vunpack.c.l.b16 %v48
  %v347 = vunpack.c.l.b16 %v49
  %v348 = vunpack.c.l.b16 %v50
  %v349 = vunpack.c.l.b16 %v51
  %v350 = vunpack.c.l.b16 %v52
  %v351 = vunpack.c.l.b16 %v53
  %v352 = vunpack.c.l.b16 %v54
  %v353 = vunpack.c.l.b16 %v55
  %v354 = vunpack.c.l.b16 %v56
  %v355 = vunpack.c.l.b16 %v57
  %v356 = vunpack.c.l.b16 %v58
  %v357 = vunpack.c.l.b16 %v59
  %v358 = vunpack.c.l.b16 %v60
  %v359 = vunpack.c.l.b16 %v61
  %v360 = vunpack.c.l.b16 %v62
  %v361 = vunpack.c.l.b16 %v63
  %v362 = vunpack.c.l.b16 %v64
  %v363 = vunpack.c.l.b16 %v65
  %v364 = vunpack.c.l.b16 %v66
  %v365 = vunpack.c.l.b16 %v67
  %v366 = vunpack.c.l.b16 %v68
  %v367 = vunpack.c.l.b16 %v69
  %v368 = vunpack.c.l.b16 %v70
  %v369 = vunpack.c.l.b16 %v71
  %v370 = vunpack.c.l.b16 %v72
  %v371 = vunpack.c.l.b16 %v73
  %v372 = vunpack.c.l.b16 %v74
  %v373 = vunpack.c.l.b16 %v75
  %v374 = vunpack.c.l.b16 %v76
  %v375 = vunpack.c.l.b16 %v77
  %v376 = vunpack.c.l.b16 %v78
  %v377 = vunpack.c.l.b16 %v79
  %v378 = vunpack.c.l.b16 %v80
  %v379 = vunpack.c.l.b16 %v81
  %v380 = vunpack.c.l.b16 %v82
  %v381 = vunpack.c.l.b16 %v83
  %v382 = vunpack.c.l.b16 %v84
  %v383 = vunpack.c.l.b16 %v85
  %v384 = vunpack.c.l.b16 %v86
  %v385 = vunpack.c.l.b16 %v87
  %v386 = vunpack.c.l.b16 %v88
  %v387 = vunpack.c.l.b16 %v89
  %v388 = vunpack.c.l.b16 %v90
  %v389 = vunpack.c.l.b16 %v91
  %v390 = vunpack.c.l.b16 %v92
  %v391 = vunpack.c.l.b16 %v93
  %v392 = vunpack.c.l.b16 %v94
  %v393 = vunpack.c.l.b16 %v95
  %v394 = vunpack.c.l.b16 %v96
  %v395 = vunpack.c.l.b16 %v97
  %v396 = vunpack.c.l.b16 %v98
  %v397 = vunpack.c.l.b16 %v99
  %v398 = vunpack.c.l.b16 %v100
  %v399 = vunpack.c.l.b16 %v101
  %v400 = vunpack.c.l.b16 %v102
  %v401 = vunpack.c.l.b16 %v103
  %v402 = vunpack.c.l.b16 %v104
  %v403 = vunpack.c.l.b16 %v105
  %v404 = vunpack.c.l.b16 %v106
  %v405 = vunpack.c.l.b16 %v107
  %v406 = vunpack.c.l.b16 %v108
  %v407 = vunpack.c.l.b16 %v109
  %v408 = vunpack.c.l.b16 %v110
  %v409 = vunpack.c.l.b16 %v111
  %v410 = vunpack.c.l.b16 %v112
  %v411 = vunpack.c.l.b16 %v113
  %v412 = vunpack.c.l.b16 %v114
  %v413 = vunpack.c.l.b16 %v115
  %v414 = vunpack.c.l.b16 %v116
  %v415 = vunpack.c.l.b16 %v117
  %v416 = vunpack.c.l.b16 %v118
  %v417 = vunpack.c.l.b16 %v119
  %v418 = vunpack.c.l.b16 %v120
  %v419 = vunpack.c.l.b16 %v121
  %v420 = vunpack.c.l.b16 %v122
  %v421 = vunpack.c.l.b16 %v123
  %v422 = vunpack.c.l.b16 %v124
  %v423 = vunpack.c.l.b16 %v125
  %v424 = vunpack.c.l.b16 %v126
  %v425 = vunpack.c.l.b16 %v127
  %v426 = vunpack.c.l.b16 %v128
  %v427 = vunpack.c.l.b16 %v129
  %v428 = vunpack.c.l.b16 %v130
  %v429 = vunpack.c.l.b16 %v131
  %v430 = vunpack.c.l.b16 %v132
  %v431 = vunpack.c.l.b16 %v133
  %v432 = vunpack.c.l.b16 %v134
  %v433 = vunpack.c.l.b16 %v135
  %v434 = vunpack.c.l.b16 %v136
  %v435 = vunpack.c.l.b16 %v137
  %v436 = vunpack.c.l.b16 %v138
  %v437 = vunpack.c.l.b16 %v139
  %v438 = vunpack.c.l.b16 %v140
  %v439 = vunpack.c.l.b16 %v141
  %v440 = vunpack.c.l.b16 %v142
  %v441 = vunpack.c.l.b16 %v143
  %v442 = vpack.c.b16 %v315, %v314
  %v443 = vpack.c.b16 %v317, %v316
  %v444 = vpack.c.b16 %v319, %v318
  %v445 = vpack.c.b16 %v321, %v320
  %v446 = vpack.c.b16 %v323, %v322
  %v447 = vpack.c.b16 %v325, %v324
  %v448 = vpack.c.b16 %v327, %v326
  %v449 = vpack.c.b16 %v329, %v328
  %v450 = vpack.c.b16 %v331, %v330
  %v451 = vpack.c.b16 %v333, %v332
  %v452 = vpack.c.b16 %v335, %v334
  %v453 = vpack.c.b16 %v337, %v336
  %v454 = vpack.c.b16 %v339, %v338
  %v455 = vpack.c.b16 %v341, %v340
  %v456 = vpack.c.b16 %v343, %v342
  %v457 = vpack.c.b16 %v345, %v344
  %v458 = vpack.c.b16 %v347, %v346
  %v459 = vpack.c.b16 %v349, %v348
  %v460 = vpack.c.b16 %v351, %v350
  %v461 = vpack.c.b16 %v353, %v352
  %v462 = vpack.c.b16 %v355, %v354
  %v463 = vpack.c.b16 %v357, %v356
  %v464 = vpack.c.b16 %v359, %v358
  %v465 = vpack.c.b16 %v361, %v360
  %v466 = vpack.c.b16 %v363, %v362
  %v467 = vpack.c.b16 %v365, %v364
  %v468 = vpack.c.b16 %v367, %v366
  %v469 = vpack.c.b16 %v369, %v368
  %v470 = vpack.c.b16 %v371, %v370
  %v471 = vpack.c.b16 %v373, %v372
  %v472 = vpack.c.b16 %v375, %v374
  %v473 = vpack.c.b16 %v377, %v376
  %v474 = vpack.c.b16 %v379, %v378
  %v475 = vpack.c.b16 %v381, %v380
  %v476 = vpack.c.b16 %v383, %v382
  %v477 = vpack.c.b16 %v385, %v384
  %v478 = vpack.c.b16 %v387, %v386
  %v479 = vpack.c.b16 %v389, %v388
  %v480 = vpack.c.b16 %v391, %v390
  %v481 = vpack.c.b16 %v393, %v392
  %v482 = vpack.c.b16 %v395, %v394
  %v483 = vpack.c.b16 %v397, %v396
  %v484 = vpack.c.b16 %v399, %v398
  %v485 = vpack.c.b16 %v401, %v400
  %v486 = vpack.c.b16 %v403, %v402
  %v487 = vpack.c.b16 %v405, %v404
  %v488 = vpack.c.b16 %v407, %v406
  %v489 = vpack.c.b16 %v409, %v408
  %v490 = vpack.c.b16 %v411, %v410
  %v491 = vpack.c.b16 %v413, %v412
  %v492 = vpack.c.b16 %v415, %v414
  %v493 = vpack.c.b16 %v417, %v416
  %v494 = vpack.c.b16 %v419, %v418
  %v495 = vpack.c.b16 %v421, %v420
  %v496 = vpack.c.b16 %v423, %v422
  %v497 = vpack.c.b16 %v425, %v424
  %v498 = vpack.c.b16 %v427, %v426
  %v499 = vpack.c.b16 %v429, %v428
  %v500 = vpack.c.b16 %v431, %v430
  %v501 = vpack.c.b16 %v433, %v432
  %v502 = vpack.c.b16 %v435, %v434
  %v503 = vpack.c.b16 %v437, %v436
  %v504 = vpack.c.b16 %v439, %v438
  %v505 = vpack.c.b16 %v441, %v440
  %570 = vmatprep.subr.bf16.mxu0 0
  %571 = vmatpush1.bf16.xpose.msra.mxu0 %v449
  %572 = vmatprep.subr.bf16.mxu0 0
  %573 = vmatpush1.bf16.xpose.msra.mxu0 %v448
  %574 = vmatprep.subr.bf16.mxu0 0
  %575 = vmatpush1.bf16.xpose.msra.mxu0 %v447
  %576 = vmatprep.subr.bf16.mxu0 0
  %577 = vmatpush1.bf16.xpose.msra.mxu0 %v446
  %578 = vmatprep.subr.bf16.mxu0 0
  %579 = vmatpush1.bf16.xpose.msra.mxu0 %v445
  %580 = vmatprep.subr.bf16.mxu0 0
  %581 = vmatpush1.bf16.xpose.msra.mxu0 %v444
  %582 = vmatprep.subr.bf16.mxu0 0
  %583 = vmatpush1.bf16.xpose.msra.mxu0 %v443
  %584 = vmatprep.subr.bf16.mxu0 0
  %585 = vmatpush1.bf16.xpose.msra.mxu0 %v442
  %586 = vmatprep.subr.bf16.mxu0 0
  %587 = vmatpush2.bf16.xpose.msra.mxu0 %v457
  %588 = vmatprep.subr.bf16.mxu0 0
  %589 = vmatpush2.bf16.xpose.msra.mxu0 %v456
  %590 = vmatprep.subr.bf16.mxu0 0
  %591 = vmatpush2.bf16.xpose.msra.mxu0 %v455
  %592 = vmatprep.subr.bf16.mxu0 0
  %593 = vmatpush2.bf16.xpose.msra.mxu0 %v454
  %594 = vmatprep.subr.bf16.mxu0 0
  %595 = vmatpush2.bf16.xpose.msra.mxu0 %v453
  %596 = vmatprep.subr.bf16.mxu0 0
  %597 = vmatpush2.bf16.xpose.msra.mxu0 %v452
  %598 = vmatprep.subr.bf16.mxu0 0
  %599 = vmatpush2.bf16.xpose.msra.mxu0 %v451
  %600 = vmatprep.subr.bf16.mxu0 0
  %601 = vmatpush2.bf16.xpose.msra.mxu0 %v450
  %602 = vmatprep.mubr.bf16.mxu0 0
  %603 = vmatmul.mubr.bf16.gmra.mxu0 %v15
  %v604 = vpop.f32.mrf.mxu0
  %v605 = vadd.f32 %v149, %v604
  %v606 = vpop.f32.mrf.mxu0
  %v607 = vadd.f32 %v153, %v606
  %v608 = vpop.f32.mrf.mxu0
  %v609 = vpop.f32.mrf.mxu0
  %610 = vdwg.mxu0
  %611 = vmatprep.subr.bf16.mxu0 0
  %612 = vmatpush1.bf16.xpose.msra.mxu0 %v465
  %613 = vmatprep.subr.bf16.mxu0 0
  %614 = vmatpush1.bf16.xpose.msra.mxu0 %v464
  %615 = vmatprep.subr.bf16.mxu0 0
  %616 = vmatpush1.bf16.xpose.msra.mxu0 %v463
  %617 = vmatprep.subr.bf16.mxu0 0
  %618 = vmatpush1.bf16.xpose.msra.mxu0 %v462
  %619 = vmatprep.subr.bf16.mxu0 0
  %620 = vmatpush1.bf16.xpose.msra.mxu0 %v461
  %621 = vmatprep.subr.bf16.mxu0 0
  %622 = vmatpush1.bf16.xpose.msra.mxu0 %v460
  %623 = vmatprep.subr.bf16.mxu0 0
  %624 = vmatpush1.bf16.xpose.msra.mxu0 %v459
  %625 = vmatprep.subr.bf16.mxu0 0
  %626 = vmatpush1.bf16.xpose.msra.mxu0 %v458
  %627 = vmatprep.subr.bf16.mxu0 0
  %628 = vmatpush2.bf16.xpose.msra.mxu0 %v473
  %629 = vmatprep.subr.bf16.mxu0 0
  %630 = vmatpush2.bf16.xpose.msra.mxu0 %v472
  %631 = vmatprep.subr.bf16.mxu0 0
  %632 = vmatpush2.bf16.xpose.msra.mxu0 %v471
  %633 = vmatprep.subr.bf16.mxu0 0
  %634 = vmatpush2.bf16.xpose.msra.mxu0 %v470
  %635 = vmatprep.subr.bf16.mxu0 0
  %636 = vmatpush2.bf16.xpose.msra.mxu0 %v469
  %637 = vmatprep.subr.bf16.mxu0 0
  %638 = vmatpush2.bf16.xpose.msra.mxu0 %v468
  %639 = vmatprep.subr.bf16.mxu0 0
  %640 = vmatpush2.bf16.xpose.msra.mxu0 %v467
  %641 = vmatprep.subr.bf16.mxu0 0
  %642 = vmatpush2.bf16.xpose.msra.mxu0 %v466
  %643 = vmatprep.mubr.bf16.mxu0 0
  %644 = vmatmul.mubr.bf16.gmra.mxu0 %v15
  %v645 = vpop.f32.mrf.mxu0
  %v646 = vadd.f32 %v157, %v645
  %v647 = vpop.f32.mrf.mxu0
  %v648 = vadd.f32 %v161, %v647
  %v649 = vpop.f32.mrf.mxu0
  %v650 = vpop.f32.mrf.mxu0
  %651 = vdwg.mxu0
  %652 = vmatprep.subr.bf16.mxu0 0
  %653 = vmatpush1.bf16.xpose.msra.mxu0 %v481
  %654 = vmatprep.subr.bf16.mxu0 0
  %655 = vmatpush1.bf16.xpose.msra.mxu0 %v480
  %656 = vmatprep.subr.bf16.mxu0 0
  %657 = vmatpush1.bf16.xpose.msra.mxu0 %v479
  %658 = vmatprep.subr.bf16.mxu0 0
  %659 = vmatpush1.bf16.xpose.msra.mxu0 %v478
  %660 = vmatprep.subr.bf16.mxu0 0
  %661 = vmatpush1.bf16.xpose.msra.mxu0 %v477
  %662 = vmatprep.subr.bf16.mxu0 0
  %663 = vmatpush1.bf16.xpose.msra.mxu0 %v476
  %664 = vmatprep.subr.bf16.mxu0 0
  %665 = vmatpush1.bf16.xpose.msra.mxu0 %v475
  %666 = vmatprep.subr.bf16.mxu0 0
  %667 = vmatpush1.bf16.xpose.msra.mxu0 %v474
  %668 = vmatprep.subr.bf16.mxu0 0
  %669 = vmatpush2.bf16.xpose.msra.mxu0 %v489
  %670 = vmatprep.subr.bf16.mxu0 0
  %671 = vmatpush2.bf16.xpose.msra.mxu0 %v488
  %672 = vmatprep.subr.bf16.mxu0 0
  %673 = vmatpush2.bf16.xpose.msra.mxu0 %v487
  %674 = vmatprep.subr.bf16.mxu0 0
  %675 = vmatpush2.bf16.xpose.msra.mxu0 %v486
  %676 = vmatprep.subr.bf16.mxu0 0
  %677 = vmatpush2.bf16.xpose.msra.mxu0 %v485
  %678 = vmatprep.subr.bf16.mxu0 0
  %679 = vmatpush2.bf16.xpose.msra.mxu0 %v484
  %680 = vmatprep.subr.bf16.mxu0 0
  %681 = vmatpush2.bf16.xpose.msra.mxu0 %v483
  %682 = vmatprep.subr.bf16.mxu0 0
  %683 = vmatpush2.bf16.xpose.msra.mxu0 %v482
  %684 = vmatprep.mubr.bf16.mxu0 0
  %685 = vmatmul.mubr.bf16.gmra.mxu0 %v15
  %v686 = vpop.f32.mrf.mxu0
  %v687 = vadd.f32 %v165, %v686
  %v688 = vpop.f32.mrf.mxu0
  %v689 = vadd.f32 %v169, %v688
  %v690 = vpop.f32.mrf.mxu0
  %v691 = vpop.f32.mrf.mxu0
  %692 = vdwg.mxu0
  %693 = vmatprep.subr.bf16.mxu0 0
  %694 = vmatpush1.bf16.xpose.msra.mxu0 %v497
  %695 = vmatprep.subr.bf16.mxu0 0
  %696 = vmatpush1.bf16.xpose.msra.mxu0 %v496
  %697 = vmatprep.subr.bf16.mxu0 0
  %698 = vmatpush1.bf16.xpose.msra.mxu0 %v495
  %699 = vmatprep.subr.bf16.mxu0 0
  %700 = vmatpush1.bf16.xpose.msra.mxu0 %v494
  %701 = vmatprep.subr.bf16.mxu0 0
  %702 = vmatpush1.bf16.xpose.msra.mxu0 %v493
  %703 = vmatprep.subr.bf16.mxu0 0
  %704 = vmatpush1.bf16.xpose.msra.mxu0 %v492
  %705 = vmatprep.subr.bf16.mxu0 0
  %706 = vmatpush1.bf16.xpose.msra.mxu0 %v491
  %707 = vmatprep.subr.bf16.mxu0 0
  %708 = vmatpush1.bf16.xpose.msra.mxu0 %v490
  %709 = vmatprep.subr.bf16.mxu0 0
  %710 = vmatpush2.bf16.xpose.msra.mxu0 %v505
  %711 = vmatprep.subr.bf16.mxu0 0
  %712 = vmatpush2.bf16.xpose.msra.mxu0 %v504
  %713 = vmatprep.subr.bf16.mxu0 0
  %714 = vmatpush2.bf16.xpose.msra.mxu0 %v503
  %715 = vmatprep.subr.bf16.mxu0 0
  %716 = vmatpush2.bf16.xpose.msra.mxu0 %v502
  %717 = vmatprep.subr.bf16.mxu0 0
  %718 = vmatpush2.bf16.xpose.msra.mxu0 %v501
  %719 = vmatprep.subr.bf16.mxu0 0
  %720 = vmatpush2.bf16.xpose.msra.mxu0 %v500
  %721 = vmatprep.subr.bf16.mxu0 0
  %722 = vmatpush2.bf16.xpose.msra.mxu0 %v499
  %723 = vmatprep.subr.bf16.mxu0 0
  %724 = vmatpush2.bf16.xpose.msra.mxu0 %v498
  %725 = vmatprep.mubr.bf16.mxu0 0
  %726 = vmatmul.mubr.bf16.gmra.mxu0 %v15
  %v727 = vpop.f32.mrf.mxu0
  %v728 = vadd.f32 %v173, %v727
  %v729 = vpop.f32.mrf.mxu0
  %v730 = vadd.f32 %v177, %v729
  %v731 = vpop.f32.mrf.mxu0
  %v732 = vpop.f32.mrf.mxu0
  %733 = vdwg.mxu0
  %v734 = vmax.f32 %v605, 0.0
  %v735 = vmax.f32 %v607, 0.0
  %v736 = vmax.f32 %v646, 0.0
  %v737 = vmax.f32 %v648, 0.0
  %v738 = vmax.f32 %v687, 0.0
  %v739 = vmax.f32 %v689, 0.0
  %v740 = vmax.f32 %v728, 0.0
  %v741 = vmax.f32 %v730, 0.0
  %v750 = vcombine.low %v734, %v735
  %v751 = vcombine.low %v736, %v737
  %v753 = vunpack.c.l.s4 1983009808
  %v754 = vunpack.c.0.s8 %v753
  %v755 = vlaneseq
  %v756 = vshrl.u32 %v755, 7
  %v757 = vsub.s32 %v754, %v756
  %v758 = vrot.slane %v750, %v757
  %v760 = vunpack.c.l.s4 1983009808
  %v761 = vunpack.c.0.s8 %v760
  %v762 = vlaneseq
  %v763 = vshrl.u32 %v762, 7
  %v764 = vsub.s32 %v761, %v763
  %v765 = vrot.slane %v751, %v764
  %v766 = vcombine.low %v758, %v765
  %v767 = vcombine.low %v738, %v739
  %v768 = vcombine.low %v740, %v741
  %v770 = vunpack.c.l.s4 1983009808
  %v771 = vunpack.c.0.s8 %v770
  %v772 = vlaneseq
  %v773 = vshrl.u32 %v772, 7
  %v774 = vsub.s32 %v771, %v773
  %v775 = vrot.slane %v767, %v774
  %v777 = vunpack.c.l.s4 1983009808
  %v778 = vunpack.c.0.s8 %v777
  %v779 = vlaneseq
  %v780 = vshrl.u32 %v779, 7
  %v781 = vsub.s32 %v778, %v780
  %v782 = vrot.slane %v768, %v781
  %v783 = vcombine.low %v775, %v782
  %786 = vst [vmem:[%s3] sm:$0xff] %v766
  %787 = vst [vmem:[%s3 + $0x8] sm:$0xff] %v783
  // Predicated region
  $region14: #{hyperdqn_forward.9} parent=0 // pred_check
    _
  $region15: #{hyperdqn_forward.9} parent=0 // pred_check_branch
    %789 = sbr.rel (0) target = $region17
  $region16: #{hyperdqn_forward.9} parent=0 // pred_region
    _
  $region17: #{hyperdqn_forward.9} parent=0 // pred_fallthru
    _
  // Predicated region
  $region18: #{hyperdqn_forward.9} parent=0 // pred_check
    _
  $region19: #{hyperdqn_forward.9} parent=0 // pred_check_branch
    %791 = sbr.rel (0) target = $region21
  $region20: #{hyperdqn_forward.9} parent=0 // pred_region
    _
  $region21: #{hyperdqn_forward.9} parent=0 // pred_fallthru
    _

// kernel: hyperdqn_forward.11
$region0: #{hyperdqn_forward.11}
  #allocation0 [shape = 'u32[]', space=smem, size = 0x4, offset = 0x4, fixed_abs, tag = 'smem constant byte address 0x4 - core index']
  #allocation1 [shape = 'u32[144,128]{1,0:T(1,128)}', space=vmem, size = 0x12000, scoped, tag = 'internal scratch']
  %s0 = inlined_call_operand.vmem [shape: bf16[2,1024], index: 0, kind: input, shape index: {}]
  %s1 = inlined_call_operand.vmem [shape: bf16[128,1024], index: 1, kind: input, shape index: {}]
  %s2 = inlined_call_operand.vmem [shape: f32[1,128], index: 2, kind: input, shape index: {}]
  %s3 = inlined_call_operand.vmem [shape: f32[2,128], index: 3, kind: output, shape index: {}]
  %s4 = sld [smem:[#allocation0]]
  $region22: #{hyperdqn_forward.11} parent=0
    _
  %s6 = ssub.s32 1, %s4
  %s7 = scalar_select 0, %s6, %s4
  // Predicated region
  $region2: #{hyperdqn_forward.11} parent=0 // pred_check
    _
  $region3: #{hyperdqn_forward.11} parent=0 // pred_check_branch
    %9 = sbr.rel (0) target = $region5
  $region4: #{hyperdqn_forward.11} parent=0 // pred_region
    _
  $region5: #{hyperdqn_forward.11} parent=0 // pred_fallthru
    _
  // Predicated region
  $region6: #{hyperdqn_forward.11} parent=0 // pred_check
    _
  $region7: #{hyperdqn_forward.11} parent=0 // pred_check_branch
    %11 = sbr.rel (0) target = $region9
  $region8: #{hyperdqn_forward.11} parent=0 // pred_region
    _
  $region9: #{hyperdqn_forward.11} parent=0 // pred_fallthru
    _
  // Predicated region
  $region10: #{hyperdqn_forward.11} parent=0 // pred_check
    _
  $region11: #{hyperdqn_forward.11} parent=0 // pred_check_branch
    %13 = sbr.rel (0) target = $region13
  $region12: #{hyperdqn_forward.11} parent=0 // pred_region
    _
  $region13: #{hyperdqn_forward.11} parent=0 // pred_fallthru
    _
  %v15 = vld [vmem:[%s0] sm:$0xff]
  %v16 = vld [vmem:[%s1] sm:$0xff]
  %v17 = vld [vmem:[%s1 + $0x8] sm:$0xff]
  %v18 = vld [vmem:[%s1 + $0x10] sm:$0xff]
  %v19 = vld [vmem:[%s1 + $0x18] sm:$0xff]
  %v20 = vld [vmem:[%s1 + $0x20] sm:$0xff]
  %v21 = vld [vmem:[%s1 + $0x28] sm:$0xff]
  %v22 = vld [vmem:[%s1 + $0x30] sm:$0xff]
  %v23 = vld [vmem:[%s1 + $0x38] sm:$0xff]
  %v24 = vld [vmem:[%s1 + $0x40] sm:$0xff]
  %v25 = vld [vmem:[%s1 + $0x48] sm:$0xff]
  %v26 = vld [vmem:[%s1 + $0x50] sm:$0xff]
  %v27 = vld [vmem:[%s1 + $0x58] sm:$0xff]
  %v28 = vld [vmem:[%s1 + $0x60] sm:$0xff]
  %v29 = vld [vmem:[%s1 + $0x68] sm:$0xff]
  %v30 = vld [vmem:[%s1 + $0x70] sm:$0xff]
  %v31 = vld [vmem:[%s1 + $0x78] sm:$0xff]
  %v32 = vld [vmem:[%s1 + $0x80] sm:$0xff]
  %v33 = vld [vmem:[%s1 + $0x88] sm:$0xff]
  %v34 = vld [vmem:[%s1 + $0x90] sm:$0xff]
  %v35 = vld [vmem:[%s1 + $0x98] sm:$0xff]
  %v36 = vld [vmem:[%s1 + $0xa0] sm:$0xff]
  %v37 = vld [vmem:[%s1 + $0xa8] sm:$0xff]
  %v38 = vld [vmem:[%s1 + $0xb0] sm:$0xff]
  %v39 = vld [vmem:[%s1 + $0xb8] sm:$0xff]
  %v40 = vld [vmem:[%s1 + $0xc0] sm:$0xff]
  %v41 = vld [vmem:[%s1 + $0xc8] sm:$0xff]
  %v42 = vld [vmem:[%s1 + $0xd0] sm:$0xff]
  %v43 = vld [vmem:[%s1 + $0xd8] sm:$0xff]
  %v44 = vld [vmem:[%s1 + $0xe0] sm:$0xff]
  %v45 = vld [vmem:[%s1 + $0xe8] sm:$0xff]
  %v46 = vld [vmem:[%s1 + $0xf0] sm:$0xff]
  %v47 = vld [vmem:[%s1 + $0xf8] sm:$0xff]
  %v48 = vld [vmem:[%s1 + $0x100] sm:$0xff]
  %v49 = vld [vmem:[%s1 + $0x108] sm:$0xff]
  %v50 = vld [vmem:[%s1 + $0x110] sm:$0xff]
  %v51 = vld [vmem:[%s1 + $0x118] sm:$0xff]
  %v52 = vld [vmem:[%s1 + $0x120] sm:$0xff]
  %v53 = vld [vmem:[%s1 + $0x128] sm:$0xff]
  %v54 = vld [vmem:[%s1 + $0x130] sm:$0xff]
  %v55 = vld [vmem:[%s1 + $0x138] sm:$0xff]
  %v56 = vld [vmem:[%s1 + $0x140] sm:$0xff]
  %v57 = vld [vmem:[%s1 + $0x148] sm:$0xff]
  %v58 = vld [vmem:[%s1 + $0x150] sm:$0xff]
  %v59 = vld [vmem:[%s1 + $0x158] sm:$0xff]
  %v60 = vld [vmem:[%s1 + $0x160] sm:$0xff]
  %v61 = vld [vmem:[%s1 + $0x168] sm:$0xff]
  %v62 = vld [vmem:[%s1 + $0x170] sm:$0xff]
  %v63 = vld [vmem:[%s1 + $0x178] sm:$0xff]
  %v64 = vld [vmem:[%s1 + $0x180] sm:$0xff]
  %v65 = vld [vmem:[%s1 + $0x188] sm:$0xff]
  %v66 = vld [vmem:[%s1 + $0x190] sm:$0xff]
  %v67 = vld [vmem:[%s1 + $0x198] sm:$0xff]
  %v68 = vld [vmem:[%s1 + $0x1a0] sm:$0xff]
  %v69 = vld [vmem:[%s1 + $0x1a8] sm:$0xff]
  %v70 = vld [vmem:[%s1 + $0x1b0] sm:$0xff]
  %v71 = vld [vmem:[%s1 + $0x1b8] sm:$0xff]
  %v72 = vld [vmem:[%s1 + $0x1c0] sm:$0xff]
  %v73 = vld [vmem:[%s1 + $0x1c8] sm:$0xff]
  %v74 = vld [vmem:[%s1 + $0x1d0] sm:$0xff]
  %v75 = vld [vmem:[%s1 + $0x1d8] sm:$0xff]
  %v76 = vld [vmem:[%s1 + $0x1e0] sm:$0xff]
  %v77 = vld [vmem:[%s1 + $0x1e8] sm:$0xff]
  %v78 = vld [vmem:[%s1 + $0x1f0] sm:$0xff]
  %v79 = vld [vmem:[%s1 + $0x1f8] sm:$0xff]
  %v80 = vld [vmem:[%s2] sm:$0x1]
  %v82 = vlaneseq
  %v83 = vshrl.u32 %v82, 7
  %v84 = vsub.s32 0, %v83
  %v85 = vrot.slane %v80, %v84
  %v88 = vcombine.high %v15, %v15
  %v90 = vunpack.c.l.s4 1966171168
  %v91 = vunpack.c.0.s8 %v90
  %v92 = vlaneseq
  %v93 = vshrl.u32 %v92, 7
  %v94 = vsub.s32 %v91, %v93
  %v95 = vrot.slane %v15, %v94
  %v97 = vunpack.c.l.s4 1966171168
  %v98 = vunpack.c.0.s8 %v97
  %v99 = vlaneseq
  %v100 = vshrl.u32 %v99, 7
  %v101 = vsub.s32 %v98, %v100
  %v102 = vrot.slane %v88, %v101
  %v103 = vcombine.high %v95, %v95
  %v104 = vcombine.high %v102, %v102
  %v106 = vunpack.c.l.s4 1966171168
  %v107 = vunpack.c.0.s8 %v106
  %v108 = vlaneseq
  %v109 = vshrl.u32 %v108, 7
  %v110 = vsub.s32 %v107, %v109
  %v111 = vrot.slane %v95, %v110
  %v113 = vunpack.c.l.s4 1966171168
  %v114 = vunpack.c.0.s8 %v113
  %v115 = vlaneseq
  %v116 = vshrl.u32 %v115, 7
  %v117 = vsub.s32 %v114, %v116
  %v118 = vrot.slane %v102, %v117
  %v120 = vunpack.c.l.s4 1966171168
  %v121 = vunpack.c.0.s8 %v120
  %v122 = vlaneseq
  %v123 = vshrl.u32 %v122, 7
  %v124 = vsub.s32 %v121, %v123
  %v125 = vrot.slane %v103, %v124
  %v127 = vunpack.c.l.s4 1966171168
  %v128 = vunpack.c.0.s8 %v127
  %v129 = vlaneseq
  %v130 = vshrl.u32 %v129, 7
  %v131 = vsub.s32 %v128, %v130
  %v132 = vrot.slane %v104, %v131
  %v133 = vcombine.high %v111, %v111
  %v134 = vcombine.high %v118, %v118
  %v135 = vcombine.high %v125, %v125
  %v136 = vcombine.high %v132, %v132
  %v209 = vunpack.c.l.b16 %v16
  %v210 = vunpack.c.h.b16 %v16
  %v211 = vunpack.c.l.b16 %v17
  %v212 = vunpack.c.h.b16 %v17
  %v213 = vunpack.c.l.b16 %v18
  %v214 = vunpack.c.h.b16 %v18
  %v215 = vunpack.c.l.b16 %v19
  %v216 = vunpack.c.h.b16 %v19
  %v217 = vunpack.c.l.b16 %v20
  %v218 = vunpack.c.h.b16 %v20
  %v219 = vunpack.c.l.b16 %v21
  %v220 = vunpack.c.h.b16 %v21
  %v221 = vunpack.c.l.b16 %v22
  %v222 = vunpack.c.h.b16 %v22
  %v223 = vunpack.c.l.b16 %v23
  %v224 = vunpack.c.h.b16 %v23
  %v225 = vunpack.c.l.b16 %v24
  %v226 = vunpack.c.h.b16 %v24
  %v227 = vunpack.c.l.b16 %v25
  %v228 = vunpack.c.h.b16 %v25
  %v229 = vunpack.c.l.b16 %v26
  %v230 = vunpack.c.h.b16 %v26
  %v231 = vunpack.c.l.b16 %v27
  %v232 = vunpack.c.h.b16 %v27
  %v233 = vunpack.c.l.b16 %v28
  %v234 = vunpack.c.h.b16 %v28
  %v235 = vunpack.c.l.b16 %v29
  %v236 = vunpack.c.h.b16 %v29
  %v237 = vunpack.c.l.b16 %v30
  %v238 = vunpack.c.h.b16 %v30
  %v239 = vunpack.c.l.b16 %v31
  %v240 = vunpack.c.h.b16 %v31
  %v241 = vunpack.c.l.b16 %v32
  %v242 = vunpack.c.h.b16 %v32
  %v243 = vunpack.c.l.b16 %v33
  %v244 = vunpack.c.h.b16 %v33
  %v245 = vunpack.c.l.b16 %v34
  %v246 = vunpack.c.h.b16 %v34
  %v247 = vunpack.c.l.b16 %v35
  %v248 = vunpack.c.h.b16 %v35
  %v249 = vunpack.c.l.b16 %v36
  %v250 = vunpack.c.h.b16 %v36
  %v251 = vunpack.c.l.b16 %v37
  %v252 = vunpack.c.h.b16 %v37
  %v253 = vunpack.c.l.b16 %v38
  %v254 = vunpack.c.h.b16 %v38
  %v255 = vunpack.c.l.b16 %v39
  %v256 = vunpack.c.h.b16 %v39
  %v257 = vunpack.c.l.b16 %v40
  %v258 = vunpack.c.h.b16 %v40
  %v259 = vunpack.c.l.b16 %v41
  %v260 = vunpack.c.h.b16 %v41
  %v261 = vunpack.c.l.b16 %v42
  %v262 = vunpack.c.h.b16 %v42
  %v263 = vunpack.c.l.b16 %v43
  %v264 = vunpack.c.h.b16 %v43
  %v265 = vunpack.c.l.b16 %v44
  %v266 = vunpack.c.h.b16 %v44
  %v267 = vunpack.c.l.b16 %v45
  %v268 = vunpack.c.h.b16 %v45
  %v269 = vunpack.c.l.b16 %v46
  %v270 = vunpack.c.h.b16 %v46
  %v271 = vunpack.c.l.b16 %v47
  %v272 = vunpack.c.h.b16 %v47
  %v273 = vunpack.c.l.b16 %v48
  %v274 = vunpack.c.h.b16 %v48
  %v275 = vunpack.c.l.b16 %v49
  %v276 = vunpack.c.h.b16 %v49
  %v277 = vunpack.c.l.b16 %v50
  %v278 = vunpack.c.h.b16 %v50
  %v279 = vunpack.c.l.b16 %v51
  %v280 = vunpack.c.h.b16 %v51
  %v281 = vunpack.c.l.b16 %v52
  %v282 = vunpack.c.h.b16 %v52
  %v283 = vunpack.c.l.b16 %v53
  %v284 = vunpack.c.h.b16 %v53
  %v285 = vunpack.c.l.b16 %v54
  %v286 = vunpack.c.h.b16 %v54
  %v287 = vunpack.c.l.b16 %v55
  %v288 = vunpack.c.h.b16 %v55
  %v289 = vunpack.c.l.b16 %v56
  %v290 = vunpack.c.h.b16 %v56
  %v291 = vunpack.c.l.b16 %v57
  %v292 = vunpack.c.h.b16 %v57
  %v293 = vunpack.c.l.b16 %v58
  %v294 = vunpack.c.h.b16 %v58
  %v295 = vunpack.c.l.b16 %v59
  %v296 = vunpack.c.h.b16 %v59
  %v297 = vunpack.c.l.b16 %v60
  %v298 = vunpack.c.h.b16 %v60
  %v299 = vunpack.c.l.b16 %v61
  %v300 = vunpack.c.h.b16 %v61
  %v301 = vunpack.c.l.b16 %v62
  %v302 = vunpack.c.h.b16 %v62
  %v303 = vunpack.c.l.b16 %v63
  %v304 = vunpack.c.h.b16 %v63
  %v305 = vunpack.c.l.b16 %v64
  %v306 = vunpack.c.h.b16 %v64
  %v307 = vunpack.c.l.b16 %v65
  %v308 = vunpack.c.h.b16 %v65
  %v309 = vunpack.c.l.b16 %v66
  %v310 = vunpack.c.h.b16 %v66
  %v311 = vunpack.c.l.b16 %v67
  %v312 = vunpack.c.h.b16 %v67
  %v313 = vunpack.c.l.b16 %v68
  %v314 = vunpack.c.h.b16 %v68
  %v315 = vunpack.c.l.b16 %v69
  %v316 = vunpack.c.h.b16 %v69
  %v317 = vunpack.c.l.b16 %v70
  %v318 = vunpack.c.h.b16 %v70
  %v319 = vunpack.c.l.b16 %v71
  %v320 = vunpack.c.h.b16 %v71
  %v321 = vunpack.c.l.b16 %v72
  %v322 = vunpack.c.h.b16 %v72
  %v323 = vunpack.c.l.b16 %v73
  %v324 = vunpack.c.h.b16 %v73
  %v325 = vunpack.c.l.b16 %v74
  %v326 = vunpack.c.h.b16 %v74
  %v327 = vunpack.c.l.b16 %v75
  %v328 = vunpack.c.h.b16 %v75
  %v329 = vunpack.c.l.b16 %v76
  %v330 = vunpack.c.h.b16 %v76
  %v331 = vunpack.c.l.b16 %v77
  %v332 = vunpack.c.h.b16 %v77
  %v333 = vunpack.c.l.b16 %v78
  %v334 = vunpack.c.h.b16 %v78
  %v335 = vunpack.c.l.b16 %v79
  %v336 = vunpack.c.h.b16 %v79
  %v337 = vpack.c.b16 %v217, %v209
  %v338 = vpack.c.b16 %v218, %v210
  %v339 = vpack.c.b16 %v219, %v211
  %v340 = vpack.c.b16 %v220, %v212
  %v341 = vpack.c.b16 %v221, %v213
  %v342 = vpack.c.b16 %v222, %v214
  %v343 = vpack.c.b16 %v223, %v215
  %v344 = vpack.c.b16 %v224, %v216
  %v345 = vpack.c.b16 %v233, %v225
  %v346 = vpack.c.b16 %v234, %v226
  %v347 = vpack.c.b16 %v235, %v227
  %v348 = vpack.c.b16 %v236, %v228
  %v349 = vpack.c.b16 %v237, %v229
  %v350 = vpack.c.b16 %v238, %v230
  %v351 = vpack.c.b16 %v239, %v231
  %v352 = vpack.c.b16 %v240, %v232
  %v353 = vpack.c.b16 %v249, %v241
  %v354 = vpack.c.b16 %v250, %v242
  %v355 = vpack.c.b16 %v251, %v243
  %v356 = vpack.c.b16 %v252, %v244
  %v357 = vpack.c.b16 %v253, %v245
  %v358 = vpack.c.b16 %v254, %v246
  %v359 = vpack.c.b16 %v255, %v247
  %v360 = vpack.c.b16 %v256, %v248
  %v361 = vpack.c.b16 %v265, %v257
  %v362 = vpack.c.b16 %v266, %v258
  %v363 = vpack.c.b16 %v267, %v259
  %v364 = vpack.c.b16 %v268, %v260
  %v365 = vpack.c.b16 %v269, %v261
  %v366 = vpack.c.b16 %v270, %v262
  %v367 = vpack.c.b16 %v271, %v263
  %v368 = vpack.c.b16 %v272, %v264
  %v369 = vpack.c.b16 %v281, %v273
  %v370 = vpack.c.b16 %v282, %v274
  %v371 = vpack.c.b16 %v283, %v275
  %v372 = vpack.c.b16 %v284, %v276
  %v373 = vpack.c.b16 %v285, %v277
  %v374 = vpack.c.b16 %v286, %v278
  %v375 = vpack.c.b16 %v287, %v279
  %v376 = vpack.c.b16 %v288, %v280
  %v377 = vpack.c.b16 %v297, %v289
  %v378 = vpack.c.b16 %v298, %v290
  %v379 = vpack.c.b16 %v299, %v291
  %v380 = vpack.c.b16 %v300, %v292
  %v381 = vpack.c.b16 %v301, %v293
  %v382 = vpack.c.b16 %v302, %v294
  %v383 = vpack.c.b16 %v303, %v295
  %v384 = vpack.c.b16 %v304, %v296
  %v385 = vpack.c.b16 %v313, %v305
  %v386 = vpack.c.b16 %v314, %v306
  %v387 = vpack.c.b16 %v315, %v307
  %v388 = vpack.c.b16 %v316, %v308
  %v389 = vpack.c.b16 %v317, %v309
  %v390 = vpack.c.b16 %v318, %v310
  %v391 = vpack.c.b16 %v319, %v311
  %v392 = vpack.c.b16 %v320, %v312
  %v393 = vpack.c.b16 %v329, %v321
  %v394 = vpack.c.b16 %v330, %v322
  %v395 = vpack.c.b16 %v331, %v323
  %v396 = vpack.c.b16 %v332, %v324
  %v397 = vpack.c.b16 %v333, %v325
  %v398 = vpack.c.b16 %v334, %v326
  %v399 = vpack.c.b16 %v335, %v327
  %v400 = vpack.c.b16 %v336, %v328
  %465 = vmatprep.subr.bf16.mxu0 %v394
  %466 = vmatpush1.bf16.xpose.msra.mxu0 %v393
  %467 = vmatprep.subr.bf16.mxu0 %v386
  %468 = vmatpush1.bf16.xpose.msra.mxu0 %v385
  %469 = vmatprep.subr.bf16.mxu0 %v378
  %470 = vmatpush1.bf16.xpose.msra.mxu0 %v377
  %471 = vmatprep.subr.bf16.mxu0 %v370
  %472 = vmatpush1.bf16.xpose.msra.mxu0 %v369
  %473 = vmatprep.subr.bf16.mxu0 %v362
  %474 = vmatpush1.bf16.xpose.msra.mxu0 %v361
  %475 = vmatprep.subr.bf16.mxu0 %v354
  %476 = vmatpush1.bf16.xpose.msra.mxu0 %v353
  %477 = vmatprep.subr.bf16.mxu0 %v346
  %478 = vmatpush1.bf16.xpose.msra.mxu0 %v345
  %479 = vmatprep.subr.bf16.mxu0 %v338
  %480 = vmatpush1.bf16.xpose.msra.mxu0 %v337
  %481 = vmatprep.subr.bf16.mxu0 0
  %482 = vmatpush2.bf16.xpose.msra.mxu0 0
  %483 = vmatprep.subr.bf16.mxu0 0
  %484 = vmatpush2.bf16.xpose.msra.mxu0 0
  %485 = vmatprep.subr.bf16.mxu0 0
  %486 = vmatpush2.bf16.xpose.msra.mxu0 0
  %487 = vmatprep.subr.bf16.mxu0 0
  %488 = vmatpush2.bf16.xpose.msra.mxu0 0
  %489 = vmatprep.subr.bf16.mxu0 0
  %490 = vmatpush2.bf16.xpose.msra.mxu0 0
  %491 = vmatprep.subr.bf16.mxu0 0
  %492 = vmatpush2.bf16.xpose.msra.mxu0 0
  %493 = vmatprep.subr.bf16.mxu0 0
  %494 = vmatpush2.bf16.xpose.msra.mxu0 0
  %495 = vmatprep.subr.bf16.mxu0 0
  %496 = vmatpush2.bf16.xpose.msra.mxu0 0
  %497 = vmatprep.mubr.bf16.mxu0 %v125
  %498 = vmatmul.mubr.bf16.gmra.mxu0 %v111
  %v499 = vpop.f32.mrf.mxu0
  %v500 = vadd.f32 %v85, %v499
  %v501 = vpop.f32.mrf.mxu0
  %v502 = vpop.f32.mrf.mxu0
  %v503 = vpop.f32.mrf.mxu0
  %504 = vdwg.mxu0
  %505 = vmatprep.subr.bf16.mxu0 %v396
  %506 = vmatpush1.bf16.xpose.msra.mxu0 %v395
  %507 = vmatprep.subr.bf16.mxu0 %v388
  %508 = vmatpush1.bf16.xpose.msra.mxu0 %v387
  %509 = vmatprep.subr.bf16.mxu0 %v380
  %510 = vmatpush1.bf16.xpose.msra.mxu0 %v379
  %511 = vmatprep.subr.bf16.mxu0 %v372
  %512 = vmatpush1.bf16.xpose.msra.mxu0 %v371
  %513 = vmatprep.subr.bf16.mxu0 %v364
  %514 = vmatpush1.bf16.xpose.msra.mxu0 %v363
  %515 = vmatprep.subr.bf16.mxu0 %v356
  %516 = vmatpush1.bf16.xpose.msra.mxu0 %v355
  %517 = vmatprep.subr.bf16.mxu0 %v348
  %518 = vmatpush1.bf16.xpose.msra.mxu0 %v347
  %519 = vmatprep.subr.bf16.mxu0 %v340
  %520 = vmatpush1.bf16.xpose.msra.mxu0 %v339
  %521 = vmatprep.subr.bf16.mxu0 0
  %522 = vmatpush2.bf16.xpose.msra.mxu0 0
  %523 = vmatprep.subr.bf16.mxu0 0
  %524 = vmatpush2.bf16.xpose.msra.mxu0 0
  %525 = vmatprep.subr.bf16.mxu0 0
  %526 = vmatpush2.bf16.xpose.msra.mxu0 0
  %527 = vmatprep.subr.bf16.mxu0 0
  %528 = vmatpush2.bf16.xpose.msra.mxu0 0
  %529 = vmatprep.subr.bf16.mxu0 0
  %530 = vmatpush2.bf16.xpose.msra.mxu0 0
  %531 = vmatprep.subr.bf16.mxu0 0
  %532 = vmatpush2.bf16.xpose.msra.mxu0 0
  %533 = vmatprep.subr.bf16.mxu0 0
  %534 = vmatpush2.bf16.xpose.msra.mxu0 0
  %535 = vmatprep.subr.bf16.mxu0 0
  %536 = vmatpush2.bf16.xpose.msra.mxu0 0
  %537 = vmatprep.mubr.bf16.mxu0 %v135
  %538 = vmatmul.mubr.bf16.gmra.mxu0 %v133
  %v539 = vpop.f32.mrf.mxu0
  %v540 = vadd.f32 %v500, %v539
  %v541 = vpop.f32.mrf.mxu0
  %v542 = vpop.f32.mrf.mxu0
  %v543 = vpop.f32.mrf.mxu0
  %544 = vdwg.mxu0
  %545 = vmatprep.subr.bf16.mxu0 %v398
  %546 = vmatpush1.bf16.xpose.msra.mxu0 %v397
  %547 = vmatprep.subr.bf16.mxu0 %v390
  %548 = vmatpush1.bf16.xpose.msra.mxu0 %v389
  %549 = vmatprep.subr.bf16.mxu0 %v382
  %550 = vmatpush1.bf16.xpose.msra.mxu0 %v381
  %551 = vmatprep.subr.bf16.mxu0 %v374
  %552 = vmatpush1.bf16.xpose.msra.mxu0 %v373
  %553 = vmatprep.subr.bf16.mxu0 %v366
  %554 = vmatpush1.bf16.xpose.msra.mxu0 %v365
  %555 = vmatprep.subr.bf16.mxu0 %v358
  %556 = vmatpush1.bf16.xpose.msra.mxu0 %v357
  %557 = vmatprep.subr.bf16.mxu0 %v350
  %558 = vmatpush1.bf16.xpose.msra.mxu0 %v349
  %559 = vmatprep.subr.bf16.mxu0 %v342
  %560 = vmatpush1.bf16.xpose.msra.mxu0 %v341
  %561 = vmatprep.subr.bf16.mxu0 0
  %562 = vmatpush2.bf16.xpose.msra.mxu0 0
  %563 = vmatprep.subr.bf16.mxu0 0
  %564 = vmatpush2.bf16.xpose.msra.mxu0 0
  %565 = vmatprep.subr.bf16.mxu0 0
  %566 = vmatpush2.bf16.xpose.msra.mxu0 0
  %567 = vmatprep.subr.bf16.mxu0 0
  %568 = vmatpush2.bf16.xpose.msra.mxu0 0
  %569 = vmatprep.subr.bf16.mxu0 0
  %570 = vmatpush2.bf16.xpose.msra.mxu0 0
  %571 = vmatprep.subr.bf16.mxu0 0
  %572 = vmatpush2.bf16.xpose.msra.mxu0 0
  %573 = vmatprep.subr.bf16.mxu0 0
  %574 = vmatpush2.bf16.xpose.msra.mxu0 0
  %575 = vmatprep.subr.bf16.mxu0 0
  %576 = vmatpush2.bf16.xpose.msra.mxu0 0
  %577 = vmatprep.mubr.bf16.mxu0 %v132
  %578 = vmatmul.mubr.bf16.gmra.mxu0 %v118
  %v579 = vpop.f32.mrf.mxu0
  %v580 = vadd.f32 %v540, %v579
  %v581 = vpop.f32.mrf.mxu0
  %v582 = vpop.f32.mrf.mxu0
  %v583 = vpop.f32.mrf.mxu0
  %584 = vdwg.mxu0
  %585 = vmatprep.subr.bf16.mxu0 %v400
  %586 = vmatpush1.bf16.xpose.msra.mxu0 %v399
  %587 = vmatprep.subr.bf16.mxu0 %v392
  %588 = vmatpush1.bf16.xpose.msra.mxu0 %v391
  %589 = vmatprep.subr.bf16.mxu0 %v384
  %590 = vmatpush1.bf16.xpose.msra.mxu0 %v383
  %591 = vmatprep.subr.bf16.mxu0 %v376
  %592 = vmatpush1.bf16.xpose.msra.mxu0 %v375
  %593 = vmatprep.subr.bf16.mxu0 %v368
  %594 = vmatpush1.bf16.xpose.msra.mxu0 %v367
  %595 = vmatprep.subr.bf16.mxu0 %v360
  %596 = vmatpush1.bf16.xpose.msra.mxu0 %v359
  %597 = vmatprep.subr.bf16.mxu0 %v352
  %598 = vmatpush1.bf16.xpose.msra.mxu0 %v351
  %599 = vmatprep.subr.bf16.mxu0 %v344
  %600 = vmatpush1.bf16.xpose.msra.mxu0 %v343
  %601 = vmatprep.subr.bf16.mxu0 0
  %602 = vmatpush2.bf16.xpose.msra.mxu0 0
  %603 = vmatprep.subr.bf16.mxu0 0
  %604 = vmatpush2.bf16.xpose.msra.mxu0 0
  %605 = vmatprep.subr.bf16.mxu0 0
  %606 = vmatpush2.bf16.xpose.msra.mxu0 0
  %607 = vmatprep.subr.bf16.mxu0 0
  %608 = vmatpush2.bf16.xpose.msra.mxu0 0
  %609 = vmatprep.subr.bf16.mxu0 0
  %610 = vmatpush2.bf16.xpose.msra.mxu0 0
  %611 = vmatprep.subr.bf16.mxu0 0
  %612 = vmatpush2.bf16.xpose.msra.mxu0 0
  %613 = vmatprep.subr.bf16.mxu0 0
  %614 = vmatpush2.bf16.xpose.msra.mxu0 0
  %615 = vmatprep.subr.bf16.mxu0 0
  %616 = vmatpush2.bf16.xpose.msra.mxu0 0
  %617 = vmatprep.mubr.bf16.mxu0 %v136
  %618 = vmatmul.mubr.bf16.gmra.mxu0 %v134
  %v619 = vpop.f32.mrf.mxu0
  %v620 = vadd.f32 %v580, %v619
  %v621 = vpop.f32.mrf.mxu0
  %v622 = vpop.f32.mrf.mxu0
  %v623 = vpop.f32.mrf.mxu0
  %624 = vdwg.mxu0
  %625 = vst [vmem:[%s3] sm:$0x3] %v620
  // Predicated region
  $region14: #{hyperdqn_forward.11} parent=0 // pred_check
    _
  $region15: #{hyperdqn_forward.11} parent=0 // pred_check_branch
    %627 = sbr.rel (0) target = $region17
  $region16: #{hyperdqn_forward.11} parent=0 // pred_region
    _
  $region17: #{hyperdqn_forward.11} parent=0 // pred_fallthru
    _
  // Predicated region
  $region18: #{hyperdqn_forward.11} parent=0 // pred_check
    _
  $region19: #{hyperdqn_forward.11} parent=0 // pred_check_branch
    %629 = sbr.rel (0) target = $region21
  $region20: #{hyperdqn_forward.11} parent=0 // pred_region
    _
  $region21: #{hyperdqn_forward.11} parent=0 // pred_fallthru
    _

// kernel: hyperdqn_forward.10
$region0: #{hyperdqn_forward.10}
  #allocation0 [shape = 'u32[]', space=smem, size = 0x4, offset = 0x4, fixed_abs, tag = 'smem constant byte address 0x4 - core index']
  #allocation1 [shape = 'u32[144,128]{1,0:T(1,128)}', space=vmem, size = 0x12000, scoped, tag = 'internal scratch']
  %s0 = inlined_call_operand.vmem [shape: bf16[2,8], index: 0, kind: input, shape index: {}]
  %s1 = inlined_call_operand.vmem [shape: bf16[6272,8], index: 1, kind: input, shape index: {}]
  %s2 = inlined_call_operand.vmem [shape: f32[1,6272], index: 2, kind: input, shape index: {}]
  %s3 = inlined_call_operand.vmem [shape: f32[2,6272], index: 3, kind: output, shape index: {}]
  %s4 = sld [smem:[#allocation0]]
  $region22: #{hyperdqn_forward.10} parent=0
    _
  %s6 = ssub.s32 1, %s4
  %s7 = scalar_select 0, %s6, %s4
  // Predicated region
  $region2: #{hyperdqn_forward.10} parent=0 // pred_check
    _
  $region3: #{hyperdqn_forward.10} parent=0 // pred_check_branch
    %9 = sbr.rel (0) target = $region5
  $region4: #{hyperdqn_forward.10} parent=0 // pred_region
    _
  $region5: #{hyperdqn_forward.10} parent=0 // pred_fallthru
    _
  // Predicated region
  $region6: #{hyperdqn_forward.10} parent=0 // pred_check
    _
  $region7: #{hyperdqn_forward.10} parent=0 // pred_check_branch
    %11 = sbr.rel (0) target = $region9
  $region8: #{hyperdqn_forward.10} parent=0 // pred_region
    _
  $region9: #{hyperdqn_forward.10} parent=0 // pred_fallthru
    _
  // Predicated region
  $region10: #{hyperdqn_forward.10} parent=0 // pred_check
    _
  $region11: #{hyperdqn_forward.10} parent=0 // pred_check_branch
    %13 = sbr.rel (0) target = $region13
  $region12: #{hyperdqn_forward.10} parent=0 // pred_region
    _
  $region13: #{hyperdqn_forward.10} parent=0 // pred_fallthru
    _
  %v15 = vld [vmem:[%s0] sm:$0x1]
  %v16 = vld [vmem:[%s1] sm:$0xf]
  %v17 = vld [vmem:[%s1 + $0x4] sm:$0xf]
  %v18 = vld [vmem:[%s1 + $0x8] sm:$0xf]
  %v19 = vld [vmem:[%s1 + $0xc] sm:$0xf]
  %v20 = vld [vmem:[%s1 + $0x10] sm:$0xf]
  %v21 = vld [vmem:[%s1 + $0x14] sm:$0xf]
  %v22 = vld [vmem:[%s1 + $0x18] sm:$0xf]
  %v23 = vld [vmem:[%s1 + $0x1c] sm:$0xf]
  %v24 = vld [vmem:[%s1 + $0x20] sm:$0xf]
  %v25 = vld [vmem:[%s1 + $0x24] sm:$0xf]
  %v26 = vld [vmem:[%s1 + $0x28] sm:$0xf]
  %v27 = vld [vmem:[%s1 + $0x2c] sm:$0xf]
  %v28 = vld [vmem:[%s1 + $0x30] sm:$0xf]
  %v29 = vld [vmem:[%s1 + $0x34] sm:$0xf]
  %v30 = vld [vmem:[%s1 + $0x38] sm:$0xf]
  %v31 = vld [vmem:[%s1 + $0x3c] sm:$0xf]
  %v32 = vld [vmem:[%s1 + $0x40] sm:$0xf]
  %v33 = vld [vmem:[%s1 + $0x44] sm:$0xf]
  %v34 = vld [vmem:[%s1 + $0x48] sm:$0xf]
  %v35 = vld [vmem:[%s1 + $0x4c] sm:$0xf]
  %v36 = vld [vmem:[%s1 + $0x50] sm:$0xf]
  %v37 = vld [vmem:[%s1 + $0x54] sm:$0xf]
  %v38 = vld [vmem:[%s1 + $0x58] sm:$0xf]
  %v39 = vld [vmem:[%s1 + $0x5c] sm:$0xf]
  %v40 = vld [vmem:[%s1 + $0x60] sm:$0xf]
  %v41 = vld [vmem:[%s1 + $0x64] sm:$0xf]
  %v42 = vld [vmem:[%s1 + $0x68] sm:$0xf]
  %v43 = vld [vmem:[%s1 + $0x6c] sm:$0xf]
  %v44 = vld [vmem:[%s1 + $0x70] sm:$0xf]
  %v45 = vld [vmem:[%s1 + $0x74] sm:$0xf]
  %v46 = vld [vmem:[%s1 + $0x78] sm:$0xf]
  %v47 = vld [vmem:[%s1 + $0x7c] sm:$0xf]
  %v48 = vld [vmem:[%s1 + $0x80] sm:$0xf]
  %v49 = vld [vmem:[%s1 + $0x84] sm:$0xf]
  %v50 = vld [vmem:[%s1 + $0x88] sm:$0xf]
  %v51 = vld [vmem:[%s1 + $0x8c] sm:$0xf]
  %v52 = vld [vmem:[%s1 + $0x90] sm:$0xf]
  %v53 = vld [vmem:[%s1 + $0x94] sm:$0xf]
  %v54 = vld [vmem:[%s1 + $0x98] sm:$0xf]
  %v55 = vld [vmem:[%s1 + $0x9c] sm:$0xf]
  %v56 = vld [vmem:[%s1 + $0xa0] sm:$0xf]
  %v57 = vld [vmem:[%s1 + $0xa4] sm:$0xf]
  %v58 = vld [vmem:[%s1 + $0xa8] sm:$0xf]
  %v59 = vld [vmem:[%s1 + $0xac] sm:$0xf]
  %v60 = vld [vmem:[%s1 + $0xb0] sm:$0xf]
  %v61 = vld [vmem:[%s1 + $0xb4] sm:$0xf]
  %v62 = vld [vmem:[%s1 + $0xb8] sm:$0xf]
  %v63 = vld [vmem:[%s1 + $0xbc] sm:$0xf]
  %v64 = vld [vmem:[%s1 + $0xc0] sm:$0xf]
  %v65 = vld [vmem:[%s1 + $0xc4] sm:$0xf]
  %v66 = vld [vmem:[%s1 + $0xc8] sm:$0xf]
  %v67 = vld [vmem:[%s1 + $0xcc] sm:$0xf]
  %v68 = vld [vmem:[%s1 + $0xd0] sm:$0xf]
  %v69 = vld [vmem:[%s1 + $0xd4] sm:$0xf]
  %v70 = vld [vmem:[%s1 + $0xd8] sm:$0xf]
  %v71 = vld [vmem:[%s1 + $0xdc] sm:$0xf]
  %v72 = vld [vmem:[%s1 + $0xe0] sm:$0xf]
  %v73 = vld [vmem:[%s1 + $0xe4] sm:$0xf]
  %v74 = vld [vmem:[%s1 + $0xe8] sm:$0xf]
  %v75 = vld [vmem:[%s1 + $0xec] sm:$0xf]
  %v76 = vld [vmem:[%s1 + $0xf0] sm:$0xf]
  %v77 = vld [vmem:[%s1 + $0xf4] sm:$0xf]
  %v78 = vld [vmem:[%s1 + $0xf8] sm:$0xf]
  %v79 = vld [vmem:[%s1 + $0xfc] sm:$0xf]
  %v80 = vld [vmem:[%s1 + $0x100] sm:$0xf]
  %v81 = vld [vmem:[%s1 + $0x104] sm:$0xf]
  %v82 = vld [vmem:[%s1 + $0x108] sm:$0xf]
  %v83 = vld [vmem:[%s1 + $0x10c] sm:$0xf]
  %v84 = vld [vmem:[%s1 + $0x110] sm:$0xf]
  %v85 = vld [vmem:[%s1 + $0x114] sm:$0xf]
  %v86 = vld [vmem:[%s1 + $0x118] sm:$0xf]
  %v87 = vld [vmem:[%s1 + $0x11c] sm:$0xf]
  %v88 = vld [vmem:[%s1 + $0x120] sm:$0xf]
  %v89 = vld [vmem:[%s1 + $0x124] sm:$0xf]
  %v90 = vld [vmem:[%s1 + $0x128] sm:$0xf]
  %v91 = vld [vmem:[%s1 + $0x12c] sm:$0xf]
  %v92 = vld [vmem:[%s1 + $0x130] sm:$0xf]
  %v93 = vld [vmem:[%s1 + $0x134] sm:$0xf]
  %v94 = vld [vmem:[%s1 + $0x138] sm:$0xf]
  %v95 = vld [vmem:[%s1 + $0x13c] sm:$0xf]
  %v96 = vld [vmem:[%s1 + $0x140] sm:$0xf]
  %v97 = vld [vmem:[%s1 + $0x144] sm:$0xf]
  %v98 = vld [vmem:[%s1 + $0x148] sm:$0xf]
  %v99 = vld [vmem:[%s1 + $0x14c] sm:$0xf]
  %v100 = vld [vmem:[%s1 + $0x150] sm:$0xf]
  %v101 = vld [vmem:[%s1 + $0x154] sm:$0xf]
  %v102 = vld [vmem:[%s1 + $0x158] sm:$0xf]
  %v103 = vld [vmem:[%s1 + $0x15c] sm:$0xf]
  %v104 = vld [vmem:[%s1 + $0x160] sm:$0xf]
  %v105 = vld [vmem:[%s1 + $0x164] sm:$0xf]
  %v106 = vld [vmem:[%s1 + $0x168] sm:$0xf]
  %v107 = vld [vmem:[%s1 + $0x16c] sm:$0xf]
  %v108 = vld [vmem:[%s1 + $0x170] sm:$0xf]
  %v109 = vld [vmem:[%s1 + $0x174] sm:$0xf]
  %v110 = vld [vmem:[%s1 + $0x178] sm:$0xf]
  %v111 = vld [vmem:[%s1 + $0x17c] sm:$0xf]
  %v112 = vld [vmem:[%s1 + $0x180] sm:$0xf]
  %v113 = vld [vmem:[%s1 + $0x184] sm:$0xf]
  %v114 = vld [vmem:[%s1 + $0x188] sm:$0xf]
  %v115 = vld [vmem:[%s1 + $0x18c] sm:$0xf]
  %v116 = vld [vmem:[%s1 + $0x190] sm:$0xf]
  %v117 = vld [vmem:[%s1 + $0x194] sm:$0xf]
  %v118 = vld [vmem:[%s1 + $0x198] sm:$0xf]
  %v119 = vld [vmem:[%s1 + $0x19c] sm:$0xf]
  %v120 = vld [vmem:[%s1 + $0x1a0] sm:$0xf]
  %v121 = vld [vmem:[%s1 + $0x1a4] sm:$0xf]
  %v122 = vld [vmem:[%s1 + $0x1a8] sm:$0xf]
  %v123 = vld [vmem:[%s1 + $0x1ac] sm:$0xf]
  %v124 = vld [vmem:[%s1 + $0x1b0] sm:$0xf]
  %v125 = vld [vmem:[%s1 + $0x1b4] sm:$0xf]
  %v126 = vld [vmem:[%s1 + $0x1b8] sm:$0xf]
  %v127 = vld [vmem:[%s1 + $0x1bc] sm:$0xf]
  %v128 = vld [vmem:[%s1 + $0x1c0] sm:$0xf]
  %v129 = vld [vmem:[%s1 + $0x1c4] sm:$0xf]
  %v130 = vld [vmem:[%s1 + $0x1c8] sm:$0xf]
  %v131 = vld [vmem:[%s1 + $0x1cc] sm:$0xf]
  %v132 = vld [vmem:[%s1 + $0x1d0] sm:$0xf]
  %v133 = vld [vmem:[%s1 + $0x1d4] sm:$0xf]
  %v134 = vld [vmem:[%s1 + $0x1d8] sm:$0xf]
  %v135 = vld [vmem:[%s1 + $0x1dc] sm:$0xf]
  %v136 = vld [vmem:[%s1 + $0x1e0] sm:$0xf]
  %v137 = vld [vmem:[%s1 + $0x1e4] sm:$0xf]
  %v138 = vld [vmem:[%s1 + $0x1e8] sm:$0xf]
  %v139 = vld [vmem:[%s1 + $0x1ec] sm:$0xf]
  %v140 = vld [vmem:[%s1 + $0x1f0] sm:$0xf]
  %v141 = vld [vmem:[%s1 + $0x1f4] sm:$0xf]
  %v142 = vld [vmem:[%s1 + $0x1f8] sm:$0xf]
  %v143 = vld [vmem:[%s1 + $0x1fc] sm:$0xf]
  %v144 = vld [vmem:[%s1 + $0x200] sm:$0xf]
  %v145 = vld [vmem:[%s1 + $0x204] sm:$0xf]
  %v146 = vld [vmem:[%s1 + $0x208] sm:$0xf]
  %v147 = vld [vmem:[%s1 + $0x20c] sm:$0xf]
  %v148 = vld [vmem:[%s1 + $0x210] sm:$0xf]
  %v149 = vld [vmem:[%s1 + $0x214] sm:$0xf]
  %v150 = vld [vmem:[%s1 + $0x218] sm:$0xf]
  %v151 = vld [vmem:[%s1 + $0x21c] sm:$0xf]
  %v152 = vld [vmem:[%s1 + $0x220] sm:$0xf]
  %v153 = vld [vmem:[%s1 + $0x224] sm:$0xf]
  %v154 = vld [vmem:[%s1 + $0x228] sm:$0xf]
  %v155 = vld [vmem:[%s1 + $0x22c] sm:$0xf]
  %v156 = vld [vmem:[%s1 + $0x230] sm:$0xf]
  %v157 = vld [vmem:[%s1 + $0x234] sm:$0xf]
  %v158 = vld [vmem:[%s1 + $0x238] sm:$0xf]
  %v159 = vld [vmem:[%s1 + $0x23c] sm:$0xf]
  %v160 = vld [vmem:[%s1 + $0x240] sm:$0xf]
  %v161 = vld [vmem:[%s1 + $0x244] sm:$0xf]
  %v162 = vld [vmem:[%s1 + $0x248] sm:$0xf]
  %v163 = vld [vmem:[%s1 + $0x24c] sm:$0xf]
  %v164 = vld [vmem:[%s1 + $0x250] sm:$0xf]
  %v165 = vld [vmem:[%s1 + $0x254] sm:$0xf]
  %v166 = vld [vmem:[%s1 + $0x258] sm:$0xf]
  %v167 = vld [vmem:[%s1 + $0x25c] sm:$0xf]
  %v168 = vld [vmem:[%s1 + $0x260] sm:$0xf]
  %v169 = vld [vmem:[%s1 + $0x264] sm:$0xf]
  %v170 = vld [vmem:[%s1 + $0x268] sm:$0xf]
  %v171 = vld [vmem:[%s1 + $0x26c] sm:$0xf]
  %v172 = vld [vmem:[%s1 + $0x270] sm:$0xf]
  %v173 = vld [vmem:[%s1 + $0x274] sm:$0xf]
  %v174 = vld [vmem:[%s1 + $0x278] sm:$0xf]
  %v175 = vld [vmem:[%s1 + $0x27c] sm:$0xf]
  %v176 = vld [vmem:[%s1 + $0x280] sm:$0xf]
  %v177 = vld [vmem:[%s1 + $0x284] sm:$0xf]
  %v178 = vld [vmem:[%s1 + $0x288] sm:$0xf]
  %v179 = vld [vmem:[%s1 + $0x28c] sm:$0xf]
  %v180 = vld [vmem:[%s1 + $0x290] sm:$0xf]
  %v181 = vld [vmem:[%s1 + $0x294] sm:$0xf]
  %v182 = vld [vmem:[%s1 + $0x298] sm:$0xf]
  %v183 = vld [vmem:[%s1 + $0x29c] sm:$0xf]
  %v184 = vld [vmem:[%s1 + $0x2a0] sm:$0xf]
  %v185 = vld [vmem:[%s1 + $0x2a4] sm:$0xf]
  %v186 = vld [vmem:[%s1 + $0x2a8] sm:$0xf]
  %v187 = vld [vmem:[%s1 + $0x2ac] sm:$0xf]
  %v188 = vld [vmem:[%s1 + $0x2b0] sm:$0xf]
  %v189 = vld [vmem:[%s1 + $0x2b4] sm:$0xf]
  %v190 = vld [vmem:[%s1 + $0x2b8] sm:$0xf]
  %v191 = vld [vmem:[%s1 + $0x2bc] sm:$0xf]
  %v192 = vld [vmem:[%s1 + $0x2c0] sm:$0xf]
  %v193 = vld [vmem:[%s1 + $0x2c4] sm:$0xf]
  %v194 = vld [vmem:[%s1 + $0x2c8] sm:$0xf]
  %v195 = vld [vmem:[%s1 + $0x2cc] sm:$0xf]
  %v196 = vld [vmem:[%s1 + $0x2d0] sm:$0xf]
  %v197 = vld [vmem:[%s1 + $0x2d4] sm:$0xf]
  %v198 = vld [vmem:[%s1 + $0x2d8] sm:$0xf]
  %v199 = vld [vmem:[%s1 + $0x2dc] sm:$0xf]
  %v200 = vld [vmem:[%s1 + $0x2e0] sm:$0xf]
  %v201 = vld [vmem:[%s1 + $0x2e4] sm:$0xf]
  %v202 = vld [vmem:[%s1 + $0x2e8] sm:$0xf]
  %v203 = vld [vmem:[%s1 + $0x2ec] sm:$0xf]
  %v204 = vld [vmem:[%s1 + $0x2f0] sm:$0xf]
  %v205 = vld [vmem:[%s1 + $0x2f4] sm:$0xf]
  %v206 = vld [vmem:[%s1 + $0x2f8] sm:$0xf]
  %v207 = vld [vmem:[%s1 + $0x2fc] sm:$0xf]
  %v208 = vld [vmem:[%s1 + $0x300] sm:$0xf]
  %v209 = vld [vmem:[%s1 + $0x304] sm:$0xf]
  %v210 = vld [vmem:[%s1 + $0x308] sm:$0xf]
  %v211 = vld [vmem:[%s1 + $0x30c] sm:$0xf]
  %v212 = vld [vmem:[%s1 + $0x310] sm:$0xf]
  %v213 = vld [vmem:[%s1 + $0x314] sm:$0xf]
  %v214 = vld [vmem:[%s1 + $0x318] sm:$0xf]
  %v215 = vld [vmem:[%s1 + $0x31c] sm:$0xf]
  %v216 = vld [vmem:[%s1 + $0x320] sm:$0xf]
  %v217 = vld [vmem:[%s1 + $0x324] sm:$0xf]
  %v218 = vld [vmem:[%s1 + $0x328] sm:$0xf]
  %v219 = vld [vmem:[%s1 + $0x32c] sm:$0xf]
  %v220 = vld [vmem:[%s1 + $0x330] sm:$0xf]
  %v221 = vld [vmem:[%s1 + $0x334] sm:$0xf]
  %v222 = vld [vmem:[%s1 + $0x338] sm:$0xf]
  %v223 = vld [vmem:[%s1 + $0x33c] sm:$0xf]
  %v224 = vld [vmem:[%s1 + $0x340] sm:$0xf]
  %v225 = vld [vmem:[%s1 + $0x344] sm:$0xf]
  %v226 = vld [vmem:[%s1 + $0x348] sm:$0xf]
  %v227 = vld [vmem:[%s1 + $0x34c] sm:$0xf]
  %v228 = vld [vmem:[%s1 + $0x350] sm:$0xf]
  %v229 = vld [vmem:[%s1 + $0x354] sm:$0xf]
  %v230 = vld [vmem:[%s1 + $0x358] sm:$0xf]
  %v231 = vld [vmem:[%s1 + $0x35c] sm:$0xf]
  %v232 = vld [vmem:[%s1 + $0x360] sm:$0xf]
  %v233 = vld [vmem:[%s1 + $0x364] sm:$0xf]
  %v234 = vld [vmem:[%s1 + $0x368] sm:$0xf]
  %v235 = vld [vmem:[%s1 + $0x36c] sm:$0xf]
  %v236 = vld [vmem:[%s1 + $0x370] sm:$0xf]
  %v237 = vld [vmem:[%s1 + $0x374] sm:$0xf]
  %v238 = vld [vmem:[%s1 + $0x378] sm:$0xf]
  %v239 = vld [vmem:[%s1 + $0x37c] sm:$0xf]
  %v240 = vld [vmem:[%s1 + $0x380] sm:$0xf]
  %v241 = vld [vmem:[%s1 + $0x384] sm:$0xf]
  %v242 = vld [vmem:[%s1 + $0x388] sm:$0xf]
  %v243 = vld [vmem:[%s1 + $0x38c] sm:$0xf]
  %v244 = vld [vmem:[%s1 + $0x390] sm:$0xf]
  %v245 = vld [vmem:[%s1 + $0x394] sm:$0xf]
  %v246 = vld [vmem:[%s1 + $0x398] sm:$0xf]
  %v247 = vld [vmem:[%s1 + $0x39c] sm:$0xf]
  %v248 = vld [vmem:[%s1 + $0x3a0] sm:$0xf]
  %v249 = vld [vmem:[%s1 + $0x3a4] sm:$0xf]
  %v250 = vld [vmem:[%s1 + $0x3a8] sm:$0xf]
  %v251 = vld [vmem:[%s1 + $0x3ac] sm:$0xf]
  %v252 = vld [vmem:[%s1 + $0x3b0] sm:$0xf]
  %v253 = vld [vmem:[%s1 + $0x3b4] sm:$0xf]
  %v254 = vld [vmem:[%s1 + $0x3b8] sm:$0xf]
  %v255 = vld [vmem:[%s1 + $0x3bc] sm:$0xf]
  %v256 = vld [vmem:[%s1 + $0x3c0] sm:$0xf]
  %v257 = vld [vmem:[%s1 + $0x3c4] sm:$0xf]
  %v258 = vld [vmem:[%s1 + $0x3c8] sm:$0xf]
  %v259 = vld [vmem:[%s1 + $0x3cc] sm:$0xf]
  %v260 = vld [vmem:[%s1 + $0x3d0] sm:$0xf]
  %v261 = vld [vmem:[%s1 + $0x3d4] sm:$0xf]
  %v262 = vld [vmem:[%s1 + $0x3d8] sm:$0xf]
  %v263 = vld [vmem:[%s1 + $0x3dc] sm:$0xf]
  %v264 = vld [vmem:[%s1 + $0x3e0] sm:$0xf]
  %v265 = vld [vmem:[%s1 + $0x3e4] sm:$0xf]
  %v266 = vld [vmem:[%s1 + $0x3e8] sm:$0xf]
  %v267 = vld [vmem:[%s1 + $0x3ec] sm:$0xf]
  %v268 = vld [vmem:[%s1 + $0x3f0] sm:$0xf]
  %v269 = vld [vmem:[%s1 + $0x3f4] sm:$0xf]
  %v270 = vld [vmem:[%s1 + $0x3f8] sm:$0xf]
  %v271 = vld [vmem:[%s1 + $0x3fc] sm:$0xf]
  %v272 = vld [vmem:[%s1 + $0x400] sm:$0xf]
  %v273 = vld [vmem:[%s1 + $0x404] sm:$0xf]
  %v274 = vld [vmem:[%s1 + $0x408] sm:$0xf]
  %v275 = vld [vmem:[%s1 + $0x40c] sm:$0xf]
  %v276 = vld [vmem:[%s1 + $0x410] sm:$0xf]
  %v277 = vld [vmem:[%s1 + $0x414] sm:$0xf]
  %v278 = vld [vmem:[%s1 + $0x418] sm:$0xf]
  %v279 = vld [vmem:[%s1 + $0x41c] sm:$0xf]
  %v280 = vld [vmem:[%s1 + $0x420] sm:$0xf]
  %v281 = vld [vmem:[%s1 + $0x424] sm:$0xf]
  %v282 = vld [vmem:[%s1 + $0x428] sm:$0xf]
  %v283 = vld [vmem:[%s1 + $0x42c] sm:$0xf]
  %v284 = vld [vmem:[%s1 + $0x430] sm:$0xf]
  %v285 = vld [vmem:[%s1 + $0x434] sm:$0xf]
  %v286 = vld [vmem:[%s1 + $0x438] sm:$0xf]
  %v287 = vld [vmem:[%s1 + $0x43c] sm:$0xf]
  %v288 = vld [vmem:[%s1 + $0x440] sm:$0xf]
  %v289 = vld [vmem:[%s1 + $0x444] sm:$0xf]
  %v290 = vld [vmem:[%s1 + $0x448] sm:$0xf]
  %v291 = vld [vmem:[%s1 + $0x44c] sm:$0xf]
  %v292 = vld [vmem:[%s1 + $0x450] sm:$0xf]
  %v293 = vld [vmem:[%s1 + $0x454] sm:$0xf]
  %v294 = vld [vmem:[%s1 + $0x458] sm:$0xf]
  %v295 = vld [vmem:[%s1 + $0x45c] sm:$0xf]
  %v296 = vld [vmem:[%s1 + $0x460] sm:$0xf]
  %v297 = vld [vmem:[%s1 + $0x464] sm:$0xf]
  %v298 = vld [vmem:[%s1 + $0x468] sm:$0xf]
  %v299 = vld [vmem:[%s1 + $0x46c] sm:$0xf]
  %v300 = vld [vmem:[%s1 + $0x470] sm:$0xf]
  %v301 = vld [vmem:[%s1 + $0x474] sm:$0xf]
  %v302 = vld [vmem:[%s1 + $0x478] sm:$0xf]
  %v303 = vld [vmem:[%s1 + $0x47c] sm:$0xf]
  %v304 = vld [vmem:[%s1 + $0x480] sm:$0xf]
  %v305 = vld [vmem:[%s1 + $0x484] sm:$0xf]
  %v306 = vld [vmem:[%s1 + $0x488] sm:$0xf]
  %v307 = vld [vmem:[%s1 + $0x48c] sm:$0xf]
  %v308 = vld [vmem:[%s1 + $0x490] sm:$0xf]
  %v309 = vld [vmem:[%s1 + $0x494] sm:$0xf]
  %v310 = vld [vmem:[%s1 + $0x498] sm:$0xf]
  %v311 = vld [vmem:[%s1 + $0x49c] sm:$0xf]
  %v312 = vld [vmem:[%s1 + $0x4a0] sm:$0xf]
  %v313 = vld [vmem:[%s1 + $0x4a4] sm:$0xf]
  %v314 = vld [vmem:[%s1 + $0x4a8] sm:$0xf]
  %v315 = vld [vmem:[%s1 + $0x4ac] sm:$0xf]
  %v316 = vld [vmem:[%s1 + $0x4b0] sm:$0xf]
  %v317 = vld [vmem:[%s1 + $0x4b4] sm:$0xf]
  %v318 = vld [vmem:[%s1 + $0x4b8] sm:$0xf]
  %v319 = vld [vmem:[%s1 + $0x4bc] sm:$0xf]
  %v320 = vld [vmem:[%s1 + $0x4c0] sm:$0xf]
  %v321 = vld [vmem:[%s1 + $0x4c4] sm:$0xf]
  %v322 = vld [vmem:[%s1 + $0x4c8] sm:$0xf]
  %v323 = vld [vmem:[%s1 + $0x4cc] sm:$0xf]
  %v324 = vld [vmem:[%s1 + $0x4d0] sm:$0xf]
  %v325 = vld [vmem:[%s1 + $0x4d4] sm:$0xf]
  %v326 = vld [vmem:[%s1 + $0x4d8] sm:$0xf]
  %v327 = vld [vmem:[%s1 + $0x4dc] sm:$0xf]
  %v328 = vld [vmem:[%s1 + $0x4e0] sm:$0xf]
  %v329 = vld [vmem:[%s1 + $0x4e4] sm:$0xf]
  %v330 = vld [vmem:[%s1 + $0x4e8] sm:$0xf]
  %v331 = vld [vmem:[%s1 + $0x4ec] sm:$0xf]
  %v332 = vld [vmem:[%s1 + $0x4f0] sm:$0xf]
  %v333 = vld [vmem:[%s1 + $0x4f4] sm:$0xf]
  %v334 = vld [vmem:[%s1 + $0x4f8] sm:$0xf]
  %v335 = vld [vmem:[%s1 + $0x4fc] sm:$0xf]
  %v336 = vld [vmem:[%s1 + $0x500] sm:$0xf]
  %v337 = vld [vmem:[%s1 + $0x504] sm:$0xf]
  %v338 = vld [vmem:[%s1 + $0x508] sm:$0xf]
  %v339 = vld [vmem:[%s1 + $0x50c] sm:$0xf]
  %v340 = vld [vmem:[%s1 + $0x510] sm:$0xf]
  %v341 = vld [vmem:[%s1 + $0x514] sm:$0xf]
  %v342 = vld [vmem:[%s1 + $0x518] sm:$0xf]
  %v343 = vld [vmem:[%s1 + $0x51c] sm:$0xf]
  %v344 = vld [vmem:[%s1 + $0x520] sm:$0xf]
  %v345 = vld [vmem:[%s1 + $0x524] sm:$0xf]
  %v346 = vld [vmem:[%s1 + $0x528] sm:$0xf]
  %v347 = vld [vmem:[%s1 + $0x52c] sm:$0xf]
  %v348 = vld [vmem:[%s1 + $0x530] sm:$0xf]
  %v349 = vld [vmem:[%s1 + $0x534] sm:$0xf]
  %v350 = vld [vmem:[%s1 + $0x538] sm:$0xf]
  %v351 = vld [vmem:[%s1 + $0x53c] sm:$0xf]
  %v352 = vld [vmem:[%s1 + $0x540] sm:$0xf]
  %v353 = vld [vmem:[%s1 + $0x544] sm:$0xf]
  %v354 = vld [vmem:[%s1 + $0x548] sm:$0xf]
  %v355 = vld [vmem:[%s1 + $0x54c] sm:$0xf]
  %v356 = vld [vmem:[%s1 + $0x550] sm:$0xf]
  %v357 = vld [vmem:[%s1 + $0x554] sm:$0xf]
  %v358 = vld [vmem:[%s1 + $0x558] sm:$0xf]
  %v359 = vld [vmem:[%s1 + $0x55c] sm:$0xf]
  %v360 = vld [vmem:[%s1 + $0x560] sm:$0xf]
  %v361 = vld [vmem:[%s1 + $0x564] sm:$0xf]
  %v362 = vld [vmem:[%s1 + $0x568] sm:$0xf]
  %v363 = vld [vmem:[%s1 + $0x56c] sm:$0xf]
  %v364 = vld [vmem:[%s1 + $0x570] sm:$0xf]
  %v365 = vld [vmem:[%s1 + $0x574] sm:$0xf]
  %v366 = vld [vmem:[%s1 + $0x578] sm:$0xf]
  %v367 = vld [vmem:[%s1 + $0x57c] sm:$0xf]
  %v368 = vld [vmem:[%s1 + $0x580] sm:$0xf]
  %v369 = vld [vmem:[%s1 + $0x584] sm:$0xf]
  %v370 = vld [vmem:[%s1 + $0x588] sm:$0xf]
  %v371 = vld [vmem:[%s1 + $0x58c] sm:$0xf]
  %v372 = vld [vmem:[%s1 + $0x590] sm:$0xf]
  %v373 = vld [vmem:[%s1 + $0x594] sm:$0xf]
  %v374 = vld [vmem:[%s1 + $0x598] sm:$0xf]
  %v375 = vld [vmem:[%s1 + $0x59c] sm:$0xf]
  %v376 = vld [vmem:[%s1 + $0x5a0] sm:$0xf]
  %v377 = vld [vmem:[%s1 + $0x5a4] sm:$0xf]
  %v378 = vld [vmem:[%s1 + $0x5a8] sm:$0xf]
  %v379 = vld [vmem:[%s1 + $0x5ac] sm:$0xf]
  %v380 = vld [vmem:[%s1 + $0x5b0] sm:$0xf]
  %v381 = vld [vmem:[%s1 + $0x5b4] sm:$0xf]
  %v382 = vld [vmem:[%s1 + $0x5b8] sm:$0xf]
  %v383 = vld [vmem:[%s1 + $0x5bc] sm:$0xf]
  %v384 = vld [vmem:[%s1 + $0x5c0] sm:$0xf]
  %v385 = vld [vmem:[%s1 + $0x5c4] sm:$0xf]
  %v386 = vld [vmem:[%s1 + $0x5c8] sm:$0xf]
  %v387 = vld [vmem:[%s1 + $0x5cc] sm:$0xf]
  %v388 = vld [vmem:[%s1 + $0x5d0] sm:$0xf]
  %v389 = vld [vmem:[%s1 + $0x5d4] sm:$0xf]
  %v390 = vld [vmem:[%s1 + $0x5d8] sm:$0xf]
  %v391 = vld [vmem:[%s1 + $0x5dc] sm:$0xf]
  %v392 = vld [vmem:[%s1 + $0x5e0] sm:$0xf]
  %v393 = vld [vmem:[%s1 + $0x5e4] sm:$0xf]
  %v394 = vld [vmem:[%s1 + $0x5e8] sm:$0xf]
  %v395 = vld [vmem:[%s1 + $0x5ec] sm:$0xf]
  %v396 = vld [vmem:[%s1 + $0x5f0] sm:$0xf]
  %v397 = vld [vmem:[%s1 + $0x5f4] sm:$0xf]
  %v398 = vld [vmem:[%s1 + $0x5f8] sm:$0xf]
  %v399 = vld [vmem:[%s1 + $0x5fc] sm:$0xf]
  %v400 = vld [vmem:[%s1 + $0x600] sm:$0xf]
  %v401 = vld [vmem:[%s1 + $0x604] sm:$0xf]
  %v402 = vld [vmem:[%s1 + $0x608] sm:$0xf]
  %v403 = vld [vmem:[%s1 + $0x60c] sm:$0xf]
  %v404 = vld [vmem:[%s1 + $0x610] sm:$0xf]
  %v405 = vld [vmem:[%s1 + $0x614] sm:$0xf]
  %v406 = vld [vmem:[%s1 + $0x618] sm:$0xf]
  %v407 = vld [vmem:[%s1 + $0x61c] sm:$0xf]
  %v408 = vld [vmem:[%s1 + $0x620] sm:$0xf]
  %v409 = vld [vmem:[%s1 + $0x624] sm:$0xf]
  %v410 = vld [vmem:[%s1 + $0x628] sm:$0xf]
  %v411 = vld [vmem:[%s1 + $0x62c] sm:$0xf]
  %v412 = vld [vmem:[%s1 + $0x630] sm:$0xf]
  %v413 = vld [vmem:[%s1 + $0x634] sm:$0xf]
  %v414 = vld [vmem:[%s1 + $0x638] sm:$0xf]
  %v415 = vld [vmem:[%s1 + $0x63c] sm:$0xf]
  %v416 = vld [vmem:[%s1 + $0x640] sm:$0xf]
  %v417 = vld [vmem:[%s1 + $0x644] sm:$0xf]
  %v418 = vld [vmem:[%s1 + $0x648] sm:$0xf]
  %v419 = vld [vmem:[%s1 + $0x64c] sm:$0xf]
  %v420 = vld [vmem:[%s1 + $0x650] sm:$0xf]
  %v421 = vld [vmem:[%s1 + $0x654] sm:$0xf]
  %v422 = vld [vmem:[%s1 + $0x658] sm:$0xf]
  %v423 = vld [vmem:[%s1 + $0x65c] sm:$0xf]
  %v424 = vld [vmem:[%s1 + $0x660] sm:$0xf]
  %v425 = vld [vmem:[%s1 + $0x664] sm:$0xf]
  %v426 = vld [vmem:[%s1 + $0x668] sm:$0xf]
  %v427 = vld [vmem:[%s1 + $0x66c] sm:$0xf]
  %v428 = vld [vmem:[%s1 + $0x670] sm:$0xf]
  %v429 = vld [vmem:[%s1 + $0x674] sm:$0xf]
  %v430 = vld [vmem:[%s1 + $0x678] sm:$0xf]
  %v431 = vld [vmem:[%s1 + $0x67c] sm:$0xf]
  %v432 = vld [vmem:[%s1 + $0x680] sm:$0xf]
  %v433 = vld [vmem:[%s1 + $0x684] sm:$0xf]
  %v434 = vld [vmem:[%s1 + $0x688] sm:$0xf]
  %v435 = vld [vmem:[%s1 + $0x68c] sm:$0xf]
  %v436 = vld [vmem:[%s1 + $0x690] sm:$0xf]
  %v437 = vld [vmem:[%s1 + $0x694] sm:$0xf]
  %v438 = vld [vmem:[%s1 + $0x698] sm:$0xf]
  %v439 = vld [vmem:[%s1 + $0x69c] sm:$0xf]
  %v440 = vld [vmem:[%s1 + $0x6a0] sm:$0xf]
  %v441 = vld [vmem:[%s1 + $0x6a4] sm:$0xf]
  %v442 = vld [vmem:[%s1 + $0x6a8] sm:$0xf]
  %v443 = vld [vmem:[%s1 + $0x6ac] sm:$0xf]
  %v444 = vld [vmem:[%s1 + $0x6b0] sm:$0xf]
  %v445 = vld [vmem:[%s1 + $0x6b4] sm:$0xf]
  %v446 = vld [vmem:[%s1 + $0x6b8] sm:$0xf]
  %v447 = vld [vmem:[%s1 + $0x6bc] sm:$0xf]
  %v448 = vld [vmem:[%s1 + $0x6c0] sm:$0xf]
  %v449 = vld [vmem:[%s1 + $0x6c4] sm:$0xf]
  %v450 = vld [vmem:[%s1 + $0x6c8] sm:$0xf]
  %v451 = vld [vmem:[%s1 + $0x6cc] sm:$0xf]
  %v452 = vld [vmem:[%s1 + $0x6d0] sm:$0xf]
  %v453 = vld [vmem:[%s1 + $0x6d4] sm:$0xf]
  %v454 = vld [vmem:[%s1 + $0x6d8] sm:$0xf]
  %v455 = vld [vmem:[%s1 + $0x6dc] sm:$0xf]
  %v456 = vld [vmem:[%s1 + $0x6e0] sm:$0xf]
  %v457 = vld [vmem:[%s1 + $0x6e4] sm:$0xf]
  %v458 = vld [vmem:[%s1 + $0x6e8] sm:$0xf]
  %v459 = vld [vmem:[%s1 + $0x6ec] sm:$0xf]
  %v460 = vld [vmem:[%s1 + $0x6f0] sm:$0xf]
  %v461 = vld [vmem:[%s1 + $0x6f4] sm:$0xf]
  %v462 = vld [vmem:[%s1 + $0x6f8] sm:$0xf]
  %v463 = vld [vmem:[%s1 + $0x6fc] sm:$0xf]
  %v464 = vld [vmem:[%s1 + $0x700] sm:$0xf]
  %v465 = vld [vmem:[%s1 + $0x704] sm:$0xf]
  %v466 = vld [vmem:[%s1 + $0x708] sm:$0xf]
  %v467 = vld [vmem:[%s1 + $0x70c] sm:$0xf]
  %v468 = vld [vmem:[%s1 + $0x710] sm:$0xf]
  %v469 = vld [vmem:[%s1 + $0x714] sm:$0xf]
  %v470 = vld [vmem:[%s1 + $0x718] sm:$0xf]
  %v471 = vld [vmem:[%s1 + $0x71c] sm:$0xf]
  %v472 = vld [vmem:[%s1 + $0x720] sm:$0xf]
  %v473 = vld [vmem:[%s1 + $0x724] sm:$0xf]
  %v474 = vld [vmem:[%s1 + $0x728] sm:$0xf]
  %v475 = vld [vmem:[%s1 + $0x72c] sm:$0xf]
  %v476 = vld [vmem:[%s1 + $0x730] sm:$0xf]
  %v477 = vld [vmem:[%s1 + $0x734] sm:$0xf]
  %v478 = vld [vmem:[%s1 + $0x738] sm:$0xf]
  %v479 = vld [vmem:[%s1 + $0x73c] sm:$0xf]
  %v480 = vld [vmem:[%s1 + $0x740] sm:$0xf]
  %v481 = vld [vmem:[%s1 + $0x744] sm:$0xf]
  %v482 = vld [vmem:[%s1 + $0x748] sm:$0xf]
  %v483 = vld [vmem:[%s1 + $0x74c] sm:$0xf]
  %v484 = vld [vmem:[%s1 + $0x750] sm:$0xf]
  %v485 = vld [vmem:[%s1 + $0x754] sm:$0xf]
  %v486 = vld [vmem:[%s1 + $0x758] sm:$0xf]
  %v487 = vld [vmem:[%s1 + $0x75c] sm:$0xf]
  %v488 = vld [vmem:[%s1 + $0x760] sm:$0xf]
  %v489 = vld [vmem:[%s1 + $0x764] sm:$0xf]
  %v490 = vld [vmem:[%s1 + $0x768] sm:$0xf]
  %v491 = vld [vmem:[%s1 + $0x76c] sm:$0xf]
  %v492 = vld [vmem:[%s1 + $0x770] sm:$0xf]
  %v493 = vld [vmem:[%s1 + $0x774] sm:$0xf]
  %v494 = vld [vmem:[%s1 + $0x778] sm:$0xf]
  %v495 = vld [vmem:[%s1 + $0x77c] sm:$0xf]
  %v496 = vld [vmem:[%s1 + $0x780] sm:$0xf]
  %v497 = vld [vmem:[%s1 + $0x784] sm:$0xf]
  %v498 = vld [vmem:[%s1 + $0x788] sm:$0xf]
  %v499 = vld [vmem:[%s1 + $0x78c] sm:$0xf]
  %v500 = vld [vmem:[%s1 + $0x790] sm:$0xf]
  %v501 = vld [vmem:[%s1 + $0x794] sm:$0xf]
  %v502 = vld [vmem:[%s1 + $0x798] sm:$0xf]
  %v503 = vld [vmem:[%s1 + $0x79c] sm:$0xf]
  %v504 = vld [vmem:[%s1 + $0x7a0] sm:$0xf]
  %v505 = vld [vmem:[%s1 + $0x7a4] sm:$0xf]
  %v506 = vld [vmem:[%s1 + $0x7a8] sm:$0xf]
  %v507 = vld [vmem:[%s1 + $0x7ac] sm:$0xf]
  %v508 = vld [vmem:[%s1 + $0x7b0] sm:$0xf]
  %v509 = vld [vmem:[%s1 + $0x7b4] sm:$0xf]
  %v510 = vld [vmem:[%s1 + $0x7b8] sm:$0xf]
  %v511 = vld [vmem:[%s1 + $0x7bc] sm:$0xf]
  %v512 = vld [vmem:[%s1 + $0x7c0] sm:$0xf]
  %v513 = vld [vmem:[%s1 + $0x7c4] sm:$0xf]
  %v514 = vld [vmem:[%s1 + $0x7c8] sm:$0xf]
  %v515 = vld [vmem:[%s1 + $0x7cc] sm:$0xf]
  %v516 = vld [vmem:[%s1 + $0x7d0] sm:$0xf]
  %v517 = vld [vmem:[%s1 + $0x7d4] sm:$0xf]
  %v518 = vld [vmem:[%s1 + $0x7d8] sm:$0xf]
  %v519 = vld [vmem:[%s1 + $0x7dc] sm:$0xf]
  %v520 = vld [vmem:[%s1 + $0x7e0] sm:$0xf]
  %v521 = vld [vmem:[%s1 + $0x7e4] sm:$0xf]
  %v522 = vld [vmem:[%s1 + $0x7e8] sm:$0xf]
  %v523 = vld [vmem:[%s1 + $0x7ec] sm:$0xf]
  %v524 = vld [vmem:[%s1 + $0x7f0] sm:$0xf]
  %v525 = vld [vmem:[%s1 + $0x7f4] sm:$0xf]
  %v526 = vld [vmem:[%s1 + $0x7f8] sm:$0xf]
  %v527 = vld [vmem:[%s1 + $0x7fc] sm:$0xf]
  %v528 = vld [vmem:[%s1 + $0x800] sm:$0xf]
  %v529 = vld [vmem:[%s1 + $0x804] sm:$0xf]
  %v530 = vld [vmem:[%s1 + $0x808] sm:$0xf]
  %v531 = vld [vmem:[%s1 + $0x80c] sm:$0xf]
  %v532 = vld [vmem:[%s1 + $0x810] sm:$0xf]
  %v533 = vld [vmem:[%s1 + $0x814] sm:$0xf]
  %v534 = vld [vmem:[%s1 + $0x818] sm:$0xf]
  %v535 = vld [vmem:[%s1 + $0x81c] sm:$0xf]
  %v536 = vld [vmem:[%s1 + $0x820] sm:$0xf]
  %v537 = vld [vmem:[%s1 + $0x824] sm:$0xf]
  %v538 = vld [vmem:[%s1 + $0x828] sm:$0xf]
  %v539 = vld [vmem:[%s1 + $0x82c] sm:$0xf]
  %v540 = vld [vmem:[%s1 + $0x830] sm:$0xf]
  %v541 = vld [vmem:[%s1 + $0x834] sm:$0xf]
  %v542 = vld [vmem:[%s1 + $0x838] sm:$0xf]
  %v543 = vld [vmem:[%s1 + $0x83c] sm:$0xf]
  %v544 = vld [vmem:[%s1 + $0x840] sm:$0xf]
  %v545 = vld [vmem:[%s1 + $0x844] sm:$0xf]
  %v546 = vld [vmem:[%s1 + $0x848] sm:$0xf]
  %v547 = vld [vmem:[%s1 + $0x84c] sm:$0xf]
  %v548 = vld [vmem:[%s1 + $0x850] sm:$0xf]
  %v549 = vld [vmem:[%s1 + $0x854] sm:$0xf]
  %v550 = vld [vmem:[%s1 + $0x858] sm:$0xf]
  %v551 = vld [vmem:[%s1 + $0x85c] sm:$0xf]
  %v552 = vld [vmem:[%s1 + $0x860] sm:$0xf]
  %v553 = vld [vmem:[%s1 + $0x864] sm:$0xf]
  %v554 = vld [vmem:[%s1 + $0x868] sm:$0xf]
  %v555 = vld [vmem:[%s1 + $0x86c] sm:$0xf]
  %v556 = vld [vmem:[%s1 + $0x870] sm:$0xf]
  %v557 = vld [vmem:[%s1 + $0x874] sm:$0xf]
  %v558 = vld [vmem:[%s1 + $0x878] sm:$0xf]
  %v559 = vld [vmem:[%s1 + $0x87c] sm:$0xf]
  %v560 = vld [vmem:[%s1 + $0x880] sm:$0xf]
  %v561 = vld [vmem:[%s1 + $0x884] sm:$0xf]
  %v562 = vld [vmem:[%s1 + $0x888] sm:$0xf]
  %v563 = vld [vmem:[%s1 + $0x88c] sm:$0xf]
  %v564 = vld [vmem:[%s1 + $0x890] sm:$0xf]
  %v565 = vld [vmem:[%s1 + $0x894] sm:$0xf]
  %v566 = vld [vmem:[%s1 + $0x898] sm:$0xf]
  %v567 = vld [vmem:[%s1 + $0x89c] sm:$0xf]
  %v568 = vld [vmem:[%s1 + $0x8a0] sm:$0xf]
  %v569 = vld [vmem:[%s1 + $0x8a4] sm:$0xf]
  %v570 = vld [vmem:[%s1 + $0x8a8] sm:$0xf]
  %v571 = vld [vmem:[%s1 + $0x8ac] sm:$0xf]
  %v572 = vld [vmem:[%s1 + $0x8b0] sm:$0xf]
  %v573 = vld [vmem:[%s1 + $0x8b4] sm:$0xf]
  %v574 = vld [vmem:[%s1 + $0x8b8] sm:$0xf]
  %v575 = vld [vmem:[%s1 + $0x8bc] sm:$0xf]
  %v576 = vld [vmem:[%s1 + $0x8c0] sm:$0xf]
  %v577 = vld [vmem:[%s1 + $0x8c4] sm:$0xf]
  %v578 = vld [vmem:[%s1 + $0x8c8] sm:$0xf]
  %v579 = vld [vmem:[%s1 + $0x8cc] sm:$0xf]
  %v580 = vld [vmem:[%s1 + $0x8d0] sm:$0xf]
  %v581 = vld [vmem:[%s1 + $0x8d4] sm:$0xf]
  %v582 = vld [vmem:[%s1 + $0x8d8] sm:$0xf]
  %v583 = vld [vmem:[%s1 + $0x8dc] sm:$0xf]
  %v584 = vld [vmem:[%s1 + $0x8e0] sm:$0xf]
  %v585 = vld [vmem:[%s1 + $0x8e4] sm:$0xf]
  %v586 = vld [vmem:[%s1 + $0x8e8] sm:$0xf]
  %v587 = vld [vmem:[%s1 + $0x8ec] sm:$0xf]
  %v588 = vld [vmem:[%s1 + $0x8f0] sm:$0xf]
  %v589 = vld [vmem:[%s1 + $0x8f4] sm:$0xf]
  %v590 = vld [vmem:[%s1 + $0x8f8] sm:$0xf]
  %v591 = vld [vmem:[%s1 + $0x8fc] sm:$0xf]
  %v592 = vld [vmem:[%s1 + $0x900] sm:$0xf]
  %v593 = vld [vmem:[%s1 + $0x904] sm:$0xf]
  %v594 = vld [vmem:[%s1 + $0x908] sm:$0xf]
  %v595 = vld [vmem:[%s1 + $0x90c] sm:$0xf]
  %v596 = vld [vmem:[%s1 + $0x910] sm:$0xf]
  %v597 = vld [vmem:[%s1 + $0x914] sm:$0xf]
  %v598 = vld [vmem:[%s1 + $0x918] sm:$0xf]
  %v599 = vld [vmem:[%s1 + $0x91c] sm:$0xf]
  %v600 = vld [vmem:[%s1 + $0x920] sm:$0xf]
  %v601 = vld [vmem:[%s1 + $0x924] sm:$0xf]
  %v602 = vld [vmem:[%s1 + $0x928] sm:$0xf]
  %v603 = vld [vmem:[%s1 + $0x92c] sm:$0xf]
  %v604 = vld [vmem:[%s1 + $0x930] sm:$0xf]
  %v605 = vld [vmem:[%s1 + $0x934] sm:$0xf]
  %v606 = vld [vmem:[%s1 + $0x938] sm:$0xf]
  %v607 = vld [vmem:[%s1 + $0x93c] sm:$0xf]
  %v608 = vld [vmem:[%s1 + $0x940] sm:$0xf]
  %v609 = vld [vmem:[%s1 + $0x944] sm:$0xf]
  %v610 = vld [vmem:[%s1 + $0x948] sm:$0xf]
  %v611 = vld [vmem:[%s1 + $0x94c] sm:$0xf]
  %v612 = vld [vmem:[%s1 + $0x950] sm:$0xf]
  %v613 = vld [vmem:[%s1 + $0x954] sm:$0xf]
  %v614 = vld [vmem:[%s1 + $0x958] sm:$0xf]
  %v615 = vld [vmem:[%s1 + $0x95c] sm:$0xf]
  %v616 = vld [vmem:[%s1 + $0x960] sm:$0xf]
  %v617 = vld [vmem:[%s1 + $0x964] sm:$0xf]
  %v618 = vld [vmem:[%s1 + $0x968] sm:$0xf]
  %v619 = vld [vmem:[%s1 + $0x96c] sm:$0xf]
  %v620 = vld [vmem:[%s1 + $0x970] sm:$0xf]
  %v621 = vld [vmem:[%s1 + $0x974] sm:$0xf]
  %v622 = vld [vmem:[%s1 + $0x978] sm:$0xf]
  %v623 = vld [vmem:[%s1 + $0x97c] sm:$0xf]
  %v624 = vld [vmem:[%s1 + $0x980] sm:$0xf]
  %v625 = vld [vmem:[%s1 + $0x984] sm:$0xf]
  %v626 = vld [vmem:[%s1 + $0x988] sm:$0xf]
  %v627 = vld [vmem:[%s1 + $0x98c] sm:$0xf]
  %v628 = vld [vmem:[%s1 + $0x990] sm:$0xf]
  %v629 = vld [vmem:[%s1 + $0x994] sm:$0xf]
  %v630 = vld [vmem:[%s1 + $0x998] sm:$0xf]
  %v631 = vld [vmem:[%s1 + $0x99c] sm:$0xf]
  %v632 = vld [vmem:[%s1 + $0x9a0] sm:$0xf]
  %v633 = vld [vmem:[%s1 + $0x9a4] sm:$0xf]
  %v634 = vld [vmem:[%s1 + $0x9a8] sm:$0xf]
  %v635 = vld [vmem:[%s1 + $0x9ac] sm:$0xf]
  %v636 = vld [vmem:[%s1 + $0x9b0] sm:$0xf]
  %v637 = vld [vmem:[%s1 + $0x9b4] sm:$0xf]
  %v638 = vld [vmem:[%s1 + $0x9b8] sm:$0xf]
  %v639 = vld [vmem:[%s1 + $0x9bc] sm:$0xf]
  %v640 = vld [vmem:[%s1 + $0x9c0] sm:$0xf]
  %v641 = vld [vmem:[%s1 + $0x9c4] sm:$0xf]
  %v642 = vld [vmem:[%s1 + $0x9c8] sm:$0xf]
  %v643 = vld [vmem:[%s1 + $0x9cc] sm:$0xf]
  %v644 = vld [vmem:[%s1 + $0x9d0] sm:$0xf]
  %v645 = vld [vmem:[%s1 + $0x9d4] sm:$0xf]
  %v646 = vld [vmem:[%s1 + $0x9d8] sm:$0xf]
  %v647 = vld [vmem:[%s1 + $0x9dc] sm:$0xf]
  %v648 = vld [vmem:[%s1 + $0x9e0] sm:$0xf]
  %v649 = vld [vmem:[%s1 + $0x9e4] sm:$0xf]
  %v650 = vld [vmem:[%s1 + $0x9e8] sm:$0xf]
  %v651 = vld [vmem:[%s1 + $0x9ec] sm:$0xf]
  %v652 = vld [vmem:[%s1 + $0x9f0] sm:$0xf]
  %v653 = vld [vmem:[%s1 + $0x9f4] sm:$0xf]
  %v654 = vld [vmem:[%s1 + $0x9f8] sm:$0xf]
  %v655 = vld [vmem:[%s1 + $0x9fc] sm:$0xf]
  %v656 = vld [vmem:[%s1 + $0xa00] sm:$0xf]
  %v657 = vld [vmem:[%s1 + $0xa04] sm:$0xf]
  %v658 = vld [vmem:[%s1 + $0xa08] sm:$0xf]
  %v659 = vld [vmem:[%s1 + $0xa0c] sm:$0xf]
  %v660 = vld [vmem:[%s1 + $0xa10] sm:$0xf]
  %v661 = vld [vmem:[%s1 + $0xa14] sm:$0xf]
  %v662 = vld [vmem:[%s1 + $0xa18] sm:$0xf]
  %v663 = vld [vmem:[%s1 + $0xa1c] sm:$0xf]
  %v664 = vld [vmem:[%s1 + $0xa20] sm:$0xf]
  %v665 = vld [vmem:[%s1 + $0xa24] sm:$0xf]
  %v666 = vld [vmem:[%s1 + $0xa28] sm:$0xf]
  %v667 = vld [vmem:[%s1 + $0xa2c] sm:$0xf]
  %v668 = vld [vmem:[%s1 + $0xa30] sm:$0xf]
  %v669 = vld [vmem:[%s1 + $0xa34] sm:$0xf]
  %v670 = vld [vmem:[%s1 + $0xa38] sm:$0xf]
  %v671 = vld [vmem:[%s1 + $0xa3c] sm:$0xf]
  %v672 = vld [vmem:[%s1 + $0xa40] sm:$0xf]
  %v673 = vld [vmem:[%s1 + $0xa44] sm:$0xf]
  %v674 = vld [vmem:[%s1 + $0xa48] sm:$0xf]
  %v675 = vld [vmem:[%s1 + $0xa4c] sm:$0xf]
  %v676 = vld [vmem:[%s1 + $0xa50] sm:$0xf]
  %v677 = vld [vmem:[%s1 + $0xa54] sm:$0xf]
  %v678 = vld [vmem:[%s1 + $0xa58] sm:$0xf]
  %v679 = vld [vmem:[%s1 + $0xa5c] sm:$0xf]
  %v680 = vld [vmem:[%s1 + $0xa60] sm:$0xf]
  %v681 = vld [vmem:[%s1 + $0xa64] sm:$0xf]
  %v682 = vld [vmem:[%s1 + $0xa68] sm:$0xf]
  %v683 = vld [vmem:[%s1 + $0xa6c] sm:$0xf]
  %v684 = vld [vmem:[%s1 + $0xa70] sm:$0xf]
  %v685 = vld [vmem:[%s1 + $0xa74] sm:$0xf]
  %v686 = vld [vmem:[%s1 + $0xa78] sm:$0xf]
  %v687 = vld [vmem:[%s1 + $0xa7c] sm:$0xf]
  %v688 = vld [vmem:[%s1 + $0xa80] sm:$0xf]
  %v689 = vld [vmem:[%s1 + $0xa84] sm:$0xf]
  %v690 = vld [vmem:[%s1 + $0xa88] sm:$0xf]
  %v691 = vld [vmem:[%s1 + $0xa8c] sm:$0xf]
  %v692 = vld [vmem:[%s1 + $0xa90] sm:$0xf]
  %v693 = vld [vmem:[%s1 + $0xa94] sm:$0xf]
  %v694 = vld [vmem:[%s1 + $0xa98] sm:$0xf]
  %v695 = vld [vmem:[%s1 + $0xa9c] sm:$0xf]
  %v696 = vld [vmem:[%s1 + $0xaa0] sm:$0xf]
  %v697 = vld [vmem:[%s1 + $0xaa4] sm:$0xf]
  %v698 = vld [vmem:[%s1 + $0xaa8] sm:$0xf]
  %v699 = vld [vmem:[%s1 + $0xaac] sm:$0xf]
  %v700 = vld [vmem:[%s1 + $0xab0] sm:$0xf]
  %v701 = vld [vmem:[%s1 + $0xab4] sm:$0xf]
  %v702 = vld [vmem:[%s1 + $0xab8] sm:$0xf]
  %v703 = vld [vmem:[%s1 + $0xabc] sm:$0xf]
  %v704 = vld [vmem:[%s1 + $0xac0] sm:$0xf]
  %v705 = vld [vmem:[%s1 + $0xac4] sm:$0xf]
  %v706 = vld [vmem:[%s1 + $0xac8] sm:$0xf]
  %v707 = vld [vmem:[%s1 + $0xacc] sm:$0xf]
  %v708 = vld [vmem:[%s1 + $0xad0] sm:$0xf]
  %v709 = vld [vmem:[%s1 + $0xad4] sm:$0xf]
  %v710 = vld [vmem:[%s1 + $0xad8] sm:$0xf]
  %v711 = vld [vmem:[%s1 + $0xadc] sm:$0xf]
  %v712 = vld [vmem:[%s1 + $0xae0] sm:$0xf]
  %v713 = vld [vmem:[%s1 + $0xae4] sm:$0xf]
  %v714 = vld [vmem:[%s1 + $0xae8] sm:$0xf]
  %v715 = vld [vmem:[%s1 + $0xaec] sm:$0xf]
  %v716 = vld [vmem:[%s1 + $0xaf0] sm:$0xf]
  %v717 = vld [vmem:[%s1 + $0xaf4] sm:$0xf]
  %v718 = vld [vmem:[%s1 + $0xaf8] sm:$0xf]
  %v719 = vld [vmem:[%s1 + $0xafc] sm:$0xf]
  %v720 = vld [vmem:[%s1 + $0xb00] sm:$0xf]
  %v721 = vld [vmem:[%s1 + $0xb04] sm:$0xf]
  %v722 = vld [vmem:[%s1 + $0xb08] sm:$0xf]
  %v723 = vld [vmem:[%s1 + $0xb0c] sm:$0xf]
  %v724 = vld [vmem:[%s1 + $0xb10] sm:$0xf]
  %v725 = vld [vmem:[%s1 + $0xb14] sm:$0xf]
  %v726 = vld [vmem:[%s1 + $0xb18] sm:$0xf]
  %v727 = vld [vmem:[%s1 + $0xb1c] sm:$0xf]
  %v728 = vld [vmem:[%s1 + $0xb20] sm:$0xf]
  %v729 = vld [vmem:[%s1 + $0xb24] sm:$0xf]
  %v730 = vld [vmem:[%s1 + $0xb28] sm:$0xf]
  %v731 = vld [vmem:[%s1 + $0xb2c] sm:$0xf]
  %v732 = vld [vmem:[%s1 + $0xb30] sm:$0xf]
  %v733 = vld [vmem:[%s1 + $0xb34] sm:$0xf]
  %v734 = vld [vmem:[%s1 + $0xb38] sm:$0xf]
  %v735 = vld [vmem:[%s1 + $0xb3c] sm:$0xf]
  %v736 = vld [vmem:[%s1 + $0xb40] sm:$0xf]
  %v737 = vld [vmem:[%s1 + $0xb44] sm:$0xf]
  %v738 = vld [vmem:[%s1 + $0xb48] sm:$0xf]
  %v739 = vld [vmem:[%s1 + $0xb4c] sm:$0xf]
  %v740 = vld [vmem:[%s1 + $0xb50] sm:$0xf]
  %v741 = vld [vmem:[%s1 + $0xb54] sm:$0xf]
  %v742 = vld [vmem:[%s1 + $0xb58] sm:$0xf]
  %v743 = vld [vmem:[%s1 + $0xb5c] sm:$0xf]
  %v744 = vld [vmem:[%s1 + $0xb60] sm:$0xf]
  %v745 = vld [vmem:[%s1 + $0xb64] sm:$0xf]
  %v746 = vld [vmem:[%s1 + $0xb68] sm:$0xf]
  %v747 = vld [vmem:[%s1 + $0xb6c] sm:$0xf]
  %v748 = vld [vmem:[%s1 + $0xb70] sm:$0xf]
  %v749 = vld [vmem:[%s1 + $0xb74] sm:$0xf]
  %v750 = vld [vmem:[%s1 + $0xb78] sm:$0xf]
  %v751 = vld [vmem:[%s1 + $0xb7c] sm:$0xf]
  %v752 = vld [vmem:[%s1 + $0xb80] sm:$0xf]
  %v753 = vld [vmem:[%s1 + $0xb84] sm:$0xf]
  %v754 = vld [vmem:[%s1 + $0xb88] sm:$0xf]
  %v755 = vld [vmem:[%s1 + $0xb8c] sm:$0xf]
  %v756 = vld [vmem:[%s1 + $0xb90] sm:$0xf]
  %v757 = vld [vmem:[%s1 + $0xb94] sm:$0xf]
  %v758 = vld [vmem:[%s1 + $0xb98] sm:$0xf]
  %v759 = vld [vmem:[%s1 + $0xb9c] sm:$0xf]
  %v760 = vld [vmem:[%s1 + $0xba0] sm:$0xf]
  %v761 = vld [vmem:[%s1 + $0xba4] sm:$0xf]
  %v762 = vld [vmem:[%s1 + $0xba8] sm:$0xf]
  %v763 = vld [vmem:[%s1 + $0xbac] sm:$0xf]
  %v764 = vld [vmem:[%s1 + $0xbb0] sm:$0xf]
  %v765 = vld [vmem:[%s1 + $0xbb4] sm:$0xf]
  %v766 = vld [vmem:[%s1 + $0xbb8] sm:$0xf]
  %v767 = vld [vmem:[%s1 + $0xbbc] sm:$0xf]
  %v768 = vld [vmem:[%s1 + $0xbc0] sm:$0xf]
  %v769 = vld [vmem:[%s1 + $0xbc4] sm:$0xf]
  %v770 = vld [vmem:[%s1 + $0xbc8] sm:$0xf]
  %v771 = vld [vmem:[%s1 + $0xbcc] sm:$0xf]
  %v772 = vld [vmem:[%s1 + $0xbd0] sm:$0xf]
  %v773 = vld [vmem:[%s1 + $0xbd4] sm:$0xf]
  %v774 = vld [vmem:[%s1 + $0xbd8] sm:$0xf]
  %v775 = vld [vmem:[%s1 + $0xbdc] sm:$0xf]
  %v776 = vld [vmem:[%s1 + $0xbe0] sm:$0xf]
  %v777 = vld [vmem:[%s1 + $0xbe4] sm:$0xf]
  %v778 = vld [vmem:[%s1 + $0xbe8] sm:$0xf]
  %v779 = vld [vmem:[%s1 + $0xbec] sm:$0xf]
  %v780 = vld [vmem:[%s1 + $0xbf0] sm:$0xf]
  %v781 = vld [vmem:[%s1 + $0xbf4] sm:$0xf]
  %v782 = vld [vmem:[%s1 + $0xbf8] sm:$0xf]
  %v783 = vld [vmem:[%s1 + $0xbfc] sm:$0xf]
  %v784 = vld [vmem:[%s1 + $0xc00] sm:$0xf]
  %v785 = vld [vmem:[%s1 + $0xc04] sm:$0xf]
  %v786 = vld [vmem:[%s1 + $0xc08] sm:$0xf]
  %v787 = vld [vmem:[%s1 + $0xc0c] sm:$0xf]
  %v788 = vld [vmem:[%s1 + $0xc10] sm:$0xf]
  %v789 = vld [vmem:[%s1 + $0xc14] sm:$0xf]
  %v790 = vld [vmem:[%s1 + $0xc18] sm:$0xf]
  %v791 = vld [vmem:[%s1 + $0xc1c] sm:$0xf]
  %v792 = vld [vmem:[%s1 + $0xc20] sm:$0xf]
  %v793 = vld [vmem:[%s1 + $0xc24] sm:$0xf]
  %v794 = vld [vmem:[%s1 + $0xc28] sm:$0xf]
  %v795 = vld [vmem:[%s1 + $0xc2c] sm:$0xf]
  %v796 = vld [vmem:[%s1 + $0xc30] sm:$0xf]
  %v797 = vld [vmem:[%s1 + $0xc34] sm:$0xf]
  %v798 = vld [vmem:[%s1 + $0xc38] sm:$0xf]
  %v799 = vld [vmem:[%s1 + $0xc3c] sm:$0xf]
  %v800 = vld [vmem:[%s2] sm:$0xff]
  %v801 = vld [vmem:[%s2 + $0x8] sm:$0xff]
  %v802 = vld [vmem:[%s2 + $0x10] sm:$0xff]
  %v803 = vld [vmem:[%s2 + $0x18] sm:$0xff]
  %v804 = vld [vmem:[%s2 + $0x20] sm:$0xff]
  %v805 = vld [vmem:[%s2 + $0x28] sm:$0xff]
  %v806 = vld [vmem:[%s2 + $0x30] sm:$0x1]
  %v814 = vlaneseq
  %v815 = vshrl.u32 %v814, 7
  %v816 = vsub.s32 0, %v815
  %v817 = vrot.slane %v800, %v816
  %v818 = vlaneseq
  %v819 = vshrl.u32 %v818, 7
  %v820 = vsub.s32 1, %v819
  %v821 = vrot.slane %v800, %v820
  %v822 = vlaneseq
  %v823 = vshrl.u32 %v822, 7
  %v824 = vsub.s32 2, %v823
  %v825 = vrot.slane %v800, %v824
  %v826 = vlaneseq
  %v827 = vshrl.u32 %v826, 7
  %v828 = vsub.s32 3, %v827
  %v829 = vrot.slane %v800, %v828
  %v830 = vlaneseq
  %v831 = vshrl.u32 %v830, 7
  %v832 = vsub.s32 4, %v831
  %v833 = vrot.slane %v800, %v832
  %v834 = vlaneseq
  %v835 = vshrl.u32 %v834, 7
  %v836 = vsub.s32 5, %v835
  %v837 = vrot.slane %v800, %v836
  %v838 = vlaneseq
  %v839 = vshrl.u32 %v838, 7
  %v840 = vsub.s32 6, %v839
  %v841 = vrot.slane %v800, %v840
  %v842 = vlaneseq
  %v843 = vshrl.u32 %v842, 7
  %v844 = vsub.s32 7, %v843
  %v845 = vrot.slane %v800, %v844
  %v846 = vlaneseq
  %v847 = vshrl.u32 %v846, 7
  %v848 = vsub.s32 0, %v847
  %v849 = vrot.slane %v801, %v848
  %v850 = vlaneseq
  %v851 = vshrl.u32 %v850, 7
  %v852 = vsub.s32 1, %v851
  %v853 = vrot.slane %v801, %v852
  %v854 = vlaneseq
  %v855 = vshrl.u32 %v854, 7
  %v856 = vsub.s32 2, %v855
  %v857 = vrot.slane %v801, %v856
  %v858 = vlaneseq
  %v859 = vshrl.u32 %v858, 7
  %v860 = vsub.s32 3, %v859
  %v861 = vrot.slane %v801, %v860
  %v862 = vlaneseq
  %v863 = vshrl.u32 %v862, 7
  %v864 = vsub.s32 4, %v863
  %v865 = vrot.slane %v801, %v864
  %v866 = vlaneseq
  %v867 = vshrl.u32 %v866, 7
  %v868 = vsub.s32 5, %v867
  %v869 = vrot.slane %v801, %v868
  %v870 = vlaneseq
  %v871 = vshrl.u32 %v870, 7
  %v872 = vsub.s32 6, %v871
  %v873 = vrot.slane %v801, %v872
  %v874 = vlaneseq
  %v875 = vshrl.u32 %v874, 7
  %v876 = vsub.s32 7, %v875
  %v877 = vrot.slane %v801, %v876
  %v878 = vlaneseq
  %v879 = vshrl.u32 %v878, 7
  %v880 = vsub.s32 0, %v879
  %v881 = vrot.slane %v802, %v880
  %v882 = vlaneseq
  %v883 = vshrl.u32 %v882, 7
  %v884 = vsub.s32 1, %v883
  %v885 = vrot.slane %v802, %v884
  %v886 = vlaneseq
  %v887 = vshrl.u32 %v886, 7
  %v888 = vsub.s32 2, %v887
  %v889 = vrot.slane %v802, %v888
  %v890 = vlaneseq
  %v891 = vshrl.u32 %v890, 7
  %v892 = vsub.s32 3, %v891
  %v893 = vrot.slane %v802, %v892
  %v894 = vlaneseq
  %v895 = vshrl.u32 %v894, 7
  %v896 = vsub.s32 4, %v895
  %v897 = vrot.slane %v802, %v896
  %v898 = vlaneseq
  %v899 = vshrl.u32 %v898, 7
  %v900 = vsub.s32 5, %v899
  %v901 = vrot.slane %v802, %v900
  %v902 = vlaneseq
  %v903 = vshrl.u32 %v902, 7
  %v904 = vsub.s32 6, %v903
  %v905 = vrot.slane %v802, %v904
  %v906 = vlaneseq
  %v907 = vshrl.u32 %v906, 7
  %v908 = vsub.s32 7, %v907
  %v909 = vrot.slane %v802, %v908
  %v910 = vlaneseq
  %v911 = vshrl.u32 %v910, 7
  %v912 = vsub.s32 0, %v911
  %v913 = vrot.slane %v803, %v912
  %v914 = vlaneseq
  %v915 = vshrl.u32 %v914, 7
  %v916 = vsub.s32 1, %v915
  %v917 = vrot.slane %v803, %v916
  %v918 = vlaneseq
  %v919 = vshrl.u32 %v918, 7
  %v920 = vsub.s32 2, %v919
  %v921 = vrot.slane %v803, %v920
  %v922 = vlaneseq
  %v923 = vshrl.u32 %v922, 7
  %v924 = vsub.s32 3, %v923
  %v925 = vrot.slane %v803, %v924
  %v926 = vlaneseq
  %v927 = vshrl.u32 %v926, 7
  %v928 = vsub.s32 4, %v927
  %v929 = vrot.slane %v803, %v928
  %v930 = vlaneseq
  %v931 = vshrl.u32 %v930, 7
  %v932 = vsub.s32 5, %v931
  %v933 = vrot.slane %v803, %v932
  %v934 = vlaneseq
  %v935 = vshrl.u32 %v934, 7
  %v936 = vsub.s32 6, %v935
  %v937 = vrot.slane %v803, %v936
  %v938 = vlaneseq
  %v939 = vshrl.u32 %v938, 7
  %v940 = vsub.s32 7, %v939
  %v941 = vrot.slane %v803, %v940
  %v942 = vlaneseq
  %v943 = vshrl.u32 %v942, 7
  %v944 = vsub.s32 0, %v943
  %v945 = vrot.slane %v804, %v944
  %v946 = vlaneseq
  %v947 = vshrl.u32 %v946, 7
  %v948 = vsub.s32 1, %v947
  %v949 = vrot.slane %v804, %v948
  %v950 = vlaneseq
  %v951 = vshrl.u32 %v950, 7
  %v952 = vsub.s32 2, %v951
  %v953 = vrot.slane %v804, %v952
  %v954 = vlaneseq
  %v955 = vshrl.u32 %v954, 7
  %v956 = vsub.s32 3, %v955
  %v957 = vrot.slane %v804, %v956
  %v958 = vlaneseq
  %v959 = vshrl.u32 %v958, 7
  %v960 = vsub.s32 4, %v959
  %v961 = vrot.slane %v804, %v960
  %v962 = vlaneseq
  %v963 = vshrl.u32 %v962, 7
  %v964 = vsub.s32 5, %v963
  %v965 = vrot.slane %v804, %v964
  %v966 = vlaneseq
  %v967 = vshrl.u32 %v966, 7
  %v968 = vsub.s32 6, %v967
  %v969 = vrot.slane %v804, %v968
  %v970 = vlaneseq
  %v971 = vshrl.u32 %v970, 7
  %v972 = vsub.s32 7, %v971
  %v973 = vrot.slane %v804, %v972
  %v974 = vlaneseq
  %v975 = vshrl.u32 %v974, 7
  %v976 = vsub.s32 0, %v975
  %v977 = vrot.slane %v805, %v976
  %v978 = vlaneseq
  %v979 = vshrl.u32 %v978, 7
  %v980 = vsub.s32 1, %v979
  %v981 = vrot.slane %v805, %v980
  %v982 = vlaneseq
  %v983 = vshrl.u32 %v982, 7
  %v984 = vsub.s32 2, %v983
  %v985 = vrot.slane %v805, %v984
  %v986 = vlaneseq
  %v987 = vshrl.u32 %v986, 7
  %v988 = vsub.s32 3, %v987
  %v989 = vrot.slane %v805, %v988
  %v990 = vlaneseq
  %v991 = vshrl.u32 %v990, 7
  %v992 = vsub.s32 4, %v991
  %v993 = vrot.slane %v805, %v992
  %v994 = vlaneseq
  %v995 = vshrl.u32 %v994, 7
  %v996 = vsub.s32 5, %v995
  %v997 = vrot.slane %v805, %v996
  %v998 = vlaneseq
  %v999 = vshrl.u32 %v998, 7
  %v1000 = vsub.s32 6, %v999
  %v1001 = vrot.slane %v805, %v1000
  %v1002 = vlaneseq
  %v1003 = vshrl.u32 %v1002, 7
  %v1004 = vsub.s32 7, %v1003
  %v1005 = vrot.slane %v805, %v1004
  %v1006 = vlaneseq
  %v1007 = vshrl.u32 %v1006, 7
  %v1008 = vsub.s32 0, %v1007
  %v1009 = vrot.slane %v806, %v1008
  %v1843 = vunpack.c.l.b16 %v16
  %v1844 = vunpack.c.l.b16 %v17
  %v1845 = vunpack.c.l.b16 %v18
  %v1846 = vunpack.c.l.b16 %v19
  %v1847 = vunpack.c.l.b16 %v20
  %v1848 = vunpack.c.l.b16 %v21
  %v1849 = vunpack.c.l.b16 %v22
  %v1850 = vunpack.c.l.b16 %v23
  %v1851 = vunpack.c.l.b16 %v24
  %v1852 = vunpack.c.l.b16 %v25
  %v1853 = vunpack.c.l.b16 %v26
  %v1854 = vunpack.c.l.b16 %v27
  %v1855 = vunpack.c.l.b16 %v28
  %v1856 = vunpack.c.l.b16 %v29
  %v1857 = vunpack.c.l.b16 %v30
  %v1858 = vunpack.c.l.b16 %v31
  %v1859 = vunpack.c.l.b16 %v32
  %v1860 = vunpack.c.l.b16 %v33
  %v1861 = vunpack.c.l.b16 %v34
  %v1862 = vunpack.c.l.b16 %v35
  %v1863 = vunpack.c.l.b16 %v36
  %v1864 = vunpack.c.l.b16 %v37
  %v1865 = vunpack.c.l.b16 %v38
  %v1866 = vunpack.c.l.b16 %v39
  %v1867 = vunpack.c.l.b16 %v40
  %v1868 = vunpack.c.l.b16 %v41
  %v1869 = vunpack.c.l.b16 %v42
  %v1870 = vunpack.c.l.b16 %v43
  %v1871 = vunpack.c.l.b16 %v44
  %v1872 = vunpack.c.l.b16 %v45
  %v1873 = vunpack.c.l.b16 %v46
  %v1874 = vunpack.c.l.b16 %v47
  %v1875 = vunpack.c.l.b16 %v48
  %v1876 = vunpack.c.l.b16 %v49
  %v1877 = vunpack.c.l.b16 %v50
  %v1878 = vunpack.c.l.b16 %v51
  %v1879 = vunpack.c.l.b16 %v52
  %v1880 = vunpack.c.l.b16 %v53
  %v1881 = vunpack.c.l.b16 %v54
  %v1882 = vunpack.c.l.b16 %v55
  %v1883 = vunpack.c.l.b16 %v56
  %v1884 = vunpack.c.l.b16 %v57
  %v1885 = vunpack.c.l.b16 %v58
  %v1886 = vunpack.c.l.b16 %v59
  %v1887 = vunpack.c.l.b16 %v60
  %v1888 = vunpack.c.l.b16 %v61
  %v1889 = vunpack.c.l.b16 %v62
  %v1890 = vunpack.c.l.b16 %v63
  %v1891 = vunpack.c.l.b16 %v64
  %v1892 = vunpack.c.l.b16 %v65
  %v1893 = vunpack.c.l.b16 %v66
  %v1894 = vunpack.c.l.b16 %v67
  %v1895 = vunpack.c.l.b16 %v68
  %v1896 = vunpack.c.l.b16 %v69
  %v1897 = vunpack.c.l.b16 %v70
  %v1898 = vunpack.c.l.b16 %v71
  %v1899 = vunpack.c.l.b16 %v72
  %v1900 = vunpack.c.l.b16 %v73
  %v1901 = vunpack.c.l.b16 %v74
  %v1902 = vunpack.c.l.b16 %v75
  %v1903 = vunpack.c.l.b16 %v76
  %v1904 = vunpack.c.l.b16 %v77
  %v1905 = vunpack.c.l.b16 %v78
  %v1906 = vunpack.c.l.b16 %v79
  %v1907 = vunpack.c.l.b16 %v80
  %v1908 = vunpack.c.l.b16 %v81
  %v1909 = vunpack.c.l.b16 %v82
  %v1910 = vunpack.c.l.b16 %v83
  %v1911 = vunpack.c.l.b16 %v84
  %v1912 = vunpack.c.l.b16 %v85
  %v1913 = vunpack.c.l.b16 %v86
  %v1914 = vunpack.c.l.b16 %v87
  %v1915 = vunpack.c.l.b16 %v88
  %v1916 = vunpack.c.l.b16 %v89
  %v1917 = vunpack.c.l.b16 %v90
  %v1918 = vunpack.c.l.b16 %v91
  %v1919 = vunpack.c.l.b16 %v92
  %v1920 = vunpack.c.l.b16 %v93
  %v1921 = vunpack.c.l.b16 %v94
  %v1922 = vunpack.c.l.b16 %v95
  %v1923 = vunpack.c.l.b16 %v96
  %v1924 = vunpack.c.l.b16 %v97
  %v1925 = vunpack.c.l.b16 %v98
  %v1926 = vunpack.c.l.b16 %v99
  %v1927 = vunpack.c.l.b16 %v100
  %v1928 = vunpack.c.l.b16 %v101
  %v1929 = vunpack.c.l.b16 %v102
  %v1930 = vunpack.c.l.b16 %v103
  %v1931 = vunpack.c.l.b16 %v104
  %v1932 = vunpack.c.l.b16 %v105
  %v1933 = vunpack.c.l.b16 %v106
  %v1934 = vunpack.c.l.b16 %v107
  %v1935 = vunpack.c.l.b16 %v108
  %v1936 = vunpack.c.l.b16 %v109
  %v1937 = vunpack.c.l.b16 %v110
  %v1938 = vunpack.c.l.b16 %v111
  %v1939 = vunpack.c.l.b16 %v112
  %v1940 = vunpack.c.l.b16 %v113
  %v1941 = vunpack.c.l.b16 %v114
  %v1942 = vunpack.c.l.b16 %v115
  %v1943 = vunpack.c.l.b16 %v116
  %v1944 = vunpack.c.l.b16 %v117
  %v1945 = vunpack.c.l.b16 %v118
  %v1946 = vunpack.c.l.b16 %v119
  %v1947 = vunpack.c.l.b16 %v120
  %v1948 = vunpack.c.l.b16 %v121
  %v1949 = vunpack.c.l.b16 %v122
  %v1950 = vunpack.c.l.b16 %v123
  %v1951 = vunpack.c.l.b16 %v124
  %v1952 = vunpack.c.l.b16 %v125
  %v1953 = vunpack.c.l.b16 %v126
  %v1954 = vunpack.c.l.b16 %v127
  %v1955 = vunpack.c.l.b16 %v128
  %v1956 = vunpack.c.l.b16 %v129
  %v1957 = vunpack.c.l.b16 %v130
  %v1958 = vunpack.c.l.b16 %v131
  %v1959 = vunpack.c.l.b16 %v132
  %v1960 = vunpack.c.l.b16 %v133
  %v1961 = vunpack.c.l.b16 %v134
  %v1962 = vunpack.c.l.b16 %v135
  %v1963 = vunpack.c.l.b16 %v136
  %v1964 = vunpack.c.l.b16 %v137
  %v1965 = vunpack.c.l.b16 %v138
  %v1966 = vunpack.c.l.b16 %v139
  %v1967 = vunpack.c.l.b16 %v140
  %v1968 = vunpack.c.l.b16 %v141
  %v1969 = vunpack.c.l.b16 %v142
  %v1970 = vunpack.c.l.b16 %v143
  %v1971 = vunpack.c.l.b16 %v144
  %v1972 = vunpack.c.l.b16 %v145
  %v1973 = vunpack.c.l.b16 %v146
  %v1974 = vunpack.c.l.b16 %v147
  %v1975 = vunpack.c.l.b16 %v148
  %v1976 = vunpack.c.l.b16 %v149
  %v1977 = vunpack.c.l.b16 %v150
  %v1978 = vunpack.c.l.b16 %v151
  %v1979 = vunpack.c.l.b16 %v152
  %v1980 = vunpack.c.l.b16 %v153
  %v1981 = vunpack.c.l.b16 %v154
  %v1982 = vunpack.c.l.b16 %v155
  %v1983 = vunpack.c.l.b16 %v156
  %v1984 = vunpack.c.l.b16 %v157
  %v1985 = vunpack.c.l.b16 %v158
  %v1986 = vunpack.c.l.b16 %v159
  %v1987 = vunpack.c.l.b16 %v160
  %v1988 = vunpack.c.l.b16 %v161
  %v1989 = vunpack.c.l.b16 %v162
  %v1990 = vunpack.c.l.b16 %v163
  %v1991 = vunpack.c.l.b16 %v164
  %v1992 = vunpack.c.l.b16 %v165
  %v1993 = vunpack.c.l.b16 %v166
  %v1994 = vunpack.c.l.b16 %v167
  %v1995 = vunpack.c.l.b16 %v168
  %v1996 = vunpack.c.l.b16 %v169
  %v1997 = vunpack.c.l.b16 %v170
  %v1998 = vunpack.c.l.b16 %v171
  %v1999 = vunpack.c.l.b16 %v172
  %v2000 = vunpack.c.l.b16 %v173
  %v2001 = vunpack.c.l.b16 %v174
  %v2002 = vunpack.c.l.b16 %v175
  %v2003 = vunpack.c.l.b16 %v176
  %v2004 = vunpack.c.l.b16 %v177
  %v2005 = vunpack.c.l.b16 %v178
  %v2006 = vunpack.c.l.b16 %v179
  %v2007 = vunpack.c.l.b16 %v180
  %v2008 = vunpack.c.l.b16 %v181
  %v2009 = vunpack.c.l.b16 %v182
  %v2010 = vunpack.c.l.b16 %v183
  %v2011 = vunpack.c.l.b16 %v184
  %v2012 = vunpack.c.l.b16 %v185
  %v2013 = vunpack.c.l.b16 %v186
  %v2014 = vunpack.c.l.b16 %v187
  %v2015 = vunpack.c.l.b16 %v188
  %v2016 = vunpack.c.l.b16 %v189
  %v2017 = vunpack.c.l.b16 %v190
  %v2018 = vunpack.c.l.b16 %v191
  %v2019 = vunpack.c.l.b16 %v192
  %v2020 = vunpack.c.l.b16 %v193
  %v2021 = vunpack.c.l.b16 %v194
  %v2022 = vunpack.c.l.b16 %v195
  %v2023 = vunpack.c.l.b16 %v196
  %v2024 = vunpack.c.l.b16 %v197
  %v2025 = vunpack.c.l.b16 %v198
  %v2026 = vunpack.c.l.b16 %v199
  %v2027 = vunpack.c.l.b16 %v200
  %v2028 = vunpack.c.l.b16 %v201
  %v2029 = vunpack.c.l.b16 %v202
  %v2030 = vunpack.c.l.b16 %v203
  %v2031 = vunpack.c.l.b16 %v204
  %v2032 = vunpack.c.l.b16 %v205
  %v2033 = vunpack.c.l.b16 %v206
  %v2034 = vunpack.c.l.b16 %v207
  %v2035 = vunpack.c.l.b16 %v208
  %v2036 = vunpack.c.l.b16 %v209
  %v2037 = vunpack.c.l.b16 %v210
  %v2038 = vunpack.c.l.b16 %v211
  %v2039 = vunpack.c.l.b16 %v212
  %v2040 = vunpack.c.l.b16 %v213
  %v2041 = vunpack.c.l.b16 %v214
  %v2042 = vunpack.c.l.b16 %v215
  %v2043 = vunpack.c.l.b16 %v216
  %v2044 = vunpack.c.l.b16 %v217
  %v2045 = vunpack.c.l.b16 %v218
  %v2046 = vunpack.c.l.b16 %v219
  %v2047 = vunpack.c.l.b16 %v220
  %v2048 = vunpack.c.l.b16 %v221
  %v2049 = vunpack.c.l.b16 %v222
  %v2050 = vunpack.c.l.b16 %v223
  %v2051 = vunpack.c.l.b16 %v224
  %v2052 = vunpack.c.l.b16 %v225
  %v2053 = vunpack.c.l.b16 %v226
  %v2054 = vunpack.c.l.b16 %v227
  %v2055 = vunpack.c.l.b16 %v228
  %v2056 = vunpack.c.l.b16 %v229
  %v2057 = vunpack.c.l.b16 %v230
  %v2058 = vunpack.c.l.b16 %v231
  %v2059 = vunpack.c.l.b16 %v232
  %v2060 = vunpack.c.l.b16 %v233
  %v2061 = vunpack.c.l.b16 %v234
  %v2062 = vunpack.c.l.b16 %v235
  %v2063 = vunpack.c.l.b16 %v236
  %v2064 = vunpack.c.l.b16 %v237
  %v2065 = vunpack.c.l.b16 %v238
  %v2066 = vunpack.c.l.b16 %v239
  %v2067 = vunpack.c.l.b16 %v240
  %v2068 = vunpack.c.l.b16 %v241
  %v2069 = vunpack.c.l.b16 %v242
  %v2070 = vunpack.c.l.b16 %v243
  %v2071 = vunpack.c.l.b16 %v244
  %v2072 = vunpack.c.l.b16 %v245
  %v2073 = vunpack.c.l.b16 %v246
  %v2074 = vunpack.c.l.b16 %v247
  %v2075 = vunpack.c.l.b16 %v248
  %v2076 = vunpack.c.l.b16 %v249
  %v2077 = vunpack.c.l.b16 %v250
  %v2078 = vunpack.c.l.b16 %v251
  %v2079 = vunpack.c.l.b16 %v252
  %v2080 = vunpack.c.l.b16 %v253
  %v2081 = vunpack.c.l.b16 %v254
  %v2082 = vunpack.c.l.b16 %v255
  %v2083 = vunpack.c.l.b16 %v256
  %v2084 = vunpack.c.l.b16 %v257
  %v2085 = vunpack.c.l.b16 %v258
  %v2086 = vunpack.c.l.b16 %v259
  %v2087 = vunpack.c.l.b16 %v260
  %v2088 = vunpack.c.l.b16 %v261
  %v2089 = vunpack.c.l.b16 %v262
  %v2090 = vunpack.c.l.b16 %v263
  %v2091 = vunpack.c.l.b16 %v264
  %v2092 = vunpack.c.l.b16 %v265
  %v2093 = vunpack.c.l.b16 %v266
  %v2094 = vunpack.c.l.b16 %v267
  %v2095 = vunpack.c.l.b16 %v268
  %v2096 = vunpack.c.l.b16 %v269
  %v2097 = vunpack.c.l.b16 %v270
  %v2098 = vunpack.c.l.b16 %v271
  %v2099 = vunpack.c.l.b16 %v272
  %v2100 = vunpack.c.l.b16 %v273
  %v2101 = vunpack.c.l.b16 %v274
  %v2102 = vunpack.c.l.b16 %v275
  %v2103 = vunpack.c.l.b16 %v276
  %v2104 = vunpack.c.l.b16 %v277
  %v2105 = vunpack.c.l.b16 %v278
  %v2106 = vunpack.c.l.b16 %v279
  %v2107 = vunpack.c.l.b16 %v280
  %v2108 = vunpack.c.l.b16 %v281
  %v2109 = vunpack.c.l.b16 %v282
  %v2110 = vunpack.c.l.b16 %v283
  %v2111 = vunpack.c.l.b16 %v284
  %v2112 = vunpack.c.l.b16 %v285
  %v2113 = vunpack.c.l.b16 %v286
  %v2114 = vunpack.c.l.b16 %v287
  %v2115 = vunpack.c.l.b16 %v288
  %v2116 = vunpack.c.l.b16 %v289
  %v2117 = vunpack.c.l.b16 %v290
  %v2118 = vunpack.c.l.b16 %v291
  %v2119 = vunpack.c.l.b16 %v292
  %v2120 = vunpack.c.l.b16 %v293
  %v2121 = vunpack.c.l.b16 %v294
  %v2122 = vunpack.c.l.b16 %v295
  %v2123 = vunpack.c.l.b16 %v296
  %v2124 = vunpack.c.l.b16 %v297
  %v2125 = vunpack.c.l.b16 %v298
  %v2126 = vunpack.c.l.b16 %v299
  %v2127 = vunpack.c.l.b16 %v300
  %v2128 = vunpack.c.l.b16 %v301
  %v2129 = vunpack.c.l.b16 %v302
  %v2130 = vunpack.c.l.b16 %v303
  %v2131 = vunpack.c.l.b16 %v304
  %v2132 = vunpack.c.l.b16 %v305
  %v2133 = vunpack.c.l.b16 %v306
  %v2134 = vunpack.c.l.b16 %v307
  %v2135 = vunpack.c.l.b16 %v308
  %v2136 = vunpack.c.l.b16 %v309
  %v2137 = vunpack.c.l.b16 %v310
  %v2138 = vunpack.c.l.b16 %v311
  %v2139 = vunpack.c.l.b16 %v312
  %v2140 = vunpack.c.l.b16 %v313
  %v2141 = vunpack.c.l.b16 %v314
  %v2142 = vunpack.c.l.b16 %v315
  %v2143 = vunpack.c.l.b16 %v316
  %v2144 = vunpack.c.l.b16 %v317
  %v2145 = vunpack.c.l.b16 %v318
  %v2146 = vunpack.c.l.b16 %v319
  %v2147 = vunpack.c.l.b16 %v320
  %v2148 = vunpack.c.l.b16 %v321
  %v2149 = vunpack.c.l.b16 %v322
  %v2150 = vunpack.c.l.b16 %v323
  %v2151 = vunpack.c.l.b16 %v324
  %v2152 = vunpack.c.l.b16 %v325
  %v2153 = vunpack.c.l.b16 %v326
  %v2154 = vunpack.c.l.b16 %v327
  %v2155 = vunpack.c.l.b16 %v328
  %v2156 = vunpack.c.l.b16 %v329
  %v2157 = vunpack.c.l.b16 %v330
  %v2158 = vunpack.c.l.b16 %v331
  %v2159 = vunpack.c.l.b16 %v332
  %v2160 = vunpack.c.l.b16 %v333
  %v2161 = vunpack.c.l.b16 %v334
  %v2162 = vunpack.c.l.b16 %v335
  %v2163 = vunpack.c.l.b16 %v336
  %v2164 = vunpack.c.l.b16 %v337
  %v2165 = vunpack.c.l.b16 %v338
  %v2166 = vunpack.c.l.b16 %v339
  %v2167 = vunpack.c.l.b16 %v340
  %v2168 = vunpack.c.l.b16 %v341
  %v2169 = vunpack.c.l.b16 %v342
  %v2170 = vunpack.c.l.b16 %v343
  %v2171 = vunpack.c.l.b16 %v344
  %v2172 = vunpack.c.l.b16 %v345
  %v2173 = vunpack.c.l.b16 %v346
  %v2174 = vunpack.c.l.b16 %v347
  %v2175 = vunpack.c.l.b16 %v348
  %v2176 = vunpack.c.l.b16 %v349
  %v2177 = vunpack.c.l.b16 %v350
  %v2178 = vunpack.c.l.b16 %v351
  %v2179 = vunpack.c.l.b16 %v352
  %v2180 = vunpack.c.l.b16 %v353
  %v2181 = vunpack.c.l.b16 %v354
  %v2182 = vunpack.c.l.b16 %v355
  %v2183 = vunpack.c.l.b16 %v356
  %v2184 = vunpack.c.l.b16 %v357
  %v2185 = vunpack.c.l.b16 %v358
  %v2186 = vunpack.c.l.b16 %v359
  %v2187 = vunpack.c.l.b16 %v360
  %v2188 = vunpack.c.l.b16 %v361
  %v2189 = vunpack.c.l.b16 %v362
  %v2190 = vunpack.c.l.b16 %v363
  %v2191 = vunpack.c.l.b16 %v364
  %v2192 = vunpack.c.l.b16 %v365
  %v2193 = vunpack.c.l.b16 %v366
  %v2194 = vunpack.c.l.b16 %v367
  %v2195 = vunpack.c.l.b16 %v368
  %v2196 = vunpack.c.l.b16 %v369
  %v2197 = vunpack.c.l.b16 %v370
  %v2198 = vunpack.c.l.b16 %v371
  %v2199 = vunpack.c.l.b16 %v372
  %v2200 = vunpack.c.l.b16 %v373
  %v2201 = vunpack.c.l.b16 %v374
  %v2202 = vunpack.c.l.b16 %v375
  %v2203 = vunpack.c.l.b16 %v376
  %v2204 = vunpack.c.l.b16 %v377
  %v2205 = vunpack.c.l.b16 %v378
  %v2206 = vunpack.c.l.b16 %v379
  %v2207 = vunpack.c.l.b16 %v380
  %v2208 = vunpack.c.l.b16 %v381
  %v2209 = vunpack.c.l.b16 %v382
  %v2210 = vunpack.c.l.b16 %v383
  %v2211 = vunpack.c.l.b16 %v384
  %v2212 = vunpack.c.l.b16 %v385
  %v2213 = vunpack.c.l.b16 %v386
  %v2214 = vunpack.c.l.b16 %v387
  %v2215 = vunpack.c.l.b16 %v388
  %v2216 = vunpack.c.l.b16 %v389
  %v2217 = vunpack.c.l.b16 %v390
  %v2218 = vunpack.c.l.b16 %v391
  %v2219 = vunpack.c.l.b16 %v392
  %v2220 = vunpack.c.l.b16 %v393
  %v2221 = vunpack.c.l.b16 %v394
  %v2222 = vunpack.c.l.b16 %v395
  %v2223 = vunpack.c.l.b16 %v396
  %v2224 = vunpack.c.l.b16 %v397
  %v2225 = vunpack.c.l.b16 %v398
  %v2226 = vunpack.c.l.b16 %v399
  %v2227 = vunpack.c.l.b16 %v400
  %v2228 = vunpack.c.l.b16 %v401
  %v2229 = vunpack.c.l.b16 %v402
  %v2230 = vunpack.c.l.b16 %v403
  %v2231 = vunpack.c.l.b16 %v404
  %v2232 = vunpack.c.l.b16 %v405
  %v2233 = vunpack.c.l.b16 %v406
  %v2234 = vunpack.c.l.b16 %v407
  %v2235 = vunpack.c.l.b16 %v408
  %v2236 = vunpack.c.l.b16 %v409
  %v2237 = vunpack.c.l.b16 %v410
  %v2238 = vunpack.c.l.b16 %v411
  %v2239 = vunpack.c.l.b16 %v412
  %v2240 = vunpack.c.l.b16 %v413
  %v2241 = vunpack.c.l.b16 %v414
  %v2242 = vunpack.c.l.b16 %v415
  %v2243 = vunpack.c.l.b16 %v416
  %v2244 = vunpack.c.l.b16 %v417
  %v2245 = vunpack.c.l.b16 %v418
  %v2246 = vunpack.c.l.b16 %v419
  %v2247 = vunpack.c.l.b16 %v420
  %v2248 = vunpack.c.l.b16 %v421
  %v2249 = vunpack.c.l.b16 %v422
  %v2250 = vunpack.c.l.b16 %v423
  %v2251 = vunpack.c.l.b16 %v424
  %v2252 = vunpack.c.l.b16 %v425
  %v2253 = vunpack.c.l.b16 %v426
  %v2254 = vunpack.c.l.b16 %v427
  %v2255 = vunpack.c.l.b16 %v428
  %v2256 = vunpack.c.l.b16 %v429
  %v2257 = vunpack.c.l.b16 %v430
  %v2258 = vunpack.c.l.b16 %v431
  %v2259 = vunpack.c.l.b16 %v432
  %v2260 = vunpack.c.l.b16 %v433
  %v2261 = vunpack.c.l.b16 %v434
  %v2262 = vunpack.c.l.b16 %v435
  %v2263 = vunpack.c.l.b16 %v436
  %v2264 = vunpack.c.l.b16 %v437
  %v2265 = vunpack.c.l.b16 %v438
  %v2266 = vunpack.c.l.b16 %v439
  %v2267 = vunpack.c.l.b16 %v440
  %v2268 = vunpack.c.l.b16 %v441
  %v2269 = vunpack.c.l.b16 %v442
  %v2270 = vunpack.c.l.b16 %v443
  %v2271 = vunpack.c.l.b16 %v444
  %v2272 = vunpack.c.l.b16 %v445
  %v2273 = vunpack.c.l.b16 %v446
  %v2274 = vunpack.c.l.b16 %v447
  %v2275 = vunpack.c.l.b16 %v448
  %v2276 = vunpack.c.l.b16 %v449
  %v2277 = vunpack.c.l.b16 %v450
  %v2278 = vunpack.c.l.b16 %v451
  %v2279 = vunpack.c.l.b16 %v452
  %v2280 = vunpack.c.l.b16 %v453
  %v2281 = vunpack.c.l.b16 %v454
  %v2282 = vunpack.c.l.b16 %v455
  %v2283 = vunpack.c.l.b16 %v456
  %v2284 = vunpack.c.l.b16 %v457
  %v2285 = vunpack.c.l.b16 %v458
  %v2286 = vunpack.c.l.b16 %v459
  %v2287 = vunpack.c.l.b16 %v460
  %v2288 = vunpack.c.l.b16 %v461
  %v2289 = vunpack.c.l.b16 %v462
  %v2290 = vunpack.c.l.b16 %v463
  %v2291 = vunpack.c.l.b16 %v464
  %v2292 = vunpack.c.l.b16 %v465
  %v2293 = vunpack.c.l.b16 %v466
  %v2294 = vunpack.c.l.b16 %v467
  %v2295 = vunpack.c.l.b16 %v468
  %v2296 = vunpack.c.l.b16 %v469
  %v2297 = vunpack.c.l.b16 %v470
  %v2298 = vunpack.c.l.b16 %v471
  %v2299 = vunpack.c.l.b16 %v472
  %v2300 = vunpack.c.l.b16 %v473
  %v2301 = vunpack.c.l.b16 %v474
  %v2302 = vunpack.c.l.b16 %v475
  %v2303 = vunpack.c.l.b16 %v476
  %v2304 = vunpack.c.l.b16 %v477
  %v2305 = vunpack.c.l.b16 %v478
  %v2306 = vunpack.c.l.b16 %v479
  %v2307 = vunpack.c.l.b16 %v480
  %v2308 = vunpack.c.l.b16 %v481
  %v2309 = vunpack.c.l.b16 %v482
  %v2310 = vunpack.c.l.b16 %v483
  %v2311 = vunpack.c.l.b16 %v484
  %v2312 = vunpack.c.l.b16 %v485
  %v2313 = vunpack.c.l.b16 %v486
  %v2314 = vunpack.c.l.b16 %v487
  %v2315 = vunpack.c.l.b16 %v488
  %v2316 = vunpack.c.l.b16 %v489
  %v2317 = vunpack.c.l.b16 %v490
  %v2318 = vunpack.c.l.b16 %v491
  %v2319 = vunpack.c.l.b16 %v492
  %v2320 = vunpack.c.l.b16 %v493
  %v2321 = vunpack.c.l.b16 %v494
  %v2322 = vunpack.c.l.b16 %v495
  %v2323 = vunpack.c.l.b16 %v496
  %v2324 = vunpack.c.l.b16 %v497
  %v2325 = vunpack.c.l.b16 %v498
  %v2326 = vunpack.c.l.b16 %v499
  %v2327 = vunpack.c.l.b16 %v500
  %v2328 = vunpack.c.l.b16 %v501
  %v2329 = vunpack.c.l.b16 %v502
  %v2330 = vunpack.c.l.b16 %v503
  %v2331 = vunpack.c.l.b16 %v504
  %v2332 = vunpack.c.l.b16 %v505
  %v2333 = vunpack.c.l.b16 %v506
  %v2334 = vunpack.c.l.b16 %v507
  %v2335 = vunpack.c.l.b16 %v508
  %v2336 = vunpack.c.l.b16 %v509
  %v2337 = vunpack.c.l.b16 %v510
  %v2338 = vunpack.c.l.b16 %v511
  %v2339 = vunpack.c.l.b16 %v512
  %v2340 = vunpack.c.l.b16 %v513
  %v2341 = vunpack.c.l.b16 %v514
  %v2342 = vunpack.c.l.b16 %v515
  %v2343 = vunpack.c.l.b16 %v516
  %v2344 = vunpack.c.l.b16 %v517
  %v2345 = vunpack.c.l.b16 %v518
  %v2346 = vunpack.c.l.b16 %v519
  %v2347 = vunpack.c.l.b16 %v520
  %v2348 = vunpack.c.l.b16 %v521
  %v2349 = vunpack.c.l.b16 %v522
  %v2350 = vunpack.c.l.b16 %v523
  %v2351 = vunpack.c.l.b16 %v524
  %v2352 = vunpack.c.l.b16 %v525
  %v2353 = vunpack.c.l.b16 %v526
  %v2354 = vunpack.c.l.b16 %v527
  %v2355 = vunpack.c.l.b16 %v528
  %v2356 = vunpack.c.l.b16 %v529
  %v2357 = vunpack.c.l.b16 %v530
  %v2358 = vunpack.c.l.b16 %v531
  %v2359 = vunpack.c.l.b16 %v532
  %v2360 = vunpack.c.l.b16 %v533
  %v2361 = vunpack.c.l.b16 %v534
  %v2362 = vunpack.c.l.b16 %v535
  %v2363 = vunpack.c.l.b16 %v536
  %v2364 = vunpack.c.l.b16 %v537
  %v2365 = vunpack.c.l.b16 %v538
  %v2366 = vunpack.c.l.b16 %v539
  %v2367 = vunpack.c.l.b16 %v540
  %v2368 = vunpack.c.l.b16 %v541
  %v2369 = vunpack.c.l.b16 %v542
  %v2370 = vunpack.c.l.b16 %v543
  %v2371 = vunpack.c.l.b16 %v544
  %v2372 = vunpack.c.l.b16 %v545
  %v2373 = vunpack.c.l.b16 %v546
  %v2374 = vunpack.c.l.b16 %v547
  %v2375 = vunpack.c.l.b16 %v548
  %v2376 = vunpack.c.l.b16 %v549
  %v2377 = vunpack.c.l.b16 %v550
  %v2378 = vunpack.c.l.b16 %v551
  %v2379 = vunpack.c.l.b16 %v552
  %v2380 = vunpack.c.l.b16 %v553
  %v2381 = vunpack.c.l.b16 %v554
  %v2382 = vunpack.c.l.b16 %v555
  %v2383 = vunpack.c.l.b16 %v556
  %v2384 = vunpack.c.l.b16 %v557
  %v2385 = vunpack.c.l.b16 %v558
  %v2386 = vunpack.c.l.b16 %v559
  %v2387 = vunpack.c.l.b16 %v560
  %v2388 = vunpack.c.l.b16 %v561
  %v2389 = vunpack.c.l.b16 %v562
  %v2390 = vunpack.c.l.b16 %v563
  %v2391 = vunpack.c.l.b16 %v564
  %v2392 = vunpack.c.l.b16 %v565
  %v2393 = vunpack.c.l.b16 %v566
  %v2394 = vunpack.c.l.b16 %v567
  %v2395 = vunpack.c.l.b16 %v568
  %v2396 = vunpack.c.l.b16 %v569
  %v2397 = vunpack.c.l.b16 %v570
  %v2398 = vunpack.c.l.b16 %v571
  %v2399 = vunpack.c.l.b16 %v572
  %v2400 = vunpack.c.l.b16 %v573
  %v2401 = vunpack.c.l.b16 %v574
  %v2402 = vunpack.c.l.b16 %v575
  %v2403 = vunpack.c.l.b16 %v576
  %v2404 = vunpack.c.l.b16 %v577
  %v2405 = vunpack.c.l.b16 %v578
  %v2406 = vunpack.c.l.b16 %v579
  %v2407 = vunpack.c.l.b16 %v580
  %v2408 = vunpack.c.l.b16 %v581
  %v2409 = vunpack.c.l.b16 %v582
  %v2410 = vunpack.c.l.b16 %v583
  %v2411 = vunpack.c.l.b16 %v584
  %v2412 = vunpack.c.l.b16 %v585
  %v2413 = vunpack.c.l.b16 %v586
  %v2414 = vunpack.c.l.b16 %v587
  %v2415 = vunpack.c.l.b16 %v588
  %v2416 = vunpack.c.l.b16 %v589
  %v2417 = vunpack.c.l.b16 %v590
  %v2418 = vunpack.c.l.b16 %v591
  %v2419 = vunpack.c.l.b16 %v592
  %v2420 = vunpack.c.l.b16 %v593
  %v2421 = vunpack.c.l.b16 %v594
  %v2422 = vunpack.c.l.b16 %v595
  %v2423 = vunpack.c.l.b16 %v596
  %v2424 = vunpack.c.l.b16 %v597
  %v2425 = vunpack.c.l.b16 %v598
  %v2426 = vunpack.c.l.b16 %v599
  %v2427 = vunpack.c.l.b16 %v600
  %v2428 = vunpack.c.l.b16 %v601
  %v2429 = vunpack.c.l.b16 %v602
  %v2430 = vunpack.c.l.b16 %v603
  %v2431 = vunpack.c.l.b16 %v604
  %v2432 = vunpack.c.l.b16 %v605
  %v2433 = vunpack.c.l.b16 %v606
  %v2434 = vunpack.c.l.b16 %v607
  %v2435 = vunpack.c.l.b16 %v608
  %v2436 = vunpack.c.l.b16 %v609
  %v2437 = vunpack.c.l.b16 %v610
  %v2438 = vunpack.c.l.b16 %v611
  %v2439 = vunpack.c.l.b16 %v612
  %v2440 = vunpack.c.l.b16 %v613
  %v2441 = vunpack.c.l.b16 %v614
  %v2442 = vunpack.c.l.b16 %v615
  %v2443 = vunpack.c.l.b16 %v616
  %v2444 = vunpack.c.l.b16 %v617
  %v2445 = vunpack.c.l.b16 %v618
  %v2446 = vunpack.c.l.b16 %v619
  %v2447 = vunpack.c.l.b16 %v620
  %v2448 = vunpack.c.l.b16 %v621
  %v2449 = vunpack.c.l.b16 %v622
  %v2450 = vunpack.c.l.b16 %v623
  %v2451 = vunpack.c.l.b16 %v624
  %v2452 = vunpack.c.l.b16 %v625
  %v2453 = vunpack.c.l.b16 %v626
  %v2454 = vunpack.c.l.b16 %v627
  %v2455 = vunpack.c.l.b16 %v628
  %v2456 = vunpack.c.l.b16 %v629
  %v2457 = vunpack.c.l.b16 %v630
  %v2458 = vunpack.c.l.b16 %v631
  %v2459 = vunpack.c.l.b16 %v632
  %v2460 = vunpack.c.l.b16 %v633
  %v2461 = vunpack.c.l.b16 %v634
  %v2462 = vunpack.c.l.b16 %v635
  %v2463 = vunpack.c.l.b16 %v636
  %v2464 = vunpack.c.l.b16 %v637
  %v2465 = vunpack.c.l.b16 %v638
  %v2466 = vunpack.c.l.b16 %v639
  %v2467 = vunpack.c.l.b16 %v640
  %v2468 = vunpack.c.l.b16 %v641
  %v2469 = vunpack.c.l.b16 %v642
  %v2470 = vunpack.c.l.b16 %v643
  %v2471 = vunpack.c.l.b16 %v644
  %v2472 = vunpack.c.l.b16 %v645
  %v2473 = vunpack.c.l.b16 %v646
  %v2474 = vunpack.c.l.b16 %v647
  %v2475 = vunpack.c.l.b16 %v648
  %v2476 = vunpack.c.l.b16 %v649
  %v2477 = vunpack.c.l.b16 %v650
  %v2478 = vunpack.c.l.b16 %v651
  %v2479 = vunpack.c.l.b16 %v652
  %v2480 = vunpack.c.l.b16 %v653
  %v2481 = vunpack.c.l.b16 %v654
  %v2482 = vunpack.c.l.b16 %v655
  %v2483 = vunpack.c.l.b16 %v656
  %v2484 = vunpack.c.l.b16 %v657
  %v2485 = vunpack.c.l.b16 %v658
  %v2486 = vunpack.c.l.b16 %v659
  %v2487 = vunpack.c.l.b16 %v660
  %v2488 = vunpack.c.l.b16 %v661
  %v2489 = vunpack.c.l.b16 %v662
  %v2490 = vunpack.c.l.b16 %v663
  %v2491 = vunpack.c.l.b16 %v664
  %v2492 = vunpack.c.l.b16 %v665
  %v2493 = vunpack.c.l.b16 %v666
  %v2494 = vunpack.c.l.b16 %v667
  %v2495 = vunpack.c.l.b16 %v668
  %v2496 = vunpack.c.l.b16 %v669
  %v2497 = vunpack.c.l.b16 %v670
  %v2498 = vunpack.c.l.b16 %v671
  %v2499 = vunpack.c.l.b16 %v672
  %v2500 = vunpack.c.l.b16 %v673
  %v2501 = vunpack.c.l.b16 %v674
  %v2502 = vunpack.c.l.b16 %v675
  %v2503 = vunpack.c.l.b16 %v676
  %v2504 = vunpack.c.l.b16 %v677
  %v2505 = vunpack.c.l.b16 %v678
  %v2506 = vunpack.c.l.b16 %v679
  %v2507 = vunpack.c.l.b16 %v680
  %v2508 = vunpack.c.l.b16 %v681
  %v2509 = vunpack.c.l.b16 %v682
  %v2510 = vunpack.c.l.b16 %v683
  %v2511 = vunpack.c.l.b16 %v684
  %v2512 = vunpack.c.l.b16 %v685
  %v2513 = vunpack.c.l.b16 %v686
  %v2514 = vunpack.c.l.b16 %v687
  %v2515 = vunpack.c.l.b16 %v688
  %v2516 = vunpack.c.l.b16 %v689
  %v2517 = vunpack.c.l.b16 %v690
  %v2518 = vunpack.c.l.b16 %v691
  %v2519 = vunpack.c.l.b16 %v692
  %v2520 = vunpack.c.l.b16 %v693
  %v2521 = vunpack.c.l.b16 %v694
  %v2522 = vunpack.c.l.b16 %v695
  %v2523 = vunpack.c.l.b16 %v696
  %v2524 = vunpack.c.l.b16 %v697
  %v2525 = vunpack.c.l.b16 %v698
  %v2526 = vunpack.c.l.b16 %v699
  %v2527 = vunpack.c.l.b16 %v700
  %v2528 = vunpack.c.l.b16 %v701
  %v2529 = vunpack.c.l.b16 %v702
  %v2530 = vunpack.c.l.b16 %v703
  %v2531 = vunpack.c.l.b16 %v704
  %v2532 = vunpack.c.l.b16 %v705
  %v2533 = vunpack.c.l.b16 %v706
  %v2534 = vunpack.c.l.b16 %v707
  %v2535 = vunpack.c.l.b16 %v708
  %v2536 = vunpack.c.l.b16 %v709
  %v2537 = vunpack.c.l.b16 %v710
  %v2538 = vunpack.c.l.b16 %v711
  %v2539 = vunpack.c.l.b16 %v712
  %v2540 = vunpack.c.l.b16 %v713
  %v2541 = vunpack.c.l.b16 %v714
  %v2542 = vunpack.c.l.b16 %v715
  %v2543 = vunpack.c.l.b16 %v716
  %v2544 = vunpack.c.l.b16 %v717
  %v2545 = vunpack.c.l.b16 %v718
  %v2546 = vunpack.c.l.b16 %v719
  %v2547 = vunpack.c.l.b16 %v720
  %v2548 = vunpack.c.l.b16 %v721
  %v2549 = vunpack.c.l.b16 %v722
  %v2550 = vunpack.c.l.b16 %v723
  %v2551 = vunpack.c.l.b16 %v724
  %v2552 = vunpack.c.l.b16 %v725
  %v2553 = vunpack.c.l.b16 %v726
  %v2554 = vunpack.c.l.b16 %v727
  %v2555 = vunpack.c.l.b16 %v728
  %v2556 = vunpack.c.l.b16 %v729
  %v2557 = vunpack.c.l.b16 %v730
  %v2558 = vunpack.c.l.b16 %v731
  %v2559 = vunpack.c.l.b16 %v732
  %v2560 = vunpack.c.l.b16 %v733
  %v2561 = vunpack.c.l.b16 %v734
  %v2562 = vunpack.c.l.b16 %v735
  %v2563 = vunpack.c.l.b16 %v736
  %v2564 = vunpack.c.l.b16 %v737
  %v2565 = vunpack.c.l.b16 %v738
  %v2566 = vunpack.c.l.b16 %v739
  %v2567 = vunpack.c.l.b16 %v740
  %v2568 = vunpack.c.l.b16 %v741
  %v2569 = vunpack.c.l.b16 %v742
  %v2570 = vunpack.c.l.b16 %v743
  %v2571 = vunpack.c.l.b16 %v744
  %v2572 = vunpack.c.l.b16 %v745
  %v2573 = vunpack.c.l.b16 %v746
  %v2574 = vunpack.c.l.b16 %v747
  %v2575 = vunpack.c.l.b16 %v748
  %v2576 = vunpack.c.l.b16 %v749
  %v2577 = vunpack.c.l.b16 %v750
  %v2578 = vunpack.c.l.b16 %v751
  %v2579 = vunpack.c.l.b16 %v752
  %v2580 = vunpack.c.l.b16 %v753
  %v2581 = vunpack.c.l.b16 %v754
  %v2582 = vunpack.c.l.b16 %v755
  %v2583 = vunpack.c.l.b16 %v756
  %v2584 = vunpack.c.l.b16 %v757
  %v2585 = vunpack.c.l.b16 %v758
  %v2586 = vunpack.c.l.b16 %v759
  %v2587 = vunpack.c.l.b16 %v760
  %v2588 = vunpack.c.l.b16 %v761
  %v2589 = vunpack.c.l.b16 %v762
  %v2590 = vunpack.c.l.b16 %v763
  %v2591 = vunpack.c.l.b16 %v764
  %v2592 = vunpack.c.l.b16 %v765
  %v2593 = vunpack.c.l.b16 %v766
  %v2594 = vunpack.c.l.b16 %v767
  %v2595 = vunpack.c.l.b16 %v768
  %v2596 = vunpack.c.l.b16 %v769
  %v2597 = vunpack.c.l.b16 %v770
  %v2598 = vunpack.c.l.b16 %v771
  %v2599 = vunpack.c.l.b16 %v772
  %v2600 = vunpack.c.l.b16 %v773
  %v2601 = vunpack.c.l.b16 %v774
  %v2602 = vunpack.c.l.b16 %v775
  %v2603 = vunpack.c.l.b16 %v776
  %v2604 = vunpack.c.l.b16 %v777
  %v2605 = vunpack.c.l.b16 %v778
  %v2606 = vunpack.c.l.b16 %v779
  %v2607 = vunpack.c.l.b16 %v780
  %v2608 = vunpack.c.l.b16 %v781
  %v2609 = vunpack.c.l.b16 %v782
  %v2610 = vunpack.c.l.b16 %v783
  %v2611 = vunpack.c.l.b16 %v784
  %v2612 = vunpack.c.l.b16 %v785
  %v2613 = vunpack.c.l.b16 %v786
  %v2614 = vunpack.c.l.b16 %v787
  %v2615 = vunpack.c.l.b16 %v788
  %v2616 = vunpack.c.l.b16 %v789
  %v2617 = vunpack.c.l.b16 %v790
  %v2618 = vunpack.c.l.b16 %v791
  %v2619 = vunpack.c.l.b16 %v792
  %v2620 = vunpack.c.l.b16 %v793
  %v2621 = vunpack.c.l.b16 %v794
  %v2622 = vunpack.c.l.b16 %v795
  %v2623 = vunpack.c.l.b16 %v796
  %v2624 = vunpack.c.l.b16 %v797
  %v2625 = vunpack.c.l.b16 %v798
  %v2626 = vunpack.c.l.b16 %v799
  %v2627 = vpack.c.b16 %v1844, %v1843
  %v2628 = vpack.c.b16 %v1846, %v1845
  %v2629 = vpack.c.b16 %v1848, %v1847
  %v2630 = vpack.c.b16 %v1850, %v1849
  %v2631 = vpack.c.b16 %v1852, %v1851
  %v2632 = vpack.c.b16 %v1854, %v1853
  %v2633 = vpack.c.b16 %v1856, %v1855
  %v2634 = vpack.c.b16 %v1858, %v1857
  %v2635 = vpack.c.b16 %v1860, %v1859
  %v2636 = vpack.c.b16 %v1862, %v1861
  %v2637 = vpack.c.b16 %v1864, %v1863
  %v2638 = vpack.c.b16 %v1866, %v1865
  %v2639 = vpack.c.b16 %v1868, %v1867
  %v2640 = vpack.c.b16 %v1870, %v1869
  %v2641 = vpack.c.b16 %v1872, %v1871
  %v2642 = vpack.c.b16 %v1874, %v1873
  %v2643 = vpack.c.b16 %v1876, %v1875
  %v2644 = vpack.c.b16 %v1878, %v1877
  %v2645 = vpack.c.b16 %v1880, %v1879
  %v2646 = vpack.c.b16 %v1882, %v1881
  %v2647 = vpack.c.b16 %v1884, %v1883
  %v2648 = vpack.c.b16 %v1886, %v1885
  %v2649 = vpack.c.b16 %v1888, %v1887
  %v2650 = vpack.c.b16 %v1890, %v1889
  %v2651 = vpack.c.b16 %v1892, %v1891
  %v2652 = vpack.c.b16 %v1894, %v1893
  %v2653 = vpack.c.b16 %v1896, %v1895
  %v2654 = vpack.c.b16 %v1898, %v1897
  %v2655 = vpack.c.b16 %v1900, %v1899
  %v2656 = vpack.c.b16 %v1902, %v1901
  %v2657 = vpack.c.b16 %v1904, %v1903
  %v2658 = vpack.c.b16 %v1906, %v1905
  %v2659 = vpack.c.b16 %v1908, %v1907
  %v2660 = vpack.c.b16 %v1910, %v1909
  %v2661 = vpack.c.b16 %v1912, %v1911
  %v2662 = vpack.c.b16 %v1914, %v1913
  %v2663 = vpack.c.b16 %v1916, %v1915
  %v2664 = vpack.c.b16 %v1918, %v1917
  %v2665 = vpack.c.b16 %v1920, %v1919
  %v2666 = vpack.c.b16 %v1922, %v1921
  %v2667 = vpack.c.b16 %v1924, %v1923
  %v2668 = vpack.c.b16 %v1926, %v1925
  %v2669 = vpack.c.b16 %v1928, %v1927
  %v2670 = vpack.c.b16 %v1930, %v1929
  %v2671 = vpack.c.b16 %v1932, %v1931
  %v2672 = vpack.c.b16 %v1934, %v1933
  %v2673 = vpack.c.b16 %v1936, %v1935
  %v2674 = vpack.c.b16 %v1938, %v1937
  %v2675 = vpack.c.b16 %v1940, %v1939
  %v2676 = vpack.c.b16 %v1942, %v1941
  %v2677 = vpack.c.b16 %v1944, %v1943
  %v2678 = vpack.c.b16 %v1946, %v1945
  %v2679 = vpack.c.b16 %v1948, %v1947
  %v2680 = vpack.c.b16 %v1950, %v1949
  %v2681 = vpack.c.b16 %v1952, %v1951
  %v2682 = vpack.c.b16 %v1954, %v1953
  %v2683 = vpack.c.b16 %v1956, %v1955
  %v2684 = vpack.c.b16 %v1958, %v1957
  %v2685 = vpack.c.b16 %v1960, %v1959
  %v2686 = vpack.c.b16 %v1962, %v1961
  %v2687 = vpack.c.b16 %v1964, %v1963
  %v2688 = vpack.c.b16 %v1966, %v1965
  %v2689 = vpack.c.b16 %v1968, %v1967
  %v2690 = vpack.c.b16 %v1970, %v1969
  %v2691 = vpack.c.b16 %v1972, %v1971
  %v2692 = vpack.c.b16 %v1974, %v1973
  %v2693 = vpack.c.b16 %v1976, %v1975
  %v2694 = vpack.c.b16 %v1978, %v1977
  %v2695 = vpack.c.b16 %v1980, %v1979
  %v2696 = vpack.c.b16 %v1982, %v1981
  %v2697 = vpack.c.b16 %v1984, %v1983
  %v2698 = vpack.c.b16 %v1986, %v1985
  %v2699 = vpack.c.b16 %v1988, %v1987
  %v2700 = vpack.c.b16 %v1990, %v1989
  %v2701 = vpack.c.b16 %v1992, %v1991
  %v2702 = vpack.c.b16 %v1994, %v1993
  %v2703 = vpack.c.b16 %v1996, %v1995
  %v2704 = vpack.c.b16 %v1998, %v1997
  %v2705 = vpack.c.b16 %v2000, %v1999
  %v2706 = vpack.c.b16 %v2002, %v2001
  %v2707 = vpack.c.b16 %v2004, %v2003
  %v2708 = vpack.c.b16 %v2006, %v2005
  %v2709 = vpack.c.b16 %v2008, %v2007
  %v2710 = vpack.c.b16 %v2010, %v2009
  %v2711 = vpack.c.b16 %v2012, %v2011
  %v2712 = vpack.c.b16 %v2014, %v2013
  %v2713 = vpack.c.b16 %v2016, %v2015
  %v2714 = vpack.c.b16 %v2018, %v2017
  %v2715 = vpack.c.b16 %v2020, %v2019
  %v2716 = vpack.c.b16 %v2022, %v2021
  %v2717 = vpack.c.b16 %v2024, %v2023
  %v2718 = vpack.c.b16 %v2026, %v2025
  %v2719 = vpack.c.b16 %v2028, %v2027
  %v2720 = vpack.c.b16 %v2030, %v2029
  %v2721 = vpack.c.b16 %v2032, %v2031
  %v2722 = vpack.c.b16 %v2034, %v2033
  %v2723 = vpack.c.b16 %v2036, %v2035
  %v2724 = vpack.c.b16 %v2038, %v2037
  %v2725 = vpack.c.b16 %v2040, %v2039
  %v2726 = vpack.c.b16 %v2042, %v2041
  %v2727 = vpack.c.b16 %v2044, %v2043
  %v2728 = vpack.c.b16 %v2046, %v2045
  %v2729 = vpack.c.b16 %v2048, %v2047
  %v2730 = vpack.c.b16 %v2050, %v2049
  %v2731 = vpack.c.b16 %v2052, %v2051
  %v2732 = vpack.c.b16 %v2054, %v2053
  %v2733 = vpack.c.b16 %v2056, %v2055
  %v2734 = vpack.c.b16 %v2058, %v2057
  %v2735 = vpack.c.b16 %v2060, %v2059
  %v2736 = vpack.c.b16 %v2062, %v2061
  %v2737 = vpack.c.b16 %v2064, %v2063
  %v2738 = vpack.c.b16 %v2066, %v2065
  %v2739 = vpack.c.b16 %v2068, %v2067
  %v2740 = vpack.c.b16 %v2070, %v2069
  %v2741 = vpack.c.b16 %v2072, %v2071
  %v2742 = vpack.c.b16 %v2074, %v2073
  %v2743 = vpack.c.b16 %v2076, %v2075
  %v2744 = vpack.c.b16 %v2078, %v2077
  %v2745 = vpack.c.b16 %v2080, %v2079
  %v2746 = vpack.c.b16 %v2082, %v2081
  %v2747 = vpack.c.b16 %v2084, %v2083
  %v2748 = vpack.c.b16 %v2086, %v2085
  %v2749 = vpack.c.b16 %v2088, %v2087
  %v2750 = vpack.c.b16 %v2090, %v2089
  %v2751 = vpack.c.b16 %v2092, %v2091
  %v2752 = vpack.c.b16 %v2094, %v2093
  %v2753 = vpack.c.b16 %v2096, %v2095
  %v2754 = vpack.c.b16 %v2098, %v2097
  %v2755 = vpack.c.b16 %v2100, %v2099
  %v2756 = vpack.c.b16 %v2102, %v2101
  %v2757 = vpack.c.b16 %v2104, %v2103
  %v2758 = vpack.c.b16 %v2106, %v2105
  %v2759 = vpack.c.b16 %v2108, %v2107
  %v2760 = vpack.c.b16 %v2110, %v2109
  %v2761 = vpack.c.b16 %v2112, %v2111
  %v2762 = vpack.c.b16 %v2114, %v2113
  %v2763 = vpack.c.b16 %v2116, %v2115
  %v2764 = vpack.c.b16 %v2118, %v2117
  %v2765 = vpack.c.b16 %v2120, %v2119
  %v2766 = vpack.c.b16 %v2122, %v2121
  %v2767 = vpack.c.b16 %v2124, %v2123
  %v2768 = vpack.c.b16 %v2126, %v2125
  %v2769 = vpack.c.b16 %v2128, %v2127
  %v2770 = vpack.c.b16 %v2130, %v2129
  %v2771 = vpack.c.b16 %v2132, %v2131
  %v2772 = vpack.c.b16 %v2134, %v2133
  %v2773 = vpack.c.b16 %v2136, %v2135
  %v2774 = vpack.c.b16 %v2138, %v2137
  %v2775 = vpack.c.b16 %v2140, %v2139
  %v2776 = vpack.c.b16 %v2142, %v2141
  %v2777 = vpack.c.b16 %v2144, %v2143
  %v2778 = vpack.c.b16 %v2146, %v2145
  %v2779 = vpack.c.b16 %v2148, %v2147
  %v2780 = vpack.c.b16 %v2150, %v2149
  %v2781 = vpack.c.b16 %v2152, %v2151
  %v2782 = vpack.c.b16 %v2154, %v2153
  %v2783 = vpack.c.b16 %v2156, %v2155
  %v2784 = vpack.c.b16 %v2158, %v2157
  %v2785 = vpack.c.b16 %v2160, %v2159
  %v2786 = vpack.c.b16 %v2162, %v2161
  %v2787 = vpack.c.b16 %v2164, %v2163
  %v2788 = vpack.c.b16 %v2166, %v2165
  %v2789 = vpack.c.b16 %v2168, %v2167
  %v2790 = vpack.c.b16 %v2170, %v2169
  %v2791 = vpack.c.b16 %v2172, %v2171
  %v2792 = vpack.c.b16 %v2174, %v2173
  %v2793 = vpack.c.b16 %v2176, %v2175
  %v2794 = vpack.c.b16 %v2178, %v2177
  %v2795 = vpack.c.b16 %v2180, %v2179
  %v2796 = vpack.c.b16 %v2182, %v2181
  %v2797 = vpack.c.b16 %v2184, %v2183
  %v2798 = vpack.c.b16 %v2186, %v2185
  %v2799 = vpack.c.b16 %v2188, %v2187
  %v2800 = vpack.c.b16 %v2190, %v2189
  %v2801 = vpack.c.b16 %v2192, %v2191
  %v2802 = vpack.c.b16 %v2194, %v2193
  %v2803 = vpack.c.b16 %v2196, %v2195
  %v2804 = vpack.c.b16 %v2198, %v2197
  %v2805 = vpack.c.b16 %v2200, %v2199
  %v2806 = vpack.c.b16 %v2202, %v2201
  %v2807 = vpack.c.b16 %v2204, %v2203
  %v2808 = vpack.c.b16 %v2206, %v2205
  %v2809 = vpack.c.b16 %v2208, %v2207
  %v2810 = vpack.c.b16 %v2210, %v2209
  %v2811 = vpack.c.b16 %v2212, %v2211
  %v2812 = vpack.c.b16 %v2214, %v2213
  %v2813 = vpack.c.b16 %v2216, %v2215
  %v2814 = vpack.c.b16 %v2218, %v2217
  %v2815 = vpack.c.b16 %v2220, %v2219
  %v2816 = vpack.c.b16 %v2222, %v2221
  %v2817 = vpack.c.b16 %v2224, %v2223
  %v2818 = vpack.c.b16 %v2226, %v2225
  %v2819 = vpack.c.b16 %v2228, %v2227
  %v2820 = vpack.c.b16 %v2230, %v2229
  %v2821 = vpack.c.b16 %v2232, %v2231
  %v2822 = vpack.c.b16 %v2234, %v2233
  %v2823 = vpack.c.b16 %v2236, %v2235
  %v2824 = vpack.c.b16 %v2238, %v2237
  %v2825 = vpack.c.b16 %v2240, %v2239
  %v2826 = vpack.c.b16 %v2242, %v2241
  %v2827 = vpack.c.b16 %v2244, %v2243
  %v2828 = vpack.c.b16 %v2246, %v2245
  %v2829 = vpack.c.b16 %v2248, %v2247
  %v2830 = vpack.c.b16 %v2250, %v2249
  %v2831 = vpack.c.b16 %v2252, %v2251
  %v2832 = vpack.c.b16 %v2254, %v2253
  %v2833 = vpack.c.b16 %v2256, %v2255
  %v2834 = vpack.c.b16 %v2258, %v2257
  %v2835 = vpack.c.b16 %v2260, %v2259
  %v2836 = vpack.c.b16 %v2262, %v2261
  %v2837 = vpack.c.b16 %v2264, %v2263
  %v2838 = vpack.c.b16 %v2266, %v2265
  %v2839 = vpack.c.b16 %v2268, %v2267
  %v2840 = vpack.c.b16 %v2270, %v2269
  %v2841 = vpack.c.b16 %v2272, %v2271
  %v2842 = vpack.c.b16 %v2274, %v2273
  %v2843 = vpack.c.b16 %v2276, %v2275
  %v2844 = vpack.c.b16 %v2278, %v2277
  %v2845 = vpack.c.b16 %v2280, %v2279
  %v2846 = vpack.c.b16 %v2282, %v2281
  %v2847 = vpack.c.b16 %v2284, %v2283
  %v2848 = vpack.c.b16 %v2286, %v2285
  %v2849 = vpack.c.b16 %v2288, %v2287
  %v2850 = vpack.c.b16 %v2290, %v2289
  %v2851 = vpack.c.b16 %v2292, %v2291
  %v2852 = vpack.c.b16 %v2294, %v2293
  %v2853 = vpack.c.b16 %v2296, %v2295
  %v2854 = vpack.c.b16 %v2298, %v2297
  %v2855 = vpack.c.b16 %v2300, %v2299
  %v2856 = vpack.c.b16 %v2302, %v2301
  %v2857 = vpack.c.b16 %v2304, %v2303
  %v2858 = vpack.c.b16 %v2306, %v2305
  %v2859 = vpack.c.b16 %v2308, %v2307
  %v2860 = vpack.c.b16 %v2310, %v2309
  %v2861 = vpack.c.b16 %v2312, %v2311
  %v2862 = vpack.c.b16 %v2314, %v2313
  %v2863 = vpack.c.b16 %v2316, %v2315
  %v2864 = vpack.c.b16 %v2318, %v2317
  %v2865 = vpack.c.b16 %v2320, %v2319
  %v2866 = vpack.c.b16 %v2322, %v2321
  %v2867 = vpack.c.b16 %v2324, %v2323
  %v2868 = vpack.c.b16 %v2326, %v2325
  %v2869 = vpack.c.b16 %v2328, %v2327
  %v2870 = vpack.c.b16 %v2330, %v2329
  %v2871 = vpack.c.b16 %v2332, %v2331
  %v2872 = vpack.c.b16 %v2334, %v2333
  %v2873 = vpack.c.b16 %v2336, %v2335
  %v2874 = vpack.c.b16 %v2338, %v2337
  %v2875 = vpack.c.b16 %v2340, %v2339
  %v2876 = vpack.c.b16 %v2342, %v2341
  %v2877 = vpack.c.b16 %v2344, %v2343
  %v2878 = vpack.c.b16 %v2346, %v2345
  %v2879 = vpack.c.b16 %v2348, %v2347
  %v2880 = vpack.c.b16 %v2350, %v2349
  %v2881 = vpack.c.b16 %v2352, %v2351
  %v2882 = vpack.c.b16 %v2354, %v2353
  %v2883 = vpack.c.b16 %v2356, %v2355
  %v2884 = vpack.c.b16 %v2358, %v2357
  %v2885 = vpack.c.b16 %v2360, %v2359
  %v2886 = vpack.c.b16 %v2362, %v2361
  %v2887 = vpack.c.b16 %v2364, %v2363
  %v2888 = vpack.c.b16 %v2366, %v2365
  %v2889 = vpack.c.b16 %v2368, %v2367
  %v2890 = vpack.c.b16 %v2370, %v2369
  %v2891 = vpack.c.b16 %v2372, %v2371
  %v2892 = vpack.c.b16 %v2374, %v2373
  %v2893 = vpack.c.b16 %v2376, %v2375
  %v2894 = vpack.c.b16 %v2378, %v2377
  %v2895 = vpack.c.b16 %v2380, %v2379
  %v2896 = vpack.c.b16 %v2382, %v2381
  %v2897 = vpack.c.b16 %v2384, %v2383
  %v2898 = vpack.c.b16 %v2386, %v2385
  %v2899 = vpack.c.b16 %v2388, %v2387
  %v2900 = vpack.c.b16 %v2390, %v2389
  %v2901 = vpack.c.b16 %v2392, %v2391
  %v2902 = vpack.c.b16 %v2394, %v2393
  %v2903 = vpack.c.b16 %v2396, %v2395
  %v2904 = vpack.c.b16 %v2398, %v2397
  %v2905 = vpack.c.b16 %v2400, %v2399
  %v2906 = vpack.c.b16 %v2402, %v2401
  %v2907 = vpack.c.b16 %v2404, %v2403
  %v2908 = vpack.c.b16 %v2406, %v2405
  %v2909 = vpack.c.b16 %v2408, %v2407
  %v2910 = vpack.c.b16 %v2410, %v2409
  %v2911 = vpack.c.b16 %v2412, %v2411
  %v2912 = vpack.c.b16 %v2414, %v2413
  %v2913 = vpack.c.b16 %v2416, %v2415
  %v2914 = vpack.c.b16 %v2418, %v2417
  %v2915 = vpack.c.b16 %v2420, %v2419
  %v2916 = vpack.c.b16 %v2422, %v2421
  %v2917 = vpack.c.b16 %v2424, %v2423
  %v2918 = vpack.c.b16 %v2426, %v2425
  %v2919 = vpack.c.b16 %v2428, %v2427
  %v2920 = vpack.c.b16 %v2430, %v2429
  %v2921 = vpack.c.b16 %v2432, %v2431
  %v2922 = vpack.c.b16 %v2434, %v2433
  %v2923 = vpack.c.b16 %v2436, %v2435
  %v2924 = vpack.c.b16 %v2438, %v2437
  %v2925 = vpack.c.b16 %v2440, %v2439
  %v2926 = vpack.c.b16 %v2442, %v2441
  %v2927 = vpack.c.b16 %v2444, %v2443
  %v2928 = vpack.c.b16 %v2446, %v2445
  %v2929 = vpack.c.b16 %v2448, %v2447
  %v2930 = vpack.c.b16 %v2450, %v2449
  %v2931 = vpack.c.b16 %v2452, %v2451
  %v2932 = vpack.c.b16 %v2454, %v2453
  %v2933 = vpack.c.b16 %v2456, %v2455
  %v2934 = vpack.c.b16 %v2458, %v2457
  %v2935 = vpack.c.b16 %v2460, %v2459
  %v2936 = vpack.c.b16 %v2462, %v2461
  %v2937 = vpack.c.b16 %v2464, %v2463
  %v2938 = vpack.c.b16 %v2466, %v2465
  %v2939 = vpack.c.b16 %v2468, %v2467
  %v2940 = vpack.c.b16 %v2470, %v2469
  %v2941 = vpack.c.b16 %v2472, %v2471
  %v2942 = vpack.c.b16 %v2474, %v2473
  %v2943 = vpack.c.b16 %v2476, %v2475
  %v2944 = vpack.c.b16 %v2478, %v2477
  %v2945 = vpack.c.b16 %v2480, %v2479
  %v2946 = vpack.c.b16 %v2482, %v2481
  %v2947 = vpack.c.b16 %v2484, %v2483
  %v2948 = vpack.c.b16 %v2486, %v2485
  %v2949 = vpack.c.b16 %v2488, %v2487
  %v2950 = vpack.c.b16 %v2490, %v2489
  %v2951 = vpack.c.b16 %v2492, %v2491
  %v2952 = vpack.c.b16 %v2494, %v2493
  %v2953 = vpack.c.b16 %v2496, %v2495
  %v2954 = vpack.c.b16 %v2498, %v2497
  %v2955 = vpack.c.b16 %v2500, %v2499
  %v2956 = vpack.c.b16 %v2502, %v2501
  %v2957 = vpack.c.b16 %v2504, %v2503
  %v2958 = vpack.c.b16 %v2506, %v2505
  %v2959 = vpack.c.b16 %v2508, %v2507
  %v2960 = vpack.c.b16 %v2510, %v2509
  %v2961 = vpack.c.b16 %v2512, %v2511
  %v2962 = vpack.c.b16 %v2514, %v2513
  %v2963 = vpack.c.b16 %v2516, %v2515
  %v2964 = vpack.c.b16 %v2518, %v2517
  %v2965 = vpack.c.b16 %v2520, %v2519
  %v2966 = vpack.c.b16 %v2522, %v2521
  %v2967 = vpack.c.b16 %v2524, %v2523
  %v2968 = vpack.c.b16 %v2526, %v2525
  %v2969 = vpack.c.b16 %v2528, %v2527
  %v2970 = vpack.c.b16 %v2530, %v2529
  %v2971 = vpack.c.b16 %v2532, %v2531
  %v2972 = vpack.c.b16 %v2534, %v2533
  %v2973 = vpack.c.b16 %v2536, %v2535
  %v2974 = vpack.c.b16 %v2538, %v2537
  %v2975 = vpack.c.b16 %v2540, %v2539
  %v2976 = vpack.c.b16 %v2542, %v2541
  %v2977 = vpack.c.b16 %v2544, %v2543
  %v2978 = vpack.c.b16 %v2546, %v2545
  %v2979 = vpack.c.b16 %v2548, %v2547
  %v2980 = vpack.c.b16 %v2550, %v2549
  %v2981 = vpack.c.b16 %v2552, %v2551
  %v2982 = vpack.c.b16 %v2554, %v2553
  %v2983 = vpack.c.b16 %v2556, %v2555
  %v2984 = vpack.c.b16 %v2558, %v2557
  %v2985 = vpack.c.b16 %v2560, %v2559
  %v2986 = vpack.c.b16 %v2562, %v2561
  %v2987 = vpack.c.b16 %v2564, %v2563
  %v2988 = vpack.c.b16 %v2566, %v2565
  %v2989 = vpack.c.b16 %v2568, %v2567
  %v2990 = vpack.c.b16 %v2570, %v2569
  %v2991 = vpack.c.b16 %v2572, %v2571
  %v2992 = vpack.c.b16 %v2574, %v2573
  %v2993 = vpack.c.b16 %v2576, %v2575
  %v2994 = vpack.c.b16 %v2578, %v2577
  %v2995 = vpack.c.b16 %v2580, %v2579
  %v2996 = vpack.c.b16 %v2582, %v2581
  %v2997 = vpack.c.b16 %v2584, %v2583
  %v2998 = vpack.c.b16 %v2586, %v2585
  %v2999 = vpack.c.b16 %v2588, %v2587
  %v3000 = vpack.c.b16 %v2590, %v2589
  %v3001 = vpack.c.b16 %v2592, %v2591
  %v3002 = vpack.c.b16 %v2594, %v2593
  %v3003 = vpack.c.b16 %v2596, %v2595
  %v3004 = vpack.c.b16 %v2598, %v2597
  %v3005 = vpack.c.b16 %v2600, %v2599
  %v3006 = vpack.c.b16 %v2602, %v2601
  %v3007 = vpack.c.b16 %v2604, %v2603
  %v3008 = vpack.c.b16 %v2606, %v2605
  %v3009 = vpack.c.b16 %v2608, %v2607
  %v3010 = vpack.c.b16 %v2610, %v2609
  %v3011 = vpack.c.b16 %v2612, %v2611
  %v3012 = vpack.c.b16 %v2614, %v2613
  %v3013 = vpack.c.b16 %v2616, %v2615
  %v3014 = vpack.c.b16 %v2618, %v2617
  %v3015 = vpack.c.b16 %v2620, %v2619
  %v3016 = vpack.c.b16 %v2622, %v2621
  %v3017 = vpack.c.b16 %v2624, %v2623
  %v3018 = vpack.c.b16 %v2626, %v2625
  %vm3019 = vcmask 64512
  %v3021 = vsel %vm3019, %v15, 0
  %v3024 = vsel %vm3019, %v2627, 0
  %v3027 = vsel %vm3019, %v2628, 0
  %v3030 = vsel %vm3019, %v2629, 0
  %v3033 = vsel %vm3019, %v2630, 0
  %v3036 = vsel %vm3019, %v2631, 0
  %v3039 = vsel %vm3019, %v2632, 0
  %v3042 = vsel %vm3019, %v2633, 0
  %v3045 = vsel %vm3019, %v2634, 0
  %v3048 = vsel %vm3019, %v2635, 0
  %v3051 = vsel %vm3019, %v2636, 0
  %v3054 = vsel %vm3019, %v2637, 0
  %v3057 = vsel %vm3019, %v2638, 0
  %v3060 = vsel %vm3019, %v2639, 0
  %v3063 = vsel %vm3019, %v2640, 0
  %v3066 = vsel %vm3019, %v2641, 0
  %v3069 = vsel %vm3019, %v2642, 0
  %v3072 = vsel %vm3019, %v2643, 0
  %v3075 = vsel %vm3019, %v2644, 0
  %v3078 = vsel %vm3019, %v2645, 0
  %v3081 = vsel %vm3019, %v2646, 0
  %v3084 = vsel %vm3019, %v2647, 0
  %v3087 = vsel %vm3019, %v2648, 0
  %v3090 = vsel %vm3019, %v2649, 0
  %v3093 = vsel %vm3019, %v2650, 0
  %v3096 = vsel %vm3019, %v2651, 0
  %v3099 = vsel %vm3019, %v2652, 0
  %v3102 = vsel %vm3019, %v2653, 0
  %v3105 = vsel %vm3019, %v2654, 0
  %v3108 = vsel %vm3019, %v2655, 0
  %v3111 = vsel %vm3019, %v2656, 0
  %v3114 = vsel %vm3019, %v2657, 0
  %v3117 = vsel %vm3019, %v2658, 0
  %v3120 = vsel %vm3019, %v2659, 0
  %v3123 = vsel %vm3019, %v2660, 0
  %v3126 = vsel %vm3019, %v2661, 0
  %v3129 = vsel %vm3019, %v2662, 0
  %v3132 = vsel %vm3019, %v2663, 0
  %v3135 = vsel %vm3019, %v2664, 0
  %v3138 = vsel %vm3019, %v2665, 0
  %v3141 = vsel %vm3019, %v2666, 0
  %v3144 = vsel %vm3019, %v2667, 0
  %v3147 = vsel %vm3019, %v2668, 0
  %v3150 = vsel %vm3019, %v2669, 0
  %v3153 = vsel %vm3019, %v2670, 0
  %v3156 = vsel %vm3019, %v2671, 0
  %v3159 = vsel %vm3019, %v2672, 0
  %v3162 = vsel %vm3019, %v2673, 0
  %v3165 = vsel %vm3019, %v2674, 0
  %v3168 = vsel %vm3019, %v2675, 0
  %v3171 = vsel %vm3019, %v2676, 0
  %v3174 = vsel %vm3019, %v2677, 0
  %v3177 = vsel %vm3019, %v2678, 0
  %v3180 = vsel %vm3019, %v2679, 0
  %v3183 = vsel %vm3019, %v2680, 0
  %v3186 = vsel %vm3019, %v2681, 0
  %v3189 = vsel %vm3019, %v2682, 0
  %v3192 = vsel %vm3019, %v2683, 0
  %v3195 = vsel %vm3019, %v2684, 0
  %v3198 = vsel %vm3019, %v2685, 0
  %v3201 = vsel %vm3019, %v2686, 0
  %v3204 = vsel %vm3019, %v2687, 0
  %v3207 = vsel %vm3019, %v2688, 0
  %v3210 = vsel %vm3019, %v2689, 0
  %v3213 = vsel %vm3019, %v2690, 0
  %v3216 = vsel %vm3019, %v2691, 0
  %v3219 = vsel %vm3019, %v2692, 0
  %v3222 = vsel %vm3019, %v2693, 0
  %v3225 = vsel %vm3019, %v2694, 0
  %v3228 = vsel %vm3019, %v2695, 0
  %v3231 = vsel %vm3019, %v2696, 0
  %v3234 = vsel %vm3019, %v2697, 0
  %v3237 = vsel %vm3019, %v2698, 0
  %v3240 = vsel %vm3019, %v2699, 0
  %v3243 = vsel %vm3019, %v2700, 0
  %v3246 = vsel %vm3019, %v2701, 0
  %v3249 = vsel %vm3019, %v2702, 0
  %v3252 = vsel %vm3019, %v2703, 0
  %v3255 = vsel %vm3019, %v2704, 0
  %v3258 = vsel %vm3019, %v2705, 0
  %v3261 = vsel %vm3019, %v2706, 0
  %v3264 = vsel %vm3019, %v2707, 0
  %v3267 = vsel %vm3019, %v2708, 0
  %v3270 = vsel %vm3019, %v2709, 0
  %v3273 = vsel %vm3019, %v2710, 0
  %v3276 = vsel %vm3019, %v2711, 0
  %v3279 = vsel %vm3019, %v2712, 0
  %v3282 = vsel %vm3019, %v2713, 0
  %v3285 = vsel %vm3019, %v2714, 0
  %v3288 = vsel %vm3019, %v2715, 0
  %v3291 = vsel %vm3019, %v2716, 0
  %v3294 = vsel %vm3019, %v2717, 0
  %v3297 = vsel %vm3019, %v2718, 0
  %v3300 = vsel %vm3019, %v2719, 0
  %v3303 = vsel %vm3019, %v2720, 0
  %v3306 = vsel %vm3019, %v2721, 0
  %v3309 = vsel %vm3019, %v2722, 0
  %v3312 = vsel %vm3019, %v2723, 0
  %v3315 = vsel %vm3019, %v2724, 0
  %v3318 = vsel %vm3019, %v2725, 0
  %v3321 = vsel %vm3019, %v2726, 0
  %v3324 = vsel %vm3019, %v2727, 0
  %v3327 = vsel %vm3019, %v2728, 0
  %v3330 = vsel %vm3019, %v2729, 0
  %v3333 = vsel %vm3019, %v2730, 0
  %v3336 = vsel %vm3019, %v2731, 0
  %v3339 = vsel %vm3019, %v2732, 0
  %v3342 = vsel %vm3019, %v2733, 0
  %v3345 = vsel %vm3019, %v2734, 0
  %v3348 = vsel %vm3019, %v2735, 0
  %v3351 = vsel %vm3019, %v2736, 0
  %v3354 = vsel %vm3019, %v2737, 0
  %v3357 = vsel %vm3019, %v2738, 0
  %v3360 = vsel %vm3019, %v2739, 0
  %v3363 = vsel %vm3019, %v2740, 0
  %v3366 = vsel %vm3019, %v2741, 0
  %v3369 = vsel %vm3019, %v2742, 0
  %v3372 = vsel %vm3019, %v2743, 0
  %v3375 = vsel %vm3019, %v2744, 0
  %v3378 = vsel %vm3019, %v2745, 0
  %v3381 = vsel %vm3019, %v2746, 0
  %v3384 = vsel %vm3019, %v2747, 0
  %v3387 = vsel %vm3019, %v2748, 0
  %v3390 = vsel %vm3019, %v2749, 0
  %v3393 = vsel %vm3019, %v2750, 0
  %v3396 = vsel %vm3019, %v2751, 0
  %v3399 = vsel %vm3019, %v2752, 0
  %v3402 = vsel %vm3019, %v2753, 0
  %v3405 = vsel %vm3019, %v2754, 0
  %v3408 = vsel %vm3019, %v2755, 0
  %v3411 = vsel %vm3019, %v2756, 0
  %v3414 = vsel %vm3019, %v2757, 0
  %v3417 = vsel %vm3019, %v2758, 0
  %v3420 = vsel %vm3019, %v2759, 0
  %v3423 = vsel %vm3019, %v2760, 0
  %v3426 = vsel %vm3019, %v2761, 0
  %v3429 = vsel %vm3019, %v2762, 0
  %v3432 = vsel %vm3019, %v2763, 0
  %v3435 = vsel %vm3019, %v2764, 0
  %v3438 = vsel %vm3019, %v2765, 0
  %v3441 = vsel %vm3019, %v2766, 0
  %v3444 = vsel %vm3019, %v2767, 0
  %v3447 = vsel %vm3019, %v2768, 0
  %v3450 = vsel %vm3019, %v2769, 0
  %v3453 = vsel %vm3019, %v2770, 0
  %v3456 = vsel %vm3019, %v2771, 0
  %v3459 = vsel %vm3019, %v2772, 0
  %v3462 = vsel %vm3019, %v2773, 0
  %v3465 = vsel %vm3019, %v2774, 0
  %v3468 = vsel %vm3019, %v2775, 0
  %v3471 = vsel %vm3019, %v2776, 0
  %v3474 = vsel %vm3019, %v2777, 0
  %v3477 = vsel %vm3019, %v2778, 0
  %v3480 = vsel %vm3019, %v2779, 0
  %v3483 = vsel %vm3019, %v2780, 0
  %v3486 = vsel %vm3019, %v2781, 0
  %v3489 = vsel %vm3019, %v2782, 0
  %v3492 = vsel %vm3019, %v2783, 0
  %v3495 = vsel %vm3019, %v2784, 0
  %v3498 = vsel %vm3019, %v2785, 0
  %v3501 = vsel %vm3019, %v2786, 0
  %v3504 = vsel %vm3019, %v2787, 0
  %v3507 = vsel %vm3019, %v2788, 0
  %v3510 = vsel %vm3019, %v2789, 0
  %v3513 = vsel %vm3019, %v2790, 0
  %v3516 = vsel %vm3019, %v2791, 0
  %v3519 = vsel %vm3019, %v2792, 0
  %v3522 = vsel %vm3019, %v2793, 0
  %v3525 = vsel %vm3019, %v2794, 0
  %v3528 = vsel %vm3019, %v2795, 0
  %v3531 = vsel %vm3019, %v2796, 0
  %v3534 = vsel %vm3019, %v2797, 0
  %v3537 = vsel %vm3019, %v2798, 0
  %v3540 = vsel %vm3019, %v2799, 0
  %v3543 = vsel %vm3019, %v2800, 0
  %v3546 = vsel %vm3019, %v2801, 0
  %v3549 = vsel %vm3019, %v2802, 0
  %v3552 = vsel %vm3019, %v2803, 0
  %v3555 = vsel %vm3019, %v2804, 0
  %v3558 = vsel %vm3019, %v2805, 0
  %v3561 = vsel %vm3019, %v2806, 0
  %v3564 = vsel %vm3019, %v2807, 0
  %v3567 = vsel %vm3019, %v2808, 0
  %v3570 = vsel %vm3019, %v2809, 0
  %v3573 = vsel %vm3019, %v2810, 0
  %v3576 = vsel %vm3019, %v2811, 0
  %v3579 = vsel %vm3019, %v2812, 0
  %v3582 = vsel %vm3019, %v2813, 0
  %v3585 = vsel %vm3019, %v2814, 0
  %v3588 = vsel %vm3019, %v2815, 0
  %v3591 = vsel %vm3019, %v2816, 0
  %v3594 = vsel %vm3019, %v2817, 0
  %v3597 = vsel %vm3019, %v2818, 0
  %v3600 = vsel %vm3019, %v2819, 0
  %v3603 = vsel %vm3019, %v2820, 0
  %v3606 = vsel %vm3019, %v2821, 0
  %v3609 = vsel %vm3019, %v2822, 0
  %v3612 = vsel %vm3019, %v2823, 0
  %v3615 = vsel %vm3019, %v2824, 0
  %v3618 = vsel %vm3019, %v2825, 0
  %v3621 = vsel %vm3019, %v2826, 0
  %v3624 = vsel %vm3019, %v2827, 0
  %v3627 = vsel %vm3019, %v2828, 0
  %v3630 = vsel %vm3019, %v2829, 0
  %v3633 = vsel %vm3019, %v2830, 0
  %v3636 = vsel %vm3019, %v2831, 0
  %v3639 = vsel %vm3019, %v2832, 0
  %v3642 = vsel %vm3019, %v2833, 0
  %v3645 = vsel %vm3019, %v2834, 0
  %v3648 = vsel %vm3019, %v2835, 0
  %v3651 = vsel %vm3019, %v2836, 0
  %v3654 = vsel %vm3019, %v2837, 0
  %v3657 = vsel %vm3019, %v2838, 0
  %v3660 = vsel %vm3019, %v2839, 0
  %v3663 = vsel %vm3019, %v2840, 0
  %v3666 = vsel %vm3019, %v2841, 0
  %v3669 = vsel %vm3019, %v2842, 0
  %v3672 = vsel %vm3019, %v2843, 0
  %v3675 = vsel %vm3019, %v2844, 0
  %v3678 = vsel %vm3019, %v2845, 0
  %v3681 = vsel %vm3019, %v2846, 0
  %v3684 = vsel %vm3019, %v2847, 0
  %v3687 = vsel %vm3019, %v2848, 0
  %v3690 = vsel %vm3019, %v2849, 0
  %v3693 = vsel %vm3019, %v2850, 0
  %v3696 = vsel %vm3019, %v2851, 0
  %v3699 = vsel %vm3019, %v2852, 0
  %v3702 = vsel %vm3019, %v2853, 0
  %v3705 = vsel %vm3019, %v2854, 0
  %v3708 = vsel %vm3019, %v2855, 0
  %v3711 = vsel %vm3019, %v2856, 0
  %v3714 = vsel %vm3019, %v2857, 0
  %v3717 = vsel %vm3019, %v2858, 0
  %v3720 = vsel %vm3019, %v2859, 0
  %v3723 = vsel %vm3019, %v2860, 0
  %v3726 = vsel %vm3019, %v2861, 0
  %v3729 = vsel %vm3019, %v2862, 0
  %v3732 = vsel %vm3019, %v2863, 0
  %v3735 = vsel %vm3019, %v2864, 0
  %v3738 = vsel %vm3019, %v2865, 0
  %v3741 = vsel %vm3019, %v2866, 0
  %v3744 = vsel %vm3019, %v2867, 0
  %v3747 = vsel %vm3019, %v2868, 0
  %v3750 = vsel %vm3019, %v2869, 0
  %v3753 = vsel %vm3019, %v2870, 0
  %v3756 = vsel %vm3019, %v2871, 0
  %v3759 = vsel %vm3019, %v2872, 0
  %v3762 = vsel %vm3019, %v2873, 0
  %v3765 = vsel %vm3019, %v2874, 0
  %v3768 = vsel %vm3019, %v2875, 0
  %v3771 = vsel %vm3019, %v2876, 0
  %v3774 = vsel %vm3019, %v2877, 0
  %v3777 = vsel %vm3019, %v2878, 0
  %v3780 = vsel %vm3019, %v2879, 0
  %v3783 = vsel %vm3019, %v2880, 0
  %v3786 = vsel %vm3019, %v2881, 0
  %v3789 = vsel %vm3019, %v2882, 0
  %v3792 = vsel %vm3019, %v2883, 0
  %v3795 = vsel %vm3019, %v2884, 0
  %v3798 = vsel %vm3019, %v2885, 0
  %v3801 = vsel %vm3019, %v2886, 0
  %v3804 = vsel %vm3019, %v2887, 0
  %v3807 = vsel %vm3019, %v2888, 0
  %v3810 = vsel %vm3019, %v2889, 0
  %v3813 = vsel %vm3019, %v2890, 0
  %v3816 = vsel %vm3019, %v2891, 0
  %v3819 = vsel %vm3019, %v2892, 0
  %v3822 = vsel %vm3019, %v2893, 0
  %v3825 = vsel %vm3019, %v2894, 0
  %v3828 = vsel %vm3019, %v2895, 0
  %v3831 = vsel %vm3019, %v2896, 0
  %v3834 = vsel %vm3019, %v2897, 0
  %v3837 = vsel %vm3019, %v2898, 0
  %v3840 = vsel %vm3019, %v2899, 0
  %v3843 = vsel %vm3019, %v2900, 0
  %v3846 = vsel %vm3019, %v2901, 0
  %v3849 = vsel %vm3019, %v2902, 0
  %v3852 = vsel %vm3019, %v2903, 0
  %v3855 = vsel %vm3019, %v2904, 0
  %v3858 = vsel %vm3019, %v2905, 0
  %v3861 = vsel %vm3019, %v2906, 0
  %v3864 = vsel %vm3019, %v2907, 0
  %v3867 = vsel %vm3019, %v2908, 0
  %v3870 = vsel %vm3019, %v2909, 0
  %v3873 = vsel %vm3019, %v2910, 0
  %v3876 = vsel %vm3019, %v2911, 0
  %v3879 = vsel %vm3019, %v2912, 0
  %v3882 = vsel %vm3019, %v2913, 0
  %v3885 = vsel %vm3019, %v2914, 0
  %v3888 = vsel %vm3019, %v2915, 0
  %v3891 = vsel %vm3019, %v2916, 0
  %v3894 = vsel %vm3019, %v2917, 0
  %v3897 = vsel %vm3019, %v2918, 0
  %v3900 = vsel %vm3019, %v2919, 0
  %v3903 = vsel %vm3019, %v2920, 0
  %v3906 = vsel %vm3019, %v2921, 0
  %v3909 = vsel %vm3019, %v2922, 0
  %v3912 = vsel %vm3019, %v2923, 0
  %v3915 = vsel %vm3019, %v2924, 0
  %v3918 = vsel %vm3019, %v2925, 0
  %v3921 = vsel %vm3019, %v2926, 0
  %v3924 = vsel %vm3019, %v2927, 0
  %v3927 = vsel %vm3019, %v2928, 0
  %v3930 = vsel %vm3019, %v2929, 0
  %v3933 = vsel %vm3019, %v2930, 0
  %v3936 = vsel %vm3019, %v2931, 0
  %v3939 = vsel %vm3019, %v2932, 0
  %v3942 = vsel %vm3019, %v2933, 0
  %v3945 = vsel %vm3019, %v2934, 0
  %v3948 = vsel %vm3019, %v2935, 0
  %v3951 = vsel %vm3019, %v2936, 0
  %v3954 = vsel %vm3019, %v2937, 0
  %v3957 = vsel %vm3019, %v2938, 0
  %v3960 = vsel %vm3019, %v2939, 0
  %v3963 = vsel %vm3019, %v2940, 0
  %v3966 = vsel %vm3019, %v2941, 0
  %v3969 = vsel %vm3019, %v2942, 0
  %v3972 = vsel %vm3019, %v2943, 0
  %v3975 = vsel %vm3019, %v2944, 0
  %v3978 = vsel %vm3019, %v2945, 0
  %v3981 = vsel %vm3019, %v2946, 0
  %v3984 = vsel %vm3019, %v2947, 0
  %v3987 = vsel %vm3019, %v2948, 0
  %v3990 = vsel %vm3019, %v2949, 0
  %v3993 = vsel %vm3019, %v2950, 0
  %v3996 = vsel %vm3019, %v2951, 0
  %v3999 = vsel %vm3019, %v2952, 0
  %v4002 = vsel %vm3019, %v2953, 0
  %v4005 = vsel %vm3019, %v2954, 0
  %v4008 = vsel %vm3019, %v2955, 0
  %v4011 = vsel %vm3019, %v2956, 0
  %v4014 = vsel %vm3019, %v2957, 0
  %v4017 = vsel %vm3019, %v2958, 0
  %v4020 = vsel %vm3019, %v2959, 0
  %v4023 = vsel %vm3019, %v2960, 0
  %v4026 = vsel %vm3019, %v2961, 0
  %v4029 = vsel %vm3019, %v2962, 0
  %v4032 = vsel %vm3019, %v2963, 0
  %v4035 = vsel %vm3019, %v2964, 0
  %v4038 = vsel %vm3019, %v2965, 0
  %v4041 = vsel %vm3019, %v2966, 0
  %v4044 = vsel %vm3019, %v2967, 0
  %v4047 = vsel %vm3019, %v2968, 0
  %v4050 = vsel %vm3019, %v2969, 0
  %v4053 = vsel %vm3019, %v2970, 0
  %v4056 = vsel %vm3019, %v2971, 0
  %v4059 = vsel %vm3019, %v2972, 0
  %v4062 = vsel %vm3019, %v2973, 0
  %v4065 = vsel %vm3019, %v2974, 0
  %v4068 = vsel %vm3019, %v2975, 0
  %v4071 = vsel %vm3019, %v2976, 0
  %v4074 = vsel %vm3019, %v2977, 0
  %v4077 = vsel %vm3019, %v2978, 0
  %v4080 = vsel %vm3019, %v2979, 0
  %v4083 = vsel %vm3019, %v2980, 0
  %v4086 = vsel %vm3019, %v2981, 0
  %v4089 = vsel %vm3019, %v2982, 0
  %v4092 = vsel %vm3019, %v2983, 0
  %v4095 = vsel %vm3019, %v2984, 0
  %v4098 = vsel %vm3019, %v2985, 0
  %v4101 = vsel %vm3019, %v2986, 0
  %v4104 = vsel %vm3019, %v2987, 0
  %v4107 = vsel %vm3019, %v2988, 0
  %v4110 = vsel %vm3019, %v2989, 0
  %v4113 = vsel %vm3019, %v2990, 0
  %v4116 = vsel %vm3019, %v2991, 0
  %v4119 = vsel %vm3019, %v2992, 0
  %v4122 = vsel %vm3019, %v2993, 0
  %v4125 = vsel %vm3019, %v2994, 0
  %v4128 = vsel %vm3019, %v2995, 0
  %v4131 = vsel %vm3019, %v2996, 0
  %v4134 = vsel %vm3019, %v2997, 0
  %v4137 = vsel %vm3019, %v2998, 0
  %v4140 = vsel %vm3019, %v2999, 0
  %v4143 = vsel %vm3019, %v3000, 0
  %v4146 = vsel %vm3019, %v3001, 0
  %v4149 = vsel %vm3019, %v3002, 0
  %v4152 = vsel %vm3019, %v3003, 0
  %v4155 = vsel %vm3019, %v3004, 0
  %v4158 = vsel %vm3019, %v3005, 0
  %v4161 = vsel %vm3019, %v3006, 0
  %v4164 = vsel %vm3019, %v3007, 0
  %v4167 = vsel %vm3019, %v3008, 0
  %v4170 = vsel %vm3019, %v3009, 0
  %v4173 = vsel %vm3019, %v3010, 0
  %v4176 = vsel %vm3019, %v3011, 0
  %v4179 = vsel %vm3019, %v3012, 0
  %v4182 = vsel %vm3019, %v3013, 0
  %v4185 = vsel %vm3019, %v3014, 0
  %v4188 = vsel %vm3019, %v3015, 0
  %v4191 = vsel %vm3019, %v3016, 0
  %v4194 = vsel %vm3019, %v3017, 0
  %v4197 = vsel %vm3019, %v3018, 0
  %4199 = vmatprep.subr.bf16.mxu0 0
  %4200 = vmatpush1.bf16.xpose.msra.mxu0 %v3045
  %4201 = vmatprep.subr.bf16.mxu0 0
  %4202 = vmatpush1.bf16.xpose.msra.mxu0 %v3042
  %4203 = vmatprep.subr.bf16.mxu0 0
  %4204 = vmatpush1.bf16.xpose.msra.mxu0 %v3039
  %4205 = vmatprep.subr.bf16.mxu0 0
  %4206 = vmatpush1.bf16.xpose.msra.mxu0 %v3036
  %4207 = vmatprep.subr.bf16.mxu0 0
  %4208 = vmatpush1.bf16.xpose.msra.mxu0 %v3033
  %4209 = vmatprep.subr.bf16.mxu0 0
  %4210 = vmatpush1.bf16.xpose.msra.mxu0 %v3030
  %4211 = vmatprep.subr.bf16.mxu0 0
  %4212 = vmatpush1.bf16.xpose.msra.mxu0 %v3027
  %4213 = vmatprep.subr.bf16.mxu0 0
  %4214 = vmatpush1.bf16.xpose.msra.mxu0 %v3024
  %4215 = vmatprep.subr.bf16.mxu0 0
  %4216 = vmatpush2.bf16.xpose.msra.mxu0 %v3069
  %4217 = vmatprep.subr.bf16.mxu0 0
  %4218 = vmatpush2.bf16.xpose.msra.mxu0 %v3066
  %4219 = vmatprep.subr.bf16.mxu0 0
  %4220 = vmatpush2.bf16.xpose.msra.mxu0 %v3063
  %4221 = vmatprep.subr.bf16.mxu0 0
  %4222 = vmatpush2.bf16.xpose.msra.mxu0 %v3060
  %4223 = vmatprep.subr.bf16.mxu0 0
  %4224 = vmatpush2.bf16.xpose.msra.mxu0 %v3057
  %4225 = vmatprep.subr.bf16.mxu0 0
  %4226 = vmatpush2.bf16.xpose.msra.mxu0 %v3054
  %4227 = vmatprep.subr.bf16.mxu0 0
  %4228 = vmatpush2.bf16.xpose.msra.mxu0 %v3051
  %4229 = vmatprep.subr.bf16.mxu0 0
  %4230 = vmatpush2.bf16.xpose.msra.mxu0 %v3048
  %4231 = vmatprep.mubr.bf16.mxu0 0
  %4232 = vmatmul.mubr.bf16.gmra.mxu0 %v3021
  %v4233 = vpop.f32.mrf.mxu0
  %v4234 = vadd.f32 %v817, %v4233
  %v4235 = vpop.f32.mrf.mxu0
  %v4236 = vadd.f32 %v821, %v4235
  %v4237 = vpop.f32.mrf.mxu0
  %v4238 = vpop.f32.mrf.mxu0
  %4239 = vdwg.mxu0
  %4240 = vmatprep.subr.bf16.mxu0 0
  %4241 = vmatpush1.bf16.xpose.msra.mxu0 %v3093
  %4242 = vmatprep.subr.bf16.mxu0 0
  %4243 = vmatpush1.bf16.xpose.msra.mxu0 %v3090
  %4244 = vmatprep.subr.bf16.mxu0 0
  %4245 = vmatpush1.bf16.xpose.msra.mxu0 %v3087
  %4246 = vmatprep.subr.bf16.mxu0 0
  %4247 = vmatpush1.bf16.xpose.msra.mxu0 %v3084
  %4248 = vmatprep.subr.bf16.mxu0 0
  %4249 = vmatpush1.bf16.xpose.msra.mxu0 %v3081
  %4250 = vmatprep.subr.bf16.mxu0 0
  %4251 = vmatpush1.bf16.xpose.msra.mxu0 %v3078
  %4252 = vmatprep.subr.bf16.mxu0 0
  %4253 = vmatpush1.bf16.xpose.msra.mxu0 %v3075
  %4254 = vmatprep.subr.bf16.mxu0 0
  %4255 = vmatpush1.bf16.xpose.msra.mxu0 %v3072
  %4256 = vmatprep.subr.bf16.mxu0 0
  %4257 = vmatpush2.bf16.xpose.msra.mxu0 %v3117
  %4258 = vmatprep.subr.bf16.mxu0 0
  %4259 = vmatpush2.bf16.xpose.msra.mxu0 %v3114
  %4260 = vmatprep.subr.bf16.mxu0 0
  %4261 = vmatpush2.bf16.xpose.msra.mxu0 %v3111
  %4262 = vmatprep.subr.bf16.mxu0 0
  %4263 = vmatpush2.bf16.xpose.msra.mxu0 %v3108
  %4264 = vmatprep.subr.bf16.mxu0 0
  %4265 = vmatpush2.bf16.xpose.msra.mxu0 %v3105
  %4266 = vmatprep.subr.bf16.mxu0 0
  %4267 = vmatpush2.bf16.xpose.msra.mxu0 %v3102
  %4268 = vmatprep.subr.bf16.mxu0 0
  %4269 = vmatpush2.bf16.xpose.msra.mxu0 %v3099
  %4270 = vmatprep.subr.bf16.mxu0 0
  %4271 = vmatpush2.bf16.xpose.msra.mxu0 %v3096
  %4272 = vmatprep.mubr.bf16.mxu0 0
  %4273 = vmatmul.mubr.bf16.gmra.mxu0 %v3021
  %v4274 = vpop.f32.mrf.mxu0
  %v4275 = vadd.f32 %v825, %v4274
  %v4276 = vpop.f32.mrf.mxu0
  %v4277 = vadd.f32 %v829, %v4276
  %v4278 = vpop.f32.mrf.mxu0
  %v4279 = vpop.f32.mrf.mxu0
  %4280 = vdwg.mxu0
  %4281 = vmatprep.subr.bf16.mxu0 0
  %4282 = vmatpush1.bf16.xpose.msra.mxu0 %v3141
  %4283 = vmatprep.subr.bf16.mxu0 0
  %4284 = vmatpush1.bf16.xpose.msra.mxu0 %v3138
  %4285 = vmatprep.subr.bf16.mxu0 0
  %4286 = vmatpush1.bf16.xpose.msra.mxu0 %v3135
  %4287 = vmatprep.subr.bf16.mxu0 0
  %4288 = vmatpush1.bf16.xpose.msra.mxu0 %v3132
  %4289 = vmatprep.subr.bf16.mxu0 0
  %4290 = vmatpush1.bf16.xpose.msra.mxu0 %v3129
  %4291 = vmatprep.subr.bf16.mxu0 0
  %4292 = vmatpush1.bf16.xpose.msra.mxu0 %v3126
  %4293 = vmatprep.subr.bf16.mxu0 0
  %4294 = vmatpush1.bf16.xpose.msra.mxu0 %v3123
  %4295 = vmatprep.subr.bf16.mxu0 0
  %4296 = vmatpush1.bf16.xpose.msra.mxu0 %v3120
  %4297 = vmatprep.subr.bf16.mxu0 0
  %4298 = vmatpush2.bf16.xpose.msra.mxu0 %v3165
  %4299 = vmatprep.subr.bf16.mxu0 0
  %4300 = vmatpush2.bf16.xpose.msra.mxu0 %v3162
  %4301 = vmatprep.subr.bf16.mxu0 0
  %4302 = vmatpush2.bf16.xpose.msra.mxu0 %v3159
  %4303 = vmatprep.subr.bf16.mxu0 0
  %4304 = vmatpush2.bf16.xpose.msra.mxu0 %v3156
  %4305 = vmatprep.subr.bf16.mxu0 0
  %4306 = vmatpush2.bf16.xpose.msra.mxu0 %v3153
  %4307 = vmatprep.subr.bf16.mxu0 0
  %4308 = vmatpush2.bf16.xpose.msra.mxu0 %v3150
  %4309 = vmatprep.subr.bf16.mxu0 0
  %4310 = vmatpush2.bf16.xpose.msra.mxu0 %v3147
  %4311 = vmatprep.subr.bf16.mxu0 0
  %4312 = vmatpush2.bf16.xpose.msra.mxu0 %v3144
  %4313 = vmatprep.mubr.bf16.mxu0 0
  %4314 = vmatmul.mubr.bf16.gmra.mxu0 %v3021
  %v4315 = vpop.f32.mrf.mxu0
  %v4316 = vadd.f32 %v833, %v4315
  %v4317 = vpop.f32.mrf.mxu0
  %v4318 = vadd.f32 %v837, %v4317
  %v4319 = vpop.f32.mrf.mxu0
  %v4320 = vpop.f32.mrf.mxu0
  %4321 = vdwg.mxu0
  %4322 = vmatprep.subr.bf16.mxu0 0
  %4323 = vmatpush1.bf16.xpose.msra.mxu0 %v3189
  %4324 = vmatprep.subr.bf16.mxu0 0
  %4325 = vmatpush1.bf16.xpose.msra.mxu0 %v3186
  %4326 = vmatprep.subr.bf16.mxu0 0
  %4327 = vmatpush1.bf16.xpose.msra.mxu0 %v3183
  %4328 = vmatprep.subr.bf16.mxu0 0
  %4329 = vmatpush1.bf16.xpose.msra.mxu0 %v3180
  %4330 = vmatprep.subr.bf16.mxu0 0
  %4331 = vmatpush1.bf16.xpose.msra.mxu0 %v3177
  %4332 = vmatprep.subr.bf16.mxu0 0
  %4333 = vmatpush1.bf16.xpose.msra.mxu0 %v3174
  %4334 = vmatprep.subr.bf16.mxu0 0
  %4335 = vmatpush1.bf16.xpose.msra.mxu0 %v3171
  %4336 = vmatprep.subr.bf16.mxu0 0
  %4337 = vmatpush1.bf16.xpose.msra.mxu0 %v3168
  %4338 = vmatprep.subr.bf16.mxu0 0
  %4339 = vmatpush2.bf16.xpose.msra.mxu0 %v3213
  %4340 = vmatprep.subr.bf16.mxu0 0
  %4341 = vmatpush2.bf16.xpose.msra.mxu0 %v3210
  %4342 = vmatprep.subr.bf16.mxu0 0
  %4343 = vmatpush2.bf16.xpose.msra.mxu0 %v3207
  %4344 = vmatprep.subr.bf16.mxu0 0
  %4345 = vmatpush2.bf16.xpose.msra.mxu0 %v3204
  %4346 = vmatprep.subr.bf16.mxu0 0
  %4347 = vmatpush2.bf16.xpose.msra.mxu0 %v3201
  %4348 = vmatprep.subr.bf16.mxu0 0
  %4349 = vmatpush2.bf16.xpose.msra.mxu0 %v3198
  %4350 = vmatprep.subr.bf16.mxu0 0
  %4351 = vmatpush2.bf16.xpose.msra.mxu0 %v3195
  %4352 = vmatprep.subr.bf16.mxu0 0
  %4353 = vmatpush2.bf16.xpose.msra.mxu0 %v3192
  %4354 = vmatprep.mubr.bf16.mxu0 0
  %4355 = vmatmul.mubr.bf16.gmra.mxu0 %v3021
  %v4356 = vpop.f32.mrf.mxu0
  %v4357 = vadd.f32 %v841, %v4356
  %v4358 = vpop.f32.mrf.mxu0
  %v4359 = vadd.f32 %v845, %v4358
  %v4360 = vpop.f32.mrf.mxu0
  %v4361 = vpop.f32.mrf.mxu0
  %4362 = vdwg.mxu0
  %4363 = vmatprep.subr.bf16.mxu0 0
  %4364 = vmatpush1.bf16.xpose.msra.mxu0 %v3237
  %4365 = vmatprep.subr.bf16.mxu0 0
  %4366 = vmatpush1.bf16.xpose.msra.mxu0 %v3234
  %4367 = vmatprep.subr.bf16.mxu0 0
  %4368 = vmatpush1.bf16.xpose.msra.mxu0 %v3231
  %4369 = vmatprep.subr.bf16.mxu0 0
  %4370 = vmatpush1.bf16.xpose.msra.mxu0 %v3228
  %4371 = vmatprep.subr.bf16.mxu0 0
  %4372 = vmatpush1.bf16.xpose.msra.mxu0 %v3225
  %4373 = vmatprep.subr.bf16.mxu0 0
  %4374 = vmatpush1.bf16.xpose.msra.mxu0 %v3222
  %4375 = vmatprep.subr.bf16.mxu0 0
  %4376 = vmatpush1.bf16.xpose.msra.mxu0 %v3219
  %4377 = vmatprep.subr.bf16.mxu0 0
  %4378 = vmatpush1.bf16.xpose.msra.mxu0 %v3216
  %4379 = vmatprep.subr.bf16.mxu0 0
  %4380 = vmatpush2.bf16.xpose.msra.mxu0 %v3261
  %4381 = vmatprep.subr.bf16.mxu0 0
  %4382 = vmatpush2.bf16.xpose.msra.mxu0 %v3258
  %4383 = vmatprep.subr.bf16.mxu0 0
  %4384 = vmatpush2.bf16.xpose.msra.mxu0 %v3255
  %4385 = vmatprep.subr.bf16.mxu0 0
  %4386 = vmatpush2.bf16.xpose.msra.mxu0 %v3252
  %4387 = vmatprep.subr.bf16.mxu0 0
  %4388 = vmatpush2.bf16.xpose.msra.mxu0 %v3249
  %4389 = vmatprep.subr.bf16.mxu0 0
  %4390 = vmatpush2.bf16.xpose.msra.mxu0 %v3246
  %4391 = vmatprep.subr.bf16.mxu0 0
  %4392 = vmatpush2.bf16.xpose.msra.mxu0 %v3243
  %4393 = vmatprep.subr.bf16.mxu0 0
  %4394 = vmatpush2.bf16.xpose.msra.mxu0 %v3240
  %4395 = vmatprep.mubr.bf16.mxu0 0
  %4396 = vmatmul.mubr.bf16.gmra.mxu0 %v3021
  %v4397 = vpop.f32.mrf.mxu0
  %v4398 = vadd.f32 %v849, %v4397
  %v4399 = vpop.f32.mrf.mxu0
  %v4400 = vadd.f32 %v853, %v4399
  %v4401 = vpop.f32.mrf.mxu0
  %v4402 = vpop.f32.mrf.mxu0
  %4403 = vdwg.mxu0
  %4404 = vmatprep.subr.bf16.mxu0 0
  %4405 = vmatpush1.bf16.xpose.msra.mxu0 %v3285
  %4406 = vmatprep.subr.bf16.mxu0 0
  %4407 = vmatpush1.bf16.xpose.msra.mxu0 %v3282
  %4408 = vmatprep.subr.bf16.mxu0 0
  %4409 = vmatpush1.bf16.xpose.msra.mxu0 %v3279
  %4410 = vmatprep.subr.bf16.mxu0 0
  %4411 = vmatpush1.bf16.xpose.msra.mxu0 %v3276
  %4412 = vmatprep.subr.bf16.mxu0 0
  %4413 = vmatpush1.bf16.xpose.msra.mxu0 %v3273
  %4414 = vmatprep.subr.bf16.mxu0 0
  %4415 = vmatpush1.bf16.xpose.msra.mxu0 %v3270
  %4416 = vmatprep.subr.bf16.mxu0 0
  %4417 = vmatpush1.bf16.xpose.msra.mxu0 %v3267
  %4418 = vmatprep.subr.bf16.mxu0 0
  %4419 = vmatpush1.bf16.xpose.msra.mxu0 %v3264
  %4420 = vmatprep.subr.bf16.mxu0 0
  %4421 = vmatpush2.bf16.xpose.msra.mxu0 %v3309
  %4422 = vmatprep.subr.bf16.mxu0 0
  %4423 = vmatpush2.bf16.xpose.msra.mxu0 %v3306
  %4424 = vmatprep.subr.bf16.mxu0 0
  %4425 = vmatpush2.bf16.xpose.msra.mxu0 %v3303
  %4426 = vmatprep.subr.bf16.mxu0 0
  %4427 = vmatpush2.bf16.xpose.msra.mxu0 %v3300
  %4428 = vmatprep.subr.bf16.mxu0 0
  %4429 = vmatpush2.bf16.xpose.msra.mxu0 %v3297
  %4430 = vmatprep.subr.bf16.mxu0 0
  %4431 = vmatpush2.bf16.xpose.msra.mxu0 %v3294
  %4432 = vmatprep.subr.bf16.mxu0 0
  %4433 = vmatpush2.bf16.xpose.msra.mxu0 %v3291
  %4434 = vmatprep.subr.bf16.mxu0 0
  %4435 = vmatpush2.bf16.xpose.msra.mxu0 %v3288
  %4436 = vmatprep.mubr.bf16.mxu0 0
  %4437 = vmatmul.mubr.bf16.gmra.mxu0 %v3021
  %v4438 = vpop.f32.mrf.mxu0
  %v4439 = vadd.f32 %v857, %v4438
  %v4440 = vpop.f32.mrf.mxu0
  %v4441 = vadd.f32 %v861, %v4440
  %v4442 = vpop.f32.mrf.mxu0
  %v4443 = vpop.f32.mrf.mxu0
  %4444 = vdwg.mxu0
  %4445 = vmatprep.subr.bf16.mxu0 0
  %4446 = vmatpush1.bf16.xpose.msra.mxu0 %v3333
  %4447 = vmatprep.subr.bf16.mxu0 0
  %4448 = vmatpush1.bf16.xpose.msra.mxu0 %v3330
  %4449 = vmatprep.subr.bf16.mxu0 0
  %4450 = vmatpush1.bf16.xpose.msra.mxu0 %v3327
  %4451 = vmatprep.subr.bf16.mxu0 0
  %4452 = vmatpush1.bf16.xpose.msra.mxu0 %v3324
  %4453 = vmatprep.subr.bf16.mxu0 0
  %4454 = vmatpush1.bf16.xpose.msra.mxu0 %v3321
  %4455 = vmatprep.subr.bf16.mxu0 0
  %4456 = vmatpush1.bf16.xpose.msra.mxu0 %v3318
  %4457 = vmatprep.subr.bf16.mxu0 0
  %4458 = vmatpush1.bf16.xpose.msra.mxu0 %v3315
  %4459 = vmatprep.subr.bf16.mxu0 0
  %4460 = vmatpush1.bf16.xpose.msra.mxu0 %v3312
  %4461 = vmatprep.subr.bf16.mxu0 0
  %4462 = vmatpush2.bf16.xpose.msra.mxu0 %v3357
  %4463 = vmatprep.subr.bf16.mxu0 0
  %4464 = vmatpush2.bf16.xpose.msra.mxu0 %v3354
  %4465 = vmatprep.subr.bf16.mxu0 0
  %4466 = vmatpush2.bf16.xpose.msra.mxu0 %v3351
  %4467 = vmatprep.subr.bf16.mxu0 0
  %4468 = vmatpush2.bf16.xpose.msra.mxu0 %v3348
  %4469 = vmatprep.subr.bf16.mxu0 0
  %4470 = vmatpush2.bf16.xpose.msra.mxu0 %v3345
  %4471 = vmatprep.subr.bf16.mxu0 0
  %4472 = vmatpush2.bf16.xpose.msra.mxu0 %v3342
  %4473 = vmatprep.subr.bf16.mxu0 0
  %4474 = vmatpush2.bf16.xpose.msra.mxu0 %v3339
  %4475 = vmatprep.subr.bf16.mxu0 0
  %4476 = vmatpush2.bf16.xpose.msra.mxu0 %v3336
  %4477 = vmatprep.mubr.bf16.mxu0 0
  %4478 = vmatmul.mubr.bf16.gmra.mxu0 %v3021
  %v4479 = vpop.f32.mrf.mxu0
  %v4480 = vadd.f32 %v865, %v4479
  %v4481 = vpop.f32.mrf.mxu0
  %v4482 = vadd.f32 %v869, %v4481
  %v4483 = vpop.f32.mrf.mxu0
  %v4484 = vpop.f32.mrf.mxu0
  %4485 = vdwg.mxu0
  %4486 = vmatprep.subr.bf16.mxu0 0
  %4487 = vmatpush1.bf16.xpose.msra.mxu0 %v3381
  %4488 = vmatprep.subr.bf16.mxu0 0
  %4489 = vmatpush1.bf16.xpose.msra.mxu0 %v3378
  %4490 = vmatprep.subr.bf16.mxu0 0
  %4491 = vmatpush1.bf16.xpose.msra.mxu0 %v3375
  %4492 = vmatprep.subr.bf16.mxu0 0
  %4493 = vmatpush1.bf16.xpose.msra.mxu0 %v3372
  %4494 = vmatprep.subr.bf16.mxu0 0
  %4495 = vmatpush1.bf16.xpose.msra.mxu0 %v3369
  %4496 = vmatprep.subr.bf16.mxu0 0
  %4497 = vmatpush1.bf16.xpose.msra.mxu0 %v3366
  %4498 = vmatprep.subr.bf16.mxu0 0
  %4499 = vmatpush1.bf16.xpose.msra.mxu0 %v3363
  %4500 = vmatprep.subr.bf16.mxu0 0
  %4501 = vmatpush1.bf16.xpose.msra.mxu0 %v3360
  %4502 = vmatprep.subr.bf16.mxu0 0
  %4503 = vmatpush2.bf16.xpose.msra.mxu0 %v3405
  %4504 = vmatprep.subr.bf16.mxu0 0
  %4505 = vmatpush2.bf16.xpose.msra.mxu0 %v3402
  %4506 = vmatprep.subr.bf16.mxu0 0
  %4507 = vmatpush2.bf16.xpose.msra.mxu0 %v3399
  %4508 = vmatprep.subr.bf16.mxu0 0
  %4509 = vmatpush2.bf16.xpose.msra.mxu0 %v3396
  %4510 = vmatprep.subr.bf16.mxu0 0
  %4511 = vmatpush2.bf16.xpose.msra.mxu0 %v3393
  %4512 = vmatprep.subr.bf16.mxu0 0
  %4513 = vmatpush2.bf16.xpose.msra.mxu0 %v3390
  %4514 = vmatprep.subr.bf16.mxu0 0
  %4515 = vmatpush2.bf16.xpose.msra.mxu0 %v3387
  %4516 = vmatprep.subr.bf16.mxu0 0
  %4517 = vmatpush2.bf16.xpose.msra.mxu0 %v3384
  %4518 = vmatprep.mubr.bf16.mxu0 0
  %4519 = vmatmul.mubr.bf16.gmra.mxu0 %v3021
  %v4520 = vpop.f32.mrf.mxu0
  %v4521 = vadd.f32 %v873, %v4520
  %v4522 = vpop.f32.mrf.mxu0
  %v4523 = vadd.f32 %v877, %v4522
  %v4524 = vpop.f32.mrf.mxu0
  %v4525 = vpop.f32.mrf.mxu0
  %4526 = vdwg.mxu0
  %4527 = vmatprep.subr.bf16.mxu0 0
  %4528 = vmatpush1.bf16.xpose.msra.mxu0 %v3429
  %4529 = vmatprep.subr.bf16.mxu0 0
  %4530 = vmatpush1.bf16.xpose.msra.mxu0 %v3426
  %4531 = vmatprep.subr.bf16.mxu0 0
  %4532 = vmatpush1.bf16.xpose.msra.mxu0 %v3423
  %4533 = vmatprep.subr.bf16.mxu0 0
  %4534 = vmatpush1.bf16.xpose.msra.mxu0 %v3420
  %4535 = vmatprep.subr.bf16.mxu0 0
  %4536 = vmatpush1.bf16.xpose.msra.mxu0 %v3417
  %4537 = vmatprep.subr.bf16.mxu0 0
  %4538 = vmatpush1.bf16.xpose.msra.mxu0 %v3414
  %4539 = vmatprep.subr.bf16.mxu0 0
  %4540 = vmatpush1.bf16.xpose.msra.mxu0 %v3411
  %4541 = vmatprep.subr.bf16.mxu0 0
  %4542 = vmatpush1.bf16.xpose.msra.mxu0 %v3408
  %4543 = vmatprep.subr.bf16.mxu0 0
  %4544 = vmatpush2.bf16.xpose.msra.mxu0 %v3453
  %4545 = vmatprep.subr.bf16.mxu0 0
  %4546 = vmatpush2.bf16.xpose.msra.mxu0 %v3450
  %4547 = vmatprep.subr.bf16.mxu0 0
  %4548 = vmatpush2.bf16.xpose.msra.mxu0 %v3447
  %4549 = vmatprep.subr.bf16.mxu0 0
  %4550 = vmatpush2.bf16.xpose.msra.mxu0 %v3444
  %4551 = vmatprep.subr.bf16.mxu0 0
  %4552 = vmatpush2.bf16.xpose.msra.mxu0 %v3441
  %4553 = vmatprep.subr.bf16.mxu0 0
  %4554 = vmatpush2.bf16.xpose.msra.mxu0 %v3438
  %4555 = vmatprep.subr.bf16.mxu0 0
  %4556 = vmatpush2.bf16.xpose.msra.mxu0 %v3435
  %4557 = vmatprep.subr.bf16.mxu0 0
  %4558 = vmatpush2.bf16.xpose.msra.mxu0 %v3432
  %4559 = vmatprep.mubr.bf16.mxu0 0
  %4560 = vmatmul.mubr.bf16.gmra.mxu0 %v3021
  %v4561 = vpop.f32.mrf.mxu0
  %v4562 = vadd.f32 %v881, %v4561
  %v4563 = vpop.f32.mrf.mxu0
  %v4564 = vadd.f32 %v885, %v4563
  %v4565 = vpop.f32.mrf.mxu0
  %v4566 = vpop.f32.mrf.mxu0
  %4567 = vdwg.mxu0
  %4568 = vmatprep.subr.bf16.mxu0 0
  %4569 = vmatpush1.bf16.xpose.msra.mxu0 %v3477
  %4570 = vmatprep.subr.bf16.mxu0 0
  %4571 = vmatpush1.bf16.xpose.msra.mxu0 %v3474
  %4572 = vmatprep.subr.bf16.mxu0 0
  %4573 = vmatpush1.bf16.xpose.msra.mxu0 %v3471
  %4574 = vmatprep.subr.bf16.mxu0 0
  %4575 = vmatpush1.bf16.xpose.msra.mxu0 %v3468
  %4576 = vmatprep.subr.bf16.mxu0 0
  %4577 = vmatpush1.bf16.xpose.msra.mxu0 %v3465
  %4578 = vmatprep.subr.bf16.mxu0 0
  %4579 = vmatpush1.bf16.xpose.msra.mxu0 %v3462
  %4580 = vmatprep.subr.bf16.mxu0 0
  %4581 = vmatpush1.bf16.xpose.msra.mxu0 %v3459
  %4582 = vmatprep.subr.bf16.mxu0 0
  %4583 = vmatpush1.bf16.xpose.msra.mxu0 %v3456
  %4584 = vmatprep.subr.bf16.mxu0 0
  %4585 = vmatpush2.bf16.xpose.msra.mxu0 %v3501
  %4586 = vmatprep.subr.bf16.mxu0 0
  %4587 = vmatpush2.bf16.xpose.msra.mxu0 %v3498
  %4588 = vmatprep.subr.bf16.mxu0 0
  %4589 = vmatpush2.bf16.xpose.msra.mxu0 %v3495
  %4590 = vmatprep.subr.bf16.mxu0 0
  %4591 = vmatpush2.bf16.xpose.msra.mxu0 %v3492
  %4592 = vmatprep.subr.bf16.mxu0 0
  %4593 = vmatpush2.bf16.xpose.msra.mxu0 %v3489
  %4594 = vmatprep.subr.bf16.mxu0 0
  %4595 = vmatpush2.bf16.xpose.msra.mxu0 %v3486
  %4596 = vmatprep.subr.bf16.mxu0 0
  %4597 = vmatpush2.bf16.xpose.msra.mxu0 %v3483
  %4598 = vmatprep.subr.bf16.mxu0 0
  %4599 = vmatpush2.bf16.xpose.msra.mxu0 %v3480
  %4600 = vmatprep.mubr.bf16.mxu0 0
  %4601 = vmatmul.mubr.bf16.gmra.mxu0 %v3021
  %v4602 = vpop.f32.mrf.mxu0
  %v4603 = vadd.f32 %v889, %v4602
  %v4604 = vpop.f32.mrf.mxu0
  %v4605 = vadd.f32 %v893, %v4604
  %v4606 = vpop.f32.mrf.mxu0
  %v4607 = vpop.f32.mrf.mxu0
  %4608 = vdwg.mxu0
  %4609 = vmatprep.subr.bf16.mxu0 0
  %4610 = vmatpush1.bf16.xpose.msra.mxu0 %v3525
  %4611 = vmatprep.subr.bf16.mxu0 0
  %4612 = vmatpush1.bf16.xpose.msra.mxu0 %v3522
  %4613 = vmatprep.subr.bf16.mxu0 0
  %4614 = vmatpush1.bf16.xpose.msra.mxu0 %v3519
  %4615 = vmatprep.subr.bf16.mxu0 0
  %4616 = vmatpush1.bf16.xpose.msra.mxu0 %v3516
  %4617 = vmatprep.subr.bf16.mxu0 0
  %4618 = vmatpush1.bf16.xpose.msra.mxu0 %v3513
  %4619 = vmatprep.subr.bf16.mxu0 0
  %4620 = vmatpush1.bf16.xpose.msra.mxu0 %v3510
  %4621 = vmatprep.subr.bf16.mxu0 0
  %4622 = vmatpush1.bf16.xpose.msra.mxu0 %v3507
  %4623 = vmatprep.subr.bf16.mxu0 0
  %4624 = vmatpush1.bf16.xpose.msra.mxu0 %v3504
  %4625 = vmatprep.subr.bf16.mxu0 0
  %4626 = vmatpush2.bf16.xpose.msra.mxu0 %v3549
  %4627 = vmatprep.subr.bf16.mxu0 0
  %4628 = vmatpush2.bf16.xpose.msra.mxu0 %v3546
  %4629 = vmatprep.subr.bf16.mxu0 0
  %4630 = vmatpush2.bf16.xpose.msra.mxu0 %v3543
  %4631 = vmatprep.subr.bf16.mxu0 0
  %4632 = vmatpush2.bf16.xpose.msra.mxu0 %v3540
  %4633 = vmatprep.subr.bf16.mxu0 0
  %4634 = vmatpush2.bf16.xpose.msra.mxu0 %v3537
  %4635 = vmatprep.subr.bf16.mxu0 0
  %4636 = vmatpush2.bf16.xpose.msra.mxu0 %v3534
  %4637 = vmatprep.subr.bf16.mxu0 0
  %4638 = vmatpush2.bf16.xpose.msra.mxu0 %v3531
  %4639 = vmatprep.subr.bf16.mxu0 0
  %4640 = vmatpush2.bf16.xpose.msra.mxu0 %v3528
  %4641 = vmatprep.mubr.bf16.mxu0 0
  %4642 = vmatmul.mubr.bf16.gmra.mxu0 %v3021
  %v4643 = vpop.f32.mrf.mxu0
  %v4644 = vadd.f32 %v897, %v4643
  %v4645 = vpop.f32.mrf.mxu0
  %v4646 = vadd.f32 %v901, %v4645
  %v4647 = vpop.f32.mrf.mxu0
  %v4648 = vpop.f32.mrf.mxu0
  %4649 = vdwg.mxu0
  %4650 = vmatprep.subr.bf16.mxu0 0
  %4651 = vmatpush1.bf16.xpose.msra.mxu0 %v3573
  %4652 = vmatprep.subr.bf16.mxu0 0
  %4653 = vmatpush1.bf16.xpose.msra.mxu0 %v3570
  %4654 = vmatprep.subr.bf16.mxu0 0
  %4655 = vmatpush1.bf16.xpose.msra.mxu0 %v3567
  %4656 = vmatprep.subr.bf16.mxu0 0
  %4657 = vmatpush1.bf16.xpose.msra.mxu0 %v3564
  %4658 = vmatprep.subr.bf16.mxu0 0
  %4659 = vmatpush1.bf16.xpose.msra.mxu0 %v3561
  %4660 = vmatprep.subr.bf16.mxu0 0
  %4661 = vmatpush1.bf16.xpose.msra.mxu0 %v3558
  %4662 = vmatprep.subr.bf16.mxu0 0
  %4663 = vmatpush1.bf16.xpose.msra.mxu0 %v3555
  %4664 = vmatprep.subr.bf16.mxu0 0
  %4665 = vmatpush1.bf16.xpose.msra.mxu0 %v3552
  %4666 = vmatprep.subr.bf16.mxu0 0
  %4667 = vmatpush2.bf16.xpose.msra.mxu0 %v3597
  %4668 = vmatprep.subr.bf16.mxu0 0
  %4669 = vmatpush2.bf16.xpose.msra.mxu0 %v3594
  %4670 = vmatprep.subr.bf16.mxu0 0
  %4671 = vmatpush2.bf16.xpose.msra.mxu0 %v3591
  %4672 = vmatprep.subr.bf16.mxu0 0
  %4673 = vmatpush2.bf16.xpose.msra.mxu0 %v3588
  %4674 = vmatprep.subr.bf16.mxu0 0
  %4675 = vmatpush2.bf16.xpose.msra.mxu0 %v3585
  %4676 = vmatprep.subr.bf16.mxu0 0
  %4677 = vmatpush2.bf16.xpose.msra.mxu0 %v3582
  %4678 = vmatprep.subr.bf16.mxu0 0
  %4679 = vmatpush2.bf16.xpose.msra.mxu0 %v3579
  %4680 = vmatprep.subr.bf16.mxu0 0
  %4681 = vmatpush2.bf16.xpose.msra.mxu0 %v3576
  %4682 = vmatprep.mubr.bf16.mxu0 0
  %4683 = vmatmul.mubr.bf16.gmra.mxu0 %v3021
  %v4684 = vpop.f32.mrf.mxu0
  %v4685 = vadd.f32 %v905, %v4684
  %v4686 = vpop.f32.mrf.mxu0
  %v4687 = vadd.f32 %v909, %v4686
  %v4688 = vpop.f32.mrf.mxu0
  %v4689 = vpop.f32.mrf.mxu0
  %4690 = vdwg.mxu0
  %4691 = vmatprep.subr.bf16.mxu0 0
  %4692 = vmatpush1.bf16.xpose.msra.mxu0 %v3621
  %4693 = vmatprep.subr.bf16.mxu0 0
  %4694 = vmatpush1.bf16.xpose.msra.mxu0 %v3618
  %4695 = vmatprep.subr.bf16.mxu0 0
  %4696 = vmatpush1.bf16.xpose.msra.mxu0 %v3615
  %4697 = vmatprep.subr.bf16.mxu0 0
  %4698 = vmatpush1.bf16.xpose.msra.mxu0 %v3612
  %4699 = vmatprep.subr.bf16.mxu0 0
  %4700 = vmatpush1.bf16.xpose.msra.mxu0 %v3609
  %4701 = vmatprep.subr.bf16.mxu0 0
  %4702 = vmatpush1.bf16.xpose.msra.mxu0 %v3606
  %4703 = vmatprep.subr.bf16.mxu0 0
  %4704 = vmatpush1.bf16.xpose.msra.mxu0 %v3603
  %4705 = vmatprep.subr.bf16.mxu0 0
  %4706 = vmatpush1.bf16.xpose.msra.mxu0 %v3600
  %4707 = vmatprep.subr.bf16.mxu0 0
  %4708 = vmatpush2.bf16.xpose.msra.mxu0 %v3645
  %4709 = vmatprep.subr.bf16.mxu0 0
  %4710 = vmatpush2.bf16.xpose.msra.mxu0 %v3642
  %4711 = vmatprep.subr.bf16.mxu0 0
  %4712 = vmatpush2.bf16.xpose.msra.mxu0 %v3639
  %4713 = vmatprep.subr.bf16.mxu0 0
  %4714 = vmatpush2.bf16.xpose.msra.mxu0 %v3636
  %4715 = vmatprep.subr.bf16.mxu0 0
  %4716 = vmatpush2.bf16.xpose.msra.mxu0 %v3633
  %4717 = vmatprep.subr.bf16.mxu0 0
  %4718 = vmatpush2.bf16.xpose.msra.mxu0 %v3630
  %4719 = vmatprep.subr.bf16.mxu0 0
  %4720 = vmatpush2.bf16.xpose.msra.mxu0 %v3627
  %4721 = vmatprep.subr.bf16.mxu0 0
  %4722 = vmatpush2.bf16.xpose.msra.mxu0 %v3624
  %4723 = vmatprep.mubr.bf16.mxu0 0
  %4724 = vmatmul.mubr.bf16.gmra.mxu0 %v3021
  %v4725 = vpop.f32.mrf.mxu0
  %v4726 = vadd.f32 %v913, %v4725
  %v4727 = vpop.f32.mrf.mxu0
  %v4728 = vadd.f32 %v917, %v4727
  %v4729 = vpop.f32.mrf.mxu0
  %v4730 = vpop.f32.mrf.mxu0
  %4731 = vdwg.mxu0
  %4732 = vmatprep.subr.bf16.mxu0 0
  %4733 = vmatpush1.bf16.xpose.msra.mxu0 %v3669
  %4734 = vmatprep.subr.bf16.mxu0 0
  %4735 = vmatpush1.bf16.xpose.msra.mxu0 %v3666
  %4736 = vmatprep.subr.bf16.mxu0 0
  %4737 = vmatpush1.bf16.xpose.msra.mxu0 %v3663
  %4738 = vmatprep.subr.bf16.mxu0 0
  %4739 = vmatpush1.bf16.xpose.msra.mxu0 %v3660
  %4740 = vmatprep.subr.bf16.mxu0 0
  %4741 = vmatpush1.bf16.xpose.msra.mxu0 %v3657
  %4742 = vmatprep.subr.bf16.mxu0 0
  %4743 = vmatpush1.bf16.xpose.msra.mxu0 %v3654
  %4744 = vmatprep.subr.bf16.mxu0 0
  %4745 = vmatpush1.bf16.xpose.msra.mxu0 %v3651
  %4746 = vmatprep.subr.bf16.mxu0 0
  %4747 = vmatpush1.bf16.xpose.msra.mxu0 %v3648
  %4748 = vmatprep.subr.bf16.mxu0 0
  %4749 = vmatpush2.bf16.xpose.msra.mxu0 %v3693
  %4750 = vmatprep.subr.bf16.mxu0 0
  %4751 = vmatpush2.bf16.xpose.msra.mxu0 %v3690
  %4752 = vmatprep.subr.bf16.mxu0 0
  %4753 = vmatpush2.bf16.xpose.msra.mxu0 %v3687
  %4754 = vmatprep.subr.bf16.mxu0 0
  %4755 = vmatpush2.bf16.xpose.msra.mxu0 %v3684
  %4756 = vmatprep.subr.bf16.mxu0 0
  %4757 = vmatpush2.bf16.xpose.msra.mxu0 %v3681
  %4758 = vmatprep.subr.bf16.mxu0 0
  %4759 = vmatpush2.bf16.xpose.msra.mxu0 %v3678
  %4760 = vmatprep.subr.bf16.mxu0 0
  %4761 = vmatpush2.bf16.xpose.msra.mxu0 %v3675
  %4762 = vmatprep.subr.bf16.mxu0 0
  %4763 = vmatpush2.bf16.xpose.msra.mxu0 %v3672
  %4764 = vmatprep.mubr.bf16.mxu0 0
  %4765 = vmatmul.mubr.bf16.gmra.mxu0 %v3021
  %v4766 = vpop.f32.mrf.mxu0
  %v4767 = vadd.f32 %v921, %v4766
  %v4768 = vpop.f32.mrf.mxu0
  %v4769 = vadd.f32 %v925, %v4768
  %v4770 = vpop.f32.mrf.mxu0
  %v4771 = vpop.f32.mrf.mxu0
  %4772 = vdwg.mxu0
  %4773 = vmatprep.subr.bf16.mxu0 0
  %4774 = vmatpush1.bf16.xpose.msra.mxu0 %v3717
  %4775 = vmatprep.subr.bf16.mxu0 0
  %4776 = vmatpush1.bf16.xpose.msra.mxu0 %v3714
  %4777 = vmatprep.subr.bf16.mxu0 0
  %4778 = vmatpush1.bf16.xpose.msra.mxu0 %v3711
  %4779 = vmatprep.subr.bf16.mxu0 0
  %4780 = vmatpush1.bf16.xpose.msra.mxu0 %v3708
  %4781 = vmatprep.subr.bf16.mxu0 0
  %4782 = vmatpush1.bf16.xpose.msra.mxu0 %v3705
  %4783 = vmatprep.subr.bf16.mxu0 0
  %4784 = vmatpush1.bf16.xpose.msra.mxu0 %v3702
  %4785 = vmatprep.subr.bf16.mxu0 0
  %4786 = vmatpush1.bf16.xpose.msra.mxu0 %v3699
  %4787 = vmatprep.subr.bf16.mxu0 0
  %4788 = vmatpush1.bf16.xpose.msra.mxu0 %v3696
  %4789 = vmatprep.subr.bf16.mxu0 0
  %4790 = vmatpush2.bf16.xpose.msra.mxu0 %v3741
  %4791 = vmatprep.subr.bf16.mxu0 0
  %4792 = vmatpush2.bf16.xpose.msra.mxu0 %v3738
  %4793 = vmatprep.subr.bf16.mxu0 0
  %4794 = vmatpush2.bf16.xpose.msra.mxu0 %v3735
  %4795 = vmatprep.subr.bf16.mxu0 0
  %4796 = vmatpush2.bf16.xpose.msra.mxu0 %v3732
  %4797 = vmatprep.subr.bf16.mxu0 0
  %4798 = vmatpush2.bf16.xpose.msra.mxu0 %v3729
  %4799 = vmatprep.subr.bf16.mxu0 0
  %4800 = vmatpush2.bf16.xpose.msra.mxu0 %v3726
  %4801 = vmatprep.subr.bf16.mxu0 0
  %4802 = vmatpush2.bf16.xpose.msra.mxu0 %v3723
  %4803 = vmatprep.subr.bf16.mxu0 0
  %4804 = vmatpush2.bf16.xpose.msra.mxu0 %v3720
  %4805 = vmatprep.mubr.bf16.mxu0 0
  %4806 = vmatmul.mubr.bf16.gmra.mxu0 %v3021
  %v4807 = vpop.f32.mrf.mxu0
  %v4808 = vadd.f32 %v929, %v4807
  %v4809 = vpop.f32.mrf.mxu0
  %v4810 = vadd.f32 %v933, %v4809
  %v4811 = vpop.f32.mrf.mxu0
  %v4812 = vpop.f32.mrf.mxu0
  %4813 = vdwg.mxu0
  %4814 = vmatprep.subr.bf16.mxu0 0
  %4815 = vmatpush1.bf16.xpose.msra.mxu0 %v3765
  %4816 = vmatprep.subr.bf16.mxu0 0
  %4817 = vmatpush1.bf16.xpose.msra.mxu0 %v3762
  %4818 = vmatprep.subr.bf16.mxu0 0
  %4819 = vmatpush1.bf16.xpose.msra.mxu0 %v3759
  %4820 = vmatprep.subr.bf16.mxu0 0
  %4821 = vmatpush1.bf16.xpose.msra.mxu0 %v3756
  %4822 = vmatprep.subr.bf16.mxu0 0
  %4823 = vmatpush1.bf16.xpose.msra.mxu0 %v3753
  %4824 = vmatprep.subr.bf16.mxu0 0
  %4825 = vmatpush1.bf16.xpose.msra.mxu0 %v3750
  %4826 = vmatprep.subr.bf16.mxu0 0
  %4827 = vmatpush1.bf16.xpose.msra.mxu0 %v3747
  %4828 = vmatprep.subr.bf16.mxu0 0
  %4829 = vmatpush1.bf16.xpose.msra.mxu0 %v3744
  %4830 = vmatprep.subr.bf16.mxu0 0
  %4831 = vmatpush2.bf16.xpose.msra.mxu0 %v3789
  %4832 = vmatprep.subr.bf16.mxu0 0
  %4833 = vmatpush2.bf16.xpose.msra.mxu0 %v3786
  %4834 = vmatprep.subr.bf16.mxu0 0
  %4835 = vmatpush2.bf16.xpose.msra.mxu0 %v3783
  %4836 = vmatprep.subr.bf16.mxu0 0
  %4837 = vmatpush2.bf16.xpose.msra.mxu0 %v3780
  %4838 = vmatprep.subr.bf16.mxu0 0
  %4839 = vmatpush2.bf16.xpose.msra.mxu0 %v3777
  %4840 = vmatprep.subr.bf16.mxu0 0
  %4841 = vmatpush2.bf16.xpose.msra.mxu0 %v3774
  %4842 = vmatprep.subr.bf16.mxu0 0
  %4843 = vmatpush2.bf16.xpose.msra.mxu0 %v3771
  %4844 = vmatprep.subr.bf16.mxu0 0
  %4845 = vmatpush2.bf16.xpose.msra.mxu0 %v3768
  %4846 = vmatprep.mubr.bf16.mxu0 0
  %4847 = vmatmul.mubr.bf16.gmra.mxu0 %v3021
  %v4848 = vpop.f32.mrf.mxu0
  %v4849 = vadd.f32 %v937, %v4848
  %v4850 = vpop.f32.mrf.mxu0
  %v4851 = vadd.f32 %v941, %v4850
  %v4852 = vpop.f32.mrf.mxu0
  %v4853 = vpop.f32.mrf.mxu0
  %4854 = vdwg.mxu0
  %4855 = vmatprep.subr.bf16.mxu0 0
  %4856 = vmatpush1.bf16.xpose.msra.mxu0 %v3813
  %4857 = vmatprep.subr.bf16.mxu0 0
  %4858 = vmatpush1.bf16.xpose.msra.mxu0 %v3810
  %4859 = vmatprep.subr.bf16.mxu0 0
  %4860 = vmatpush1.bf16.xpose.msra.mxu0 %v3807
  %4861 = vmatprep.subr.bf16.mxu0 0
  %4862 = vmatpush1.bf16.xpose.msra.mxu0 %v3804
  %4863 = vmatprep.subr.bf16.mxu0 0
  %4864 = vmatpush1.bf16.xpose.msra.mxu0 %v3801
  %4865 = vmatprep.subr.bf16.mxu0 0
  %4866 = vmatpush1.bf16.xpose.msra.mxu0 %v3798
  %4867 = vmatprep.subr.bf16.mxu0 0
  %4868 = vmatpush1.bf16.xpose.msra.mxu0 %v3795
  %4869 = vmatprep.subr.bf16.mxu0 0
  %4870 = vmatpush1.bf16.xpose.msra.mxu0 %v3792
  %4871 = vmatprep.subr.bf16.mxu0 0
  %4872 = vmatpush2.bf16.xpose.msra.mxu0 %v3837
  %4873 = vmatprep.subr.bf16.mxu0 0
  %4874 = vmatpush2.bf16.xpose.msra.mxu0 %v3834
  %4875 = vmatprep.subr.bf16.mxu0 0
  %4876 = vmatpush2.bf16.xpose.msra.mxu0 %v3831
  %4877 = vmatprep.subr.bf16.mxu0 0
  %4878 = vmatpush2.bf16.xpose.msra.mxu0 %v3828
  %4879 = vmatprep.subr.bf16.mxu0 0
  %4880 = vmatpush2.bf16.xpose.msra.mxu0 %v3825
  %4881 = vmatprep.subr.bf16.mxu0 0
  %4882 = vmatpush2.bf16.xpose.msra.mxu0 %v3822
  %4883 = vmatprep.subr.bf16.mxu0 0
  %4884 = vmatpush2.bf16.xpose.msra.mxu0 %v3819
  %4885 = vmatprep.subr.bf16.mxu0 0
  %4886 = vmatpush2.bf16.xpose.msra.mxu0 %v3816
  %4887 = vmatprep.mubr.bf16.mxu0 0
  %4888 = vmatmul.mubr.bf16.gmra.mxu0 %v3021
  %v4889 = vpop.f32.mrf.mxu0
  %v4890 = vadd.f32 %v945, %v4889
  %v4891 = vpop.f32.mrf.mxu0
  %v4892 = vadd.f32 %v949, %v4891
  %v4893 = vpop.f32.mrf.mxu0
  %v4894 = vpop.f32.mrf.mxu0
  %4895 = vdwg.mxu0
  %4896 = vmatprep.subr.bf16.mxu0 0
  %4897 = vmatpush1.bf16.xpose.msra.mxu0 %v3861
  %4898 = vmatprep.subr.bf16.mxu0 0
  %4899 = vmatpush1.bf16.xpose.msra.mxu0 %v3858
  %4900 = vmatprep.subr.bf16.mxu0 0
  %4901 = vmatpush1.bf16.xpose.msra.mxu0 %v3855
  %4902 = vmatprep.subr.bf16.mxu0 0
  %4903 = vmatpush1.bf16.xpose.msra.mxu0 %v3852
  %4904 = vmatprep.subr.bf16.mxu0 0
  %4905 = vmatpush1.bf16.xpose.msra.mxu0 %v3849
  %4906 = vmatprep.subr.bf16.mxu0 0
  %4907 = vmatpush1.bf16.xpose.msra.mxu0 %v3846
  %4908 = vmatprep.subr.bf16.mxu0 0
  %4909 = vmatpush1.bf16.xpose.msra.mxu0 %v3843
  %4910 = vmatprep.subr.bf16.mxu0 0
  %4911 = vmatpush1.bf16.xpose.msra.mxu0 %v3840
  %4912 = vmatprep.subr.bf16.mxu0 0
  %4913 = vmatpush2.bf16.xpose.msra.mxu0 %v3885
  %4914 = vmatprep.subr.bf16.mxu0 0
  %4915 = vmatpush2.bf16.xpose.msra.mxu0 %v3882
  %4916 = vmatprep.subr.bf16.mxu0 0
  %4917 = vmatpush2.bf16.xpose.msra.mxu0 %v3879
  %4918 = vmatprep.subr.bf16.mxu0 0
  %4919 = vmatpush2.bf16.xpose.msra.mxu0 %v3876
  %4920 = vmatprep.subr.bf16.mxu0 0
  %4921 = vmatpush2.bf16.xpose.msra.mxu0 %v3873
  %4922 = vmatprep.subr.bf16.mxu0 0
  %4923 = vmatpush2.bf16.xpose.msra.mxu0 %v3870
  %4924 = vmatprep.subr.bf16.mxu0 0
  %4925 = vmatpush2.bf16.xpose.msra.mxu0 %v3867
  %4926 = vmatprep.subr.bf16.mxu0 0
  %4927 = vmatpush2.bf16.xpose.msra.mxu0 %v3864
  %4928 = vmatprep.mubr.bf16.mxu0 0
  %4929 = vmatmul.mubr.bf16.gmra.mxu0 %v3021
  %v4930 = vpop.f32.mrf.mxu0
  %v4931 = vadd.f32 %v953, %v4930
  %v4932 = vpop.f32.mrf.mxu0
  %v4933 = vadd.f32 %v957, %v4932
  %v4934 = vpop.f32.mrf.mxu0
  %v4935 = vpop.f32.mrf.mxu0
  %4936 = vdwg.mxu0
  %4937 = vmatprep.subr.bf16.mxu0 0
  %4938 = vmatpush1.bf16.xpose.msra.mxu0 %v3909
  %4939 = vmatprep.subr.bf16.mxu0 0
  %4940 = vmatpush1.bf16.xpose.msra.mxu0 %v3906
  %4941 = vmatprep.subr.bf16.mxu0 0
  %4942 = vmatpush1.bf16.xpose.msra.mxu0 %v3903
  %4943 = vmatprep.subr.bf16.mxu0 0
  %4944 = vmatpush1.bf16.xpose.msra.mxu0 %v3900
  %4945 = vmatprep.subr.bf16.mxu0 0
  %4946 = vmatpush1.bf16.xpose.msra.mxu0 %v3897
  %4947 = vmatprep.subr.bf16.mxu0 0
  %4948 = vmatpush1.bf16.xpose.msra.mxu0 %v3894
  %4949 = vmatprep.subr.bf16.mxu0 0
  %4950 = vmatpush1.bf16.xpose.msra.mxu0 %v3891
  %4951 = vmatprep.subr.bf16.mxu0 0
  %4952 = vmatpush1.bf16.xpose.msra.mxu0 %v3888
  %4953 = vmatprep.subr.bf16.mxu0 0
  %4954 = vmatpush2.bf16.xpose.msra.mxu0 %v3933
  %4955 = vmatprep.subr.bf16.mxu0 0
  %4956 = vmatpush2.bf16.xpose.msra.mxu0 %v3930
  %4957 = vmatprep.subr.bf16.mxu0 0
  %4958 = vmatpush2.bf16.xpose.msra.mxu0 %v3927
  %4959 = vmatprep.subr.bf16.mxu0 0
  %4960 = vmatpush2.bf16.xpose.msra.mxu0 %v3924
  %4961 = vmatprep.subr.bf16.mxu0 0
  %4962 = vmatpush2.bf16.xpose.msra.mxu0 %v3921
  %4963 = vmatprep.subr.bf16.mxu0 0
  %4964 = vmatpush2.bf16.xpose.msra.mxu0 %v3918
  %4965 = vmatprep.subr.bf16.mxu0 0
  %4966 = vmatpush2.bf16.xpose.msra.mxu0 %v3915
  %4967 = vmatprep.subr.bf16.mxu0 0
  %4968 = vmatpush2.bf16.xpose.msra.mxu0 %v3912
  %4969 = vmatprep.mubr.bf16.mxu0 0
  %4970 = vmatmul.mubr.bf16.gmra.mxu0 %v3021
  %v4971 = vpop.f32.mrf.mxu0
  %v4972 = vadd.f32 %v961, %v4971
  %v4973 = vpop.f32.mrf.mxu0
  %v4974 = vadd.f32 %v965, %v4973
  %v4975 = vpop.f32.mrf.mxu0
  %v4976 = vpop.f32.mrf.mxu0
  %4977 = vdwg.mxu0
  %4978 = vmatprep.subr.bf16.mxu0 0
  %4979 = vmatpush1.bf16.xpose.msra.mxu0 %v3957
  %4980 = vmatprep.subr.bf16.mxu0 0
  %4981 = vmatpush1.bf16.xpose.msra.mxu0 %v3954
  %4982 = vmatprep.subr.bf16.mxu0 0
  %4983 = vmatpush1.bf16.xpose.msra.mxu0 %v3951
  %4984 = vmatprep.subr.bf16.mxu0 0
  %4985 = vmatpush1.bf16.xpose.msra.mxu0 %v3948
  %4986 = vmatprep.subr.bf16.mxu0 0
  %4987 = vmatpush1.bf16.xpose.msra.mxu0 %v3945
  %4988 = vmatprep.subr.bf16.mxu0 0
  %4989 = vmatpush1.bf16.xpose.msra.mxu0 %v3942
  %4990 = vmatprep.subr.bf16.mxu0 0
  %4991 = vmatpush1.bf16.xpose.msra.mxu0 %v3939
  %4992 = vmatprep.subr.bf16.mxu0 0
  %4993 = vmatpush1.bf16.xpose.msra.mxu0 %v3936
  %4994 = vmatprep.subr.bf16.mxu0 0
  %4995 = vmatpush2.bf16.xpose.msra.mxu0 %v3981
  %4996 = vmatprep.subr.bf16.mxu0 0
  %4997 = vmatpush2.bf16.xpose.msra.mxu0 %v3978
  %4998 = vmatprep.subr.bf16.mxu0 0
  %4999 = vmatpush2.bf16.xpose.msra.mxu0 %v3975
  %5000 = vmatprep.subr.bf16.mxu0 0
  %5001 = vmatpush2.bf16.xpose.msra.mxu0 %v3972
  %5002 = vmatprep.subr.bf16.mxu0 0
  %5003 = vmatpush2.bf16.xpose.msra.mxu0 %v3969
  %5004 = vmatprep.subr.bf16.mxu0 0
  %5005 = vmatpush2.bf16.xpose.msra.mxu0 %v3966
  %5006 = vmatprep.subr.bf16.mxu0 0
  %5007 = vmatpush2.bf16.xpose.msra.mxu0 %v3963
  %5008 = vmatprep.subr.bf16.mxu0 0
  %5009 = vmatpush2.bf16.xpose.msra.mxu0 %v3960
  %5010 = vmatprep.mubr.bf16.mxu0 0
  %5011 = vmatmul.mubr.bf16.gmra.mxu0 %v3021
  %v5012 = vpop.f32.mrf.mxu0
  %v5013 = vadd.f32 %v969, %v5012
  %v5014 = vpop.f32.mrf.mxu0
  %v5015 = vadd.f32 %v973, %v5014
  %v5016 = vpop.f32.mrf.mxu0
  %v5017 = vpop.f32.mrf.mxu0
  %5018 = vdwg.mxu0
  %5019 = vmatprep.subr.bf16.mxu0 0
  %5020 = vmatpush1.bf16.xpose.msra.mxu0 %v4005
  %5021 = vmatprep.subr.bf16.mxu0 0
  %5022 = vmatpush1.bf16.xpose.msra.mxu0 %v4002
  %5023 = vmatprep.subr.bf16.mxu0 0
  %5024 = vmatpush1.bf16.xpose.msra.mxu0 %v3999
  %5025 = vmatprep.subr.bf16.mxu0 0
  %5026 = vmatpush1.bf16.xpose.msra.mxu0 %v3996
  %5027 = vmatprep.subr.bf16.mxu0 0
  %5028 = vmatpush1.bf16.xpose.msra.mxu0 %v3993
  %5029 = vmatprep.subr.bf16.mxu0 0
  %5030 = vmatpush1.bf16.xpose.msra.mxu0 %v3990
  %5031 = vmatprep.subr.bf16.mxu0 0
  %5032 = vmatpush1.bf16.xpose.msra.mxu0 %v3987
  %5033 = vmatprep.subr.bf16.mxu0 0
  %5034 = vmatpush1.bf16.xpose.msra.mxu0 %v3984
  %5035 = vmatprep.subr.bf16.mxu0 0
  %5036 = vmatpush2.bf16.xpose.msra.mxu0 %v4029
  %5037 = vmatprep.subr.bf16.mxu0 0
  %5038 = vmatpush2.bf16.xpose.msra.mxu0 %v4026
  %5039 = vmatprep.subr.bf16.mxu0 0
  %5040 = vmatpush2.bf16.xpose.msra.mxu0 %v4023
  %5041 = vmatprep.subr.bf16.mxu0 0
  %5042 = vmatpush2.bf16.xpose.msra.mxu0 %v4020
  %5043 = vmatprep.subr.bf16.mxu0 0
  %5044 = vmatpush2.bf16.xpose.msra.mxu0 %v4017
  %5045 = vmatprep.subr.bf16.mxu0 0
  %5046 = vmatpush2.bf16.xpose.msra.mxu0 %v4014
  %5047 = vmatprep.subr.bf16.mxu0 0
  %5048 = vmatpush2.bf16.xpose.msra.mxu0 %v4011
  %5049 = vmatprep.subr.bf16.mxu0 0
  %5050 = vmatpush2.bf16.xpose.msra.mxu0 %v4008
  %5051 = vmatprep.mubr.bf16.mxu0 0
  %5052 = vmatmul.mubr.bf16.gmra.mxu0 %v3021
  %v5053 = vpop.f32.mrf.mxu0
  %v5054 = vadd.f32 %v977, %v5053
  %v5055 = vpop.f32.mrf.mxu0
  %v5056 = vadd.f32 %v981, %v5055
  %v5057 = vpop.f32.mrf.mxu0
  %v5058 = vpop.f32.mrf.mxu0
  %5059 = vdwg.mxu0
  %5060 = vmatprep.subr.bf16.mxu0 0
  %5061 = vmatpush1.bf16.xpose.msra.mxu0 %v4053
  %5062 = vmatprep.subr.bf16.mxu0 0
  %5063 = vmatpush1.bf16.xpose.msra.mxu0 %v4050
  %5064 = vmatprep.subr.bf16.mxu0 0
  %5065 = vmatpush1.bf16.xpose.msra.mxu0 %v4047
  %5066 = vmatprep.subr.bf16.mxu0 0
  %5067 = vmatpush1.bf16.xpose.msra.mxu0 %v4044
  %5068 = vmatprep.subr.bf16.mxu0 0
  %5069 = vmatpush1.bf16.xpose.msra.mxu0 %v4041
  %5070 = vmatprep.subr.bf16.mxu0 0
  %5071 = vmatpush1.bf16.xpose.msra.mxu0 %v4038
  %5072 = vmatprep.subr.bf16.mxu0 0
  %5073 = vmatpush1.bf16.xpose.msra.mxu0 %v4035
  %5074 = vmatprep.subr.bf16.mxu0 0
  %5075 = vmatpush1.bf16.xpose.msra.mxu0 %v4032
  %5076 = vmatprep.subr.bf16.mxu0 0
  %5077 = vmatpush2.bf16.xpose.msra.mxu0 %v4077
  %5078 = vmatprep.subr.bf16.mxu0 0
  %5079 = vmatpush2.bf16.xpose.msra.mxu0 %v4074
  %5080 = vmatprep.subr.bf16.mxu0 0
  %5081 = vmatpush2.bf16.xpose.msra.mxu0 %v4071
  %5082 = vmatprep.subr.bf16.mxu0 0
  %5083 = vmatpush2.bf16.xpose.msra.mxu0 %v4068
  %5084 = vmatprep.subr.bf16.mxu0 0
  %5085 = vmatpush2.bf16.xpose.msra.mxu0 %v4065
  %5086 = vmatprep.subr.bf16.mxu0 0
  %5087 = vmatpush2.bf16.xpose.msra.mxu0 %v4062
  %5088 = vmatprep.subr.bf16.mxu0 0
  %5089 = vmatpush2.bf16.xpose.msra.mxu0 %v4059
  %5090 = vmatprep.subr.bf16.mxu0 0
  %5091 = vmatpush2.bf16.xpose.msra.mxu0 %v4056
  %5092 = vmatprep.mubr.bf16.mxu0 0
  %5093 = vmatmul.mubr.bf16.gmra.mxu0 %v3021
  %v5094 = vpop.f32.mrf.mxu0
  %v5095 = vadd.f32 %v985, %v5094
  %v5096 = vpop.f32.mrf.mxu0
  %v5097 = vadd.f32 %v989, %v5096
  %v5098 = vpop.f32.mrf.mxu0
  %v5099 = vpop.f32.mrf.mxu0
  %5100 = vdwg.mxu0
  %5101 = vmatprep.subr.bf16.mxu0 0
  %5102 = vmatpush1.bf16.xpose.msra.mxu0 %v4101
  %5103 = vmatprep.subr.bf16.mxu0 0
  %5104 = vmatpush1.bf16.xpose.msra.mxu0 %v4098
  %5105 = vmatprep.subr.bf16.mxu0 0
  %5106 = vmatpush1.bf16.xpose.msra.mxu0 %v4095
  %5107 = vmatprep.subr.bf16.mxu0 0
  %5108 = vmatpush1.bf16.xpose.msra.mxu0 %v4092
  %5109 = vmatprep.subr.bf16.mxu0 0
  %5110 = vmatpush1.bf16.xpose.msra.mxu0 %v4089
  %5111 = vmatprep.subr.bf16.mxu0 0
  %5112 = vmatpush1.bf16.xpose.msra.mxu0 %v4086
  %5113 = vmatprep.subr.bf16.mxu0 0
  %5114 = vmatpush1.bf16.xpose.msra.mxu0 %v4083
  %5115 = vmatprep.subr.bf16.mxu0 0
  %5116 = vmatpush1.bf16.xpose.msra.mxu0 %v4080
  %5117 = vmatprep.subr.bf16.mxu0 0
  %5118 = vmatpush2.bf16.xpose.msra.mxu0 %v4125
  %5119 = vmatprep.subr.bf16.mxu0 0
  %5120 = vmatpush2.bf16.xpose.msra.mxu0 %v4122
  %5121 = vmatprep.subr.bf16.mxu0 0
  %5122 = vmatpush2.bf16.xpose.msra.mxu0 %v4119
  %5123 = vmatprep.subr.bf16.mxu0 0
  %5124 = vmatpush2.bf16.xpose.msra.mxu0 %v4116
  %5125 = vmatprep.subr.bf16.mxu0 0
  %5126 = vmatpush2.bf16.xpose.msra.mxu0 %v4113
  %5127 = vmatprep.subr.bf16.mxu0 0
  %5128 = vmatpush2.bf16.xpose.msra.mxu0 %v4110
  %5129 = vmatprep.subr.bf16.mxu0 0
  %5130 = vmatpush2.bf16.xpose.msra.mxu0 %v4107
  %5131 = vmatprep.subr.bf16.mxu0 0
  %5132 = vmatpush2.bf16.xpose.msra.mxu0 %v4104
  %5133 = vmatprep.mubr.bf16.mxu0 0
  %5134 = vmatmul.mubr.bf16.gmra.mxu0 %v3021
  %v5135 = vpop.f32.mrf.mxu0
  %v5136 = vadd.f32 %v993, %v5135
  %v5137 = vpop.f32.mrf.mxu0
  %v5138 = vadd.f32 %v997, %v5137
  %v5139 = vpop.f32.mrf.mxu0
  %v5140 = vpop.f32.mrf.mxu0
  %5141 = vdwg.mxu0
  %5142 = vmatprep.subr.bf16.mxu0 0
  %5143 = vmatpush1.bf16.xpose.msra.mxu0 %v4149
  %5144 = vmatprep.subr.bf16.mxu0 0
  %5145 = vmatpush1.bf16.xpose.msra.mxu0 %v4146
  %5146 = vmatprep.subr.bf16.mxu0 0
  %5147 = vmatpush1.bf16.xpose.msra.mxu0 %v4143
  %5148 = vmatprep.subr.bf16.mxu0 0
  %5149 = vmatpush1.bf16.xpose.msra.mxu0 %v4140
  %5150 = vmatprep.subr.bf16.mxu0 0
  %5151 = vmatpush1.bf16.xpose.msra.mxu0 %v4137
  %5152 = vmatprep.subr.bf16.mxu0 0
  %5153 = vmatpush1.bf16.xpose.msra.mxu0 %v4134
  %5154 = vmatprep.subr.bf16.mxu0 0
  %5155 = vmatpush1.bf16.xpose.msra.mxu0 %v4131
  %5156 = vmatprep.subr.bf16.mxu0 0
  %5157 = vmatpush1.bf16.xpose.msra.mxu0 %v4128
  %5158 = vmatprep.subr.bf16.mxu0 0
  %5159 = vmatpush2.bf16.xpose.msra.mxu0 %v4173
  %5160 = vmatprep.subr.bf16.mxu0 0
  %5161 = vmatpush2.bf16.xpose.msra.mxu0 %v4170
  %5162 = vmatprep.subr.bf16.mxu0 0
  %5163 = vmatpush2.bf16.xpose.msra.mxu0 %v4167
  %5164 = vmatprep.subr.bf16.mxu0 0
  %5165 = vmatpush2.bf16.xpose.msra.mxu0 %v4164
  %5166 = vmatprep.subr.bf16.mxu0 0
  %5167 = vmatpush2.bf16.xpose.msra.mxu0 %v4161
  %5168 = vmatprep.subr.bf16.mxu0 0
  %5169 = vmatpush2.bf16.xpose.msra.mxu0 %v4158
  %5170 = vmatprep.subr.bf16.mxu0 0
  %5171 = vmatpush2.bf16.xpose.msra.mxu0 %v4155
  %5172 = vmatprep.subr.bf16.mxu0 0
  %5173 = vmatpush2.bf16.xpose.msra.mxu0 %v4152
  %5174 = vmatprep.mubr.bf16.mxu0 0
  %5175 = vmatmul.mubr.bf16.gmra.mxu0 %v3021
  %v5176 = vpop.f32.mrf.mxu0
  %v5177 = vadd.f32 %v1001, %v5176
  %v5178 = vpop.f32.mrf.mxu0
  %v5179 = vadd.f32 %v1005, %v5178
  %v5180 = vpop.f32.mrf.mxu0
  %v5181 = vpop.f32.mrf.mxu0
  %5182 = vdwg.mxu0
  %5183 = vmatprep.subr.bf16.mxu0 0
  %5184 = vmatpush1.bf16.xpose.msra.mxu0 %v4197
  %5185 = vmatprep.subr.bf16.mxu0 0
  %5186 = vmatpush1.bf16.xpose.msra.mxu0 %v4194
  %5187 = vmatprep.subr.bf16.mxu0 0
  %5188 = vmatpush1.bf16.xpose.msra.mxu0 %v4191
  %5189 = vmatprep.subr.bf16.mxu0 0
  %5190 = vmatpush1.bf16.xpose.msra.mxu0 %v4188
  %5191 = vmatprep.subr.bf16.mxu0 0
  %5192 = vmatpush1.bf16.xpose.msra.mxu0 %v4185
  %5193 = vmatprep.subr.bf16.mxu0 0
  %5194 = vmatpush1.bf16.xpose.msra.mxu0 %v4182
  %5195 = vmatprep.subr.bf16.mxu0 0
  %5196 = vmatpush1.bf16.xpose.msra.mxu0 %v4179
  %5197 = vmatprep.subr.bf16.mxu0 0
  %5198 = vmatpush1.bf16.xpose.msra.mxu0 %v4176
  %5199 = vmatprep.subr.bf16.mxu0 0
  %5200 = vmatpush2.bf16.xpose.msra.mxu0 0
  %5201 = vmatprep.subr.bf16.mxu0 0
  %5202 = vmatpush2.bf16.xpose.msra.mxu0 0
  %5203 = vmatprep.subr.bf16.mxu0 0
  %5204 = vmatpush2.bf16.xpose.msra.mxu0 0
  %5205 = vmatprep.subr.bf16.mxu0 0
  %5206 = vmatpush2.bf16.xpose.msra.mxu0 0
  %5207 = vmatprep.subr.bf16.mxu0 0
  %5208 = vmatpush2.bf16.xpose.msra.mxu0 0
  %5209 = vmatprep.subr.bf16.mxu0 0
  %5210 = vmatpush2.bf16.xpose.msra.mxu0 0
  %5211 = vmatprep.subr.bf16.mxu0 0
  %5212 = vmatpush2.bf16.xpose.msra.mxu0 0
  %5213 = vmatprep.subr.bf16.mxu0 0
  %5214 = vmatpush2.bf16.xpose.msra.mxu0 0
  %5215 = vmatprep.mubr.bf16.mxu0 0
  %5216 = vmatmul.mubr.bf16.gmra.mxu0 %v3021
  %v5217 = vpop.f32.mrf.mxu0
  %v5218 = vadd.f32 %v1009, %v5217
  %v5219 = vpop.f32.mrf.mxu0
  %v5220 = vpop.f32.mrf.mxu0
  %v5221 = vpop.f32.mrf.mxu0
  %5222 = vdwg.mxu0
  %v5272 = vcombine.low %v4234, %v4236
  %v5273 = vcombine.low %v4275, %v4277
  %v5275 = vunpack.c.l.s4 1983009808
  %v5276 = vunpack.c.0.s8 %v5275
  %v5277 = vlaneseq
  %v5278 = vshrl.u32 %v5277, 7
  %v5279 = vsub.s32 %v5276, %v5278
  %v5280 = vrot.slane %v5272, %v5279
  %v5282 = vunpack.c.l.s4 1983009808
  %v5283 = vunpack.c.0.s8 %v5282
  %v5284 = vlaneseq
  %v5285 = vshrl.u32 %v5284, 7
  %v5286 = vsub.s32 %v5283, %v5285
  %v5287 = vrot.slane %v5273, %v5286
  %v5288 = vcombine.low %v5280, %v5287
  %v5289 = vcombine.low %v4316, %v4318
  %v5290 = vcombine.low %v4357, %v4359
  %v5292 = vunpack.c.l.s4 1983009808
  %v5293 = vunpack.c.0.s8 %v5292
  %v5294 = vlaneseq
  %v5295 = vshrl.u32 %v5294, 7
  %v5296 = vsub.s32 %v5293, %v5295
  %v5297 = vrot.slane %v5289, %v5296
  %v5299 = vunpack.c.l.s4 1983009808
  %v5300 = vunpack.c.0.s8 %v5299
  %v5301 = vlaneseq
  %v5302 = vshrl.u32 %v5301, 7
  %v5303 = vsub.s32 %v5300, %v5302
  %v5304 = vrot.slane %v5290, %v5303
  %v5305 = vcombine.low %v5297, %v5304
  %v5306 = vcombine.low %v4398, %v4400
  %v5307 = vcombine.low %v4439, %v4441
  %v5309 = vunpack.c.l.s4 1983009808
  %v5310 = vunpack.c.0.s8 %v5309
  %v5311 = vlaneseq
  %v5312 = vshrl.u32 %v5311, 7
  %v5313 = vsub.s32 %v5310, %v5312
  %v5314 = vrot.slane %v5306, %v5313
  %v5316 = vunpack.c.l.s4 1983009808
  %v5317 = vunpack.c.0.s8 %v5316
  %v5318 = vlaneseq
  %v5319 = vshrl.u32 %v5318, 7
  %v5320 = vsub.s32 %v5317, %v5319
  %v5321 = vrot.slane %v5307, %v5320
  %v5322 = vcombine.low %v5314, %v5321
  %v5323 = vcombine.low %v4480, %v4482
  %v5324 = vcombine.low %v4521, %v4523
  %v5326 = vunpack.c.l.s4 1983009808
  %v5327 = vunpack.c.0.s8 %v5326
  %v5328 = vlaneseq
  %v5329 = vshrl.u32 %v5328, 7
  %v5330 = vsub.s32 %v5327, %v5329
  %v5331 = vrot.slane %v5323, %v5330
  %v5333 = vunpack.c.l.s4 1983009808
  %v5334 = vunpack.c.0.s8 %v5333
  %v5335 = vlaneseq
  %v5336 = vshrl.u32 %v5335, 7
  %v5337 = vsub.s32 %v5334, %v5336
  %v5338 = vrot.slane %v5324, %v5337
  %v5339 = vcombine.low %v5331, %v5338
  %v5340 = vcombine.low %v4562, %v4564
  %v5341 = vcombine.low %v4603, %v4605
  %v5343 = vunpack.c.l.s4 1983009808
  %v5344 = vunpack.c.0.s8 %v5343
  %v5345 = vlaneseq
  %v5346 = vshrl.u32 %v5345, 7
  %v5347 = vsub.s32 %v5344, %v5346
  %v5348 = vrot.slane %v5340, %v5347
  %v5350 = vunpack.c.l.s4 1983009808
  %v5351 = vunpack.c.0.s8 %v5350
  %v5352 = vlaneseq
  %v5353 = vshrl.u32 %v5352, 7
  %v5354 = vsub.s32 %v5351, %v5353
  %v5355 = vrot.slane %v5341, %v5354
  %v5356 = vcombine.low %v5348, %v5355
  %v5357 = vcombine.low %v4644, %v4646
  %v5358 = vcombine.low %v4685, %v4687
  %v5360 = vunpack.c.l.s4 1983009808
  %v5361 = vunpack.c.0.s8 %v5360
  %v5362 = vlaneseq
  %v5363 = vshrl.u32 %v5362, 7
  %v5364 = vsub.s32 %v5361, %v5363
  %v5365 = vrot.slane %v5357, %v5364
  %v5367 = vunpack.c.l.s4 1983009808
  %v5368 = vunpack.c.0.s8 %v5367
  %v5369 = vlaneseq
  %v5370 = vshrl.u32 %v5369, 7
  %v5371 = vsub.s32 %v5368, %v5370
  %v5372 = vrot.slane %v5358, %v5371
  %v5373 = vcombine.low %v5365, %v5372
  %v5374 = vcombine.low %v4726, %v4728
  %v5375 = vcombine.low %v4767, %v4769
  %v5377 = vunpack.c.l.s4 1983009808
  %v5378 = vunpack.c.0.s8 %v5377
  %v5379 = vlaneseq
  %v5380 = vshrl.u32 %v5379, 7
  %v5381 = vsub.s32 %v5378, %v5380
  %v5382 = vrot.slane %v5374, %v5381
  %v5384 = vunpack.c.l.s4 1983009808
  %v5385 = vunpack.c.0.s8 %v5384
  %v5386 = vlaneseq
  %v5387 = vshrl.u32 %v5386, 7
  %v5388 = vsub.s32 %v5385, %v5387
  %v5389 = vrot.slane %v5375, %v5388
  %v5390 = vcombine.low %v5382, %v5389
  %v5391 = vcombine.low %v4808, %v4810
  %v5392 = vcombine.low %v4849, %v4851
  %v5394 = vunpack.c.l.s4 1983009808
  %v5395 = vunpack.c.0.s8 %v5394
  %v5396 = vlaneseq
  %v5397 = vshrl.u32 %v5396, 7
  %v5398 = vsub.s32 %v5395, %v5397
  %v5399 = vrot.slane %v5391, %v5398
  %v5401 = vunpack.c.l.s4 1983009808
  %v5402 = vunpack.c.0.s8 %v5401
  %v5403 = vlaneseq
  %v5404 = vshrl.u32 %v5403, 7
  %v5405 = vsub.s32 %v5402, %v5404
  %v5406 = vrot.slane %v5392, %v5405
  %v5407 = vcombine.low %v5399, %v5406
  %v5408 = vcombine.low %v4890, %v4892
  %v5409 = vcombine.low %v4931, %v4933
  %v5411 = vunpack.c.l.s4 1983009808
  %v5412 = vunpack.c.0.s8 %v5411
  %v5413 = vlaneseq
  %v5414 = vshrl.u32 %v5413, 7
  %v5415 = vsub.s32 %v5412, %v5414
  %v5416 = vrot.slane %v5408, %v5415
  %v5418 = vunpack.c.l.s4 1983009808
  %v5419 = vunpack.c.0.s8 %v5418
  %v5420 = vlaneseq
  %v5421 = vshrl.u32 %v5420, 7
  %v5422 = vsub.s32 %v5419, %v5421
  %v5423 = vrot.slane %v5409, %v5422
  %v5424 = vcombine.low %v5416, %v5423
  %v5425 = vcombine.low %v4972, %v4974
  %v5426 = vcombine.low %v5013, %v5015
  %v5428 = vunpack.c.l.s4 1983009808
  %v5429 = vunpack.c.0.s8 %v5428
  %v5430 = vlaneseq
  %v5431 = vshrl.u32 %v5430, 7
  %v5432 = vsub.s32 %v5429, %v5431
  %v5433 = vrot.slane %v5425, %v5432
  %v5435 = vunpack.c.l.s4 1983009808
  %v5436 = vunpack.c.0.s8 %v5435
  %v5437 = vlaneseq
  %v5438 = vshrl.u32 %v5437, 7
  %v5439 = vsub.s32 %v5436, %v5438
  %v5440 = vrot.slane %v5426, %v5439
  %v5441 = vcombine.low %v5433, %v5440
  %v5442 = vcombine.low %v5054, %v5056
  %v5443 = vcombine.low %v5095, %v5097
  %v5445 = vunpack.c.l.s4 1983009808
  %v5446 = vunpack.c.0.s8 %v5445
  %v5447 = vlaneseq
  %v5448 = vshrl.u32 %v5447, 7
  %v5449 = vsub.s32 %v5446, %v5448
  %v5450 = vrot.slane %v5442, %v5449
  %v5452 = vunpack.c.l.s4 1983009808
  %v5453 = vunpack.c.0.s8 %v5452
  %v5454 = vlaneseq
  %v5455 = vshrl.u32 %v5454, 7
  %v5456 = vsub.s32 %v5453, %v5455
  %v5457 = vrot.slane %v5443, %v5456
  %v5458 = vcombine.low %v5450, %v5457
  %v5459 = vcombine.low %v5136, %v5138
  %v5460 = vcombine.low %v5177, %v5179
  %v5462 = vunpack.c.l.s4 1983009808
  %v5463 = vunpack.c.0.s8 %v5462
  %v5464 = vlaneseq
  %v5465 = vshrl.u32 %v5464, 7
  %v5466 = vsub.s32 %v5463, %v5465
  %v5467 = vrot.slane %v5459, %v5466
  %v5469 = vunpack.c.l.s4 1983009808
  %v5470 = vunpack.c.0.s8 %v5469
  %v5471 = vlaneseq
  %v5472 = vshrl.u32 %v5471, 7
  %v5473 = vsub.s32 %v5470, %v5472
  %v5474 = vrot.slane %v5460, %v5473
  %v5475 = vcombine.low %v5467, %v5474
  %v5477 = vunpack.c.l.s4 1983009808
  %v5478 = vunpack.c.0.s8 %v5477
  %v5479 = vlaneseq
  %v5480 = vshrl.u32 %v5479, 7
  %v5481 = vsub.s32 %v5478, %v5480
  %v5482 = vrot.slane %v5218, %v5481
  %5496 = vst [vmem:[%s3] sm:$0xff] %v5288
  %5497 = vst [vmem:[%s3 + $0x8] sm:$0xff] %v5305
  %5498 = vst [vmem:[%s3 + $0x10] sm:$0xff] %v5322
  %5499 = vst [vmem:[%s3 + $0x18] sm:$0xff] %v5339
  %5500 = vst [vmem:[%s3 + $0x20] sm:$0xff] %v5356
  %5501 = vst [vmem:[%s3 + $0x28] sm:$0xff] %v5373
  %5502 = vst [vmem:[%s3 + $0x30] sm:$0xff] %v5390
  %5503 = vst [vmem:[%s3 + $0x38] sm:$0xff] %v5407
  %5504 = vst [vmem:[%s3 + $0x40] sm:$0xff] %v5424
  %5505 = vst [vmem:[%s3 + $0x48] sm:$0xff] %v5441
  %5506 = vst [vmem:[%s3 + $0x50] sm:$0xff] %v5458
  %5507 = vst [vmem:[%s3 + $0x58] sm:$0xff] %v5475
  %5508 = vst [vmem:[%s3 + $0x60] sm:$0x3] %v5482
  // Predicated region
  $region14: #{hyperdqn_forward.10} parent=0 // pred_check
    _
  $region15: #{hyperdqn_forward.10} parent=0 // pred_check_branch
    %5510 = sbr.rel (0) target = $region17
  $region16: #{hyperdqn_forward.10} parent=0 // pred_region
    _
  $region17: #{hyperdqn_forward.10} parent=0 // pred_fallthru
    _
  // Predicated region
  $region18: #{hyperdqn_forward.10} parent=0 // pred_check
    _
  $region19: #{hyperdqn_forward.10} parent=0 // pred_check_branch
    %5512 = sbr.rel (0) target = $region21
  $region20: #{hyperdqn_forward.10} parent=0 // pred_region
    _
  $region21: #{hyperdqn_forward.10} parent=0 // pred_fallthru
    _

</llo_original>
